<compile_context>
chip_gen: v7x
topology: tpu7x:2x2x1
jax: 0.10.0
libtpu: 0.0.40
codegen_flags: <defaults>
</compile_context>

<pallas_src>
import math

import jax
import jax.numpy as jnp
import numpy as np
from jax.experimental import pallas as pl
from jax.experimental.pallas import tpu as pltpu


# Row indices inside the packed [10, H] bias/LayerNorm slab.
BM1, BQ2, BM2, BOUT, G1, BE1, G2, BE2, G3, BE3 = range(10)


# ----------------------------------------------------------------------------
# Pallas kernel: whole guided-attention block for a block of Bb batch rows.
# grid = (B // Bb,); weights are passed as full (untiled) VMEM blocks.
# ----------------------------------------------------------------------------
def make_kernel(n_head, compute_dtype):
    cdt = compute_dtype

    def kernel(x_ref, y_ref, xm_ref, ym_ref,
               wqkv1, bqkv1, wm1, wq2, wkv2, bkv2, wm2, wfc, bfc, wout, vecs,
               o_ref, ctx_scr):
        Bb, Sx, H = x_ref.shape
        Sy = y_ref.shape[1]
        dh = H // n_head
        M = Bb * Sx

        vec = vecs[...]                       # [10, H] f32 packed biases / LN

        def row(i):
            return vec[i:i + 1, :]            # [1, H]

        def linear(a, w_ref, b):
            # Weights pre-transposed (and bf16) in the wrapper: y = a @ W_t + b.
            return jnp.dot(a.astype(cdt), w_ref[...],
                           preferred_element_type=jnp.float32) + b

        def layer_norm(a, gi, bi, eps=1e-6):
            # MCAN LayerNorm: g * (x - mean) / (std + eps) + b, unbiased std.
            # Exact reciprocal here (approx only in softmax) per review.
            h = a.shape[-1]
            mean = jnp.mean(a, axis=-1, keepdims=True)
            d = a - mean
            var = jnp.sum(d * d, axis=-1, keepdims=True) * (1.0 / (h - 1))
            inv = 1.0 / (jnp.sqrt(var) + eps)
            return row(gi) * (d * inv) + row(bi)

        def attend(q, k, v, bias, Sq, Sk, wm_ref, bm_row):
            # q: [Bb*Sq, H]; k, v: [Bb*Sk, H]; bias: [Bb, 1, Sk] additive mask.
            # 1/sqrt(dh) is already folded into the Q projection weights.
            qb = q.reshape(Bb, Sq, H).astype(cdt)
            kb = k.reshape(Bb, Sk, H).astype(cdt)
            vb = v.reshape(Bb, Sk, H).astype(cdt)
            # Hoisted, head-invariant mask broadcast (JAX doesn't CSE it).
            bias_b = jnp.broadcast_to(bias, (Bb, Sq, Sk))
            for hh in range(n_head):
                sl = slice(hh * dh, (hh + 1) * dh)
                s = jnp.einsum('bqd,bkd->bqk', qb[:, :, sl], kb[:, :, sl],
                               preferred_element_type=jnp.float32)
                s = s + bias_b
                m = jnp.max(s, axis=-1, keepdims=True)
                e = jnp.exp(s - m)
                p = e * pl.reciprocal(jnp.sum(e, axis=-1, keepdims=True),
                                      approx=True)
                ctx = jnp.einsum('bqk,bkd->bqd', p.astype(cdt), vb[:, :, sl],
                                 preferred_element_type=jnp.float32)
                # Write this head's context into its lane slot of the scratch
                # slab; ONE full-K merge matmul runs after the loop.
                ctx_scr[:, sl] = ctx.reshape(Bb * Sq, dh).astype(cdt)
            merged = jnp.dot(ctx_scr[...], wm_ref[...],
                             preferred_element_type=jnp.float32)
            return merged + bm_row

        x = x_ref[...].reshape(M, H)                  # [Bb*Sx, H] f32
        yf = y_ref[...].reshape(Bb * Sy, H)           # [Bb*Sy, H] f32

        neg = jnp.float32(-1e9)
        zero = jnp.float32(0.0)
        bias_x = jnp.where(xm_ref[...] > 0.0, neg, zero)   # [Bb, 1, Sx]
        bias_y = jnp.where(ym_ref[...] > 0.0, neg, zero)   # [Bb, 1, Sy]

        # ---- x = norm1(x + mhatt1(v=x, k=x, q=x, mask=x_mask)) ----
        qkv = linear(x, wqkv1, bqkv1[...])            # fused QKV: [Bb*Sx, 3H]
        att1 = attend(qkv[:, :H], qkv[:, H:2 * H], qkv[:, 2 * H:],
                      bias_x, Sx, Sx, wm1, row(BM1))
        x = layer_norm(x + att1, G1, BE1)

        # ---- x = norm2(x + mhatt2(v=y, k=y, q=x, mask=y_mask)) ----
        q2 = linear(x, wq2, row(BQ2))                 # [Bb*Sx, H]
        kv = linear(yf, wkv2, bkv2[...])              # fused KV: [Bb*Sy, 2H]
        att2 = attend(q2, kv[:, :H], kv[:, H:], bias_y, Sx, Sy, wm2, row(BM2))
        x = layer_norm(x + att2, G2, BE2)

        # ---- x = norm3(x + ffn(x)); FFN = Linear -> ReLU -> (dropout) -> Linear
        hid = jnp.maximum(linear(x, wfc, bfc[...]), 0.0)
        x = layer_norm(x + linear(hid, wout, row(BOUT)), G3, BE3)

        o_ref[...] = x.reshape(Bb, Sx, H).astype(o_ref.dtype)

    return kernel


def sguided_attention(x, y, x_mask, y_mask, params, n_head, batch_block=None,
                      compute_dtype=jnp.bfloat16):
    """x: [B,Sx,H], y: [B,Sy,H], x_mask: [B,1,Sx], y_mask: [B,1,Sy]."""
    B, Sx, H = x.shape
    Sy = y.shape[1]
    assert H % n_head == 0
    dh = H // n_head
    ff = params["wfc"].shape[0]

    # Default batch_block: pick the largest divisor of B that is <= B//2 so
    # nb >= 2 and the "parallel" batch axis shards across both TCs on v7x.
    # For production sizes, size Bb against the generation's VMEM budget.
    if batch_block is None:
        batch_block = B
        for cand in range(B // 2, 0, -1):
            if B % cand == 0:
                batch_block = cand
                break
    Bb = batch_block
    assert B % Bb == 0, "batch_block must divide B"
    nb = B // Bb

    f32 = jnp.float32
    cdt = compute_dtype
    scale = 1.0 / math.sqrt(dh)
    t = lambda w: jnp.asarray(w, f32).T

    # One-time weight preprocessing (outside the kernel):
    #   * transpose every nn.Linear weight -> kernel does a @ W_t
    #   * fuse Q/K/V (mhatt1) and K/V (mhatt2) along the output dim
    #   * fold 1/sqrt(dh) into the Q weights + Q biases
    #   * cast weights to bf16 (MXU-native), keep biases / LN params in f32
    #   * pack the 10 H-wide bias / LayerNorm vectors into one [10, H] slab.
    wqkv1 = jnp.concatenate([t(params["wq1"]) * scale, t(params["wk1"]),
                             t(params["wv1"])], axis=1).astype(cdt)     # [H,3H]
    bqkv1 = jnp.concatenate([params["bq1"] * scale, params["bk1"],
                             params["bv1"]], axis=-1).astype(f32)       # [1,3H]
    wm1 = t(params["wm1"]).astype(cdt)
    wq2 = (t(params["wq2"]) * scale).astype(cdt)
    wkv2 = jnp.concatenate([t(params["wk2"]), t(params["wv2"])],
                           axis=1).astype(cdt)                          # [H,2H]
    bkv2 = jnp.concatenate([params["bk2"], params["bv2"]],
                           axis=-1).astype(f32)                         # [1,2H]
    wm2 = t(params["wm2"]).astype(cdt)
    wfc = t(params["wfc"]).astype(cdt)                                  # [H,ff]
    bfc = jnp.asarray(params["bfc"], f32)                               # [1,ff]
    wout = t(params["wout"]).astype(cdt)                                # [ff,H]
    vecs = jnp.concatenate([
        params["bm1"], params["bq2"] * scale, params["bm2"], params["bout"],
        params["g1"], params["be1"], params["g2"], params["be2"],
        params["g3"], params["be3"]], axis=0).astype(f32)               # [10,H]

    proc = [wqkv1, bqkv1, wm1, wq2, wkv2, bkv2, wm2, wfc, bfc, wout, vecs]

    # Generation-aware scoped VMEM limit (v7x has 64 MiB/TC, v5e/v6e 128 MiB).
    try:
        vmem_cap = int(pltpu.get_tpu_info().vmem_capacity_bytes)
    except Exception:
        vmem_cap = 64 * 1024 * 1024
    vmem_limit = min((vmem_cap * 3) // 4, 100 * 1024 * 1024)

    # Advisory cost estimate (weights counted ONCE — they are grid-invariant).
    Mt = B * Sx
    flops = (2 * Mt * H * (3 * H)          # fused QKV projection (mhatt1)
             + 2 * Mt * H * H              # merge 1
             + 4 * B * Sx * Sx * H         # scores + context 1
             + 2 * Mt * H * H              # q projection (mhatt2)
             + 2 * B * Sy * H * (2 * H)    # fused KV projection (mhatt2)
             + 2 * Mt * H * H              # merge 2
             + 4 * B * Sx * Sy * H         # scores + context 2
             + 4 * Mt * H * ff)            # FFN
    transc = B * n_head * (Sx * Sx + Sx * Sy) + B * Sx * (2 * n_head + 3)
    param_bytes = sum(int(p.size) * p.dtype.itemsize for p in proc)
    bytes_acc = 4 * (2 * B * Sx * H + B * Sy * H + B * (Sx + Sy)) + param_bytes

    def build(single_buffer_weights):
        def full_spec(a):
            nd = a.ndim
            idx = lambda b, _nd=nd: (0,) * _nd
            if single_buffer_weights:
                # Grid-invariant weights: single-buffer (no double-buffer waste).
                return pl.BlockSpec(a.shape, idx,
                                    pipeline_mode=pl.Buffered(buffer_count=1))
            return pl.BlockSpec(a.shape, idx)

        in_specs = [
            pl.BlockSpec((Bb, Sx, H), lambda b: (b, 0, 0)),
            pl.BlockSpec((Bb, Sy, H), lambda b: (b, 0, 0)),
            pl.BlockSpec((Bb, 1, Sx), lambda b: (b, 0, 0)),
            pl.BlockSpec((Bb, 1, Sy), lambda b: (b, 0, 0)),
        ] + [full_spec(p) for p in proc]
        out_specs = pl.BlockSpec((Bb, Sx, H), lambda b: (b, 0, 0))

        return pl.pallas_call(
            make_kernel(n_head, cdt),
            out_shape=jax.ShapeDtypeStruct((B, Sx, H), jnp.float32),
            grid=(nb,),
            in_specs=in_specs,
            out_specs=out_specs,
            scratch_shapes=[pltpu.VMEM((Bb * Sx, H), cdt)],   # head-merge slab
            compiler_params=pltpu.CompilerParams(
                dimension_semantics=("parallel",),
                vmem_limit_bytes=int(vmem_limit)),
            cost_estimate=pl.CostEstimate(flops=int(flops),
                                          transcendentals=int(transc),
                                          bytes_accessed=int(bytes_acc)),
        )

    try:
        return build(True)(x, y, x_mask, y_mask, *proc)
    except Exception:
        # Fallback if this jax build rejects buffer_count=1 on the pallas_call
        # pipeline: identical kernel, weights just use default buffering.
        return build(False)(x, y, x_mask, y_mask, *proc)


# ----------------------------------------------------------------------------
# Pure-JAX reference (mirrors the PyTorch module in eval mode) for checking.
# ----------------------------------------------------------------------------
def ref_forward(x, y, xm, ym, p, n_head):
    def linear(a, w, b):
        return a @ w.T + b

    def layer_norm(a, g, be, eps=1e-6):
        h = a.shape[-1]
        mean = a.mean(-1, keepdims=True)
        d = a - mean
        std = jnp.sqrt((d * d).sum(-1, keepdims=True) / (h - 1))
        return g * d / (std + eps) + be

    def mha(q_in, kv, mask, wq, bq, wk, bk, wv, bv, wm, bm):
        B, Sq, H = q_in.shape
        Sk = kv.shape[1]
        dh = H // n_head
        q = linear(q_in, wq, bq).reshape(B, Sq, n_head, dh).transpose(0, 2, 1, 3)
        k = linear(kv, wk, bk).reshape(B, Sk, n_head, dh).transpose(0, 2, 1, 3)
        v = linear(kv, wv, bv).reshape(B, Sk, n_head, dh).transpose(0, 2, 1, 3)
        s = jnp.einsum("bhqd,bhkd->bhqk", q, k) / math.sqrt(dh)
        s = jnp.where(mask[:, None, :, :] > 0.0, -1e9, s)
        a = jax.nn.softmax(s, axis=-1)
        o = jnp.einsum("bhqk,bhkd->bhqd", a, v).transpose(0, 2, 1, 3).reshape(B, Sq, H)
        return linear(o, wm, bm)

    x = layer_norm(x + mha(x, x, xm, p["wq1"], p["bq1"], p["wk1"], p["bk1"],
                           p["wv1"], p["bv1"], p["wm1"], p["bm1"]),
                   p["g1"], p["be1"])
    x = layer_norm(x + mha(x, y, ym, p["wq2"], p["bq2"], p["wk2"], p["bk2"],
                           p["wv2"], p["bv2"], p["wm2"], p["bm2"]),
                   p["g2"], p["be2"])
    ff = linear(jax.nn.relu(linear(x, p["wfc"], p["bfc"])), p["wout"], p["bout"])
    x = layer_norm(x + ff, p["g3"], p["be3"])
    return x


def init_params(key, hidden, ff_size):
    ks = jax.random.split(key, 12)

    def w(k, shape, scale=0.05):
        return scale * jax.random.normal(k, shape, dtype=jnp.float32)

    return {
        # mhatt1 (PyTorch nn.Linear layout: W is [out, in])
        "wq1": w(ks[0], (hidden, hidden)), "bq1": jnp.zeros((1, hidden), jnp.float32),
        "wk1": w(ks[1], (hidden, hidden)), "bk1": jnp.zeros((1, hidden), jnp.float32),
        "wv1": w(ks[2], (hidden, hidden)), "bv1": jnp.zeros((1, hidden), jnp.float32),
        "wm1": w(ks[3], (hidden, hidden)), "bm1": jnp.zeros((1, hidden), jnp.float32),
        # mhatt2
        "wq2": w(ks[4], (hidden, hidden)), "bq2": jnp.zeros((1, hidden), jnp.float32),
        "wk2": w(ks[5], (hidden, hidden)), "bk2": jnp.zeros((1, hidden), jnp.float32),
        "wv2": w(ks[6], (hidden, hidden)), "bv2": jnp.zeros((1, hidden), jnp.float32),
        "wm2": w(ks[7], (hidden, hidden)), "bm2": jnp.zeros((1, hidden), jnp.float32),
        # FFN (Linear(H->ff) -> ReLU -> (dropout) -> Linear(ff->H))
        "wfc": w(ks[8], (ff_size, hidden)), "bfc": 0.01 * jnp.ones((1, ff_size), jnp.float32),
        "wout": w(ks[9], (hidden, ff_size)), "bout": jnp.zeros((1, hidden), jnp.float32),
        # LayerNorms
        "g1": jnp.ones((1, hidden), jnp.float32), "be1": jnp.zeros((1, hidden), jnp.float32),
        "g2": jnp.ones((1, hidden), jnp.float32), "be2": jnp.zeros((1, hidden), jnp.float32),
        "g3": jnp.ones((1, hidden), jnp.float32), "be3": jnp.zeros((1, hidden), jnp.float32),
    }


if __name__ == "__main__":
    # Lane-dense hidden size (multiple of 128); small demo shapes.
    B, Sx, Sy = 4, 8, 16
    hidden, n_head, ff_size = 128, 4, 256

    key = jax.random.PRNGKey(0)
    kx, ky, kp = jax.random.split(key, 3)

    x = jax.random.normal(kx, (B, Sx, hidden), dtype=jnp.float32)
    y = jax.random.normal(ky, (B, Sy, hidden), dtype=jnp.float32)

    # 1.0 marks masked (padded) key positions.
    x_mask = np.zeros((B, 1, Sx), np.float32)
    x_mask[:, :, Sx - 2:] = 1.0
    y_mask = np.zeros((B, 1, Sy), np.float32)
    y_mask[:, :, Sy - 3:] = 1.0
    x_mask = jnp.asarray(x_mask)
    y_mask = jnp.asarray(y_mask)

    params = init_params(kp, hidden, ff_size)

    # Default batch_block -> Bb=2, nb=2 (both TCs busy on v7x).
    out = sguided_attention(x, y, x_mask, y_mask, params, n_head)
    out = jax.block_until_ready(out)

    ref = ref_forward(x, y, x_mask, y_mask, params, n_head)
    ref = jax.block_until_ready(ref)

    assert out.shape == (B, Sx, hidden)
    # Tolerance accounts for bf16 MXU inputs (f32 accumulation) and the
    # approximate EUP reciprocal in the softmax denominator.
    np.testing.assert_allclose(np.asarray(out), np.asarray(ref),
                               rtol=5e-2, atol=5e-2)
    print("KERNEL_OK")
</pallas_src>

<mosaic_0001>
module attributes {stable_mosaic.version = 11 : i64} {
  func.func @kernel(%arg0: i32, %arg1: memref<2x8x128xf32, #tpu.memory_space<vmem>>, %arg2: memref<2x16x128xf32, #tpu.memory_space<vmem>>, %arg3: memref<2x1x8xf32, #tpu.memory_space<vmem>>, %arg4: memref<2x1x16xf32, #tpu.memory_space<vmem>>, %arg5: memref<128x384xbf16, #tpu.memory_space<vmem>>, %arg6: memref<1x384xf32, #tpu.memory_space<vmem>>, %arg7: memref<128x128xbf16, #tpu.memory_space<vmem>>, %arg8: memref<128x128xbf16, #tpu.memory_space<vmem>>, %arg9: memref<128x256xbf16, #tpu.memory_space<vmem>>, %arg10: memref<1x256xf32, #tpu.memory_space<vmem>>, %arg11: memref<128x128xbf16, #tpu.memory_space<vmem>>, %arg12: memref<128x256xbf16, #tpu.memory_space<vmem>>, %arg13: memref<1x256xf32, #tpu.memory_space<vmem>>, %arg14: memref<256x128xbf16, #tpu.memory_space<vmem>>, %arg15: memref<10x128xf32, #tpu.memory_space<vmem>>, %arg16: memref<2x8x128xf32, #tpu.memory_space<vmem>>, %arg17: memref<16x128xbf16, #tpu.memory_space<vmem>>) attributes {dimension_semantics = [#tpu.dimension_semantics<parallel>], iteration_bounds = array<i64: 2>, scalar_prefetch = 0 : i64, scratch_operands = 1 : i64, tpu.core_type = #tpu.core_type<tc>, window_params = [{transform_indices = @transform_0, window_bounds = array<i64: 2, 8, 128>}, {transform_indices = @transform_1, window_bounds = array<i64: 2, 16, 128>}, {transform_indices = @transform_2, window_bounds = array<i64: 2, 1, 8>}, {transform_indices = @transform_3, window_bounds = array<i64: 2, 1, 16>}, {pipeline_mode = #tpu.pipeline_mode<synchronous>, transform_indices = @transform_4, window_bounds = array<i64: 128, 384>}, {pipeline_mode = #tpu.pipeline_mode<synchronous>, transform_indices = @transform_5, window_bounds = array<i64: 1, 384>}, {pipeline_mode = #tpu.pipeline_mode<synchronous>, transform_indices = @transform_6, window_bounds = array<i64: 128, 128>}, {pipeline_mode = #tpu.pipeline_mode<synchronous>, transform_indices = @transform_7, window_bounds = array<i64: 128, 128>}, {pipeline_mode = #tpu.pipeline_mode<synchronous>, transform_indices = @transform_8, window_bounds = array<i64: 128, 256>}, {pipeline_mode = #tpu.pipeline_mode<synchronous>, transform_indices = @transform_9, window_bounds = array<i64: 1, 256>}, {pipeline_mode = #tpu.pipeline_mode<synchronous>, transform_indices = @transform_10, window_bounds = array<i64: 128, 128>}, {pipeline_mode = #tpu.pipeline_mode<synchronous>, transform_indices = @transform_11, window_bounds = array<i64: 128, 256>}, {pipeline_mode = #tpu.pipeline_mode<synchronous>, transform_indices = @transform_12, window_bounds = array<i64: 1, 256>}, {pipeline_mode = #tpu.pipeline_mode<synchronous>, transform_indices = @transform_13, window_bounds = array<i64: 256, 128>}, {pipeline_mode = #tpu.pipeline_mode<synchronous>, transform_indices = @transform_14, window_bounds = array<i64: 10, 128>}, {transform_indices = @transform_15, window_bounds = array<i64: 2, 8, 128>}]} {
    %c0 = arith.constant 0 : index
    %c0_0 = arith.constant 0 : index
    %0 = vector.load %arg15[%c0, %c0_0] : memref<10x128xf32, #tpu.memory_space<vmem>>, vector<10x128xf32>
    %c0_1 = arith.constant 0 : index
    %c0_2 = arith.constant 0 : index
    %c0_3 = arith.constant 0 : index
    %1 = vector.load %arg1[%c0_1, %c0_2, %c0_3] : memref<2x8x128xf32, #tpu.memory_space<vmem>>, vector<2x8x128xf32>
    %2 = vector.shape_cast %1 : vector<2x8x128xf32> to vector<16x128xf32>
    %c0_4 = arith.constant 0 : index
    %c0_5 = arith.constant 0 : index
    %c0_6 = arith.constant 0 : index
    %3 = vector.load %arg2[%c0_4, %c0_5, %c0_6] : memref<2x16x128xf32, #tpu.memory_space<vmem>>, vector<2x16x128xf32>
    %4 = vector.shape_cast %3 : vector<2x16x128xf32> to vector<32x128xf32>
    %c0_7 = arith.constant 0 : index
    %c0_8 = arith.constant 0 : index
    %c0_9 = arith.constant 0 : index
    %5 = vector.load %arg3[%c0_7, %c0_8, %c0_9] : memref<2x1x8xf32, #tpu.memory_space<vmem>>, vector<2x1x8xf32>
    %cst = arith.constant 0.000000e+00 : f32
    %6 = vector.broadcast %cst : f32 to vector<2x1x8xf32>
    %7 = arith.cmpf ogt, %5, %6 : vector<2x1x8xf32>
    %cst_10 = arith.constant -1.000000e+09 : f32
    %cst_11 = arith.constant 0.000000e+00 : f32
    %8 = vector.broadcast %cst_10 : f32 to vector<2x1x8xf32>
    %9 = vector.broadcast %cst_11 : f32 to vector<2x1x8xf32>
    %10 = arith.select %7, %8, %9 : vector<2x1x8xi1>, vector<2x1x8xf32>
    %c0_12 = arith.constant 0 : index
    %c0_13 = arith.constant 0 : index
    %c0_14 = arith.constant 0 : index
    %11 = vector.load %arg4[%c0_12, %c0_13, %c0_14] : memref<2x1x16xf32, #tpu.memory_space<vmem>>, vector<2x1x16xf32>
    %cst_15 = arith.constant 0.000000e+00 : f32
    %12 = vector.broadcast %cst_15 : f32 to vector<2x1x16xf32>
    %13 = arith.cmpf ogt, %11, %12 : vector<2x1x16xf32>
    %cst_16 = arith.constant -1.000000e+09 : f32
    %cst_17 = arith.constant 0.000000e+00 : f32
    %14 = vector.broadcast %cst_16 : f32 to vector<2x1x16xf32>
    %15 = vector.broadcast %cst_17 : f32 to vector<2x1x16xf32>
    %16 = arith.select %13, %14, %15 : vector<2x1x16xi1>, vector<2x1x16xf32>
    %c0_18 = arith.constant 0 : index
    %c0_19 = arith.constant 0 : index
    %17 = vector.load %arg6[%c0_18, %c0_19] : memref<1x384xf32, #tpu.memory_space<vmem>>, vector<1x384xf32>
    %18 = arith.truncf %2 : vector<16x128xf32> to vector<16x128xbf16>
    %c0_20 = arith.constant 0 : index
    %c0_21 = arith.constant 0 : index
    %19 = vector.load %arg5[%c0_20, %c0_21] : memref<128x384xbf16, #tpu.memory_space<vmem>>, vector<128x384xbf16>
    %cst_22 = arith.constant dense<0.000000e+00> : vector<16x384xf32>
    %20 = tpu.matmul %18, %19, %cst_22 {dimension_numbers = #tpu.dot_dimension_numbers<[1], [0], [0], [1], [0, 0, 1, 1], [], []>} : vector<16x128xbf16>, vector<128x384xbf16>, vector<16x384xf32> -> vector<16x384xf32>
    %21 = vector.broadcast %17 : vector<1x384xf32> to vector<16x384xf32>
    %22 = arith.addf %20, %21 : vector<16x384xf32>
    %23 = vector.extract_strided_slice %22 {offsets = [0, 0], sizes = [16, 128], strides = [1, 1]} : vector<16x384xf32> to vector<16x128xf32>
    %24 = vector.extract_strided_slice %22 {offsets = [0, 128], sizes = [16, 128], strides = [1, 1]} : vector<16x384xf32> to vector<16x128xf32>
    %25 = vector.extract_strided_slice %22 {offsets = [0, 256], sizes = [16, 128], strides = [1, 1]} : vector<16x384xf32> to vector<16x128xf32>
    %26 = vector.extract_strided_slice %0 {offsets = [0, 0], sizes = [1, 128], strides = [1, 1]} : vector<10x128xf32> to vector<1x128xf32>
    %27 = vector.shape_cast %23 : vector<16x128xf32> to vector<2x8x128xf32>
    %28 = arith.truncf %27 : vector<2x8x128xf32> to vector<2x8x128xbf16>
    %29 = vector.shape_cast %24 : vector<16x128xf32> to vector<2x8x128xf32>
    %30 = arith.truncf %29 : vector<2x8x128xf32> to vector<2x8x128xbf16>
    %31 = vector.shape_cast %25 : vector<16x128xf32> to vector<2x8x128xf32>
    %32 = arith.truncf %31 : vector<2x8x128xf32> to vector<2x8x128xbf16>
    %33 = vector.shape_cast %10 : vector<2x1x8xf32> to vector<2x1x8xf32>
    %34 = vector.broadcast %33 : vector<2x1x8xf32> to vector<2x8x8xf32>
    %35 = vector.extract_strided_slice %28 {offsets = [0, 0, 0], sizes = [2, 8, 32], strides = [1, 1, 1]} : vector<2x8x128xbf16> to vector<2x8x32xbf16>
    %36 = vector.extract_strided_slice %30 {offsets = [0, 0, 0], sizes = [2, 8, 32], strides = [1, 1, 1]} : vector<2x8x128xbf16> to vector<2x8x32xbf16>
    "tpu.trace_start"() <{level = 10 : i32, message = "bqd,bkd->bqk"}> : () -> ()
    %cst_23 = arith.constant dense<0.000000e+00> : vector<2x8x8xf32>
    %37 = tpu.matmul %35, %36, %cst_23 {dimension_numbers = #tpu.dot_dimension_numbers<[2], [2], [1], [1], [0, 0, 0, 1, 1, 1], [0], [0]>} : vector<2x8x32xbf16>, vector<2x8x32xbf16>, vector<2x8x8xf32> -> vector<2x8x8xf32>
    "tpu.trace_stop"() : () -> ()
    %38 = arith.addf %37, %34 : vector<2x8x8xf32>
    %cst_24 = arith.constant dense<0xFF800000> : vector<2x8xf32>
    %39 = vector.multi_reduction <maximumf>, %38, %cst_24 [2] : vector<2x8x8xf32> to vector<2x8xf32>
    %40 = vector.shape_cast %39 : vector<2x8xf32> to vector<2x8x1xf32>
    %41 = vector.broadcast %40 : vector<2x8x1xf32> to vector<2x8x8xf32>
    %42 = arith.subf %38, %41 : vector<2x8x8xf32>
    %43 = math.exp %42 : vector<2x8x8xf32>
    %cst_25 = arith.constant dense<0.000000e+00> : vector<2x8xf32>
    %44 = vector.multi_reduction <add>, %43, %cst_25 [2] : vector<2x8x8xf32> to vector<2x8xf32>
    %45 = vector.shape_cast %44 : vector<2x8xf32> to vector<2x8x1xf32>
    %46 = tpu.reciprocal %45 {approx = true} : vector<2x8x1xf32> -> vector<2x8x1xf32>
    %47 = vector.broadcast %46 : vector<2x8x1xf32> to vector<2x8x8xf32>
    %48 = arith.mulf %43, %47 : vector<2x8x8xf32>
    %49 = arith.truncf %48 : vector<2x8x8xf32> to vector<2x8x8xbf16>
    %50 = vector.extract_strided_slice %32 {offsets = [0, 0, 0], sizes = [2, 8, 32], strides = [1, 1, 1]} : vector<2x8x128xbf16> to vector<2x8x32xbf16>
    "tpu.trace_start"() <{level = 10 : i32, message = "bqk,bkd->bqd"}> : () -> ()
    %cst_26 = arith.constant dense<0.000000e+00> : vector<2x8x32xf32>
    %51 = tpu.matmul %49, %50, %cst_26 {dimension_numbers = #tpu.dot_dimension_numbers<[2], [1], [1], [2], [0, 0, 0, 1, 1, 2], [0], [0]>} : vector<2x8x8xbf16>, vector<2x8x32xbf16>, vector<2x8x32xf32> -> vector<2x8x32xf32>
    "tpu.trace_stop"() : () -> ()
    %52 = vector.shape_cast %51 : vector<2x8x32xf32> to vector<16x32xf32>
    %53 = arith.truncf %52 : vector<16x32xf32> to vector<16x32xbf16>
    %c0_27 = arith.constant 0 : index
    %c0_28 = arith.constant 0 : index
    %54 = vector.load %arg17[%c0_27, %c0_28] : memref<16x128xbf16, #tpu.memory_space<vmem>>, vector<16x32xbf16>
    tpu.vector_store %arg17[%c0_27, %c0_28], %53 {strides = array<i32>} : memref<16x128xbf16, #tpu.memory_space<vmem>>, vector<16x32xbf16>,
    %55 = vector.extract_strided_slice %28 {offsets = [0, 0, 32], sizes = [2, 8, 32], strides = [1, 1, 1]} : vector<2x8x128xbf16> to vector<2x8x32xbf16>
    %56 = vector.extract_strided_slice %30 {offsets = [0, 0, 32], sizes = [2, 8, 32], strides = [1, 1, 1]} : vector<2x8x128xbf16> to vector<2x8x32xbf16>
    "tpu.trace_start"() <{level = 10 : i32, message = "bqd,bkd->bqk"}> : () -> ()
    %cst_29 = arith.constant dense<0.000000e+00> : vector<2x8x8xf32>
    %57 = tpu.matmul %55, %56, %cst_29 {dimension_numbers = #tpu.dot_dimension_numbers<[2], [2], [1], [1], [0, 0, 0, 1, 1, 1], [0], [0]>} : vector<2x8x32xbf16>, vector<2x8x32xbf16>, vector<2x8x8xf32> -> vector<2x8x8xf32>
    "tpu.trace_stop"() : () -> ()
    %58 = arith.addf %57, %34 : vector<2x8x8xf32>
    %cst_30 = arith.constant dense<0xFF800000> : vector<2x8xf32>
    %59 = vector.multi_reduction <maximumf>, %58, %cst_30 [2] : vector<2x8x8xf32> to vector<2x8xf32>
    %60 = vector.shape_cast %59 : vector<2x8xf32> to vector<2x8x1xf32>
    %61 = vector.broadcast %60 : vector<2x8x1xf32> to vector<2x8x8xf32>
    %62 = arith.subf %58, %61 : vector<2x8x8xf32>
    %63 = math.exp %62 : vector<2x8x8xf32>
    %cst_31 = arith.constant dense<0.000000e+00> : vector<2x8xf32>
    %64 = vector.multi_reduction <add>, %63, %cst_31 [2] : vector<2x8x8xf32> to vector<2x8xf32>
    %65 = vector.shape_cast %64 : vector<2x8xf32> to vector<2x8x1xf32>
    %66 = tpu.reciprocal %65 {approx = true} : vector<2x8x1xf32> -> vector<2x8x1xf32>
    %67 = vector.broadcast %66 : vector<2x8x1xf32> to vector<2x8x8xf32>
    %68 = arith.mulf %63, %67 : vector<2x8x8xf32>
    %69 = arith.truncf %68 : vector<2x8x8xf32> to vector<2x8x8xbf16>
    %70 = vector.extract_strided_slice %32 {offsets = [0, 0, 32], sizes = [2, 8, 32], strides = [1, 1, 1]} : vector<2x8x128xbf16> to vector<2x8x32xbf16>
    "tpu.trace_start"() <{level = 10 : i32, message = "bqk,bkd->bqd"}> : () -> ()
    %cst_32 = arith.constant dense<0.000000e+00> : vector<2x8x32xf32>
    %71 = tpu.matmul %69, %70, %cst_32 {dimension_numbers = #tpu.dot_dimension_numbers<[2], [1], [1], [2], [0, 0, 0, 1, 1, 2], [0], [0]>} : vector<2x8x8xbf16>, vector<2x8x32xbf16>, vector<2x8x32xf32> -> vector<2x8x32xf32>
    "tpu.trace_stop"() : () -> ()
    %72 = vector.shape_cast %71 : vector<2x8x32xf32> to vector<16x32xf32>
    %73 = arith.truncf %72 : vector<16x32xf32> to vector<16x32xbf16>
    %c0_33 = arith.constant 0 : index
    %c32 = arith.constant 32 : index
    %74 = vector.load %arg17[%c0_33, %c32] : memref<16x128xbf16, #tpu.memory_space<vmem>>, vector<16x32xbf16>
    tpu.vector_store %arg17[%c0_33, %c32], %73 {strides = array<i32>} : memref<16x128xbf16, #tpu.memory_space<vmem>>, vector<16x32xbf16>,
    %75 = vector.extract_strided_slice %28 {offsets = [0, 0, 64], sizes = [2, 8, 32], strides = [1, 1, 1]} : vector<2x8x128xbf16> to vector<2x8x32xbf16>
    %76 = vector.extract_strided_slice %30 {offsets = [0, 0, 64], sizes = [2, 8, 32], strides = [1, 1, 1]} : vector<2x8x128xbf16> to vector<2x8x32xbf16>
    "tpu.trace_start"() <{level = 10 : i32, message = "bqd,bkd->bqk"}> : () -> ()
    %cst_34 = arith.constant dense<0.000000e+00> : vector<2x8x8xf32>
    %77 = tpu.matmul %75, %76, %cst_34 {dimension_numbers = #tpu.dot_dimension_numbers<[2], [2], [1], [1], [0, 0, 0, 1, 1, 1], [0], [0]>} : vector<2x8x32xbf16>, vector<2x8x32xbf16>, vector<2x8x8xf32> -> vector<2x8x8xf32>
    "tpu.trace_stop"() : () -> ()
    %78 = arith.addf %77, %34 : vector<2x8x8xf32>
    %cst_35 = arith.constant dense<0xFF800000> : vector<2x8xf32>
    %79 = vector.multi_reduction <maximumf>, %78, %cst_35 [2] : vector<2x8x8xf32> to vector<2x8xf32>
    %80 = vector.shape_cast %79 : vector<2x8xf32> to vector<2x8x1xf32>
    %81 = vector.broadcast %80 : vector<2x8x1xf32> to vector<2x8x8xf32>
    %82 = arith.subf %78, %81 : vector<2x8x8xf32>
    %83 = math.exp %82 : vector<2x8x8xf32>
    %cst_36 = arith.constant dense<0.000000e+00> : vector<2x8xf32>
    %84 = vector.multi_reduction <add>, %83, %cst_36 [2] : vector<2x8x8xf32> to vector<2x8xf32>
    %85 = vector.shape_cast %84 : vector<2x8xf32> to vector<2x8x1xf32>
    %86 = tpu.reciprocal %85 {approx = true} : vector<2x8x1xf32> -> vector<2x8x1xf32>
    %87 = vector.broadcast %86 : vector<2x8x1xf32> to vector<2x8x8xf32>
    %88 = arith.mulf %83, %87 : vector<2x8x8xf32>
    %89 = arith.truncf %88 : vector<2x8x8xf32> to vector<2x8x8xbf16>
    %90 = vector.extract_strided_slice %32 {offsets = [0, 0, 64], sizes = [2, 8, 32], strides = [1, 1, 1]} : vector<2x8x128xbf16> to vector<2x8x32xbf16>
    "tpu.trace_start"() <{level = 10 : i32, message = "bqk,bkd->bqd"}> : () -> ()
    %cst_37 = arith.constant dense<0.000000e+00> : vector<2x8x32xf32>
    %91 = tpu.matmul %89, %90, %cst_37 {dimension_numbers = #tpu.dot_dimension_numbers<[2], [1], [1], [2], [0, 0, 0, 1, 1, 2], [0], [0]>} : vector<2x8x8xbf16>, vector<2x8x32xbf16>, vector<2x8x32xf32> -> vector<2x8x32xf32>
    "tpu.trace_stop"() : () -> ()
    %92 = vector.shape_cast %91 : vector<2x8x32xf32> to vector<16x32xf32>
    %93 = arith.truncf %92 : vector<16x32xf32> to vector<16x32xbf16>
    %c0_38 = arith.constant 0 : index
    %c64 = arith.constant 64 : index
    %94 = vector.load %arg17[%c0_38, %c64] : memref<16x128xbf16, #tpu.memory_space<vmem>>, vector<16x32xbf16>
    tpu.vector_store %arg17[%c0_38, %c64], %93 {strides = array<i32>} : memref<16x128xbf16, #tpu.memory_space<vmem>>, vector<16x32xbf16>,
    %95 = vector.extract_strided_slice %28 {offsets = [0, 0, 96], sizes = [2, 8, 32], strides = [1, 1, 1]} : vector<2x8x128xbf16> to vector<2x8x32xbf16>
    %96 = vector.extract_strided_slice %30 {offsets = [0, 0, 96], sizes = [2, 8, 32], strides = [1, 1, 1]} : vector<2x8x128xbf16> to vector<2x8x32xbf16>
    "tpu.trace_start"() <{level = 10 : i32, message = "bqd,bkd->bqk"}> : () -> ()
    %cst_39 = arith.constant dense<0.000000e+00> : vector<2x8x8xf32>
    %97 = tpu.matmul %95, %96, %cst_39 {dimension_numbers = #tpu.dot_dimension_numbers<[2], [2], [1], [1], [0, 0, 0, 1, 1, 1], [0], [0]>} : vector<2x8x32xbf16>, vector<2x8x32xbf16>, vector<2x8x8xf32> -> vector<2x8x8xf32>
    "tpu.trace_stop"() : () -> ()
    %98 = arith.addf %97, %34 : vector<2x8x8xf32>
    %cst_40 = arith.constant dense<0xFF800000> : vector<2x8xf32>
    %99 = vector.multi_reduction <maximumf>, %98, %cst_40 [2] : vector<2x8x8xf32> to vector<2x8xf32>
    %100 = vector.shape_cast %99 : vector<2x8xf32> to vector<2x8x1xf32>
    %101 = vector.broadcast %100 : vector<2x8x1xf32> to vector<2x8x8xf32>
    %102 = arith.subf %98, %101 : vector<2x8x8xf32>
    %103 = math.exp %102 : vector<2x8x8xf32>
    %cst_41 = arith.constant dense<0.000000e+00> : vector<2x8xf32>
    %104 = vector.multi_reduction <add>, %103, %cst_41 [2] : vector<2x8x8xf32> to vector<2x8xf32>
    %105 = vector.shape_cast %104 : vector<2x8xf32> to vector<2x8x1xf32>
    %106 = tpu.reciprocal %105 {approx = true} : vector<2x8x1xf32> -> vector<2x8x1xf32>
    %107 = vector.broadcast %106 : vector<2x8x1xf32> to vector<2x8x8xf32>
    %108 = arith.mulf %103, %107 : vector<2x8x8xf32>
    %109 = arith.truncf %108 : vector<2x8x8xf32> to vector<2x8x8xbf16>
    %110 = vector.extract_strided_slice %32 {offsets = [0, 0, 96], sizes = [2, 8, 32], strides = [1, 1, 1]} : vector<2x8x128xbf16> to vector<2x8x32xbf16>
    "tpu.trace_start"() <{level = 10 : i32, message = "bqk,bkd->bqd"}> : () -> ()
    %cst_42 = arith.constant dense<0.000000e+00> : vector<2x8x32xf32>
    %111 = tpu.matmul %109, %110, %cst_42 {dimension_numbers = #tpu.dot_dimension_numbers<[2], [1], [1], [2], [0, 0, 0, 1, 1, 2], [0], [0]>} : vector<2x8x8xbf16>, vector<2x8x32xbf16>, vector<2x8x32xf32> -> vector<2x8x32xf32>
    "tpu.trace_stop"() : () -> ()
    %112 = vector.shape_cast %111 : vector<2x8x32xf32> to vector<16x32xf32>
    %113 = arith.truncf %112 : vector<16x32xf32> to vector<16x32xbf16>
    %c0_43 = arith.constant 0 : index
    %c96 = arith.constant 96 : index
    %114 = vector.load %arg17[%c0_43, %c96] : memref<16x128xbf16, #tpu.memory_space<vmem>>, vector<16x32xbf16>
    tpu.vector_store %arg17[%c0_43, %c96], %113 {strides = array<i32>} : memref<16x128xbf16, #tpu.memory_space<vmem>>, vector<16x32xbf16>,
    %c0_44 = arith.constant 0 : index
    %c0_45 = arith.constant 0 : index
    %115 = vector.load %arg17[%c0_44, %c0_45] : memref<16x128xbf16, #tpu.memory_space<vmem>>, vector<16x128xbf16>
    %c0_46 = arith.constant 0 : index
    %c0_47 = arith.constant 0 : index
    %116 = vector.load %arg7[%c0_46, %c0_47] : memref<128x128xbf16, #tpu.memory_space<vmem>>, vector<128x128xbf16>
    %cst_48 = arith.constant dense<0.000000e+00> : vector<16x128xf32>
    %117 = tpu.matmul %115, %116, %cst_48 {dimension_numbers = #tpu.dot_dimension_numbers<[1], [0], [0], [1], [0, 0, 1, 1], [], []>} : vector<16x128xbf16>, vector<128x128xbf16>, vector<16x128xf32> -> vector<16x128xf32>
    %118 = vector.broadcast %26 : vector<1x128xf32> to vector<16x128xf32>
    %119 = arith.addf %117, %118 : vector<16x128xf32>
    %120 = arith.addf %2, %119 : vector<16x128xf32>
    %cst_49 = arith.constant dense<0.000000e+00> : vector<16xf32>
    %121 = vector.multi_reduction <add>, %120, %cst_49 [1] : vector<16x128xf32> to vector<16xf32>
    %122 = vector.shape_cast %121 : vector<16xf32> to vector<16x1xf32>
    %cst_50 = arith.constant 1.280000e+02 : f32
    %123 = vector.broadcast %cst_50 : f32 to vector<16x1xf32>
    %124 = arith.divf %122, %123 : vector<16x1xf32>
    %125 = vector.broadcast %124 : vector<16x1xf32> to vector<16x128xf32>
    %126 = arith.subf %120, %125 : vector<16x128xf32>
    %127 = arith.mulf %126, %126 : vector<16x128xf32>
    %cst_51 = arith.constant dense<0.000000e+00> : vector<16xf32>
    %128 = vector.multi_reduction <add>, %127, %cst_51 [1] : vector<16x128xf32> to vector<16xf32>
    %129 = vector.shape_cast %128 : vector<16xf32> to vector<16x1xf32>
    %cst_52 = arith.constant 0.00787401571 : f32
    %130 = vector.broadcast %cst_52 : f32 to vector<16x1xf32>
    %131 = arith.mulf %129, %130 : vector<16x1xf32>
    %132 = math.sqrt %131 : vector<16x1xf32>
    %cst_53 = arith.constant 9.99999997E-7 : f32
    %133 = vector.broadcast %cst_53 : f32 to vector<16x1xf32>
    %134 = arith.addf %132, %133 : vector<16x1xf32>
    %cst_54 = arith.constant 1.000000e+00 : f32
    %135 = vector.broadcast %cst_54 : f32 to vector<16x1xf32>
    %136 = arith.divf %135, %134 : vector<16x1xf32>
    %137 = vector.extract_strided_slice %0 {offsets = [4, 0], sizes = [1, 128], strides = [1, 1]} : vector<10x128xf32> to vector<1x128xf32>
    %138 = vector.broadcast %136 : vector<16x1xf32> to vector<16x128xf32>
    %139 = arith.mulf %126, %138 : vector<16x128xf32>
    %140 = vector.broadcast %137 : vector<1x128xf32> to vector<16x128xf32>
    %141 = arith.mulf %140, %139 : vector<16x128xf32>
    %142 = vector.extract_strided_slice %0 {offsets = [5, 0], sizes = [1, 128], strides = [1, 1]} : vector<10x128xf32> to vector<1x128xf32>
    %143 = vector.broadcast %142 : vector<1x128xf32> to vector<16x128xf32>
    %144 = arith.addf %141, %143 : vector<16x128xf32>
    %145 = vector.extract_strided_slice %0 {offsets = [1, 0], sizes = [1, 128], strides = [1, 1]} : vector<10x128xf32> to vector<1x128xf32>
    %146 = arith.truncf %144 : vector<16x128xf32> to vector<16x128xbf16>
    %c0_55 = arith.constant 0 : index
    %c0_56 = arith.constant 0 : index
    %147 = vector.load %arg8[%c0_55, %c0_56] : memref<128x128xbf16, #tpu.memory_space<vmem>>, vector<128x128xbf16>
    %cst_57 = arith.constant dense<0.000000e+00> : vector<16x128xf32>
    %148 = tpu.matmul %146, %147, %cst_57 {dimension_numbers = #tpu.dot_dimension_numbers<[1], [0], [0], [1], [0, 0, 1, 1], [], []>} : vector<16x128xbf16>, vector<128x128xbf16>, vector<16x128xf32> -> vector<16x128xf32>
    %149 = vector.broadcast %145 : vector<1x128xf32> to vector<16x128xf32>
    %150 = arith.addf %148, %149 : vector<16x128xf32>
    %c0_58 = arith.constant 0 : index
    %c0_59 = arith.constant 0 : index
    %151 = vector.load %arg10[%c0_58, %c0_59] : memref<1x256xf32, #tpu.memory_space<vmem>>, vector<1x256xf32>
    %152 = arith.truncf %4 : vector<32x128xf32> to vector<32x128xbf16>
    %c0_60 = arith.constant 0 : index
    %c0_61 = arith.constant 0 : index
    %153 = vector.load %arg9[%c0_60, %c0_61] : memref<128x256xbf16, #tpu.memory_space<vmem>>, vector<128x256xbf16>
    %cst_62 = arith.constant dense<0.000000e+00> : vector<32x256xf32>
    %154 = tpu.matmul %152, %153, %cst_62 {dimension_numbers = #tpu.dot_dimension_numbers<[1], [0], [0], [1], [0, 0, 1, 1], [], []>} : vector<32x128xbf16>, vector<128x256xbf16>, vector<32x256xf32> -> vector<32x256xf32>
    %155 = vector.broadcast %151 : vector<1x256xf32> to vector<32x256xf32>
    %156 = arith.addf %154, %155 : vector<32x256xf32>
    %157 = vector.extract_strided_slice %156 {offsets = [0, 0], sizes = [32, 128], strides = [1, 1]} : vector<32x256xf32> to vector<32x128xf32>
    %158 = vector.extract_strided_slice %156 {offsets = [0, 128], sizes = [32, 128], strides = [1, 1]} : vector<32x256xf32> to vector<32x128xf32>
    %159 = vector.extract_strided_slice %0 {offsets = [2, 0], sizes = [1, 128], strides = [1, 1]} : vector<10x128xf32> to vector<1x128xf32>
    %160 = vector.shape_cast %150 : vector<16x128xf32> to vector<2x8x128xf32>
    %161 = arith.truncf %160 : vector<2x8x128xf32> to vector<2x8x128xbf16>
    %162 = vector.shape_cast %157 : vector<32x128xf32> to vector<2x16x128xf32>
    %163 = arith.truncf %162 : vector<2x16x128xf32> to vector<2x16x128xbf16>
    %164 = vector.shape_cast %158 : vector<32x128xf32> to vector<2x16x128xf32>
    %165 = arith.truncf %164 : vector<2x16x128xf32> to vector<2x16x128xbf16>
    %166 = vector.shape_cast %16 : vector<2x1x16xf32> to vector<2x1x16xf32>
    %167 = vector.broadcast %166 : vector<2x1x16xf32> to vector<2x8x16xf32>
    %168 = vector.extract_strided_slice %161 {offsets = [0, 0, 0], sizes = [2, 8, 32], strides = [1, 1, 1]} : vector<2x8x128xbf16> to vector<2x8x32xbf16>
    %169 = vector.extract_strided_slice %163 {offsets = [0, 0, 0], sizes = [2, 16, 32], strides = [1, 1, 1]} : vector<2x16x128xbf16> to vector<2x16x32xbf16>
    "tpu.trace_start"() <{level = 10 : i32, message = "bqd,bkd->bqk"}> : () -> ()
    %cst_63 = arith.constant dense<0.000000e+00> : vector<2x8x16xf32>
    %170 = tpu.matmul %168, %169, %cst_63 {dimension_numbers = #tpu.dot_dimension_numbers<[2], [2], [1], [1], [0, 0, 0, 1, 1, 1], [0], [0]>} : vector<2x8x32xbf16>, vector<2x16x32xbf16>, vector<2x8x16xf32> -> vector<2x8x16xf32>
    "tpu.trace_stop"() : () -> ()
    %171 = arith.addf %170, %167 : vector<2x8x16xf32>
    %cst_64 = arith.constant dense<0xFF800000> : vector<2x8xf32>
    %172 = vector.multi_reduction <maximumf>, %171, %cst_64 [2] : vector<2x8x16xf32> to vector<2x8xf32>
    %173 = vector.shape_cast %172 : vector<2x8xf32> to vector<2x8x1xf32>
    %174 = vector.broadcast %173 : vector<2x8x1xf32> to vector<2x8x16xf32>
    %175 = arith.subf %171, %174 : vector<2x8x16xf32>
    %176 = math.exp %175 : vector<2x8x16xf32>
    %cst_65 = arith.constant dense<0.000000e+00> : vector<2x8xf32>
    %177 = vector.multi_reduction <add>, %176, %cst_65 [2] : vector<2x8x16xf32> to vector<2x8xf32>
    %178 = vector.shape_cast %177 : vector<2x8xf32> to vector<2x8x1xf32>
    %179 = tpu.reciprocal %178 {approx = true} : vector<2x8x1xf32> -> vector<2x8x1xf32>
    %180 = vector.broadcast %179 : vector<2x8x1xf32> to vector<2x8x16xf32>
    %181 = arith.mulf %176, %180 : vector<2x8x16xf32>
    %182 = arith.truncf %181 : vector<2x8x16xf32> to vector<2x8x16xbf16>
    %183 = vector.extract_strided_slice %165 {offsets = [0, 0, 0], sizes = [2, 16, 32], strides = [1, 1, 1]} : vector<2x16x128xbf16> to vector<2x16x32xbf16>
    "tpu.trace_start"() <{level = 10 : i32, message = "bqk,bkd->bqd"}> : () -> ()
    %cst_66 = arith.constant dense<0.000000e+00> : vector<2x8x32xf32>
    %184 = tpu.matmul %182, %183, %cst_66 {dimension_numbers = #tpu.dot_dimension_numbers<[2], [1], [1], [2], [0, 0, 0, 1, 1, 2], [0], [0]>} : vector<2x8x16xbf16>, vector<2x16x32xbf16>, vector<2x8x32xf32> -> vector<2x8x32xf32>
    "tpu.trace_stop"() : () -> ()
    %185 = vector.shape_cast %184 : vector<2x8x32xf32> to vector<16x32xf32>
    %186 = arith.truncf %185 : vector<16x32xf32> to vector<16x32xbf16>
    %c0_67 = arith.constant 0 : index
    %c0_68 = arith.constant 0 : index
    %187 = vector.load %arg17[%c0_67, %c0_68] : memref<16x128xbf16, #tpu.memory_space<vmem>>, vector<16x32xbf16>
    tpu.vector_store %arg17[%c0_67, %c0_68], %186 {strides = array<i32>} : memref<16x128xbf16, #tpu.memory_space<vmem>>, vector<16x32xbf16>,
    %188 = vector.extract_strided_slice %161 {offsets = [0, 0, 32], sizes = [2, 8, 32], strides = [1, 1, 1]} : vector<2x8x128xbf16> to vector<2x8x32xbf16>
    %189 = vector.extract_strided_slice %163 {offsets = [0, 0, 32], sizes = [2, 16, 32], strides = [1, 1, 1]} : vector<2x16x128xbf16> to vector<2x16x32xbf16>
    "tpu.trace_start"() <{level = 10 : i32, message = "bqd,bkd->bqk"}> : () -> ()
    %cst_69 = arith.constant dense<0.000000e+00> : vector<2x8x16xf32>
    %190 = tpu.matmul %188, %189, %cst_69 {dimension_numbers = #tpu.dot_dimension_numbers<[2], [2], [1], [1], [0, 0, 0, 1, 1, 1], [0], [0]>} : vector<2x8x32xbf16>, vector<2x16x32xbf16>, vector<2x8x16xf32> -> vector<2x8x16xf32>
    "tpu.trace_stop"() : () -> ()
    %191 = arith.addf %190, %167 : vector<2x8x16xf32>
    %cst_70 = arith.constant dense<0xFF800000> : vector<2x8xf32>
    %192 = vector.multi_reduction <maximumf>, %191, %cst_70 [2] : vector<2x8x16xf32> to vector<2x8xf32>
    %193 = vector.shape_cast %192 : vector<2x8xf32> to vector<2x8x1xf32>
    %194 = vector.broadcast %193 : vector<2x8x1xf32> to vector<2x8x16xf32>
    %195 = arith.subf %191, %194 : vector<2x8x16xf32>
    %196 = math.exp %195 : vector<2x8x16xf32>
    %cst_71 = arith.constant dense<0.000000e+00> : vector<2x8xf32>
    %197 = vector.multi_reduction <add>, %196, %cst_71 [2] : vector<2x8x16xf32> to vector<2x8xf32>
    %198 = vector.shape_cast %197 : vector<2x8xf32> to vector<2x8x1xf32>
    %199 = tpu.reciprocal %198 {approx = true} : vector<2x8x1xf32> -> vector<2x8x1xf32>
    %200 = vector.broadcast %199 : vector<2x8x1xf32> to vector<2x8x16xf32>
    %201 = arith.mulf %196, %200 : vector<2x8x16xf32>
    %202 = arith.truncf %201 : vector<2x8x16xf32> to vector<2x8x16xbf16>
    %203 = vector.extract_strided_slice %165 {offsets = [0, 0, 32], sizes = [2, 16, 32], strides = [1, 1, 1]} : vector<2x16x128xbf16> to vector<2x16x32xbf16>
    "tpu.trace_start"() <{level = 10 : i32, message = "bqk,bkd->bqd"}> : () -> ()
    %cst_72 = arith.constant dense<0.000000e+00> : vector<2x8x32xf32>
    %204 = tpu.matmul %202, %203, %cst_72 {dimension_numbers = #tpu.dot_dimension_numbers<[2], [1], [1], [2], [0, 0, 0, 1, 1, 2], [0], [0]>} : vector<2x8x16xbf16>, vector<2x16x32xbf16>, vector<2x8x32xf32> -> vector<2x8x32xf32>
    "tpu.trace_stop"() : () -> ()
    %205 = vector.shape_cast %204 : vector<2x8x32xf32> to vector<16x32xf32>
    %206 = arith.truncf %205 : vector<16x32xf32> to vector<16x32xbf16>
    %c0_73 = arith.constant 0 : index
    %c32_74 = arith.constant 32 : index
    %207 = vector.load %arg17[%c0_73, %c32_74] : memref<16x128xbf16, #tpu.memory_space<vmem>>, vector<16x32xbf16>
    tpu.vector_store %arg17[%c0_73, %c32_74], %206 {strides = array<i32>} : memref<16x128xbf16, #tpu.memory_space<vmem>>, vector<16x32xbf16>,
    %208 = vector.extract_strided_slice %161 {offsets = [0, 0, 64], sizes = [2, 8, 32], strides = [1, 1, 1]} : vector<2x8x128xbf16> to vector<2x8x32xbf16>
    %209 = vector.extract_strided_slice %163 {offsets = [0, 0, 64], sizes = [2, 16, 32], strides = [1, 1, 1]} : vector<2x16x128xbf16> to vector<2x16x32xbf16>
    "tpu.trace_start"() <{level = 10 : i32, message = "bqd,bkd->bqk"}> : () -> ()
    %cst_75 = arith.constant dense<0.000000e+00> : vector<2x8x16xf32>
    %210 = tpu.matmul %208, %209, %cst_75 {dimension_numbers = #tpu.dot_dimension_numbers<[2], [2], [1], [1], [0, 0, 0, 1, 1, 1], [0], [0]>} : vector<2x8x32xbf16>, vector<2x16x32xbf16>, vector<2x8x16xf32> -> vector<2x8x16xf32>
    "tpu.trace_stop"() : () -> ()
    %211 = arith.addf %210, %167 : vector<2x8x16xf32>
    %cst_76 = arith.constant dense<0xFF800000> : vector<2x8xf32>
    %212 = vector.multi_reduction <maximumf>, %211, %cst_76 [2] : vector<2x8x16xf32> to vector<2x8xf32>
    %213 = vector.shape_cast %212 : vector<2x8xf32> to vector<2x8x1xf32>
    %214 = vector.broadcast %213 : vector<2x8x1xf32> to vector<2x8x16xf32>
    %215 = arith.subf %211, %214 : vector<2x8x16xf32>
    %216 = math.exp %215 : vector<2x8x16xf32>
    %cst_77 = arith.constant dense<0.000000e+00> : vector<2x8xf32>
    %217 = vector.multi_reduction <add>, %216, %cst_77 [2] : vector<2x8x16xf32> to vector<2x8xf32>
    %218 = vector.shape_cast %217 : vector<2x8xf32> to vector<2x8x1xf32>
    %219 = tpu.reciprocal %218 {approx = true} : vector<2x8x1xf32> -> vector<2x8x1xf32>
    %220 = vector.broadcast %219 : vector<2x8x1xf32> to vector<2x8x16xf32>
    %221 = arith.mulf %216, %220 : vector<2x8x16xf32>
    %222 = arith.truncf %221 : vector<2x8x16xf32> to vector<2x8x16xbf16>
    %223 = vector.extract_strided_slice %165 {offsets = [0, 0, 64], sizes = [2, 16, 32], strides = [1, 1, 1]} : vector<2x16x128xbf16> to vector<2x16x32xbf16>
    "tpu.trace_start"() <{level = 10 : i32, message = "bqk,bkd->bqd"}> : () -> ()
    %cst_78 = arith.constant dense<0.000000e+00> : vector<2x8x32xf32>
    %224 = tpu.matmul %222, %223, %cst_78 {dimension_numbers = #tpu.dot_dimension_numbers<[2], [1], [1], [2], [0, 0, 0, 1, 1, 2], [0], [0]>} : vector<2x8x16xbf16>, vector<2x16x32xbf16>, vector<2x8x32xf32> -> vector<2x8x32xf32>
    "tpu.trace_stop"() : () -> ()
    %225 = vector.shape_cast %224 : vector<2x8x32xf32> to vector<16x32xf32>
    %226 = arith.truncf %225 : vector<16x32xf32> to vector<16x32xbf16>
    %c0_79 = arith.constant 0 : index
    %c64_80 = arith.constant 64 : index
    %227 = vector.load %arg17[%c0_79, %c64_80] : memref<16x128xbf16, #tpu.memory_space<vmem>>, vector<16x32xbf16>
    tpu.vector_store %arg17[%c0_79, %c64_80], %226 {strides = array<i32>} : memref<16x128xbf16, #tpu.memory_space<vmem>>, vector<16x32xbf16>,
    %228 = vector.extract_strided_slice %161 {offsets = [0, 0, 96], sizes = [2, 8, 32], strides = [1, 1, 1]} : vector<2x8x128xbf16> to vector<2x8x32xbf16>
    %229 = vector.extract_strided_slice %163 {offsets = [0, 0, 96], sizes = [2, 16, 32], strides = [1, 1, 1]} : vector<2x16x128xbf16> to vector<2x16x32xbf16>
    "tpu.trace_start"() <{level = 10 : i32, message = "bqd,bkd->bqk"}> : () -> ()
    %cst_81 = arith.constant dense<0.000000e+00> : vector<2x8x16xf32>
    %230 = tpu.matmul %228, %229, %cst_81 {dimension_numbers = #tpu.dot_dimension_numbers<[2], [2], [1], [1], [0, 0, 0, 1, 1, 1], [0], [0]>} : vector<2x8x32xbf16>, vector<2x16x32xbf16>, vector<2x8x16xf32> -> vector<2x8x16xf32>
    "tpu.trace_stop"() : () -> ()
    %231 = arith.addf %230, %167 : vector<2x8x16xf32>
    %cst_82 = arith.constant dense<0xFF800000> : vector<2x8xf32>
    %232 = vector.multi_reduction <maximumf>, %231, %cst_82 [2] : vector<2x8x16xf32> to vector<2x8xf32>
    %233 = vector.shape_cast %232 : vector<2x8xf32> to vector<2x8x1xf32>
    %234 = vector.broadcast %233 : vector<2x8x1xf32> to vector<2x8x16xf32>
    %235 = arith.subf %231, %234 : vector<2x8x16xf32>
    %236 = math.exp %235 : vector<2x8x16xf32>
    %cst_83 = arith.constant dense<0.000000e+00> : vector<2x8xf32>
    %237 = vector.multi_reduction <add>, %236, %cst_83 [2] : vector<2x8x16xf32> to vector<2x8xf32>
    %238 = vector.shape_cast %237 : vector<2x8xf32> to vector<2x8x1xf32>
    %239 = tpu.reciprocal %238 {approx = true} : vector<2x8x1xf32> -> vector<2x8x1xf32>
    %240 = vector.broadcast %239 : vector<2x8x1xf32> to vector<2x8x16xf32>
    %241 = arith.mulf %236, %240 : vector<2x8x16xf32>
    %242 = arith.truncf %241 : vector<2x8x16xf32> to vector<2x8x16xbf16>
    %243 = vector.extract_strided_slice %165 {offsets = [0, 0, 96], sizes = [2, 16, 32], strides = [1, 1, 1]} : vector<2x16x128xbf16> to vector<2x16x32xbf16>
    "tpu.trace_start"() <{level = 10 : i32, message = "bqk,bkd->bqd"}> : () -> ()
    %cst_84 = arith.constant dense<0.000000e+00> : vector<2x8x32xf32>
    %244 = tpu.matmul %242, %243, %cst_84 {dimension_numbers = #tpu.dot_dimension_numbers<[2], [1], [1], [2], [0, 0, 0, 1, 1, 2], [0], [0]>} : vector<2x8x16xbf16>, vector<2x16x32xbf16>, vector<2x8x32xf32> -> vector<2x8x32xf32>
    "tpu.trace_stop"() : () -> ()
    %245 = vector.shape_cast %244 : vector<2x8x32xf32> to vector<16x32xf32>
    %246 = arith.truncf %245 : vector<16x32xf32> to vector<16x32xbf16>
    %c0_85 = arith.constant 0 : index
    %c96_86 = arith.constant 96 : index
    %247 = vector.load %arg17[%c0_85, %c96_86] : memref<16x128xbf16, #tpu.memory_space<vmem>>, vector<16x32xbf16>
    tpu.vector_store %arg17[%c0_85, %c96_86], %246 {strides = array<i32>} : memref<16x128xbf16, #tpu.memory_space<vmem>>, vector<16x32xbf16>,
    %c0_87 = arith.constant 0 : index
    %c0_88 = arith.constant 0 : index
    %248 = vector.load %arg17[%c0_87, %c0_88] : memref<16x128xbf16, #tpu.memory_space<vmem>>, vector<16x128xbf16>
    %c0_89 = arith.constant 0 : index
    %c0_90 = arith.constant 0 : index
    %249 = vector.load %arg11[%c0_89, %c0_90] : memref<128x128xbf16, #tpu.memory_space<vmem>>, vector<128x128xbf16>
    %cst_91 = arith.constant dense<0.000000e+00> : vector<16x128xf32>
    %250 = tpu.matmul %248, %249, %cst_91 {dimension_numbers = #tpu.dot_dimension_numbers<[1], [0], [0], [1], [0, 0, 1, 1], [], []>} : vector<16x128xbf16>, vector<128x128xbf16>, vector<16x128xf32> -> vector<16x128xf32>
    %251 = vector.broadcast %159 : vector<1x128xf32> to vector<16x128xf32>
    %252 = arith.addf %250, %251 : vector<16x128xf32>
    %253 = arith.addf %144, %252 : vector<16x128xf32>
    %cst_92 = arith.constant dense<0.000000e+00> : vector<16xf32>
    %254 = vector.multi_reduction <add>, %253, %cst_92 [1] : vector<16x128xf32> to vector<16xf32>
    %255 = vector.shape_cast %254 : vector<16xf32> to vector<16x1xf32>
    %cst_93 = arith.constant 1.280000e+02 : f32
    %256 = vector.broadcast %cst_93 : f32 to vector<16x1xf32>
    %257 = arith.divf %255, %256 : vector<16x1xf32>
    %258 = vector.broadcast %257 : vector<16x1xf32> to vector<16x128xf32>
    %259 = arith.subf %253, %258 : vector<16x128xf32>
    %260 = arith.mulf %259, %259 : vector<16x128xf32>
    %cst_94 = arith.constant dense<0.000000e+00> : vector<16xf32>
    %261 = vector.multi_reduction <add>, %260, %cst_94 [1] : vector<16x128xf32> to vector<16xf32>
    %262 = vector.shape_cast %261 : vector<16xf32> to vector<16x1xf32>
    %cst_95 = arith.constant 0.00787401571 : f32
    %263 = vector.broadcast %cst_95 : f32 to vector<16x1xf32>
    %264 = arith.mulf %262, %263 : vector<16x1xf32>
    %265 = math.sqrt %264 : vector<16x1xf32>
    %cst_96 = arith.constant 9.99999997E-7 : f32
    %266 = vector.broadcast %cst_96 : f32 to vector<16x1xf32>
    %267 = arith.addf %265, %266 : vector<16x1xf32>
    %cst_97 = arith.constant 1.000000e+00 : f32
    %268 = vector.broadcast %cst_97 : f32 to vector<16x1xf32>
    %269 = arith.divf %268, %267 : vector<16x1xf32>
    %270 = vector.extract_strided_slice %0 {offsets = [6, 0], sizes = [1, 128], strides = [1, 1]} : vector<10x128xf32> to vector<1x128xf32>
    %271 = vector.broadcast %269 : vector<16x1xf32> to vector<16x128xf32>
    %272 = arith.mulf %259, %271 : vector<16x128xf32>
    %273 = vector.broadcast %270 : vector<1x128xf32> to vector<16x128xf32>
    %274 = arith.mulf %273, %272 : vector<16x128xf32>
    %275 = vector.extract_strided_slice %0 {offsets = [7, 0], sizes = [1, 128], strides = [1, 1]} : vector<10x128xf32> to vector<1x128xf32>
    %276 = vector.broadcast %275 : vector<1x128xf32> to vector<16x128xf32>
    %277 = arith.addf %274, %276 : vector<16x128xf32>
    %c0_98 = arith.constant 0 : index
    %c0_99 = arith.constant 0 : index
    %278 = vector.load %arg13[%c0_98, %c0_99] : memref<1x256xf32, #tpu.memory_space<vmem>>, vector<1x256xf32>
    %279 = arith.truncf %277 : vector<16x128xf32> to vector<16x128xbf16>
    %c0_100 = arith.constant 0 : index
    %c0_101 = arith.constant 0 : index
    %280 = vector.load %arg12[%c0_100, %c0_101] : memref<128x256xbf16, #tpu.memory_space<vmem>>, vector<128x256xbf16>
    %cst_102 = arith.constant dense<0.000000e+00> : vector<16x256xf32>
    %281 = tpu.matmul %279, %280, %cst_102 {dimension_numbers = #tpu.dot_dimension_numbers<[1], [0], [0], [1], [0, 0, 1, 1], [], []>} : vector<16x128xbf16>, vector<128x256xbf16>, vector<16x256xf32> -> vector<16x256xf32>
    %282 = vector.broadcast %278 : vector<1x256xf32> to vector<16x256xf32>
    %283 = arith.addf %281, %282 : vector<16x256xf32>
    %cst_103 = arith.constant 0.000000e+00 : f32
    %284 = vector.broadcast %cst_103 : f32 to vector<16x256xf32>
    %285 = arith.maximumf %283, %284 : vector<16x256xf32>
    %286 = vector.extract_strided_slice %0 {offsets = [3, 0], sizes = [1, 128], strides = [1, 1]} : vector<10x128xf32> to vector<1x128xf32>
    %287 = arith.truncf %285 : vector<16x256xf32> to vector<16x256xbf16>
    %c0_104 = arith.constant 0 : index
    %c0_105 = arith.constant 0 : index
    %288 = vector.load %arg14[%c0_104, %c0_105] : memref<256x128xbf16, #tpu.memory_space<vmem>>, vector<256x128xbf16>
    %cst_106 = arith.constant dense<0.000000e+00> : vector<16x128xf32>
    %289 = tpu.matmul %287, %288, %cst_106 {dimension_numbers = #tpu.dot_dimension_numbers<[1], [0], [0], [1], [0, 0, 1, 1], [], []>} : vector<16x256xbf16>, vector<256x128xbf16>, vector<16x128xf32> -> vector<16x128xf32>
    %290 = vector.broadcast %286 : vector<1x128xf32> to vector<16x128xf32>
    %291 = arith.addf %289, %290 : vector<16x128xf32>
    %292 = arith.addf %277, %291 : vector<16x128xf32>
    %cst_107 = arith.constant dense<0.000000e+00> : vector<16xf32>
    %293 = vector.multi_reduction <add>, %292, %cst_107 [1] : vector<16x128xf32> to vector<16xf32>
    %294 = vector.shape_cast %293 : vector<16xf32> to vector<16x1xf32>
    %cst_108 = arith.constant 1.280000e+02 : f32
    %295 = vector.broadcast %cst_108 : f32 to vector<16x1xf32>
    %296 = arith.divf %294, %295 : vector<16x1xf32>
    %297 = vector.broadcast %296 : vector<16x1xf32> to vector<16x128xf32>
    %298 = arith.subf %292, %297 : vector<16x128xf32>
    %299 = arith.mulf %298, %298 : vector<16x128xf32>
    %cst_109 = arith.constant dense<0.000000e+00> : vector<16xf32>
    %300 = vector.multi_reduction <add>, %299, %cst_109 [1] : vector<16x128xf32> to vector<16xf32>
    %301 = vector.shape_cast %300 : vector<16xf32> to vector<16x1xf32>
    %cst_110 = arith.constant 0.00787401571 : f32
    %302 = vector.broadcast %cst_110 : f32 to vector<16x1xf32>
    %303 = arith.mulf %301, %302 : vector<16x1xf32>
    %304 = math.sqrt %303 : vector<16x1xf32>
    %cst_111 = arith.constant 9.99999997E-7 : f32
    %305 = vector.broadcast %cst_111 : f32 to vector<16x1xf32>
    %306 = arith.addf %304, %305 : vector<16x1xf32>
    %cst_112 = arith.constant 1.000000e+00 : f32
    %307 = vector.broadcast %cst_112 : f32 to vector<16x1xf32>
    %308 = arith.divf %307, %306 : vector<16x1xf32>
    %309 = vector.extract_strided_slice %0 {offsets = [8, 0], sizes = [1, 128], strides = [1, 1]} : vector<10x128xf32> to vector<1x128xf32>
    %310 = vector.broadcast %308 : vector<16x1xf32> to vector<16x128xf32>
    %311 = arith.mulf %298, %310 : vector<16x128xf32>
    %312 = vector.broadcast %309 : vector<1x128xf32> to vector<16x128xf32>
    %313 = arith.mulf %312, %311 : vector<16x128xf32>
    %314 = vector.extract_strided_slice %0 {offsets = [9, 0], sizes = [1, 128], strides = [1, 1]} : vector<10x128xf32> to vector<1x128xf32>
    %315 = vector.broadcast %314 : vector<1x128xf32> to vector<16x128xf32>
    %316 = arith.addf %313, %315 : vector<16x128xf32>
    %317 = vector.shape_cast %316 : vector<16x128xf32> to vector<2x8x128xf32>
    %c0_113 = arith.constant 0 : index
    %c0_114 = arith.constant 0 : index
    %c0_115 = arith.constant 0 : index
    %318 = vector.load %arg16[%c0_113, %c0_114, %c0_115] : memref<2x8x128xf32, #tpu.memory_space<vmem>>, vector<2x8x128xf32>
    tpu.vector_store %arg16[%c0_113, %c0_114, %c0_115], %317 {strides = array<i32>} : memref<2x8x128xf32, #tpu.memory_space<vmem>>, vector<2x8x128xf32>,
    return
  }
  func.func @transform_0(%arg0: i32) -> (i32, i32, i32) {
    %c0_i32 = arith.constant 0 : i32
    %c0_i32_0 = arith.constant 0 : i32
    %c0_i32_1 = arith.constant 0 : i32
    return %arg0, %c0_i32, %c0_i32_0 : i32, i32, i32
  }
  func.func @transform_1(%arg0: i32) -> (i32, i32, i32) {
    %c0_i32 = arith.constant 0 : i32
    %c0_i32_0 = arith.constant 0 : i32
    %c0_i32_1 = arith.constant 0 : i32
    return %arg0, %c0_i32, %c0_i32_0 : i32, i32, i32
  }
  func.func @transform_2(%arg0: i32) -> (i32, i32, i32) {
    %c0_i32 = arith.constant 0 : i32
    %c0_i32_0 = arith.constant 0 : i32
    %c0_i32_1 = arith.constant 0 : i32
    return %arg0, %c0_i32, %c0_i32_0 : i32, i32, i32
  }
  func.func @transform_3(%arg0: i32) -> (i32, i32, i32) {
    %c0_i32 = arith.constant 0 : i32
    %c0_i32_0 = arith.constant 0 : i32
    %c0_i32_1 = arith.constant 0 : i32
    return %arg0, %c0_i32, %c0_i32_0 : i32, i32, i32
  }
  func.func @transform_4(%arg0: i32) -> (i32, i32) {
    %c0_i32 = arith.constant 0 : i32
    %c0_i32_0 = arith.constant 0 : i32
    %c0_i32_1 = arith.constant 0 : i32
    return %c0_i32, %c0_i32_0 : i32, i32
  }
  func.func @transform_5(%arg0: i32) -> (i32, i32) {
    %c0_i32 = arith.constant 0 : i32
    %c0_i32_0 = arith.constant 0 : i32
    %c0_i32_1 = arith.constant 0 : i32
    return %c0_i32, %c0_i32_0 : i32, i32
  }
  func.func @transform_6(%arg0: i32) -> (i32, i32) {
    %c0_i32 = arith.constant 0 : i32
    %c0_i32_0 = arith.constant 0 : i32
    %c0_i32_1 = arith.constant 0 : i32
    return %c0_i32, %c0_i32_0 : i32, i32
  }
  func.func @transform_7(%arg0: i32) -> (i32, i32) {
    %c0_i32 = arith.constant 0 : i32
    %c0_i32_0 = arith.constant 0 : i32
    %c0_i32_1 = arith.constant 0 : i32
    return %c0_i32, %c0_i32_0 : i32, i32
  }
  func.func @transform_8(%arg0: i32) -> (i32, i32) {
    %c0_i32 = arith.constant 0 : i32
    %c0_i32_0 = arith.constant 0 : i32
    %c0_i32_1 = arith.constant 0 : i32
    return %c0_i32, %c0_i32_0 : i32, i32
  }
  func.func @transform_9(%arg0: i32) -> (i32, i32) {
    %c0_i32 = arith.constant 0 : i32
    %c0_i32_0 = arith.constant 0 : i32
    %c0_i32_1 = arith.constant 0 : i32
    return %c0_i32, %c0_i32_0 : i32, i32
  }
  func.func @transform_10(%arg0: i32) -> (i32, i32) {
    %c0_i32 = arith.constant 0 : i32
    %c0_i32_0 = arith.constant 0 : i32
    %c0_i32_1 = arith.constant 0 : i32
    return %c0_i32, %c0_i32_0 : i32, i32
  }
  func.func @transform_11(%arg0: i32) -> (i32, i32) {
    %c0_i32 = arith.constant 0 : i32
    %c0_i32_0 = arith.constant 0 : i32
    %c0_i32_1 = arith.constant 0 : i32
    return %c0_i32, %c0_i32_0 : i32, i32
  }
  func.func @transform_12(%arg0: i32) -> (i32, i32) {
    %c0_i32 = arith.constant 0 : i32
    %c0_i32_0 = arith.constant 0 : i32
    %c0_i32_1 = arith.constant 0 : i32
    return %c0_i32, %c0_i32_0 : i32, i32
  }
  func.func @transform_13(%arg0: i32) -> (i32, i32) {
    %c0_i32 = arith.constant 0 : i32
    %c0_i32_0 = arith.constant 0 : i32
    %c0_i32_1 = arith.constant 0 : i32
    return %c0_i32, %c0_i32_0 : i32, i32
  }
  func.func @transform_14(%arg0: i32) -> (i32, i32) {
    %c0_i32 = arith.constant 0 : i32
    %c0_i32_0 = arith.constant 0 : i32
    %c0_i32_1 = arith.constant 0 : i32
    return %c0_i32, %c0_i32_0 : i32, i32
  }
  func.func @transform_15(%arg0: i32) -> (i32, i32, i32) {
    %c0_i32 = arith.constant 0 : i32
    %c0_i32_0 = arith.constant 0 : i32
    %c0_i32_1 = arith.constant 0 : i32
    return %arg0, %c0_i32, %c0_i32_0 : i32, i32, i32
  }
}

module attributes {stable_mosaic.version = 11 : i64} {
  func.func @kernel(%arg0: i32, %arg1: memref<2x8x128xf32, #tpu.memory_space<vmem>>, %arg2: memref<2x16x128xf32, #tpu.memory_space<vmem>>, %arg3: memref<2x1x8xf32, #tpu.memory_space<vmem>>, %arg4: memref<2x1x16xf32, #tpu.memory_space<vmem>>, %arg5: memref<128x384xbf16, #tpu.memory_space<vmem>>, %arg6: memref<1x384xf32, #tpu.memory_space<vmem>>, %arg7: memref<128x128xbf16, #tpu.memory_space<vmem>>, %arg8: memref<128x128xbf16, #tpu.memory_space<vmem>>, %arg9: memref<128x256xbf16, #tpu.memory_space<vmem>>, %arg10: memref<1x256xf32, #tpu.memory_space<vmem>>, %arg11: memref<128x128xbf16, #tpu.memory_space<vmem>>, %arg12: memref<128x256xbf16, #tpu.memory_space<vmem>>, %arg13: memref<1x256xf32, #tpu.memory_space<vmem>>, %arg14: memref<256x128xbf16, #tpu.memory_space<vmem>>, %arg15: memref<10x128xf32, #tpu.memory_space<vmem>>, %arg16: memref<2x8x128xf32, #tpu.memory_space<vmem>>, %arg17: memref<16x128xbf16, #tpu.memory_space<vmem>>) attributes {dimension_semantics = [#tpu.dimension_semantics<parallel>], iteration_bounds = array<i64: 2>, scalar_prefetch = 0 : i64, scratch_operands = 1 : i64, tpu.core_type = #tpu.core_type<tc>, window_params = [{transform_indices = @transform_0, window_bounds = array<i64: 2, 8, 128>}, {transform_indices = @transform_1, window_bounds = array<i64: 2, 16, 128>}, {transform_indices = @transform_2, window_bounds = array<i64: 2, 1, 8>}, {transform_indices = @transform_3, window_bounds = array<i64: 2, 1, 16>}, {pipeline_mode = #tpu.pipeline_mode<synchronous>, transform_indices = @transform_4, window_bounds = array<i64: 128, 384>}, {pipeline_mode = #tpu.pipeline_mode<synchronous>, transform_indices = @transform_5, window_bounds = array<i64: 1, 384>}, {pipeline_mode = #tpu.pipeline_mode<synchronous>, transform_indices = @transform_6, window_bounds = array<i64: 128, 128>}, {pipeline_mode = #tpu.pipeline_mode<synchronous>, transform_indices = @transform_7, window_bounds = array<i64: 128, 128>}, {pipeline_mode = #tpu.pipeline_mode<synchronous>, transform_indices = @transform_8, window_bounds = array<i64: 128, 256>}, {pipeline_mode = #tpu.pipeline_mode<synchronous>, transform_indices = @transform_9, window_bounds = array<i64: 1, 256>}, {pipeline_mode = #tpu.pipeline_mode<synchronous>, transform_indices = @transform_10, window_bounds = array<i64: 128, 128>}, {pipeline_mode = #tpu.pipeline_mode<synchronous>, transform_indices = @transform_11, window_bounds = array<i64: 128, 256>}, {pipeline_mode = #tpu.pipeline_mode<synchronous>, transform_indices = @transform_12, window_bounds = array<i64: 1, 256>}, {pipeline_mode = #tpu.pipeline_mode<synchronous>, transform_indices = @transform_13, window_bounds = array<i64: 256, 128>}, {pipeline_mode = #tpu.pipeline_mode<synchronous>, transform_indices = @transform_14, window_bounds = array<i64: 10, 128>}, {transform_indices = @transform_15, window_bounds = array<i64: 2, 8, 128>}]} {
    %c0 = arith.constant 0 : index
    %c0_0 = arith.constant 0 : index
    %0 = vector.load %arg15[%c0, %c0_0] : memref<10x128xf32, #tpu.memory_space<vmem>>, vector<10x128xf32>
    %c0_1 = arith.constant 0 : index
    %c0_2 = arith.constant 0 : index
    %c0_3 = arith.constant 0 : index
    %1 = vector.load %arg1[%c0_1, %c0_2, %c0_3] : memref<2x8x128xf32, #tpu.memory_space<vmem>>, vector<2x8x128xf32>
    %2 = vector.shape_cast %1 : vector<2x8x128xf32> to vector<16x128xf32>
    %c0_4 = arith.constant 0 : index
    %c0_5 = arith.constant 0 : index
    %c0_6 = arith.constant 0 : index
    %3 = vector.load %arg2[%c0_4, %c0_5, %c0_6] : memref<2x16x128xf32, #tpu.memory_space<vmem>>, vector<2x16x128xf32>
    %4 = vector.shape_cast %3 : vector<2x16x128xf32> to vector<32x128xf32>
    %c0_7 = arith.constant 0 : index
    %c0_8 = arith.constant 0 : index
    %c0_9 = arith.constant 0 : index
    %5 = vector.load %arg3[%c0_7, %c0_8, %c0_9] : memref<2x1x8xf32, #tpu.memory_space<vmem>>, vector<2x1x8xf32>
    %cst = arith.constant 0.000000e+00 : f32
    %6 = vector.broadcast %cst : f32 to vector<2x1x8xf32>
    %7 = arith.cmpf ogt, %5, %6 : vector<2x1x8xf32>
    %cst_10 = arith.constant -1.000000e+09 : f32
    %cst_11 = arith.constant 0.000000e+00 : f32
    %8 = vector.broadcast %cst_10 : f32 to vector<2x1x8xf32>
    %9 = vector.broadcast %cst_11 : f32 to vector<2x1x8xf32>
    %10 = arith.select %7, %8, %9 : vector<2x1x8xi1>, vector<2x1x8xf32>
    %c0_12 = arith.constant 0 : index
    %c0_13 = arith.constant 0 : index
    %c0_14 = arith.constant 0 : index
    %11 = vector.load %arg4[%c0_12, %c0_13, %c0_14] : memref<2x1x16xf32, #tpu.memory_space<vmem>>, vector<2x1x16xf32>
    %cst_15 = arith.constant 0.000000e+00 : f32
    %12 = vector.broadcast %cst_15 : f32 to vector<2x1x16xf32>
    %13 = arith.cmpf ogt, %11, %12 : vector<2x1x16xf32>
    %cst_16 = arith.constant -1.000000e+09 : f32
    %cst_17 = arith.constant 0.000000e+00 : f32
    %14 = vector.broadcast %cst_16 : f32 to vector<2x1x16xf32>
    %15 = vector.broadcast %cst_17 : f32 to vector<2x1x16xf32>
    %16 = arith.select %13, %14, %15 : vector<2x1x16xi1>, vector<2x1x16xf32>
    %c0_18 = arith.constant 0 : index
    %c0_19 = arith.constant 0 : index
    %17 = vector.load %arg6[%c0_18, %c0_19] : memref<1x384xf32, #tpu.memory_space<vmem>>, vector<1x384xf32>
    %18 = arith.truncf %2 : vector<16x128xf32> to vector<16x128xbf16>
    %c0_20 = arith.constant 0 : index
    %c0_21 = arith.constant 0 : index
    %19 = vector.load %arg5[%c0_20, %c0_21] : memref<128x384xbf16, #tpu.memory_space<vmem>>, vector<128x384xbf16>
    %cst_22 = arith.constant dense<0.000000e+00> : vector<16x384xf32>
    %20 = tpu.matmul %18, %19, %cst_22 {dimension_numbers = #tpu.dot_dimension_numbers<[1], [0], [0], [1], [0, 0, 1, 1], [], []>} : vector<16x128xbf16>, vector<128x384xbf16>, vector<16x384xf32> -> vector<16x384xf32>
    %21 = vector.broadcast %17 : vector<1x384xf32> to vector<16x384xf32>
    %22 = arith.addf %20, %21 : vector<16x384xf32>
    %23 = vector.extract_strided_slice %22 {offsets = [0, 0], sizes = [16, 128], strides = [1, 1]} : vector<16x384xf32> to vector<16x128xf32>
    %24 = vector.extract_strided_slice %22 {offsets = [0, 128], sizes = [16, 128], strides = [1, 1]} : vector<16x384xf32> to vector<16x128xf32>
    %25 = vector.extract_strided_slice %22 {offsets = [0, 256], sizes = [16, 128], strides = [1, 1]} : vector<16x384xf32> to vector<16x128xf32>
    %26 = vector.extract_strided_slice %0 {offsets = [0, 0], sizes = [1, 128], strides = [1, 1]} : vector<10x128xf32> to vector<1x128xf32>
    %27 = vector.shape_cast %23 : vector<16x128xf32> to vector<2x8x128xf32>
    %28 = arith.truncf %27 : vector<2x8x128xf32> to vector<2x8x128xbf16>
    %29 = vector.shape_cast %24 : vector<16x128xf32> to vector<2x8x128xf32>
    %30 = arith.truncf %29 : vector<2x8x128xf32> to vector<2x8x128xbf16>
    %31 = vector.shape_cast %25 : vector<16x128xf32> to vector<2x8x128xf32>
    %32 = arith.truncf %31 : vector<2x8x128xf32> to vector<2x8x128xbf16>
    %33 = vector.shape_cast %10 : vector<2x1x8xf32> to vector<2x1x8xf32>
    %34 = vector.broadcast %33 : vector<2x1x8xf32> to vector<2x8x8xf32>
    %35 = vector.extract_strided_slice %28 {offsets = [0, 0, 0], sizes = [2, 8, 32], strides = [1, 1, 1]} : vector<2x8x128xbf16> to vector<2x8x32xbf16>
    %36 = vector.extract_strided_slice %30 {offsets = [0, 0, 0], sizes = [2, 8, 32], strides = [1, 1, 1]} : vector<2x8x128xbf16> to vector<2x8x32xbf16>
    "tpu.trace_start"() <{level = 10 : i32, message = "bqd,bkd->bqk"}> : () -> ()
    %cst_23 = arith.constant dense<0.000000e+00> : vector<2x8x8xf32>
    %37 = tpu.matmul %35, %36, %cst_23 {dimension_numbers = #tpu.dot_dimension_numbers<[2], [2], [1], [1], [0, 0, 0, 1, 1, 1], [0], [0]>} : vector<2x8x32xbf16>, vector<2x8x32xbf16>, vector<2x8x8xf32> -> vector<2x8x8xf32>
    "tpu.trace_stop"() : () -> ()
    %38 = arith.addf %37, %34 : vector<2x8x8xf32>
    %cst_24 = arith.constant dense<0xFF800000> : vector<2x8xf32>
    %39 = vector.multi_reduction <maximumf>, %38, %cst_24 [2] : vector<2x8x8xf32> to vector<2x8xf32>
    %40 = vector.shape_cast %39 : vector<2x8xf32> to vector<2x8x1xf32>
    %41 = vector.broadcast %40 : vector<2x8x1xf32> to vector<2x8x8xf32>
    %42 = arith.subf %38, %41 : vector<2x8x8xf32>
    %43 = math.exp %42 : vector<2x8x8xf32>
    %cst_25 = arith.constant dense<0.000000e+00> : vector<2x8xf32>
    %44 = vector.multi_reduction <add>, %43, %cst_25 [2] : vector<2x8x8xf32> to vector<2x8xf32>
    %45 = vector.shape_cast %44 : vector<2x8xf32> to vector<2x8x1xf32>
    %46 = tpu.reciprocal %45 {approx = true} : vector<2x8x1xf32> -> vector<2x8x1xf32>
    %47 = vector.broadcast %46 : vector<2x8x1xf32> to vector<2x8x8xf32>
    %48 = arith.mulf %43, %47 : vector<2x8x8xf32>
    %49 = arith.truncf %48 : vector<2x8x8xf32> to vector<2x8x8xbf16>
    %50 = vector.extract_strided_slice %32 {offsets = [0, 0, 0], sizes = [2, 8, 32], strides = [1, 1, 1]} : vector<2x8x128xbf16> to vector<2x8x32xbf16>
    "tpu.trace_start"() <{level = 10 : i32, message = "bqk,bkd->bqd"}> : () -> ()
    %cst_26 = arith.constant dense<0.000000e+00> : vector<2x8x32xf32>
    %51 = tpu.matmul %49, %50, %cst_26 {dimension_numbers = #tpu.dot_dimension_numbers<[2], [1], [1], [2], [0, 0, 0, 1, 1, 2], [0], [0]>} : vector<2x8x8xbf16>, vector<2x8x32xbf16>, vector<2x8x32xf32> -> vector<2x8x32xf32>
    "tpu.trace_stop"() : () -> ()
    %52 = vector.shape_cast %51 : vector<2x8x32xf32> to vector<16x32xf32>
    %53 = arith.truncf %52 : vector<16x32xf32> to vector<16x32xbf16>
    %c0_27 = arith.constant 0 : index
    %c0_28 = arith.constant 0 : index
    %54 = vector.load %arg17[%c0_27, %c0_28] : memref<16x128xbf16, #tpu.memory_space<vmem>>, vector<16x32xbf16>
    tpu.vector_store %arg17[%c0_27, %c0_28], %53 {strides = array<i32>} : memref<16x128xbf16, #tpu.memory_space<vmem>>, vector<16x32xbf16>,
    %55 = vector.extract_strided_slice %28 {offsets = [0, 0, 32], sizes = [2, 8, 32], strides = [1, 1, 1]} : vector<2x8x128xbf16> to vector<2x8x32xbf16>
    %56 = vector.extract_strided_slice %30 {offsets = [0, 0, 32], sizes = [2, 8, 32], strides = [1, 1, 1]} : vector<2x8x128xbf16> to vector<2x8x32xbf16>
    "tpu.trace_start"() <{level = 10 : i32, message = "bqd,bkd->bqk"}> : () -> ()
    %cst_29 = arith.constant dense<0.000000e+00> : vector<2x8x8xf32>
    %57 = tpu.matmul %55, %56, %cst_29 {dimension_numbers = #tpu.dot_dimension_numbers<[2], [2], [1], [1], [0, 0, 0, 1, 1, 1], [0], [0]>} : vector<2x8x32xbf16>, vector<2x8x32xbf16>, vector<2x8x8xf32> -> vector<2x8x8xf32>
    "tpu.trace_stop"() : () -> ()
    %58 = arith.addf %57, %34 : vector<2x8x8xf32>
    %cst_30 = arith.constant dense<0xFF800000> : vector<2x8xf32>
    %59 = vector.multi_reduction <maximumf>, %58, %cst_30 [2] : vector<2x8x8xf32> to vector<2x8xf32>
    %60 = vector.shape_cast %59 : vector<2x8xf32> to vector<2x8x1xf32>
    %61 = vector.broadcast %60 : vector<2x8x1xf32> to vector<2x8x8xf32>
    %62 = arith.subf %58, %61 : vector<2x8x8xf32>
    %63 = math.exp %62 : vector<2x8x8xf32>
    %cst_31 = arith.constant dense<0.000000e+00> : vector<2x8xf32>
    %64 = vector.multi_reduction <add>, %63, %cst_31 [2] : vector<2x8x8xf32> to vector<2x8xf32>
    %65 = vector.shape_cast %64 : vector<2x8xf32> to vector<2x8x1xf32>
    %66 = tpu.reciprocal %65 {approx = true} : vector<2x8x1xf32> -> vector<2x8x1xf32>
    %67 = vector.broadcast %66 : vector<2x8x1xf32> to vector<2x8x8xf32>
    %68 = arith.mulf %63, %67 : vector<2x8x8xf32>
    %69 = arith.truncf %68 : vector<2x8x8xf32> to vector<2x8x8xbf16>
    %70 = vector.extract_strided_slice %32 {offsets = [0, 0, 32], sizes = [2, 8, 32], strides = [1, 1, 1]} : vector<2x8x128xbf16> to vector<2x8x32xbf16>
    "tpu.trace_start"() <{level = 10 : i32, message = "bqk,bkd->bqd"}> : () -> ()
    %cst_32 = arith.constant dense<0.000000e+00> : vector<2x8x32xf32>
    %71 = tpu.matmul %69, %70, %cst_32 {dimension_numbers = #tpu.dot_dimension_numbers<[2], [1], [1], [2], [0, 0, 0, 1, 1, 2], [0], [0]>} : vector<2x8x8xbf16>, vector<2x8x32xbf16>, vector<2x8x32xf32> -> vector<2x8x32xf32>
    "tpu.trace_stop"() : () -> ()
    %72 = vector.shape_cast %71 : vector<2x8x32xf32> to vector<16x32xf32>
    %73 = arith.truncf %72 : vector<16x32xf32> to vector<16x32xbf16>
    %c0_33 = arith.constant 0 : index
    %c32 = arith.constant 32 : index
    %74 = vector.load %arg17[%c0_33, %c32] : memref<16x128xbf16, #tpu.memory_space<vmem>>, vector<16x32xbf16>
    tpu.vector_store %arg17[%c0_33, %c32], %73 {strides = array<i32>} : memref<16x128xbf16, #tpu.memory_space<vmem>>, vector<16x32xbf16>,
    %75 = vector.extract_strided_slice %28 {offsets = [0, 0, 64], sizes = [2, 8, 32], strides = [1, 1, 1]} : vector<2x8x128xbf16> to vector<2x8x32xbf16>
    %76 = vector.extract_strided_slice %30 {offsets = [0, 0, 64], sizes = [2, 8, 32], strides = [1, 1, 1]} : vector<2x8x128xbf16> to vector<2x8x32xbf16>
    "tpu.trace_start"() <{level = 10 : i32, message = "bqd,bkd->bqk"}> : () -> ()
    %cst_34 = arith.constant dense<0.000000e+00> : vector<2x8x8xf32>
    %77 = tpu.matmul %75, %76, %cst_34 {dimension_numbers = #tpu.dot_dimension_numbers<[2], [2], [1], [1], [0, 0, 0, 1, 1, 1], [0], [0]>} : vector<2x8x32xbf16>, vector<2x8x32xbf16>, vector<2x8x8xf32> -> vector<2x8x8xf32>
    "tpu.trace_stop"() : () -> ()
    %78 = arith.addf %77, %34 : vector<2x8x8xf32>
    %cst_35 = arith.constant dense<0xFF800000> : vector<2x8xf32>
    %79 = vector.multi_reduction <maximumf>, %78, %cst_35 [2] : vector<2x8x8xf32> to vector<2x8xf32>
    %80 = vector.shape_cast %79 : vector<2x8xf32> to vector<2x8x1xf32>
    %81 = vector.broadcast %80 : vector<2x8x1xf32> to vector<2x8x8xf32>
    %82 = arith.subf %78, %81 : vector<2x8x8xf32>
    %83 = math.exp %82 : vector<2x8x8xf32>
    %cst_36 = arith.constant dense<0.000000e+00> : vector<2x8xf32>
    %84 = vector.multi_reduction <add>, %83, %cst_36 [2] : vector<2x8x8xf32> to vector<2x8xf32>
    %85 = vector.shape_cast %84 : vector<2x8xf32> to vector<2x8x1xf32>
    %86 = tpu.reciprocal %85 {approx = true} : vector<2x8x1xf32> -> vector<2x8x1xf32>
    %87 = vector.broadcast %86 : vector<2x8x1xf32> to vector<2x8x8xf32>
    %88 = arith.mulf %83, %87 : vector<2x8x8xf32>
    %89 = arith.truncf %88 : vector<2x8x8xf32> to vector<2x8x8xbf16>
    %90 = vector.extract_strided_slice %32 {offsets = [0, 0, 64], sizes = [2, 8, 32], strides = [1, 1, 1]} : vector<2x8x128xbf16> to vector<2x8x32xbf16>
    "tpu.trace_start"() <{level = 10 : i32, message = "bqk,bkd->bqd"}> : () -> ()
    %cst_37 = arith.constant dense<0.000000e+00> : vector<2x8x32xf32>
    %91 = tpu.matmul %89, %90, %cst_37 {dimension_numbers = #tpu.dot_dimension_numbers<[2], [1], [1], [2], [0, 0, 0, 1, 1, 2], [0], [0]>} : vector<2x8x8xbf16>, vector<2x8x32xbf16>, vector<2x8x32xf32> -> vector<2x8x32xf32>
    "tpu.trace_stop"() : () -> ()
    %92 = vector.shape_cast %91 : vector<2x8x32xf32> to vector<16x32xf32>
    %93 = arith.truncf %92 : vector<16x32xf32> to vector<16x32xbf16>
    %c0_38 = arith.constant 0 : index
    %c64 = arith.constant 64 : index
    %94 = vector.load %arg17[%c0_38, %c64] : memref<16x128xbf16, #tpu.memory_space<vmem>>, vector<16x32xbf16>
    tpu.vector_store %arg17[%c0_38, %c64], %93 {strides = array<i32>} : memref<16x128xbf16, #tpu.memory_space<vmem>>, vector<16x32xbf16>,
    %95 = vector.extract_strided_slice %28 {offsets = [0, 0, 96], sizes = [2, 8, 32], strides = [1, 1, 1]} : vector<2x8x128xbf16> to vector<2x8x32xbf16>
    %96 = vector.extract_strided_slice %30 {offsets = [0, 0, 96], sizes = [2, 8, 32], strides = [1, 1, 1]} : vector<2x8x128xbf16> to vector<2x8x32xbf16>
    "tpu.trace_start"() <{level = 10 : i32, message = "bqd,bkd->bqk"}> : () -> ()
    %cst_39 = arith.constant dense<0.000000e+00> : vector<2x8x8xf32>
    %97 = tpu.matmul %95, %96, %cst_39 {dimension_numbers = #tpu.dot_dimension_numbers<[2], [2], [1], [1], [0, 0, 0, 1, 1, 1], [0], [0]>} : vector<2x8x32xbf16>, vector<2x8x32xbf16>, vector<2x8x8xf32> -> vector<2x8x8xf32>
    "tpu.trace_stop"() : () -> ()
    %98 = arith.addf %97, %34 : vector<2x8x8xf32>
    %cst_40 = arith.constant dense<0xFF800000> : vector<2x8xf32>
    %99 = vector.multi_reduction <maximumf>, %98, %cst_40 [2] : vector<2x8x8xf32> to vector<2x8xf32>
    %100 = vector.shape_cast %99 : vector<2x8xf32> to vector<2x8x1xf32>
    %101 = vector.broadcast %100 : vector<2x8x1xf32> to vector<2x8x8xf32>
    %102 = arith.subf %98, %101 : vector<2x8x8xf32>
    %103 = math.exp %102 : vector<2x8x8xf32>
    %cst_41 = arith.constant dense<0.000000e+00> : vector<2x8xf32>
    %104 = vector.multi_reduction <add>, %103, %cst_41 [2] : vector<2x8x8xf32> to vector<2x8xf32>
    %105 = vector.shape_cast %104 : vector<2x8xf32> to vector<2x8x1xf32>
    %106 = tpu.reciprocal %105 {approx = true} : vector<2x8x1xf32> -> vector<2x8x1xf32>
    %107 = vector.broadcast %106 : vector<2x8x1xf32> to vector<2x8x8xf32>
    %108 = arith.mulf %103, %107 : vector<2x8x8xf32>
    %109 = arith.truncf %108 : vector<2x8x8xf32> to vector<2x8x8xbf16>
    %110 = vector.extract_strided_slice %32 {offsets = [0, 0, 96], sizes = [2, 8, 32], strides = [1, 1, 1]} : vector<2x8x128xbf16> to vector<2x8x32xbf16>
    "tpu.trace_start"() <{level = 10 : i32, message = "bqk,bkd->bqd"}> : () -> ()
    %cst_42 = arith.constant dense<0.000000e+00> : vector<2x8x32xf32>
    %111 = tpu.matmul %109, %110, %cst_42 {dimension_numbers = #tpu.dot_dimension_numbers<[2], [1], [1], [2], [0, 0, 0, 1, 1, 2], [0], [0]>} : vector<2x8x8xbf16>, vector<2x8x32xbf16>, vector<2x8x32xf32> -> vector<2x8x32xf32>
    "tpu.trace_stop"() : () -> ()
    %112 = vector.shape_cast %111 : vector<2x8x32xf32> to vector<16x32xf32>
    %113 = arith.truncf %112 : vector<16x32xf32> to vector<16x32xbf16>
    %c0_43 = arith.constant 0 : index
    %c96 = arith.constant 96 : index
    %114 = vector.load %arg17[%c0_43, %c96] : memref<16x128xbf16, #tpu.memory_space<vmem>>, vector<16x32xbf16>
    tpu.vector_store %arg17[%c0_43, %c96], %113 {strides = array<i32>} : memref<16x128xbf16, #tpu.memory_space<vmem>>, vector<16x32xbf16>,
    %c0_44 = arith.constant 0 : index
    %c0_45 = arith.constant 0 : index
    %115 = vector.load %arg17[%c0_44, %c0_45] : memref<16x128xbf16, #tpu.memory_space<vmem>>, vector<16x128xbf16>
    %c0_46 = arith.constant 0 : index
    %c0_47 = arith.constant 0 : index
    %116 = vector.load %arg7[%c0_46, %c0_47] : memref<128x128xbf16, #tpu.memory_space<vmem>>, vector<128x128xbf16>
    %cst_48 = arith.constant dense<0.000000e+00> : vector<16x128xf32>
    %117 = tpu.matmul %115, %116, %cst_48 {dimension_numbers = #tpu.dot_dimension_numbers<[1], [0], [0], [1], [0, 0, 1, 1], [], []>} : vector<16x128xbf16>, vector<128x128xbf16>, vector<16x128xf32> -> vector<16x128xf32>
    %118 = vector.broadcast %26 : vector<1x128xf32> to vector<16x128xf32>
    %119 = arith.addf %117, %118 : vector<16x128xf32>
    %120 = arith.addf %2, %119 : vector<16x128xf32>
    %cst_49 = arith.constant dense<0.000000e+00> : vector<16xf32>
    %121 = vector.multi_reduction <add>, %120, %cst_49 [1] : vector<16x128xf32> to vector<16xf32>
    %122 = vector.shape_cast %121 : vector<16xf32> to vector<16x1xf32>
    %cst_50 = arith.constant 1.280000e+02 : f32
    %123 = vector.broadcast %cst_50 : f32 to vector<16x1xf32>
    %124 = arith.divf %122, %123 : vector<16x1xf32>
    %125 = vector.broadcast %124 : vector<16x1xf32> to vector<16x128xf32>
    %126 = arith.subf %120, %125 : vector<16x128xf32>
    %127 = arith.mulf %126, %126 : vector<16x128xf32>
    %cst_51 = arith.constant dense<0.000000e+00> : vector<16xf32>
    %128 = vector.multi_reduction <add>, %127, %cst_51 [1] : vector<16x128xf32> to vector<16xf32>
    %129 = vector.shape_cast %128 : vector<16xf32> to vector<16x1xf32>
    %cst_52 = arith.constant 0.00787401571 : f32
    %130 = vector.broadcast %cst_52 : f32 to vector<16x1xf32>
    %131 = arith.mulf %129, %130 : vector<16x1xf32>
    %132 = math.sqrt %131 : vector<16x1xf32>
    %cst_53 = arith.constant 9.99999997E-7 : f32
    %133 = vector.broadcast %cst_53 : f32 to vector<16x1xf32>
    %134 = arith.addf %132, %133 : vector<16x1xf32>
    %cst_54 = arith.constant 1.000000e+00 : f32
    %135 = vector.broadcast %cst_54 : f32 to vector<16x1xf32>
    %136 = arith.divf %135, %134 : vector<16x1xf32>
    %137 = vector.extract_strided_slice %0 {offsets = [4, 0], sizes = [1, 128], strides = [1, 1]} : vector<10x128xf32> to vector<1x128xf32>
    %138 = vector.broadcast %136 : vector<16x1xf32> to vector<16x128xf32>
    %139 = arith.mulf %126, %138 : vector<16x128xf32>
    %140 = vector.broadcast %137 : vector<1x128xf32> to vector<16x128xf32>
    %141 = arith.mulf %140, %139 : vector<16x128xf32>
    %142 = vector.extract_strided_slice %0 {offsets = [5, 0], sizes = [1, 128], strides = [1, 1]} : vector<10x128xf32> to vector<1x128xf32>
    %143 = vector.broadcast %142 : vector<1x128xf32> to vector<16x128xf32>
    %144 = arith.addf %141, %143 : vector<16x128xf32>
    %145 = vector.extract_strided_slice %0 {offsets = [1, 0], sizes = [1, 128], strides = [1, 1]} : vector<10x128xf32> to vector<1x128xf32>
    %146 = arith.truncf %144 : vector<16x128xf32> to vector<16x128xbf16>
    %c0_55 = arith.constant 0 : index
    %c0_56 = arith.constant 0 : index
    %147 = vector.load %arg8[%c0_55, %c0_56] : memref<128x128xbf16, #tpu.memory_space<vmem>>, vector<128x128xbf16>
    %cst_57 = arith.constant dense<0.000000e+00> : vector<16x128xf32>
    %148 = tpu.matmul %146, %147, %cst_57 {dimension_numbers = #tpu.dot_dimension_numbers<[1], [0], [0], [1], [0, 0, 1, 1], [], []>} : vector<16x128xbf16>, vector<128x128xbf16>, vector<16x128xf32> -> vector<16x128xf32>
    %149 = vector.broadcast %145 : vector<1x128xf32> to vector<16x128xf32>
    %150 = arith.addf %148, %149 : vector<16x128xf32>
    %c0_58 = arith.constant 0 : index
    %c0_59 = arith.constant 0 : index
    %151 = vector.load %arg10[%c0_58, %c0_59] : memref<1x256xf32, #tpu.memory_space<vmem>>, vector<1x256xf32>
    %152 = arith.truncf %4 : vector<32x128xf32> to vector<32x128xbf16>
    %c0_60 = arith.constant 0 : index
    %c0_61 = arith.constant 0 : index
    %153 = vector.load %arg9[%c0_60, %c0_61] : memref<128x256xbf16, #tpu.memory_space<vmem>>, vector<128x256xbf16>
    %cst_62 = arith.constant dense<0.000000e+00> : vector<32x256xf32>
    %154 = tpu.matmul %152, %153, %cst_62 {dimension_numbers = #tpu.dot_dimension_numbers<[1], [0], [0], [1], [0, 0, 1, 1], [], []>} : vector<32x128xbf16>, vector<128x256xbf16>, vector<32x256xf32> -> vector<32x256xf32>
    %155 = vector.broadcast %151 : vector<1x256xf32> to vector<32x256xf32>
    %156 = arith.addf %154, %155 : vector<32x256xf32>
    %157 = vector.extract_strided_slice %156 {offsets = [0, 0], sizes = [32, 128], strides = [1, 1]} : vector<32x256xf32> to vector<32x128xf32>
    %158 = vector.extract_strided_slice %156 {offsets = [0, 128], sizes = [32, 128], strides = [1, 1]} : vector<32x256xf32> to vector<32x128xf32>
    %159 = vector.extract_strided_slice %0 {offsets = [2, 0], sizes = [1, 128], strides = [1, 1]} : vector<10x128xf32> to vector<1x128xf32>
    %160 = vector.shape_cast %150 : vector<16x128xf32> to vector<2x8x128xf32>
    %161 = arith.truncf %160 : vector<2x8x128xf32> to vector<2x8x128xbf16>
    %162 = vector.shape_cast %157 : vector<32x128xf32> to vector<2x16x128xf32>
    %163 = arith.truncf %162 : vector<2x16x128xf32> to vector<2x16x128xbf16>
    %164 = vector.shape_cast %158 : vector<32x128xf32> to vector<2x16x128xf32>
    %165 = arith.truncf %164 : vector<2x16x128xf32> to vector<2x16x128xbf16>
    %166 = vector.shape_cast %16 : vector<2x1x16xf32> to vector<2x1x16xf32>
    %167 = vector.broadcast %166 : vector<2x1x16xf32> to vector<2x8x16xf32>
    %168 = vector.extract_strided_slice %161 {offsets = [0, 0, 0], sizes = [2, 8, 32], strides = [1, 1, 1]} : vector<2x8x128xbf16> to vector<2x8x32xbf16>
    %169 = vector.extract_strided_slice %163 {offsets = [0, 0, 0], sizes = [2, 16, 32], strides = [1, 1, 1]} : vector<2x16x128xbf16> to vector<2x16x32xbf16>
    "tpu.trace_start"() <{level = 10 : i32, message = "bqd,bkd->bqk"}> : () -> ()
    %cst_63 = arith.constant dense<0.000000e+00> : vector<2x8x16xf32>
    %170 = tpu.matmul %168, %169, %cst_63 {dimension_numbers = #tpu.dot_dimension_numbers<[2], [2], [1], [1], [0, 0, 0, 1, 1, 1], [0], [0]>} : vector<2x8x32xbf16>, vector<2x16x32xbf16>, vector<2x8x16xf32> -> vector<2x8x16xf32>
    "tpu.trace_stop"() : () -> ()
    %171 = arith.addf %170, %167 : vector<2x8x16xf32>
    %cst_64 = arith.constant dense<0xFF800000> : vector<2x8xf32>
    %172 = vector.multi_reduction <maximumf>, %171, %cst_64 [2] : vector<2x8x16xf32> to vector<2x8xf32>
    %173 = vector.shape_cast %172 : vector<2x8xf32> to vector<2x8x1xf32>
    %174 = vector.broadcast %173 : vector<2x8x1xf32> to vector<2x8x16xf32>
    %175 = arith.subf %171, %174 : vector<2x8x16xf32>
    %176 = math.exp %175 : vector<2x8x16xf32>
    %cst_65 = arith.constant dense<0.000000e+00> : vector<2x8xf32>
    %177 = vector.multi_reduction <add>, %176, %cst_65 [2] : vector<2x8x16xf32> to vector<2x8xf32>
    %178 = vector.shape_cast %177 : vector<2x8xf32> to vector<2x8x1xf32>
    %179 = tpu.reciprocal %178 {approx = true} : vector<2x8x1xf32> -> vector<2x8x1xf32>
    %180 = vector.broadcast %179 : vector<2x8x1xf32> to vector<2x8x16xf32>
    %181 = arith.mulf %176, %180 : vector<2x8x16xf32>
    %182 = arith.truncf %181 : vector<2x8x16xf32> to vector<2x8x16xbf16>
    %183 = vector.extract_strided_slice %165 {offsets = [0, 0, 0], sizes = [2, 16, 32], strides = [1, 1, 1]} : vector<2x16x128xbf16> to vector<2x16x32xbf16>
    "tpu.trace_start"() <{level = 10 : i32, message = "bqk,bkd->bqd"}> : () -> ()
    %cst_66 = arith.constant dense<0.000000e+00> : vector<2x8x32xf32>
    %184 = tpu.matmul %182, %183, %cst_66 {dimension_numbers = #tpu.dot_dimension_numbers<[2], [1], [1], [2], [0, 0, 0, 1, 1, 2], [0], [0]>} : vector<2x8x16xbf16>, vector<2x16x32xbf16>, vector<2x8x32xf32> -> vector<2x8x32xf32>
    "tpu.trace_stop"() : () -> ()
    %185 = vector.shape_cast %184 : vector<2x8x32xf32> to vector<16x32xf32>
    %186 = arith.truncf %185 : vector<16x32xf32> to vector<16x32xbf16>
    %c0_67 = arith.constant 0 : index
    %c0_68 = arith.constant 0 : index
    %187 = vector.load %arg17[%c0_67, %c0_68] : memref<16x128xbf16, #tpu.memory_space<vmem>>, vector<16x32xbf16>
    tpu.vector_store %arg17[%c0_67, %c0_68], %186 {strides = array<i32>} : memref<16x128xbf16, #tpu.memory_space<vmem>>, vector<16x32xbf16>,
    %188 = vector.extract_strided_slice %161 {offsets = [0, 0, 32], sizes = [2, 8, 32], strides = [1, 1, 1]} : vector<2x8x128xbf16> to vector<2x8x32xbf16>
    %189 = vector.extract_strided_slice %163 {offsets = [0, 0, 32], sizes = [2, 16, 32], strides = [1, 1, 1]} : vector<2x16x128xbf16> to vector<2x16x32xbf16>
    "tpu.trace_start"() <{level = 10 : i32, message = "bqd,bkd->bqk"}> : () -> ()
    %cst_69 = arith.constant dense<0.000000e+00> : vector<2x8x16xf32>
    %190 = tpu.matmul %188, %189, %cst_69 {dimension_numbers = #tpu.dot_dimension_numbers<[2], [2], [1], [1], [0, 0, 0, 1, 1, 1], [0], [0]>} : vector<2x8x32xbf16>, vector<2x16x32xbf16>, vector<2x8x16xf32> -> vector<2x8x16xf32>
    "tpu.trace_stop"() : () -> ()
    %191 = arith.addf %190, %167 : vector<2x8x16xf32>
    %cst_70 = arith.constant dense<0xFF800000> : vector<2x8xf32>
    %192 = vector.multi_reduction <maximumf>, %191, %cst_70 [2] : vector<2x8x16xf32> to vector<2x8xf32>
    %193 = vector.shape_cast %192 : vector<2x8xf32> to vector<2x8x1xf32>
    %194 = vector.broadcast %193 : vector<2x8x1xf32> to vector<2x8x16xf32>
    %195 = arith.subf %191, %194 : vector<2x8x16xf32>
    %196 = math.exp %195 : vector<2x8x16xf32>
    %cst_71 = arith.constant dense<0.000000e+00> : vector<2x8xf32>
    %197 = vector.multi_reduction <add>, %196, %cst_71 [2] : vector<2x8x16xf32> to vector<2x8xf32>
    %198 = vector.shape_cast %197 : vector<2x8xf32> to vector<2x8x1xf32>
    %199 = tpu.reciprocal %198 {approx = true} : vector<2x8x1xf32> -> vector<2x8x1xf32>
    %200 = vector.broadcast %199 : vector<2x8x1xf32> to vector<2x8x16xf32>
    %201 = arith.mulf %196, %200 : vector<2x8x16xf32>
    %202 = arith.truncf %201 : vector<2x8x16xf32> to vector<2x8x16xbf16>
    %203 = vector.extract_strided_slice %165 {offsets = [0, 0, 32], sizes = [2, 16, 32], strides = [1, 1, 1]} : vector<2x16x128xbf16> to vector<2x16x32xbf16>
    "tpu.trace_start"() <{level = 10 : i32, message = "bqk,bkd->bqd"}> : () -> ()
    %cst_72 = arith.constant dense<0.000000e+00> : vector<2x8x32xf32>
    %204 = tpu.matmul %202, %203, %cst_72 {dimension_numbers = #tpu.dot_dimension_numbers<[2], [1], [1], [2], [0, 0, 0, 1, 1, 2], [0], [0]>} : vector<2x8x16xbf16>, vector<2x16x32xbf16>, vector<2x8x32xf32> -> vector<2x8x32xf32>
    "tpu.trace_stop"() : () -> ()
    %205 = vector.shape_cast %204 : vector<2x8x32xf32> to vector<16x32xf32>
    %206 = arith.truncf %205 : vector<16x32xf32> to vector<16x32xbf16>
    %c0_73 = arith.constant 0 : index
    %c32_74 = arith.constant 32 : index
    %207 = vector.load %arg17[%c0_73, %c32_74] : memref<16x128xbf16, #tpu.memory_space<vmem>>, vector<16x32xbf16>
    tpu.vector_store %arg17[%c0_73, %c32_74], %206 {strides = array<i32>} : memref<16x128xbf16, #tpu.memory_space<vmem>>, vector<16x32xbf16>,
    %208 = vector.extract_strided_slice %161 {offsets = [0, 0, 64], sizes = [2, 8, 32], strides = [1, 1, 1]} : vector<2x8x128xbf16> to vector<2x8x32xbf16>
    %209 = vector.extract_strided_slice %163 {offsets = [0, 0, 64], sizes = [2, 16, 32], strides = [1, 1, 1]} : vector<2x16x128xbf16> to vector<2x16x32xbf16>
    "tpu.trace_start"() <{level = 10 : i32, message = "bqd,bkd->bqk"}> : () -> ()
    %cst_75 = arith.constant dense<0.000000e+00> : vector<2x8x16xf32>
    %210 = tpu.matmul %208, %209, %cst_75 {dimension_numbers = #tpu.dot_dimension_numbers<[2], [2], [1], [1], [0, 0, 0, 1, 1, 1], [0], [0]>} : vector<2x8x32xbf16>, vector<2x16x32xbf16>, vector<2x8x16xf32> -> vector<2x8x16xf32>
    "tpu.trace_stop"() : () -> ()
    %211 = arith.addf %210, %167 : vector<2x8x16xf32>
    %cst_76 = arith.constant dense<0xFF800000> : vector<2x8xf32>
    %212 = vector.multi_reduction <maximumf>, %211, %cst_76 [2] : vector<2x8x16xf32> to vector<2x8xf32>
    %213 = vector.shape_cast %212 : vector<2x8xf32> to vector<2x8x1xf32>
    %214 = vector.broadcast %213 : vector<2x8x1xf32> to vector<2x8x16xf32>
    %215 = arith.subf %211, %214 : vector<2x8x16xf32>
    %216 = math.exp %215 : vector<2x8x16xf32>
    %cst_77 = arith.constant dense<0.000000e+00> : vector<2x8xf32>
    %217 = vector.multi_reduction <add>, %216, %cst_77 [2] : vector<2x8x16xf32> to vector<2x8xf32>
    %218 = vector.shape_cast %217 : vector<2x8xf32> to vector<2x8x1xf32>
    %219 = tpu.reciprocal %218 {approx = true} : vector<2x8x1xf32> -> vector<2x8x1xf32>
    %220 = vector.broadcast %219 : vector<2x8x1xf32> to vector<2x8x16xf32>
    %221 = arith.mulf %216, %220 : vector<2x8x16xf32>
    %222 = arith.truncf %221 : vector<2x8x16xf32> to vector<2x8x16xbf16>
    %223 = vector.extract_strided_slice %165 {offsets = [0, 0, 64], sizes = [2, 16, 32], strides = [1, 1, 1]} : vector<2x16x128xbf16> to vector<2x16x32xbf16>
    "tpu.trace_start"() <{level = 10 : i32, message = "bqk,bkd->bqd"}> : () -> ()
    %cst_78 = arith.constant dense<0.000000e+00> : vector<2x8x32xf32>
    %224 = tpu.matmul %222, %223, %cst_78 {dimension_numbers = #tpu.dot_dimension_numbers<[2], [1], [1], [2], [0, 0, 0, 1, 1, 2], [0], [0]>} : vector<2x8x16xbf16>, vector<2x16x32xbf16>, vector<2x8x32xf32> -> vector<2x8x32xf32>
    "tpu.trace_stop"() : () -> ()
    %225 = vector.shape_cast %224 : vector<2x8x32xf32> to vector<16x32xf32>
    %226 = arith.truncf %225 : vector<16x32xf32> to vector<16x32xbf16>
    %c0_79 = arith.constant 0 : index
    %c64_80 = arith.constant 64 : index
    %227 = vector.load %arg17[%c0_79, %c64_80] : memref<16x128xbf16, #tpu.memory_space<vmem>>, vector<16x32xbf16>
    tpu.vector_store %arg17[%c0_79, %c64_80], %226 {strides = array<i32>} : memref<16x128xbf16, #tpu.memory_space<vmem>>, vector<16x32xbf16>,
    %228 = vector.extract_strided_slice %161 {offsets = [0, 0, 96], sizes = [2, 8, 32], strides = [1, 1, 1]} : vector<2x8x128xbf16> to vector<2x8x32xbf16>
    %229 = vector.extract_strided_slice %163 {offsets = [0, 0, 96], sizes = [2, 16, 32], strides = [1, 1, 1]} : vector<2x16x128xbf16> to vector<2x16x32xbf16>
    "tpu.trace_start"() <{level = 10 : i32, message = "bqd,bkd->bqk"}> : () -> ()
    %cst_81 = arith.constant dense<0.000000e+00> : vector<2x8x16xf32>
    %230 = tpu.matmul %228, %229, %cst_81 {dimension_numbers = #tpu.dot_dimension_numbers<[2], [2], [1], [1], [0, 0, 0, 1, 1, 1], [0], [0]>} : vector<2x8x32xbf16>, vector<2x16x32xbf16>, vector<2x8x16xf32> -> vector<2x8x16xf32>
    "tpu.trace_stop"() : () -> ()
    %231 = arith.addf %230, %167 : vector<2x8x16xf32>
    %cst_82 = arith.constant dense<0xFF800000> : vector<2x8xf32>
    %232 = vector.multi_reduction <maximumf>, %231, %cst_82 [2] : vector<2x8x16xf32> to vector<2x8xf32>
    %233 = vector.shape_cast %232 : vector<2x8xf32> to vector<2x8x1xf32>
    %234 = vector.broadcast %233 : vector<2x8x1xf32> to vector<2x8x16xf32>
    %235 = arith.subf %231, %234 : vector<2x8x16xf32>
    %236 = math.exp %235 : vector<2x8x16xf32>
    %cst_83 = arith.constant dense<0.000000e+00> : vector<2x8xf32>
    %237 = vector.multi_reduction <add>, %236, %cst_83 [2] : vector<2x8x16xf32> to vector<2x8xf32>
    %238 = vector.shape_cast %237 : vector<2x8xf32> to vector<2x8x1xf32>
    %239 = tpu.reciprocal %238 {approx = true} : vector<2x8x1xf32> -> vector<2x8x1xf32>
    %240 = vector.broadcast %239 : vector<2x8x1xf32> to vector<2x8x16xf32>
    %241 = arith.mulf %236, %240 : vector<2x8x16xf32>
    %242 = arith.truncf %241 : vector<2x8x16xf32> to vector<2x8x16xbf16>
    %243 = vector.extract_strided_slice %165 {offsets = [0, 0, 96], sizes = [2, 16, 32], strides = [1, 1, 1]} : vector<2x16x128xbf16> to vector<2x16x32xbf16>
    "tpu.trace_start"() <{level = 10 : i32, message = "bqk,bkd->bqd"}> : () -> ()
    %cst_84 = arith.constant dense<0.000000e+00> : vector<2x8x32xf32>
    %244 = tpu.matmul %242, %243, %cst_84 {dimension_numbers = #tpu.dot_dimension_numbers<[2], [1], [1], [2], [0, 0, 0, 1, 1, 2], [0], [0]>} : vector<2x8x16xbf16>, vector<2x16x32xbf16>, vector<2x8x32xf32> -> vector<2x8x32xf32>
    "tpu.trace_stop"() : () -> ()
    %245 = vector.shape_cast %244 : vector<2x8x32xf32> to vector<16x32xf32>
    %246 = arith.truncf %245 : vector<16x32xf32> to vector<16x32xbf16>
    %c0_85 = arith.constant 0 : index
    %c96_86 = arith.constant 96 : index
    %247 = vector.load %arg17[%c0_85, %c96_86] : memref<16x128xbf16, #tpu.memory_space<vmem>>, vector<16x32xbf16>
    tpu.vector_store %arg17[%c0_85, %c96_86], %246 {strides = array<i32>} : memref<16x128xbf16, #tpu.memory_space<vmem>>, vector<16x32xbf16>,
    %c0_87 = arith.constant 0 : index
    %c0_88 = arith.constant 0 : index
    %248 = vector.load %arg17[%c0_87, %c0_88] : memref<16x128xbf16, #tpu.memory_space<vmem>>, vector<16x128xbf16>
    %c0_89 = arith.constant 0 : index
    %c0_90 = arith.constant 0 : index
    %249 = vector.load %arg11[%c0_89, %c0_90] : memref<128x128xbf16, #tpu.memory_space<vmem>>, vector<128x128xbf16>
    %cst_91 = arith.constant dense<0.000000e+00> : vector<16x128xf32>
    %250 = tpu.matmul %248, %249, %cst_91 {dimension_numbers = #tpu.dot_dimension_numbers<[1], [0], [0], [1], [0, 0, 1, 1], [], []>} : vector<16x128xbf16>, vector<128x128xbf16>, vector<16x128xf32> -> vector<16x128xf32>
    %251 = vector.broadcast %159 : vector<1x128xf32> to vector<16x128xf32>
    %252 = arith.addf %250, %251 : vector<16x128xf32>
    %253 = arith.addf %144, %252 : vector<16x128xf32>
    %cst_92 = arith.constant dense<0.000000e+00> : vector<16xf32>
    %254 = vector.multi_reduction <add>, %253, %cst_92 [1] : vector<16x128xf32> to vector<16xf32>
    %255 = vector.shape_cast %254 : vector<16xf32> to vector<16x1xf32>
    %cst_93 = arith.constant 1.280000e+02 : f32
    %256 = vector.broadcast %cst_93 : f32 to vector<16x1xf32>
    %257 = arith.divf %255, %256 : vector<16x1xf32>
    %258 = vector.broadcast %257 : vector<16x1xf32> to vector<16x128xf32>
    %259 = arith.subf %253, %258 : vector<16x128xf32>
    %260 = arith.mulf %259, %259 : vector<16x128xf32>
    %cst_94 = arith.constant dense<0.000000e+00> : vector<16xf32>
    %261 = vector.multi_reduction <add>, %260, %cst_94 [1] : vector<16x128xf32> to vector<16xf32>
    %262 = vector.shape_cast %261 : vector<16xf32> to vector<16x1xf32>
    %cst_95 = arith.constant 0.00787401571 : f32
    %263 = vector.broadcast %cst_95 : f32 to vector<16x1xf32>
    %264 = arith.mulf %262, %263 : vector<16x1xf32>
    %265 = math.sqrt %264 : vector<16x1xf32>
    %cst_96 = arith.constant 9.99999997E-7 : f32
    %266 = vector.broadcast %cst_96 : f32 to vector<16x1xf32>
    %267 = arith.addf %265, %266 : vector<16x1xf32>
    %cst_97 = arith.constant 1.000000e+00 : f32
    %268 = vector.broadcast %cst_97 : f32 to vector<16x1xf32>
    %269 = arith.divf %268, %267 : vector<16x1xf32>
    %270 = vector.extract_strided_slice %0 {offsets = [6, 0], sizes = [1, 128], strides = [1, 1]} : vector<10x128xf32> to vector<1x128xf32>
    %271 = vector.broadcast %269 : vector<16x1xf32> to vector<16x128xf32>
    %272 = arith.mulf %259, %271 : vector<16x128xf32>
    %273 = vector.broadcast %270 : vector<1x128xf32> to vector<16x128xf32>
    %274 = arith.mulf %273, %272 : vector<16x128xf32>
    %275 = vector.extract_strided_slice %0 {offsets = [7, 0], sizes = [1, 128], strides = [1, 1]} : vector<10x128xf32> to vector<1x128xf32>
    %276 = vector.broadcast %275 : vector<1x128xf32> to vector<16x128xf32>
    %277 = arith.addf %274, %276 : vector<16x128xf32>
    %c0_98 = arith.constant 0 : index
    %c0_99 = arith.constant 0 : index
    %278 = vector.load %arg13[%c0_98, %c0_99] : memref<1x256xf32, #tpu.memory_space<vmem>>, vector<1x256xf32>
    %279 = arith.truncf %277 : vector<16x128xf32> to vector<16x128xbf16>
    %c0_100 = arith.constant 0 : index
    %c0_101 = arith.constant 0 : index
    %280 = vector.load %arg12[%c0_100, %c0_101] : memref<128x256xbf16, #tpu.memory_space<vmem>>, vector<128x256xbf16>
    %cst_102 = arith.constant dense<0.000000e+00> : vector<16x256xf32>
    %281 = tpu.matmul %279, %280, %cst_102 {dimension_numbers = #tpu.dot_dimension_numbers<[1], [0], [0], [1], [0, 0, 1, 1], [], []>} : vector<16x128xbf16>, vector<128x256xbf16>, vector<16x256xf32> -> vector<16x256xf32>
    %282 = vector.broadcast %278 : vector<1x256xf32> to vector<16x256xf32>
    %283 = arith.addf %281, %282 : vector<16x256xf32>
    %cst_103 = arith.constant 0.000000e+00 : f32
    %284 = vector.broadcast %cst_103 : f32 to vector<16x256xf32>
    %285 = arith.maximumf %283, %284 : vector<16x256xf32>
    %286 = vector.extract_strided_slice %0 {offsets = [3, 0], sizes = [1, 128], strides = [1, 1]} : vector<10x128xf32> to vector<1x128xf32>
    %287 = arith.truncf %285 : vector<16x256xf32> to vector<16x256xbf16>
    %c0_104 = arith.constant 0 : index
    %c0_105 = arith.constant 0 : index
    %288 = vector.load %arg14[%c0_104, %c0_105] : memref<256x128xbf16, #tpu.memory_space<vmem>>, vector<256x128xbf16>
    %cst_106 = arith.constant dense<0.000000e+00> : vector<16x128xf32>
    %289 = tpu.matmul %287, %288, %cst_106 {dimension_numbers = #tpu.dot_dimension_numbers<[1], [0], [0], [1], [0, 0, 1, 1], [], []>} : vector<16x256xbf16>, vector<256x128xbf16>, vector<16x128xf32> -> vector<16x128xf32>
    %290 = vector.broadcast %286 : vector<1x128xf32> to vector<16x128xf32>
    %291 = arith.addf %289, %290 : vector<16x128xf32>
    %292 = arith.addf %277, %291 : vector<16x128xf32>
    %cst_107 = arith.constant dense<0.000000e+00> : vector<16xf32>
    %293 = vector.multi_reduction <add>, %292, %cst_107 [1] : vector<16x128xf32> to vector<16xf32>
    %294 = vector.shape_cast %293 : vector<16xf32> to vector<16x1xf32>
    %cst_108 = arith.constant 1.280000e+02 : f32
    %295 = vector.broadcast %cst_108 : f32 to vector<16x1xf32>
    %296 = arith.divf %294, %295 : vector<16x1xf32>
    %297 = vector.broadcast %296 : vector<16x1xf32> to vector<16x128xf32>
    %298 = arith.subf %292, %297 : vector<16x128xf32>
    %299 = arith.mulf %298, %298 : vector<16x128xf32>
    %cst_109 = arith.constant dense<0.000000e+00> : vector<16xf32>
    %300 = vector.multi_reduction <add>, %299, %cst_109 [1] : vector<16x128xf32> to vector<16xf32>
    %301 = vector.shape_cast %300 : vector<16xf32> to vector<16x1xf32>
    %cst_110 = arith.constant 0.00787401571 : f32
    %302 = vector.broadcast %cst_110 : f32 to vector<16x1xf32>
    %303 = arith.mulf %301, %302 : vector<16x1xf32>
    %304 = math.sqrt %303 : vector<16x1xf32>
    %cst_111 = arith.constant 9.99999997E-7 : f32
    %305 = vector.broadcast %cst_111 : f32 to vector<16x1xf32>
    %306 = arith.addf %304, %305 : vector<16x1xf32>
    %cst_112 = arith.constant 1.000000e+00 : f32
    %307 = vector.broadcast %cst_112 : f32 to vector<16x1xf32>
    %308 = arith.divf %307, %306 : vector<16x1xf32>
    %309 = vector.extract_strided_slice %0 {offsets = [8, 0], sizes = [1, 128], strides = [1, 1]} : vector<10x128xf32> to vector<1x128xf32>
    %310 = vector.broadcast %308 : vector<16x1xf32> to vector<16x128xf32>
    %311 = arith.mulf %298, %310 : vector<16x128xf32>
    %312 = vector.broadcast %309 : vector<1x128xf32> to vector<16x128xf32>
    %313 = arith.mulf %312, %311 : vector<16x128xf32>
    %314 = vector.extract_strided_slice %0 {offsets = [9, 0], sizes = [1, 128], strides = [1, 1]} : vector<10x128xf32> to vector<1x128xf32>
    %315 = vector.broadcast %314 : vector<1x128xf32> to vector<16x128xf32>
    %316 = arith.addf %313, %315 : vector<16x128xf32>
    %317 = vector.shape_cast %316 : vector<16x128xf32> to vector<2x8x128xf32>
    %c0_113 = arith.constant 0 : index
    %c0_114 = arith.constant 0 : index
    %c0_115 = arith.constant 0 : index
    %318 = vector.load %arg16[%c0_113, %c0_114, %c0_115] : memref<2x8x128xf32, #tpu.memory_space<vmem>>, vector<2x8x128xf32>
    tpu.vector_store %arg16[%c0_113, %c0_114, %c0_115], %317 {strides = array<i32>} : memref<2x8x128xf32, #tpu.memory_space<vmem>>, vector<2x8x128xf32>,
    return
  }
  func.func @transform_0(%arg0: i32) -> (i32, i32, i32) {
    %c0_i32 = arith.constant 0 : i32
    %c0_i32_0 = arith.constant 0 : i32
    %c0_i32_1 = arith.constant 0 : i32
    return %arg0, %c0_i32, %c0_i32_0 : i32, i32, i32
  }
  func.func @transform_1(%arg0: i32) -> (i32, i32, i32) {
    %c0_i32 = arith.constant 0 : i32
    %c0_i32_0 = arith.constant 0 : i32
    %c0_i32_1 = arith.constant 0 : i32
    return %arg0, %c0_i32, %c0_i32_0 : i32, i32, i32
  }
  func.func @transform_2(%arg0: i32) -> (i32, i32, i32) {
    %c0_i32 = arith.constant 0 : i32
    %c0_i32_0 = arith.constant 0 : i32
    %c0_i32_1 = arith.constant 0 : i32
    return %arg0, %c0_i32, %c0_i32_0 : i32, i32, i32
  }
  func.func @transform_3(%arg0: i32) -> (i32, i32, i32) {
    %c0_i32 = arith.constant 0 : i32
    %c0_i32_0 = arith.constant 0 : i32
    %c0_i32_1 = arith.constant 0 : i32
    return %arg0, %c0_i32, %c0_i32_0 : i32, i32, i32
  }
  func.func @transform_4(%arg0: i32) -> (i32, i32) {
    %c0_i32 = arith.constant 0 : i32
    %c0_i32_0 = arith.constant 0 : i32
    %c0_i32_1 = arith.constant 0 : i32
    return %c0_i32, %c0_i32_0 : i32, i32
  }
  func.func @transform_5(%arg0: i32) -> (i32, i32) {
    %c0_i32 = arith.constant 0 : i32
    %c0_i32_0 = arith.constant 0 : i32
    %c0_i32_1 = arith.constant 0 : i32
    return %c0_i32, %c0_i32_0 : i32, i32
  }
  func.func @transform_6(%arg0: i32) -> (i32, i32) {
    %c0_i32 = arith.constant 0 : i32
    %c0_i32_0 = arith.constant 0 : i32
    %c0_i32_1 = arith.constant 0 : i32
    return %c0_i32, %c0_i32_0 : i32, i32
  }
  func.func @transform_7(%arg0: i32) -> (i32, i32) {
    %c0_i32 = arith.constant 0 : i32
    %c0_i32_0 = arith.constant 0 : i32
    %c0_i32_1 = arith.constant 0 : i32
    return %c0_i32, %c0_i32_0 : i32, i32
  }
  func.func @transform_8(%arg0: i32) -> (i32, i32) {
    %c0_i32 = arith.constant 0 : i32
    %c0_i32_0 = arith.constant 0 : i32
    %c0_i32_1 = arith.constant 0 : i32
    return %c0_i32, %c0_i32_0 : i32, i32
  }
  func.func @transform_9(%arg0: i32) -> (i32, i32) {
    %c0_i32 = arith.constant 0 : i32
    %c0_i32_0 = arith.constant 0 : i32
    %c0_i32_1 = arith.constant 0 : i32
    return %c0_i32, %c0_i32_0 : i32, i32
  }
  func.func @transform_10(%arg0: i32) -> (i32, i32) {
    %c0_i32 = arith.constant 0 : i32
    %c0_i32_0 = arith.constant 0 : i32
    %c0_i32_1 = arith.constant 0 : i32
    return %c0_i32, %c0_i32_0 : i32, i32
  }
  func.func @transform_11(%arg0: i32) -> (i32, i32) {
    %c0_i32 = arith.constant 0 : i32
    %c0_i32_0 = arith.constant 0 : i32
    %c0_i32_1 = arith.constant 0 : i32
    return %c0_i32, %c0_i32_0 : i32, i32
  }
  func.func @transform_12(%arg0: i32) -> (i32, i32) {
    %c0_i32 = arith.constant 0 : i32
    %c0_i32_0 = arith.constant 0 : i32
    %c0_i32_1 = arith.constant 0 : i32
    return %c0_i32, %c0_i32_0 : i32, i32
  }
  func.func @transform_13(%arg0: i32) -> (i32, i32) {
    %c0_i32 = arith.constant 0 : i32
    %c0_i32_0 = arith.constant 0 : i32
    %c0_i32_1 = arith.constant 0 : i32
    return %c0_i32, %c0_i32_0 : i32, i32
  }
  func.func @transform_14(%arg0: i32) -> (i32, i32) {
    %c0_i32 = arith.constant 0 : i32
    %c0_i32_0 = arith.constant 0 : i32
    %c0_i32_1 = arith.constant 0 : i32
    return %c0_i32, %c0_i32_0 : i32, i32
  }
  func.func @transform_15(%arg0: i32) -> (i32, i32, i32) {
    %c0_i32 = arith.constant 0 : i32
    %c0_i32_0 = arith.constant 0 : i32
    %c0_i32_1 = arith.constant 0 : i32
    return %arg0, %c0_i32, %c0_i32_0 : i32, i32, i32
  }
}

</mosaic_0001>

<llo_original>
// kernel: tpu_custom_call.1
$region0: #{tpu_custom_call.1}
  #allocation0 [shape = 'u32[]', space=smem, size = 0x4, offset = 0x4, fixed_abs, tag = 'smem constant byte address 0x4 - core index']
  #allocation1 [shape = 'u32[144,128]{1,0:T(1,128)}', space=vmem, size = 0x12000, scoped, tag = 'internal scratch']
  #allocation2 [shape = 'bf16[16,128]{1,0:T(16,128)(2,1)}', space=vmem, size = 0x1000, scoped, tag = 'scratch operand']
  %s0 = inlined_call_operand.hbm [shape: f32[4,8,128], index: 0, kind: input, shape index: {}]
  %s1 = inlined_call_operand.hbm [shape: f32[4,16,128], index: 1, kind: input, shape index: {}]
  %s2 = inlined_call_operand.vmem [shape: f32[4,1,8], index: 2, kind: input, shape index: {}]
  %s3 = inlined_call_operand.vmem [shape: f32[4,1,16], index: 3, kind: input, shape index: {}]
  %s4 = inlined_call_operand.hbm [shape: bf16[128,384], index: 4, kind: input, shape index: {}]
  %s5 = inlined_call_operand.vmem [shape: f32[1,384], index: 5, kind: input, shape index: {}]
  %s6 = inlined_call_operand.hbm [shape: bf16[128,128], index: 6, kind: input, shape index: {}]
  %s7 = inlined_call_operand.hbm [shape: bf16[128,128], index: 7, kind: input, shape index: {}]
  %s8 = inlined_call_operand.hbm [shape: bf16[128,256], index: 8, kind: input, shape index: {}]
  %s9 = inlined_call_operand.vmem [shape: f32[1,256], index: 9, kind: input, shape index: {}]
  %s10 = inlined_call_operand.hbm [shape: bf16[128,128], index: 10, kind: input, shape index: {}]
  %s11 = inlined_call_operand.hbm [shape: bf16[128,256], index: 11, kind: input, shape index: {}]
  %s12 = inlined_call_operand.vmem [shape: f32[1,256], index: 12, kind: input, shape index: {}]
  %s13 = inlined_call_operand.hbm [shape: bf16[256,128], index: 13, kind: input, shape index: {}]
  %s14 = inlined_call_operand.vmem [shape: f32[10,128], index: 14, kind: input, shape index: {}]
  %s15 = inlined_call_operand.hbm [shape: f32[4,8,128], index: 15, kind: output, shape index: {}]
  %s16 = sld [smem:[#allocation0]]
  $region129: #{tpu_custom_call.1} parent=0
    _
  %s18 = ssub.s32 1, %s16
  %s19 = scalar_select 0, %s18, %s16
  $region1: #{tpu_custom_call.1} parent=0
    #allocation3 [shape = 'u8[16384]{0}', space=vmem, size = 0x4000, scoped, tag = 'input window, operand 0']
    #allocation4 [shape = 's32[2]{0}', space=sflag, size = 0x8, scoped, tag = 'scoped memory for tpu_custom_call.1']
    #allocation5 [shape = 's32[2]{0}', space=sflag, size = 0x8, scoped, tag = 'scoped memory for tpu_custom_call.1']
    #allocation6 [shape = 'u8[32768]{0}', space=vmem, size = 0x8000, scoped, tag = 'input window, operand 1']
    #allocation7 [shape = 's32[2]{0}', space=sflag, size = 0x8, scoped, tag = 'scoped memory for tpu_custom_call.1']
    #allocation8 [shape = 'u8[98304]{0}', space=vmem, size = 0x18000, scoped, tag = 'input window, operand 4, single buffered']
    #allocation9 [shape = 'u8[32768]{0}', space=vmem, size = 0x8000, scoped, tag = 'input window, operand 6, single buffered']
    #allocation10 [shape = 's32[1]{0}', space=sflag, size = 0x4, scoped, tag = 'scoped memory for tpu_custom_call.1']
    #allocation11 [shape = 'u8[32768]{0}', space=vmem, size = 0x8000, scoped, tag = 'input window, operand 7, single buffered']
    #allocation12 [shape = 'u8[65536]{0}', space=vmem, size = 0x10000, scoped, tag = 'input window, operand 8, single buffered']
    #allocation13 [shape = 's32[1]{0}', space=sflag, size = 0x4, scoped, tag = 'scoped memory for tpu_custom_call.1']
    #allocation14 [shape = 'u8[32768]{0}', space=vmem, size = 0x8000, scoped, tag = 'input window, operand 10, single buffered']
    #allocation15 [shape = 'u8[65536]{0}', space=vmem, size = 0x10000, scoped, tag = 'input window, operand 11, single buffered']
    #allocation16 [shape = 's32[1]{0}', space=sflag, size = 0x4, scoped, tag = 'scoped memory for tpu_custom_call.1']
    #allocation17 [shape = 'u8[65536]{0}', space=vmem, size = 0x10000, scoped, tag = 'input window, operand 13, single buffered']
    #allocation18 [shape = 'u8[16384]{0}', space=vmem, size = 0x4000, scoped, tag = 'output window, operand 0']
    %20 = vsyncpa [#allocation4], 0
    %s21 = scalar_lea.sflag [#allocation4], 1
    %22 = vsyncpa %s21, 0
    %23 = vsyncpa [#allocation7], 0
    %s24 = scalar_lea.sflag [#allocation7], 1
    %25 = vsyncpa %s24, 0
    %26 = vsyncpa [#allocation10], 0
    %27 = vsyncpa [#allocation13], 0
    %28 = vsyncpa [#allocation16], 0
    %29 = vsyncpa [#allocation5], 0
    %s30 = scalar_lea.sflag [#allocation5], 1
    %31 = vsyncpa %s30, 0
    loop: start=0, step=1, limit=4
    $region2: #{tpu_custom_call.1} parent=1 // loop_pre_header
      _
    $region3: #{tpu_custom_call.1} parent=1 // loop_header
      %s33 = sphi 0, %s37
      %p34 = scmp.ge.s32.totalorder %s33, 4
      %s43 = sphi 0, %s45
      %s46 = sphi 0, %s43
      %s47 = sphi 0, %s46
      %s63 = sphi 0, %s47
      %s69 = sphi 0, %s71
      %s72 = sphi 0, %s69
      %s73 = sphi 0, %s72
      %s89 = sphi 0, %s73
      %s95 = sphi 0, %s97
      %s98 = sphi 0, %s95
      %s99 = sphi 0, %s98
      %s115 = sphi 0, %s99
      %s121 = sphi 0, %s123
      %s124 = sphi 0, %s121
      %s125 = sphi 0, %s124
      %s141 = sphi 0, %s125
      %s145 = sphi 0, %s145
      %s147 = sphi 0, %s145
      %s148 = sphi 0, %s147
      %s162 = sphi 0, %s148
      %s166 = sphi 0, %s166
      %s168 = sphi 0, %s166
      %s169 = sphi 0, %s168
      %s183 = sphi 0, %s169
      %s187 = sphi 0, %s187
      %s189 = sphi 0, %s187
      %s190 = sphi 0, %s189
      %s204 = sphi 0, %s190
      %s208 = sphi 0, %s208
      %s210 = sphi 0, %s208
      %s211 = sphi 0, %s210
      %s225 = sphi 0, %s211
      %s229 = sphi 0, %s229
      %s231 = sphi 0, %s229
      %s232 = sphi 0, %s231
      %s246 = sphi 0, %s232
      %s250 = sphi 0, %s250
      %s252 = sphi 0, %s250
      %s253 = sphi 0, %s252
      %s267 = sphi 0, %s253
      %s271 = sphi 0, %s271
      %s273 = sphi 0, %s271
      %s274 = sphi 0, %s273
      %s288 = sphi 0, %s274
      %s292 = sphi 0, %s292
      %s294 = sphi 0, %s292
      %s295 = sphi 0, %s294
      %s309 = sphi 0, %s295
      %s313 = sphi 0, %s313
      %s315 = sphi 0, %s313
      %s316 = sphi 0, %s315
      %s330 = sphi 0, %s316
      %s334 = sphi 0, %s334
      %s336 = sphi 0, %s334
      %s337 = sphi 0, %s336
      %s351 = sphi 0, %s337
      %s355 = sphi 0, %s355
      %s357 = sphi 0, %s355
      %s358 = sphi 0, %s357
      %s372 = sphi 0, %s358
      %s378 = sphi 0, %s380
      %s381 = sphi 0, %s378
      %s382 = sphi 0, %s381
      %s398 = sphi 0, %s382
    $region4: #{tpu_custom_call.1} parent=1 // loop_header_branch
      %36 = sbr.rel (%p34) target = $region8
    $region5: #{tpu_custom_call.1} parent=1 // loop_body
      %s38 = ssub.s32 %s33, 1
      %s39 = ssub.s32 %s33, 2
      %s40 = sadd.s32 %s33, 1
      %s41 = ssub.s32 %s33, %s40
      %p42 = scmp.eq.s32.totalorder %s41, 0
      %s44 = sadd.s32 %s43, 1
      %s45 = scalar_select %p42, %s43, %s44
      %p48 = pneg %p42
      %p49 = scmp.eq.s32.totalorder %s33, 1
      %p50 = por %p48, %p49
      %p51 = scmp.ne.s32.totalorder %s43, %s46
      %p52 = scmp.eq.s32.totalorder %s33, 0
      %p53 = por %p51, %p52
      %p54 = scmp.ne.s32.totalorder %s43, %s46
      %p55 = scmp.eq.s32.totalorder %s38, 1
      %p56 = por %p54, %p55
      %p57 = scmp.ne.s32.totalorder %s46, %s47
      %p58 = scmp.eq.s32.totalorder %s38, 0
      %p59 = por %p57, %p58
      %p60 = scmp.ne.s32.totalorder %s46, %s47
      %p61 = scmp.eq.s32.totalorder %s39, 1
      %p62 = por %p60, %p61
      %p64 = scmp.ne.s32.totalorder %s47, %s63
      %p65 = scmp.eq.s32.totalorder %s39, 0
      %p66 = por %p64, %p65
      %s67 = ssub.s32 %s33, %s40
      %p68 = scmp.eq.s32.totalorder %s67, 0
      %s70 = sadd.s32 %s69, 1
      %s71 = scalar_select %p68, %s69, %s70
      %p74 = pneg %p68
      %p75 = scmp.eq.s32.totalorder %s33, 1
      %p76 = por %p74, %p75
      %p77 = scmp.ne.s32.totalorder %s69, %s72
      %p78 = scmp.eq.s32.totalorder %s33, 0
      %p79 = por %p77, %p78
      %p80 = scmp.ne.s32.totalorder %s69, %s72
      %p81 = scmp.eq.s32.totalorder %s38, 1
      %p82 = por %p80, %p81
      %p83 = scmp.ne.s32.totalorder %s72, %s73
      %p84 = scmp.eq.s32.totalorder %s38, 0
      %p85 = por %p83, %p84
      %p86 = scmp.ne.s32.totalorder %s72, %s73
      %p87 = scmp.eq.s32.totalorder %s39, 1
      %p88 = por %p86, %p87
      %p90 = scmp.ne.s32.totalorder %s73, %s89
      %p91 = scmp.eq.s32.totalorder %s39, 0
      %p92 = por %p90, %p91
      %s93 = ssub.s32 %s33, %s40
      %p94 = scmp.eq.s32.totalorder %s93, 0
      %s96 = sadd.s32 %s95, 1
      %s97 = scalar_select %p94, %s95, %s96
      %p100 = pneg %p94
      %p101 = scmp.eq.s32.totalorder %s33, 1
      %p102 = por %p100, %p101
      %p103 = scmp.ne.s32.totalorder %s95, %s98
      %p104 = scmp.eq.s32.totalorder %s33, 0
      %p105 = por %p103, %p104
      %p106 = scmp.ne.s32.totalorder %s95, %s98
      %p107 = scmp.eq.s32.totalorder %s38, 1
      %p108 = por %p106, %p107
      %p109 = scmp.ne.s32.totalorder %s98, %s99
      %p110 = scmp.eq.s32.totalorder %s38, 0
      %p111 = por %p109, %p110
      %p112 = scmp.ne.s32.totalorder %s98, %s99
      %p113 = scmp.eq.s32.totalorder %s39, 1
      %p114 = por %p112, %p113
      %p116 = scmp.ne.s32.totalorder %s99, %s115
      %p117 = scmp.eq.s32.totalorder %s39, 0
      %p118 = por %p116, %p117
      %s119 = ssub.s32 %s33, %s40
      %p120 = scmp.eq.s32.totalorder %s119, 0
      %s122 = sadd.s32 %s121, 1
      %s123 = scalar_select %p120, %s121, %s122
      %p126 = pneg %p120
      %p127 = scmp.eq.s32.totalorder %s33, 1
      %p128 = por %p126, %p127
      %p129 = scmp.ne.s32.totalorder %s121, %s124
      %p130 = scmp.eq.s32.totalorder %s33, 0
      %p131 = por %p129, %p130
      %p132 = scmp.ne.s32.totalorder %s121, %s124
      %p133 = scmp.eq.s32.totalorder %s38, 1
      %p134 = por %p132, %p133
      %p135 = scmp.ne.s32.totalorder %s124, %s125
      %p136 = scmp.eq.s32.totalorder %s38, 0
      %p137 = por %p135, %p136
      %p138 = scmp.ne.s32.totalorder %s124, %s125
      %p139 = scmp.eq.s32.totalorder %s39, 1
      %p140 = por %p138, %p139
      %p142 = scmp.ne.s32.totalorder %s125, %s141
      %p143 = scmp.eq.s32.totalorder %s39, 0
      %p144 = por %p142, %p143
      %s146 = sadd.s32 %s145, 1
      %p149 = scmp.eq.s32.totalorder %s33, 1
      %p150 = scmp.ne.s32.totalorder %s145, %s147
      %p151 = scmp.eq.s32.totalorder %s33, 0
      %p152 = por %p150, %p151
      %p153 = scmp.ne.s32.totalorder %s145, %s147
      %p154 = scmp.eq.s32.totalorder %s38, 1
      %p155 = por %p153, %p154
      %p156 = scmp.ne.s32.totalorder %s147, %s148
      %p157 = scmp.eq.s32.totalorder %s38, 0
      %p158 = por %p156, %p157
      %p159 = scmp.ne.s32.totalorder %s147, %s148
      %p160 = scmp.eq.s32.totalorder %s39, 1
      %p161 = por %p159, %p160
      %p163 = scmp.ne.s32.totalorder %s148, %s162
      %p164 = scmp.eq.s32.totalorder %s39, 0
      %p165 = por %p163, %p164
      %s167 = sadd.s32 %s166, 1
      %p170 = scmp.eq.s32.totalorder %s33, 1
      %p171 = scmp.ne.s32.totalorder %s166, %s168
      %p172 = scmp.eq.s32.totalorder %s33, 0
      %p173 = por %p171, %p172
      %p174 = scmp.ne.s32.totalorder %s166, %s168
      %p175 = scmp.eq.s32.totalorder %s38, 1
      %p176 = por %p174, %p175
      %p177 = scmp.ne.s32.totalorder %s168, %s169
      %p178 = scmp.eq.s32.totalorder %s38, 0
      %p179 = por %p177, %p178
      %p180 = scmp.ne.s32.totalorder %s168, %s169
      %p181 = scmp.eq.s32.totalorder %s39, 1
      %p182 = por %p180, %p181
      %p184 = scmp.ne.s32.totalorder %s169, %s183
      %p185 = scmp.eq.s32.totalorder %s39, 0
      %p186 = por %p184, %p185
      %s188 = sadd.s32 %s187, 1
      %p191 = scmp.eq.s32.totalorder %s33, 1
      %p192 = scmp.ne.s32.totalorder %s187, %s189
      %p193 = scmp.eq.s32.totalorder %s33, 0
      %p194 = por %p192, %p193
      %p195 = scmp.ne.s32.totalorder %s187, %s189
      %p196 = scmp.eq.s32.totalorder %s38, 1
      %p197 = por %p195, %p196
      %p198 = scmp.ne.s32.totalorder %s189, %s190
      %p199 = scmp.eq.s32.totalorder %s38, 0
      %p200 = por %p198, %p199
      %p201 = scmp.ne.s32.totalorder %s189, %s190
      %p202 = scmp.eq.s32.totalorder %s39, 1
      %p203 = por %p201, %p202
      %p205 = scmp.ne.s32.totalorder %s190, %s204
      %p206 = scmp.eq.s32.totalorder %s39, 0
      %p207 = por %p205, %p206
      %s209 = sadd.s32 %s208, 1
      %p212 = scmp.eq.s32.totalorder %s33, 1
      %p213 = scmp.ne.s32.totalorder %s208, %s210
      %p214 = scmp.eq.s32.totalorder %s33, 0
      %p215 = por %p213, %p214
      %p216 = scmp.ne.s32.totalorder %s208, %s210
      %p217 = scmp.eq.s32.totalorder %s38, 1
      %p218 = por %p216, %p217
      %p219 = scmp.ne.s32.totalorder %s210, %s211
      %p220 = scmp.eq.s32.totalorder %s38, 0
      %p221 = por %p219, %p220
      %p222 = scmp.ne.s32.totalorder %s210, %s211
      %p223 = scmp.eq.s32.totalorder %s39, 1
      %p224 = por %p222, %p223
      %p226 = scmp.ne.s32.totalorder %s211, %s225
      %p227 = scmp.eq.s32.totalorder %s39, 0
      %p228 = por %p226, %p227
      %s230 = sadd.s32 %s229, 1
      %p233 = scmp.eq.s32.totalorder %s33, 1
      %p234 = scmp.ne.s32.totalorder %s229, %s231
      %p235 = scmp.eq.s32.totalorder %s33, 0
      %p236 = por %p234, %p235
      %p237 = scmp.ne.s32.totalorder %s229, %s231
      %p238 = scmp.eq.s32.totalorder %s38, 1
      %p239 = por %p237, %p238
      %p240 = scmp.ne.s32.totalorder %s231, %s232
      %p241 = scmp.eq.s32.totalorder %s38, 0
      %p242 = por %p240, %p241
      %p243 = scmp.ne.s32.totalorder %s231, %s232
      %p244 = scmp.eq.s32.totalorder %s39, 1
      %p245 = por %p243, %p244
      %p247 = scmp.ne.s32.totalorder %s232, %s246
      %p248 = scmp.eq.s32.totalorder %s39, 0
      %p249 = por %p247, %p248
      %s251 = sadd.s32 %s250, 1
      %p254 = scmp.eq.s32.totalorder %s33, 1
      %p255 = scmp.ne.s32.totalorder %s250, %s252
      %p256 = scmp.eq.s32.totalorder %s33, 0
      %p257 = por %p255, %p256
      %p258 = scmp.ne.s32.totalorder %s250, %s252
      %p259 = scmp.eq.s32.totalorder %s38, 1
      %p260 = por %p258, %p259
      %p261 = scmp.ne.s32.totalorder %s252, %s253
      %p262 = scmp.eq.s32.totalorder %s38, 0
      %p263 = por %p261, %p262
      %p264 = scmp.ne.s32.totalorder %s252, %s253
      %p265 = scmp.eq.s32.totalorder %s39, 1
      %p266 = por %p264, %p265
      %p268 = scmp.ne.s32.totalorder %s253, %s267
      %p269 = scmp.eq.s32.totalorder %s39, 0
      %p270 = por %p268, %p269
      %s272 = sadd.s32 %s271, 1
      %p275 = scmp.eq.s32.totalorder %s33, 1
      %p276 = scmp.ne.s32.totalorder %s271, %s273
      %p277 = scmp.eq.s32.totalorder %s33, 0
      %p278 = por %p276, %p277
      %p279 = scmp.ne.s32.totalorder %s271, %s273
      %p280 = scmp.eq.s32.totalorder %s38, 1
      %p281 = por %p279, %p280
      %p282 = scmp.ne.s32.totalorder %s273, %s274
      %p283 = scmp.eq.s32.totalorder %s38, 0
      %p284 = por %p282, %p283
      %p285 = scmp.ne.s32.totalorder %s273, %s274
      %p286 = scmp.eq.s32.totalorder %s39, 1
      %p287 = por %p285, %p286
      %p289 = scmp.ne.s32.totalorder %s274, %s288
      %p290 = scmp.eq.s32.totalorder %s39, 0
      %p291 = por %p289, %p290
      %s293 = sadd.s32 %s292, 1
      %p296 = scmp.eq.s32.totalorder %s33, 1
      %p297 = scmp.ne.s32.totalorder %s292, %s294
      %p298 = scmp.eq.s32.totalorder %s33, 0
      %p299 = por %p297, %p298
      %p300 = scmp.ne.s32.totalorder %s292, %s294
      %p301 = scmp.eq.s32.totalorder %s38, 1
      %p302 = por %p300, %p301
      %p303 = scmp.ne.s32.totalorder %s294, %s295
      %p304 = scmp.eq.s32.totalorder %s38, 0
      %p305 = por %p303, %p304
      %p306 = scmp.ne.s32.totalorder %s294, %s295
      %p307 = scmp.eq.s32.totalorder %s39, 1
      %p308 = por %p306, %p307
      %p310 = scmp.ne.s32.totalorder %s295, %s309
      %p311 = scmp.eq.s32.totalorder %s39, 0
      %p312 = por %p310, %p311
      %s314 = sadd.s32 %s313, 1
      %p317 = scmp.eq.s32.totalorder %s33, 1
      %p318 = scmp.ne.s32.totalorder %s313, %s315
      %p319 = scmp.eq.s32.totalorder %s33, 0
      %p320 = por %p318, %p319
      %p321 = scmp.ne.s32.totalorder %s313, %s315
      %p322 = scmp.eq.s32.totalorder %s38, 1
      %p323 = por %p321, %p322
      %p324 = scmp.ne.s32.totalorder %s315, %s316
      %p325 = scmp.eq.s32.totalorder %s38, 0
      %p326 = por %p324, %p325
      %p327 = scmp.ne.s32.totalorder %s315, %s316
      %p328 = scmp.eq.s32.totalorder %s39, 1
      %p329 = por %p327, %p328
      %p331 = scmp.ne.s32.totalorder %s316, %s330
      %p332 = scmp.eq.s32.totalorder %s39, 0
      %p333 = por %p331, %p332
      %s335 = sadd.s32 %s334, 1
      %p338 = scmp.eq.s32.totalorder %s33, 1
      %p339 = scmp.ne.s32.totalorder %s334, %s336
      %p340 = scmp.eq.s32.totalorder %s33, 0
      %p341 = por %p339, %p340
      %p342 = scmp.ne.s32.totalorder %s334, %s336
      %p343 = scmp.eq.s32.totalorder %s38, 1
      %p344 = por %p342, %p343
      %p345 = scmp.ne.s32.totalorder %s336, %s337
      %p346 = scmp.eq.s32.totalorder %s38, 0
      %p347 = por %p345, %p346
      %p348 = scmp.ne.s32.totalorder %s336, %s337
      %p349 = scmp.eq.s32.totalorder %s39, 1
      %p350 = por %p348, %p349
      %p352 = scmp.ne.s32.totalorder %s337, %s351
      %p353 = scmp.eq.s32.totalorder %s39, 0
      %p354 = por %p352, %p353
      %s356 = sadd.s32 %s355, 1
      %p359 = scmp.eq.s32.totalorder %s33, 1
      %p360 = scmp.ne.s32.totalorder %s355, %s357
      %p361 = scmp.eq.s32.totalorder %s33, 0
      %p362 = por %p360, %p361
      %p363 = scmp.ne.s32.totalorder %s355, %s357
      %p364 = scmp.eq.s32.totalorder %s38, 1
      %p365 = por %p363, %p364
      %p366 = scmp.ne.s32.totalorder %s357, %s358
      %p367 = scmp.eq.s32.totalorder %s38, 0
      %p368 = por %p366, %p367
      %p369 = scmp.ne.s32.totalorder %s357, %s358
      %p370 = scmp.eq.s32.totalorder %s39, 1
      %p371 = por %p369, %p370
      %p373 = scmp.ne.s32.totalorder %s358, %s372
      %p374 = scmp.eq.s32.totalorder %s39, 0
      %p375 = por %p373, %p374
      %s376 = ssub.s32 %s33, %s40
      %p377 = scmp.eq.s32.totalorder %s376, 0
      %s379 = sadd.s32 %s378, 1
      %s380 = scalar_select %p377, %s378, %s379
      %p383 = pneg %p377
      %p384 = scmp.eq.s32.totalorder %s33, 1
      %p385 = por %p383, %p384
      %p386 = scmp.ne.s32.totalorder %s378, %s381
      %p387 = scmp.eq.s32.totalorder %s33, 0
      %p388 = por %p386, %p387
      %p389 = scmp.ne.s32.totalorder %s378, %s381
      %p390 = scmp.eq.s32.totalorder %s38, 1
      %p391 = por %p389, %p390
      %p392 = scmp.ne.s32.totalorder %s381, %s382
      %p393 = scmp.eq.s32.totalorder %s38, 0
      %p394 = por %p392, %p393
      %p395 = scmp.ne.s32.totalorder %s381, %s382
      %p396 = scmp.eq.s32.totalorder %s39, 1
      %p397 = por %p395, %p396
      %p399 = scmp.ne.s32.totalorder %s382, %s398
      %p400 = scmp.eq.s32.totalorder %s39, 0
      %p401 = por %p399, %p400
      %p402 = scmp.le.s32.totalorder 1, %s33
      %p403 = scmp.lt.s32.totalorder %s33, 3
      %p404 = pnand %p402, %p403
      %p405 = pneg %p404
      // Predicated region
      $region9: #{tpu_custom_call.1} parent=5 // pred_check
        _
      $region10: #{tpu_custom_call.1} parent=5 // pred_check_branch
        %407 = sbr.rel (%p404) target = $region12
      $region11: #{tpu_custom_call.1} parent=5 // pred_region
        %s408 = ssub.s32 %s33, 1
        // Predicated region
        $region13: #{tpu_custom_call.1} parent=11 // pred_check
          %p409 = pneg %p158
        $region14: #{tpu_custom_call.1} parent=11 // pred_check_branch
          %411 = sbr.rel (%p409) target = $region16
        $region15: #{tpu_custom_call.1} parent=11 // pred_region
          %s413 = ssub.s32 3072, 3072
          %414 = vsyncadd [#allocation7], %s413
          %s415 = sshll.u32 [#allocation8], 4
          %s416 = int_to_ptr.vmem [resolvable:$true] %s415
          %421 = dma.hbm_to_vmem [thread:$0]  %s4, 3072, %s416, [#allocation7], 192, 192, 12
        $region16: #{tpu_custom_call.1} parent=11 // pred_fallthru
          _
        // Predicated region
        $region17: #{tpu_custom_call.1} parent=11 // pred_check
          %p422 = pneg %p179
        $region18: #{tpu_custom_call.1} parent=11 // pred_check_branch
          %424 = sbr.rel (%p422) target = $region20
        $region19: #{tpu_custom_call.1} parent=11 // pred_region
          _
        $region20: #{tpu_custom_call.1} parent=11 // pred_fallthru
          _
        // Predicated region
        $region21: #{tpu_custom_call.1} parent=11 // pred_check
          %p425 = pneg %p200
        $region22: #{tpu_custom_call.1} parent=11 // pred_check_branch
          %427 = sbr.rel (%p425) target = $region24
        $region23: #{tpu_custom_call.1} parent=11 // pred_region
          %s429 = ssub.s32 1024, 1024
          %430 = vsyncadd [#allocation10], %s429
          %s431 = sshll.u32 [#allocation9], 4
          %s432 = int_to_ptr.vmem [resolvable:$true] %s431
          %437 = dma.hbm_to_vmem [thread:$0]  %s6, 1024, %s432, [#allocation10], 64, 64, 4
        $region24: #{tpu_custom_call.1} parent=11 // pred_fallthru
          _
        // Predicated region
        $region25: #{tpu_custom_call.1} parent=11 // pred_check
          %p438 = pneg %p221
        $region26: #{tpu_custom_call.1} parent=11 // pred_check_branch
          %440 = sbr.rel (%p438) target = $region28
        $region27: #{tpu_custom_call.1} parent=11 // pred_region
          %s442 = ssub.s32 1024, 1024
          %443 = vsyncadd [#allocation10], %s442
          %s444 = sshll.u32 [#allocation11], 4
          %s445 = int_to_ptr.vmem [resolvable:$true] %s444
          %450 = dma.hbm_to_vmem [thread:$0]  %s7, 1024, %s445, [#allocation10], 64, 64, 4
        $region28: #{tpu_custom_call.1} parent=11 // pred_fallthru
          _
        // Predicated region
        $region29: #{tpu_custom_call.1} parent=11 // pred_check
          %p451 = pneg %p242
        $region30: #{tpu_custom_call.1} parent=11 // pred_check_branch
          %453 = sbr.rel (%p451) target = $region32
        $region31: #{tpu_custom_call.1} parent=11 // pred_region
          %s455 = ssub.s32 2048, 2048
          %456 = vsyncadd [#allocation13], %s455
          %s457 = sshll.u32 [#allocation12], 4
          %s458 = int_to_ptr.vmem [resolvable:$true] %s457
          %463 = dma.hbm_to_vmem [thread:$0]  %s8, 2048, %s458, [#allocation13], 128, 128, 8
        $region32: #{tpu_custom_call.1} parent=11 // pred_fallthru
          _
        // Predicated region
        $region33: #{tpu_custom_call.1} parent=11 // pred_check
          %p464 = pneg %p263
        $region34: #{tpu_custom_call.1} parent=11 // pred_check_branch
          %466 = sbr.rel (%p464) target = $region36
        $region35: #{tpu_custom_call.1} parent=11 // pred_region
          _
        $region36: #{tpu_custom_call.1} parent=11 // pred_fallthru
          _
        // Predicated region
        $region37: #{tpu_custom_call.1} parent=11 // pred_check
          %p467 = pneg %p284
        $region38: #{tpu_custom_call.1} parent=11 // pred_check_branch
          %469 = sbr.rel (%p467) target = $region40
        $region39: #{tpu_custom_call.1} parent=11 // pred_region
          %s471 = ssub.s32 1024, 1024
          %472 = vsyncadd [#allocation13], %s471
          %s473 = sshll.u32 [#allocation14], 4
          %s474 = int_to_ptr.vmem [resolvable:$true] %s473
          %479 = dma.hbm_to_vmem [thread:$0]  %s10, 1024, %s474, [#allocation13], 64, 64, 4
        $region40: #{tpu_custom_call.1} parent=11 // pred_fallthru
          _
        // Predicated region
        $region41: #{tpu_custom_call.1} parent=11 // pred_check
          %p480 = pneg %p305
        $region42: #{tpu_custom_call.1} parent=11 // pred_check_branch
          %482 = sbr.rel (%p480) target = $region44
        $region43: #{tpu_custom_call.1} parent=11 // pred_region
          %s484 = ssub.s32 2048, 2048
          %485 = vsyncadd [#allocation16], %s484
          %s486 = sshll.u32 [#allocation15], 4
          %s487 = int_to_ptr.vmem [resolvable:$true] %s486
          %492 = dma.hbm_to_vmem [thread:$0]  %s11, 2048, %s487, [#allocation16], 128, 128, 8
        $region44: #{tpu_custom_call.1} parent=11 // pred_fallthru
          _
        // Predicated region
        $region45: #{tpu_custom_call.1} parent=11 // pred_check
          %p493 = pneg %p326
        $region46: #{tpu_custom_call.1} parent=11 // pred_check_branch
          %495 = sbr.rel (%p493) target = $region48
        $region47: #{tpu_custom_call.1} parent=11 // pred_region
          _
        $region48: #{tpu_custom_call.1} parent=11 // pred_fallthru
          _
        // Predicated region
        $region49: #{tpu_custom_call.1} parent=11 // pred_check
          %p496 = pneg %p347
        $region50: #{tpu_custom_call.1} parent=11 // pred_check_branch
          %498 = sbr.rel (%p496) target = $region52
        $region51: #{tpu_custom_call.1} parent=11 // pred_region
          %s500 = ssub.s32 2048, 2048
          %501 = vsyncadd [#allocation16], %s500
          %s502 = sshll.u32 [#allocation17], 4
          %s503 = int_to_ptr.vmem [resolvable:$true] %s502
          %508 = dma.hbm_to_vmem [thread:$0]  %s13, 2048, %s503, [#allocation16], 64, 64, 4
        $region52: #{tpu_custom_call.1} parent=11 // pred_fallthru
          _
        // Predicated region
        $region53: #{tpu_custom_call.1} parent=11 // pred_check
          %p509 = pneg %p368
        $region54: #{tpu_custom_call.1} parent=11 // pred_check_branch
          %511 = sbr.rel (%p509) target = $region56
        $region55: #{tpu_custom_call.1} parent=11 // pred_region
          _
        $region56: #{tpu_custom_call.1} parent=11 // pred_fallthru
          _
      $region12: #{tpu_custom_call.1} parent=5 // pred_fallthru
        _
      %p512 = scmp.lt.s32.totalorder %s33, 2
      // Predicated region
      $region57: #{tpu_custom_call.1} parent=5 // pred_check
        %p513 = pneg %p512
      $region58: #{tpu_custom_call.1} parent=5 // pred_check_branch
        %515 = sbr.rel (%p513) target = $region60
      $region59: #{tpu_custom_call.1} parent=5 // pred_region
        // Predicated region
        $region61: #{tpu_custom_call.1} parent=59 // pred_check
          %p516 = pneg %p53
        $region62: #{tpu_custom_call.1} parent=59 // pred_check_branch
          %518 = sbr.rel (%p516) target = $region64
        $region63: #{tpu_custom_call.1} parent=59 // pred_region
          %s519 = sand.u32 %s43, 1
          %s520 = scalar_lea.sflag [#allocation4], %s519
          %s521 = sand.u32 %s43, 1
          %s522 = smul.addr %s521, 16
          %s523 = scalar_lea.vmem [#allocation3], %s522
          %s524 = smul.u32 2, %s33
          %s526 = ssub.s32 256, 256
          %527 = vsyncadd %s520, %s526
          %s528 = smul.addr %s524, 128
          %s529 = scalar_lea.hbm %s0, %s528
          %s530 = sshll.u32 %s523, 4
          %s531 = int_to_ptr.vmem [resolvable:$true] %s530
          %536 = dma.hbm_to_vmem [thread:$0]  %s529, 256, %s531, %s520, 128, 128, 8
        $region64: #{tpu_custom_call.1} parent=59 // pred_fallthru
          _
        // Predicated region
        $region65: #{tpu_custom_call.1} parent=59 // pred_check
          %p537 = pneg %p79
        $region66: #{tpu_custom_call.1} parent=59 // pred_check_branch
          %539 = sbr.rel (%p537) target = $region68
        $region67: #{tpu_custom_call.1} parent=59 // pred_region
          %s540 = sand.u32 %s33, 1
          %s541 = scalar_lea.sflag [#allocation7], %s540
          %s542 = sand.u32 %s69, 1
          %s543 = smul.addr %s542, 32
          %s544 = scalar_lea.vmem [#allocation6], %s543
          %s545 = smul.u32 2, %s33
          %s547 = ssub.s32 512, 512
          %548 = vsyncadd %s541, %s547
          %s549 = smul.addr %s545, 2
          %s550 = smul.addr %s549, 128
          %s551 = scalar_lea.hbm %s1, %s550
          %s552 = sshll.u32 %s544, 4
          %s553 = int_to_ptr.vmem [resolvable:$true] %s552
          %558 = dma.hbm_to_vmem [thread:$0]  %s551, 512, %s553, %s541, 128, 128, 8
        $region68: #{tpu_custom_call.1} parent=59 // pred_fallthru
          _
        // Predicated region
        $region69: #{tpu_custom_call.1} parent=59 // pred_check
          %p559 = pneg %p105
        $region70: #{tpu_custom_call.1} parent=59 // pred_check_branch
          %561 = sbr.rel (%p559) target = $region72
        $region71: #{tpu_custom_call.1} parent=59 // pred_region
          %s562 = smul.u32 2, %s33
          %p563 = scmp.lt.s32.totalorder %s562, 3
          %s564 = scalar_select %p563, %s562, 3
          %s565 = scalar_lea.vmem %s2, %s564
          %s566 = smul.u32 2, %s33
        $region72: #{tpu_custom_call.1} parent=59 // pred_fallthru
          _
        // Predicated region
        $region73: #{tpu_custom_call.1} parent=59 // pred_check
          %p567 = pneg %p131
        $region74: #{tpu_custom_call.1} parent=59 // pred_check_branch
          %569 = sbr.rel (%p567) target = $region76
        $region75: #{tpu_custom_call.1} parent=59 // pred_region
          %s570 = smul.u32 2, %s33
          %p571 = scmp.lt.s32.totalorder %s570, 3
          %s572 = scalar_select %p571, %s570, 3
          %s573 = scalar_lea.vmem %s3, %s572
          %s574 = smul.u32 2, %s33
        $region76: #{tpu_custom_call.1} parent=59 // pred_fallthru
          _
      $region60: #{tpu_custom_call.1} parent=5 // pred_fallthru
        _
      %p575 = scmp.le.s32.totalorder 1, %s33
      %p576 = scmp.lt.s32.totalorder %s33, 3
      %p577 = pnand %p575, %p576
      %p578 = pneg %p577
      // Predicated region
      $region77: #{tpu_custom_call.1} parent=5 // pred_check
        _
      $region78: #{tpu_custom_call.1} parent=5 // pred_check_branch
        %580 = sbr.rel (%p577) target = $region80
      $region79: #{tpu_custom_call.1} parent=5 // pred_region
        %s581 = ssub.s32 %s33, 1
        %s582 = sand.u32 %s46, 1
        %s583 = scalar_lea.sflag [#allocation4], %s582
        %s584 = sand.u32 %s46, 1
        %s585 = smul.addr %s584, 16
        %s586 = scalar_lea.vmem [#allocation3], %s585
        // Predicated region
        $region81: #{tpu_custom_call.1} parent=79 // pred_check
          %p587 = pneg %p59
        $region82: #{tpu_custom_call.1} parent=79 // pred_check_branch
          %589 = sbr.rel (%p587) target = $region84
        $region83: #{tpu_custom_call.1} parent=79 // pred_region
          %590 = dma.done %s583, 256
        $region84: #{tpu_custom_call.1} parent=79 // pred_fallthru
          _
        %s591 = sand.u32 %s38, 1
        %s592 = scalar_lea.sflag [#allocation7], %s591
        %s593 = sand.u32 %s72, 1
        %s594 = smul.addr %s593, 32
        %s595 = scalar_lea.vmem [#allocation6], %s594
        // Predicated region
        $region85: #{tpu_custom_call.1} parent=79 // pred_check
          %p596 = pneg %p85
        $region86: #{tpu_custom_call.1} parent=79 // pred_check_branch
          %598 = sbr.rel (%p596) target = $region88
        $region87: #{tpu_custom_call.1} parent=79 // pred_region
          %599 = dma.done %s592, 512
        $region88: #{tpu_custom_call.1} parent=79 // pred_fallthru
          _
        // Predicated region
        $region89: #{tpu_custom_call.1} parent=79 // pred_check
          %p600 = pneg %p158
        $region90: #{tpu_custom_call.1} parent=79 // pred_check_branch
          %602 = sbr.rel (%p600) target = $region92
        $region91: #{tpu_custom_call.1} parent=79 // pred_region
          %603 = dma.done [#allocation7], 3072
        $region92: #{tpu_custom_call.1} parent=79 // pred_fallthru
          _
        // Predicated region
        $region93: #{tpu_custom_call.1} parent=79 // pred_check
          %p604 = pneg %p200
        $region94: #{tpu_custom_call.1} parent=79 // pred_check_branch
          %606 = sbr.rel (%p604) target = $region96
        $region95: #{tpu_custom_call.1} parent=79 // pred_region
          %607 = dma.done [#allocation10], 1024
        $region96: #{tpu_custom_call.1} parent=79 // pred_fallthru
          _
        // Predicated region
        $region97: #{tpu_custom_call.1} parent=79 // pred_check
          %p608 = pneg %p221
        $region98: #{tpu_custom_call.1} parent=79 // pred_check_branch
          %610 = sbr.rel (%p608) target = $region100
        $region99: #{tpu_custom_call.1} parent=79 // pred_region
          %611 = dma.done [#allocation10], 1024
        $region100: #{tpu_custom_call.1} parent=79 // pred_fallthru
          _
        // Predicated region
        $region101: #{tpu_custom_call.1} parent=79 // pred_check
          %p612 = pneg %p242
        $region102: #{tpu_custom_call.1} parent=79 // pred_check_branch
          %614 = sbr.rel (%p612) target = $region104
        $region103: #{tpu_custom_call.1} parent=79 // pred_region
          %615 = dma.done [#allocation13], 2048
        $region104: #{tpu_custom_call.1} parent=79 // pred_fallthru
          _
        // Predicated region
        $region105: #{tpu_custom_call.1} parent=79 // pred_check
          %p616 = pneg %p284
        $region106: #{tpu_custom_call.1} parent=79 // pred_check_branch
          %618 = sbr.rel (%p616) target = $region108
        $region107: #{tpu_custom_call.1} parent=79 // pred_region
          %619 = dma.done [#allocation13], 1024
        $region108: #{tpu_custom_call.1} parent=79 // pred_fallthru
          _
        // Predicated region
        $region109: #{tpu_custom_call.1} parent=79 // pred_check
          %p620 = pneg %p305
        $region110: #{tpu_custom_call.1} parent=79 // pred_check_branch
          %622 = sbr.rel (%p620) target = $region112
        $region111: #{tpu_custom_call.1} parent=79 // pred_region
          %623 = dma.done [#allocation16], 2048
        $region112: #{tpu_custom_call.1} parent=79 // pred_fallthru
          _
        // Predicated region
        $region113: #{tpu_custom_call.1} parent=79 // pred_check
          %p624 = pneg %p347
        $region114: #{tpu_custom_call.1} parent=79 // pred_check_branch
          %626 = sbr.rel (%p624) target = $region116
        $region115: #{tpu_custom_call.1} parent=79 // pred_region
          %627 = dma.done [#allocation16], 2048
        $region116: #{tpu_custom_call.1} parent=79 // pred_fallthru
          _
        %s628 = sand.u32 %s46, 1
        %s629 = scalar_lea.sflag [#allocation4], %s628
        %s630 = sand.u32 %s46, 1
        %s631 = smul.addr %s630, 16
        %s632 = scalar_lea.vmem [#allocation3], %s631
        %p633 = pneg %p59
        %p634 = pneg %p56
        %s635 = sand.u32 %s38, 1
        %s636 = scalar_lea.sflag [#allocation7], %s635
        %s637 = sand.u32 %s72, 1
        %s638 = smul.addr %s637, 32
        %s639 = scalar_lea.vmem [#allocation6], %s638
        %p640 = pneg %p85
        %p641 = pneg %p82
        %s642 = smul.u32 2, %s38
        %p643 = scmp.lt.s32.totalorder %s642, 3
        %s644 = scalar_select %p643, %s642, 3
        %s645 = scalar_lea.vmem %s2, %s644
        %p646 = pneg %p111
        %p647 = pneg %p108
        %s648 = smul.u32 2, %s38
        %p649 = scmp.lt.s32.totalorder %s648, 3
        %s650 = scalar_select %p649, %s648, 3
        %s651 = scalar_lea.vmem %s3, %s650
        %p652 = pneg %p137
        %p653 = pneg %p134
        %p654 = pneg %p158
        %p655 = pneg %p155
        %p656 = pneg %p179
        %p657 = pneg %p176
        %p658 = pneg %p200
        %p659 = pneg %p197
        %p660 = pneg %p221
        %p661 = pneg %p218
        %p662 = pneg %p242
        %p663 = pneg %p239
        %p664 = pneg %p263
        %p665 = pneg %p260
        %p666 = pneg %p284
        %p667 = pneg %p281
        %p668 = pneg %p305
        %p669 = pneg %p302
        %p670 = pneg %p326
        %p671 = pneg %p323
        %p672 = pneg %p347
        %p673 = pneg %p344
        %p674 = pneg %p368
        %p675 = pneg %p365
        %p676 = pneg %p394
        %p677 = pneg %p391
        %s678 = sand.u32 %s381, 1
        %s679 = scalar_lea.sflag [#allocation5], %s678
        %s680 = sand.u32 %s381, 1
        %s681 = smul.addr %s680, 16
        %s682 = scalar_lea.vmem [#allocation18], %s681
        %s683 = smul.u32 2, %s38
        %s684 = smul.u32 2, %s38
        %s685 = smul.u32 2, %s38
        %p686 = scmp.lt.s32.totalorder %s685, 3
        %s687 = scalar_select %p686, %s685, 3
        %s688 = scalar_lea.vmem %s2, %s687
        %s689 = smul.u32 2, %s38
        %s690 = smul.u32 2, %s38
        %p691 = scmp.lt.s32.totalorder %s690, 3
        %s692 = scalar_select %p691, %s690, 3
        %s693 = scalar_lea.vmem %s3, %s692
        %s694 = smul.u32 2, %s38
        %s695 = smul.u32 2, %s38
        %v697 = vld [vmem:[%s14] sm:$0xff]
        %v698 = vld [vmem:[%s14 + $0x8] sm:$0x3]
        %v699 = vld [vmem:[%s586] sm:$0xff]
        %v700 = vld [vmem:[%s586 + $0x8] sm:$0xff]
        %v701 = vld [vmem:[%s595] sm:$0xff]
        %v702 = vld [vmem:[%s595 + $0x8] sm:$0xff]
        %v703 = vld [vmem:[%s595 + $0x10] sm:$0xff]
        %v704 = vld [vmem:[%s595 + $0x18] sm:$0xff]
        %v705 = vld [vmem:[%s688] sm:$0x1]
        %v706 = vld [vmem:[%s688 + $0x1] sm:$0x1]
        %vm707 = vcmp.gt.f32.partialorder %v705, 0.0
        %vm708 = vcmp.gt.f32.partialorder %v706, 0.0
        %v709 = vsel %vm707, -1e+09, 0.0
        %v710 = vsel %vm708, -1e+09, 0.0
        %v711 = vld [vmem:[%s693] sm:$0x1]
        %v712 = vld [vmem:[%s693 + $0x1] sm:$0x1]
        %vm713 = vcmp.gt.f32.partialorder %v711, 0.0
        %vm714 = vcmp.gt.f32.partialorder %v712, 0.0
        %v715 = vsel %vm713, -1e+09, 0.0
        %v716 = vsel %vm714, -1e+09, 0.0
        %v717 = vld [vmem:[%s5] sm:$0x7]
        %v718 = vpack.c.bf16 %v700, %v699
        %v719 = vld [vmem:[#allocation8] sm:$0xff]
        %v720 = vld [vmem:[#allocation8 + $0x8] sm:$0xf]
        %v721 = vld [vmem:[#allocation8 + $0xc] sm:$0xff]
        %v722 = vld [vmem:[#allocation8 + $0x14] sm:$0xf]
        %v723 = vld [vmem:[#allocation8 + $0x18] sm:$0xff]
        %v724 = vld [vmem:[#allocation8 + $0x20] sm:$0xf]
        %v725 = vld [vmem:[#allocation8 + $0x24] sm:$0xff]
        %v726 = vld [vmem:[#allocation8 + $0x2c] sm:$0xf]
        %v727 = vld [vmem:[#allocation8 + $0x30] sm:$0xff]
        %v728 = vld [vmem:[#allocation8 + $0x38] sm:$0xf]
        %v729 = vld [vmem:[#allocation8 + $0x3c] sm:$0xff]
        %v730 = vld [vmem:[#allocation8 + $0x44] sm:$0xf]
        %v731 = vld [vmem:[#allocation8 + $0x48] sm:$0xff]
        %v732 = vld [vmem:[#allocation8 + $0x50] sm:$0xf]
        %v733 = vld [vmem:[#allocation8 + $0x54] sm:$0xff]
        %v734 = vld [vmem:[#allocation8 + $0x5c] sm:$0xf]
        %v735 = vld [vmem:[#allocation8 + $0x60] sm:$0xff]
        %v736 = vld [vmem:[#allocation8 + $0x68] sm:$0xf]
        %v737 = vld [vmem:[#allocation8 + $0x6c] sm:$0xff]
        %v738 = vld [vmem:[#allocation8 + $0x74] sm:$0xf]
        %v739 = vld [vmem:[#allocation8 + $0x78] sm:$0xff]
        %v740 = vld [vmem:[#allocation8 + $0x80] sm:$0xf]
        %v741 = vld [vmem:[#allocation8 + $0x84] sm:$0xff]
        %v742 = vld [vmem:[#allocation8 + $0x8c] sm:$0xf]
        %v743 = vld [vmem:[#allocation8 + $0x90] sm:$0xff]
        %v744 = vld [vmem:[#allocation8 + $0x98] sm:$0xf]
        %v745 = vld [vmem:[#allocation8 + $0x9c] sm:$0xff]
        %v746 = vld [vmem:[#allocation8 + $0xa4] sm:$0xf]
        %v747 = vld [vmem:[#allocation8 + $0xa8] sm:$0xff]
        %v748 = vld [vmem:[#allocation8 + $0xb0] sm:$0xf]
        %v749 = vld [vmem:[#allocation8 + $0xb4] sm:$0xff]
        %v750 = vld [vmem:[#allocation8 + $0xbc] sm:$0xf]
        %v752 = vlaneseq
        %v753 = vshrl.u32 %v752, 7
        %v754 = vsub.s32 0, %v753
        %v755 = vrot.slane %v717, %v754
        %v756 = vlaneseq
        %v757 = vshrl.u32 %v756, 7
        %v758 = vsub.s32 1, %v757
        %v759 = vrot.slane %v717, %v758
        %v760 = vlaneseq
        %v761 = vshrl.u32 %v760, 7
        %v762 = vsub.s32 2, %v761
        %v763 = vrot.slane %v717, %v762
        %v799 = vunpack.c.l.b16 %v719
        %v800 = vunpack.c.h.b16 %v719
        %v801 = vunpack.c.l.b16 %v720
        %v802 = vunpack.c.l.b16 %v721
        %v803 = vunpack.c.h.b16 %v721
        %v804 = vunpack.c.l.b16 %v722
        %v805 = vunpack.c.l.b16 %v723
        %v806 = vunpack.c.h.b16 %v723
        %v807 = vunpack.c.l.b16 %v724
        %v808 = vunpack.c.l.b16 %v725
        %v809 = vunpack.c.h.b16 %v725
        %v810 = vunpack.c.l.b16 %v726
        %v811 = vunpack.c.l.b16 %v727
        %v812 = vunpack.c.h.b16 %v727
        %v813 = vunpack.c.l.b16 %v728
        %v814 = vunpack.c.l.b16 %v729
        %v815 = vunpack.c.h.b16 %v729
        %v816 = vunpack.c.l.b16 %v730
        %v817 = vunpack.c.l.b16 %v731
        %v818 = vunpack.c.h.b16 %v731
        %v819 = vunpack.c.l.b16 %v732
        %v820 = vunpack.c.l.b16 %v733
        %v821 = vunpack.c.h.b16 %v733
        %v822 = vunpack.c.l.b16 %v734
        %v823 = vunpack.c.l.b16 %v735
        %v824 = vunpack.c.h.b16 %v735
        %v825 = vunpack.c.l.b16 %v736
        %v826 = vunpack.c.l.b16 %v737
        %v827 = vunpack.c.h.b16 %v737
        %v828 = vunpack.c.l.b16 %v738
        %v829 = vunpack.c.l.b16 %v739
        %v830 = vunpack.c.h.b16 %v739
        %v831 = vunpack.c.l.b16 %v740
        %v832 = vunpack.c.l.b16 %v741
        %v833 = vunpack.c.h.b16 %v741
        %v834 = vunpack.c.l.b16 %v742
        %v835 = vunpack.c.l.b16 %v743
        %v836 = vunpack.c.h.b16 %v743
        %v837 = vunpack.c.l.b16 %v744
        %v838 = vunpack.c.l.b16 %v745
        %v839 = vunpack.c.h.b16 %v745
        %v840 = vunpack.c.l.b16 %v746
        %v841 = vunpack.c.l.b16 %v747
        %v842 = vunpack.c.h.b16 %v747
        %v843 = vunpack.c.l.b16 %v748
        %v844 = vunpack.c.l.b16 %v749
        %v845 = vunpack.c.h.b16 %v749
        %v846 = vunpack.c.l.b16 %v750
        %v847 = vpack.c.b16 %v802, %v799
        %v848 = vpack.c.b16 %v803, %v800
        %v849 = vpack.c.b16 %v804, %v801
        %v850 = vpack.c.b16 %v808, %v805
        %v851 = vpack.c.b16 %v809, %v806
        %v852 = vpack.c.b16 %v810, %v807
        %v853 = vpack.c.b16 %v814, %v811
        %v854 = vpack.c.b16 %v815, %v812
        %v855 = vpack.c.b16 %v816, %v813
        %v856 = vpack.c.b16 %v820, %v817
        %v857 = vpack.c.b16 %v821, %v818
        %v858 = vpack.c.b16 %v822, %v819
        %v859 = vpack.c.b16 %v826, %v823
        %v860 = vpack.c.b16 %v827, %v824
        %v861 = vpack.c.b16 %v828, %v825
        %v862 = vpack.c.b16 %v832, %v829
        %v863 = vpack.c.b16 %v833, %v830
        %v864 = vpack.c.b16 %v834, %v831
        %v865 = vpack.c.b16 %v838, %v835
        %v866 = vpack.c.b16 %v839, %v836
        %v867 = vpack.c.b16 %v840, %v837
        %v868 = vpack.c.b16 %v844, %v841
        %v869 = vpack.c.b16 %v845, %v842
        %v870 = vpack.c.b16 %v846, %v843
        %895 = vmatprep.subr.bf16.mxu0 %v848
        %896 = vmatpush1.bf16.msra.mxu0 %v847
        %897 = vmatprep.subr.bf16.mxu0 %v851
        %898 = vmatpush1.bf16.msra.mxu0 %v850
        %899 = vmatprep.subr.bf16.mxu0 %v854
        %900 = vmatpush1.bf16.msra.mxu0 %v853
        %901 = vmatprep.subr.bf16.mxu0 %v857
        %902 = vmatpush1.bf16.msra.mxu0 %v856
        %903 = vmatprep.subr.bf16.mxu0 %v860
        %904 = vmatpush1.bf16.msra.mxu0 %v859
        %905 = vmatprep.subr.bf16.mxu0 %v863
        %906 = vmatpush1.bf16.msra.mxu0 %v862
        %907 = vmatprep.subr.bf16.mxu0 %v866
        %908 = vmatpush1.bf16.msra.mxu0 %v865
        %909 = vmatprep.subr.bf16.mxu0 %v869
        %910 = vmatpush1.bf16.msra.mxu0 %v868
        %911 = vmatprep.subr.bf16.mxu0 0
        %912 = vmatpush1.bf16.msra.mxu0 0
        %913 = vmatprep.subr.bf16.mxu0 0
        %914 = vmatpush1.bf16.msra.mxu0 0
        %915 = vmatprep.subr.bf16.mxu0 0
        %916 = vmatpush1.bf16.msra.mxu0 0
        %917 = vmatprep.subr.bf16.mxu0 0
        %918 = vmatpush1.bf16.msra.mxu0 0
        %919 = vmatprep.subr.bf16.mxu0 0
        %920 = vmatpush1.bf16.msra.mxu0 0
        %921 = vmatprep.subr.bf16.mxu0 0
        %922 = vmatpush1.bf16.msra.mxu0 0
        %923 = vmatprep.subr.bf16.mxu0 0
        %924 = vmatpush1.bf16.msra.mxu0 0
        %925 = vmatprep.subr.bf16.mxu0 0
        %926 = vmatpush1.bf16.msra.mxu0 0
        %927 = vmatprep.mubr.bf16.mxu0 0
        %928 = vmatmul.mubr.bf16.gmra.mrb[0].mxu0 %v718
        %v929 = vpop.f32.mrb[0].mxu0
        %v930 = vadd.f32 %v755, %v929
        %v931 = vpop.f32.mrb[0].mxu0
        %v932 = vadd.f32 %v759, %v931
        %v933 = vpop.f32.mrb[0].mxu0
        %v934 = vadd.f32 %v755, %v933
        %v935 = vpop.f32.mrb[0].mxu0
        %v936 = vadd.f32 %v759, %v935
        %937 = vdwg.mxu0
        %938 = vmatprep.subr.bf16.mxu0 0
        %939 = vmatpush1.bf16.msra.mxu0 %v849
        %940 = vmatprep.subr.bf16.mxu0 0
        %941 = vmatpush1.bf16.msra.mxu0 %v852
        %942 = vmatprep.subr.bf16.mxu0 0
        %943 = vmatpush1.bf16.msra.mxu0 %v855
        %944 = vmatprep.subr.bf16.mxu0 0
        %945 = vmatpush1.bf16.msra.mxu0 %v858
        %946 = vmatprep.subr.bf16.mxu0 0
        %947 = vmatpush1.bf16.msra.mxu0 %v861
        %948 = vmatprep.subr.bf16.mxu0 0
        %949 = vmatpush1.bf16.msra.mxu0 %v864
        %950 = vmatprep.subr.bf16.mxu0 0
        %951 = vmatpush1.bf16.msra.mxu0 %v867
        %952 = vmatprep.subr.bf16.mxu0 0
        %953 = vmatpush1.bf16.msra.mxu0 %v870
        %954 = vmatprep.subr.bf16.mxu0 0
        %955 = vmatpush1.bf16.msra.mxu0 0
        %956 = vmatprep.subr.bf16.mxu0 0
        %957 = vmatpush1.bf16.msra.mxu0 0
        %958 = vmatprep.subr.bf16.mxu0 0
        %959 = vmatpush1.bf16.msra.mxu0 0
        %960 = vmatprep.subr.bf16.mxu0 0
        %961 = vmatpush1.bf16.msra.mxu0 0
        %962 = vmatprep.subr.bf16.mxu0 0
        %963 = vmatpush1.bf16.msra.mxu0 0
        %964 = vmatprep.subr.bf16.mxu0 0
        %965 = vmatpush1.bf16.msra.mxu0 0
        %966 = vmatprep.subr.bf16.mxu0 0
        %967 = vmatpush1.bf16.msra.mxu0 0
        %968 = vmatprep.subr.bf16.mxu0 0
        %969 = vmatpush1.bf16.msra.mxu0 0
        %970 = vmatprep.mubr.bf16.mxu0 0
        %971 = vmatmul.mubr.bf16.gmra.mrb[0].mxu0 %v718
        %v972 = vpop.f32.mrb[0].mxu0
        %v973 = vadd.f32 %v763, %v972
        %v974 = vpop.f32.mrb[0].mxu0
        %v975 = vpop.f32.mrb[0].mxu0
        %v976 = vadd.f32 %v763, %v975
        %v977 = vpop.f32.mrb[0].mxu0
        %978 = vdwg.mxu0
        %v979 = vpack.c.bf16 %v930, %v930
        %v980 = vpack.c.bf16 %v934, %v934
        %v981 = vpack.c.bf16 %v932, %v932
        %v982 = vpack.c.bf16 %v936, %v936
        %v983 = vpack.c.bf16 %v973, %v973
        %v984 = vpack.c.bf16 %v976, %v976
        %v987 = vlaneseq
        %v988 = vshrl.u32 %v987, 7
        %v989 = vsub.s32 0, %v988
        %v990 = vrot.slane %v709, %v989
        %v991 = vlaneseq
        %v992 = vshrl.u32 %v991, 7
        %v993 = vsub.s32 0, %v992
        %v994 = vrot.slane %v710, %v993
        %vm997 = vcmask 261120
        %v999 = vsel %vm997, %v979, 0
        %v1002 = vsel %vm997, %v981, 0
        %1004 = vmatprep.subr.bf16.mxu0 0
        %1005 = vmatpush1.bf16.xpose.msra.mxu0 %v1002
        %1006 = vmatprep.subr.bf16.mxu0 0
        %1007 = vmatpush1.bf16.xpose.msra.mxu0 0
        %1008 = vmatprep.subr.bf16.mxu0 0
        %1009 = vmatpush1.bf16.xpose.msra.mxu0 0
        %1010 = vmatprep.subr.bf16.mxu0 0
        %1011 = vmatpush1.bf16.xpose.msra.mxu0 0
        %1012 = vmatprep.subr.bf16.mxu0 0
        %1013 = vmatpush1.bf16.xpose.msra.mxu0 0
        %1014 = vmatprep.subr.bf16.mxu0 0
        %1015 = vmatpush1.bf16.xpose.msra.mxu0 0
        %1016 = vmatprep.subr.bf16.mxu0 0
        %1017 = vmatpush1.bf16.xpose.msra.mxu0 0
        %1018 = vmatprep.subr.bf16.mxu0 0
        %1019 = vmatpush1.bf16.xpose.msra.mxu0 0
        %1020 = vmatprep.subr.bf16.mxu0 0
        %1021 = vmatpush1.bf16.xpose.msra.mxu0 0
        %1022 = vmatprep.subr.bf16.mxu0 0
        %1023 = vmatpush1.bf16.xpose.msra.mxu0 0
        %1024 = vmatprep.subr.bf16.mxu0 0
        %1025 = vmatpush1.bf16.xpose.msra.mxu0 0
        %1026 = vmatprep.subr.bf16.mxu0 0
        %1027 = vmatpush1.bf16.xpose.msra.mxu0 0
        %1028 = vmatprep.subr.bf16.mxu0 0
        %1029 = vmatpush1.bf16.xpose.msra.mxu0 0
        %1030 = vmatprep.subr.bf16.mxu0 0
        %1031 = vmatpush1.bf16.xpose.msra.mxu0 0
        %1032 = vmatprep.subr.bf16.mxu0 0
        %1033 = vmatpush1.bf16.xpose.msra.mxu0 0
        %1034 = vmatprep.subr.bf16.mxu0 0
        %1035 = vmatpush1.bf16.xpose.msra.mxu0 0
        %1036 = vmatprep.mubr.bf16.mxu0 0
        %1037 = vmatmul.mubr.bf16.gmra.mrb[0].mxu0 %v999
        %v1038 = vpop.f32.mrb[0].mxu0
        %v1039 = vadd.f32 %v990, %v1038
        %v1040 = vpop.f32.mrb[0].mxu0
        %v1041 = vpop.f32.mrb[0].mxu0
        %v1042 = vpop.f32.mrb[0].mxu0
        %1043 = vdwg.mxu0
        %v1045 = vsel %vm997, %v980, 0
        %v1048 = vsel %vm997, %v982, 0
        %1050 = vmatprep.subr.bf16.mxu0 0
        %1051 = vmatpush1.bf16.xpose.msra.mxu0 %v1048
        %1052 = vmatprep.subr.bf16.mxu0 0
        %1053 = vmatpush1.bf16.xpose.msra.mxu0 0
        %1054 = vmatprep.subr.bf16.mxu0 0
        %1055 = vmatpush1.bf16.xpose.msra.mxu0 0
        %1056 = vmatprep.subr.bf16.mxu0 0
        %1057 = vmatpush1.bf16.xpose.msra.mxu0 0
        %1058 = vmatprep.subr.bf16.mxu0 0
        %1059 = vmatpush1.bf16.xpose.msra.mxu0 0
        %1060 = vmatprep.subr.bf16.mxu0 0
        %1061 = vmatpush1.bf16.xpose.msra.mxu0 0
        %1062 = vmatprep.subr.bf16.mxu0 0
        %1063 = vmatpush1.bf16.xpose.msra.mxu0 0
        %1064 = vmatprep.subr.bf16.mxu0 0
        %1065 = vmatpush1.bf16.xpose.msra.mxu0 0
        %1066 = vmatprep.subr.bf16.mxu0 0
        %1067 = vmatpush1.bf16.xpose.msra.mxu0 0
        %1068 = vmatprep.subr.bf16.mxu0 0
        %1069 = vmatpush1.bf16.xpose.msra.mxu0 0
        %1070 = vmatprep.subr.bf16.mxu0 0
        %1071 = vmatpush1.bf16.xpose.msra.mxu0 0
        %1072 = vmatprep.subr.bf16.mxu0 0
        %1073 = vmatpush1.bf16.xpose.msra.mxu0 0
        %1074 = vmatprep.subr.bf16.mxu0 0
        %1075 = vmatpush1.bf16.xpose.msra.mxu0 0
        %1076 = vmatprep.subr.bf16.mxu0 0
        %1077 = vmatpush1.bf16.xpose.msra.mxu0 0
        %1078 = vmatprep.subr.bf16.mxu0 0
        %1079 = vmatpush1.bf16.xpose.msra.mxu0 0
        %1080 = vmatprep.subr.bf16.mxu0 0
        %1081 = vmatpush1.bf16.xpose.msra.mxu0 0
        %1082 = vmatprep.mubr.bf16.mxu0 0
        %1083 = vmatmul.mubr.bf16.gmra.mrb[0].mxu0 %v1045
        %v1084 = vpop.f32.mrb[0].mxu0
        %v1085 = vadd.f32 %v994, %v1084
        %v1086 = vpop.f32.mrb[0].mxu0
        %v1087 = vpop.f32.mrb[0].mxu0
        %v1088 = vpop.f32.mrb[0].mxu0
        %1089 = vdwg.mxu0
        %vm1090 = vcmask 64512
        %v1091 = vsel %vm1090, %v1039, -inf
        %1092 = vmax.xlane.f32.xlu0 %v1091
        %v1093 = vpop.xlane.xlu0 %1092
        %v1094 = vsel %vm1090, %v1085, -inf
        %1095 = vmax.xlane.f32.xlu0 %v1094
        %v1096 = vpop.xlane.xlu0 %1095
        %v1097 = vsub.f32 %v1039, %v1093
        %v1098 = vsub.f32 %v1085, %v1096
        %v1099 = vmul.f32 %v1097, 1.442695
        %v1100 = vpow.pop %v1099
        %v1101 = vmul.f32 %v1098, 1.442695
        %v1102 = vpow.pop %v1101
        %v1103 = vsel %vm1090, %v1100, 0.0
        %1104 = vadd.xlane.f32.xlu0 %v1103
        %v1105 = vpop.xlane.xlu0 %1104
        %v1106 = vsel %vm1090, %v1102, 0.0
        %1107 = vadd.xlane.f32.xlu0 %v1106
        %v1108 = vpop.xlane.xlu0 %1107
        %v1109 = vrcp.pop %v1105
        %v1110 = vrcp.pop %v1108
        %v1111 = vmul.f32 %v1100, %v1109
        %v1112 = vmul.f32 %v1102, %v1110
        %v1113 = vpack.c.bf16 %v1111, %v1111
        %v1114 = vpack.c.bf16 %v1112, %v1112
        %v1116 = vsel %vm1090, %v1113, 0
        %vm1118 = vcmask 1043456
        %v1120 = vsel %vm1118, %v983, 0
        %1122 = vmatprep.subr.bf16.mxu0 0
        %1123 = vmatpush1.bf16.msra.mxu0 %v1120
        %1124 = vmatprep.subr.bf16.mxu0 0
        %1125 = vmatpush1.bf16.msra.mxu0 0
        %1126 = vmatprep.subr.bf16.mxu0 0
        %1127 = vmatpush1.bf16.msra.mxu0 0
        %1128 = vmatprep.subr.bf16.mxu0 0
        %1129 = vmatpush1.bf16.msra.mxu0 0
        %1130 = vmatprep.subr.bf16.mxu0 0
        %1131 = vmatpush1.bf16.msra.mxu0 0
        %1132 = vmatprep.subr.bf16.mxu0 0
        %1133 = vmatpush1.bf16.msra.mxu0 0
        %1134 = vmatprep.subr.bf16.mxu0 0
        %1135 = vmatpush1.bf16.msra.mxu0 0
        %1136 = vmatprep.subr.bf16.mxu0 0
        %1137 = vmatpush1.bf16.msra.mxu0 0
        %1138 = vmatprep.subr.bf16.mxu0 0
        %1139 = vmatpush1.bf16.msra.mxu0 0
        %1140 = vmatprep.subr.bf16.mxu0 0
        %1141 = vmatpush1.bf16.msra.mxu0 0
        %1142 = vmatprep.subr.bf16.mxu0 0
        %1143 = vmatpush1.bf16.msra.mxu0 0
        %1144 = vmatprep.subr.bf16.mxu0 0
        %1145 = vmatpush1.bf16.msra.mxu0 0
        %1146 = vmatprep.subr.bf16.mxu0 0
        %1147 = vmatpush1.bf16.msra.mxu0 0
        %1148 = vmatprep.subr.bf16.mxu0 0
        %1149 = vmatpush1.bf16.msra.mxu0 0
        %1150 = vmatprep.subr.bf16.mxu0 0
        %1151 = vmatpush1.bf16.msra.mxu0 0
        %1152 = vmatprep.subr.bf16.mxu0 0
        %1153 = vmatpush1.bf16.msra.mxu0 0
        %1154 = vmatprep.mubr.bf16.mxu0 0
        %1155 = vmatmul.mubr.bf16.gmra.mrb[0].mxu0 %v1116
        %v1156 = vpop.f32.mrb[0].mxu0
        %v1157 = vadd.f32 0.0, %v1156
        %v1158 = vpop.f32.mrb[0].mxu0
        %v1159 = vpop.f32.mrb[0].mxu0
        %v1160 = vpop.f32.mrb[0].mxu0
        %1161 = vdwg.mxu0
        %v1163 = vsel %vm1090, %v1114, 0
        %v1166 = vsel %vm1118, %v984, 0
        %1168 = vmatprep.subr.bf16.mxu0 0
        %1169 = vmatpush1.bf16.msra.mxu0 %v1166
        %1170 = vmatprep.subr.bf16.mxu0 0
        %1171 = vmatpush1.bf16.msra.mxu0 0
        %1172 = vmatprep.subr.bf16.mxu0 0
        %1173 = vmatpush1.bf16.msra.mxu0 0
        %1174 = vmatprep.subr.bf16.mxu0 0
        %1175 = vmatpush1.bf16.msra.mxu0 0
        %1176 = vmatprep.subr.bf16.mxu0 0
        %1177 = vmatpush1.bf16.msra.mxu0 0
        %1178 = vmatprep.subr.bf16.mxu0 0
        %1179 = vmatpush1.bf16.msra.mxu0 0
        %1180 = vmatprep.subr.bf16.mxu0 0
        %1181 = vmatpush1.bf16.msra.mxu0 0
        %1182 = vmatprep.subr.bf16.mxu0 0
        %1183 = vmatpush1.bf16.msra.mxu0 0
        %1184 = vmatprep.subr.bf16.mxu0 0
        %1185 = vmatpush1.bf16.msra.mxu0 0
        %1186 = vmatprep.subr.bf16.mxu0 0
        %1187 = vmatpush1.bf16.msra.mxu0 0
        %1188 = vmatprep.subr.bf16.mxu0 0
        %1189 = vmatpush1.bf16.msra.mxu0 0
        %1190 = vmatprep.subr.bf16.mxu0 0
        %1191 = vmatpush1.bf16.msra.mxu0 0
        %1192 = vmatprep.subr.bf16.mxu0 0
        %1193 = vmatpush1.bf16.msra.mxu0 0
        %1194 = vmatprep.subr.bf16.mxu0 0
        %1195 = vmatpush1.bf16.msra.mxu0 0
        %1196 = vmatprep.subr.bf16.mxu0 0
        %1197 = vmatpush1.bf16.msra.mxu0 0
        %1198 = vmatprep.subr.bf16.mxu0 0
        %1199 = vmatpush1.bf16.msra.mxu0 0
        %1200 = vmatprep.mubr.bf16.mxu0 0
        %1201 = vmatmul.mubr.bf16.gmra.mrb[0].mxu0 %v1163
        %v1202 = vpop.f32.mrb[0].mxu0
        %v1203 = vadd.f32 0.0, %v1202
        %v1204 = vpop.f32.mrb[0].mxu0
        %v1205 = vpop.f32.mrb[0].mxu0
        %v1206 = vpop.f32.mrb[0].mxu0
        %1207 = vdwg.mxu0
        %v1208 = vpack.c.bf16 %v1203, %v1157
        %1209 = vst.msk [vmem:[#allocation2] sm:$0xff] %vm997, %v1208
        %1211 = vrot.lane.b32.xlu0 %v979, 96
        %v1212 = vpop.permute.xlu0 %1211
        %1214 = vrot.lane.b32.xlu0 %v981, 96
        %v1215 = vpop.permute.xlu0 %1214
        %v1217 = vsel %vm997, %v1212, 0
        %v1220 = vsel %vm997, %v1215, 0
        %1222 = vmatprep.subr.bf16.mxu0 0
        %1223 = vmatpush1.bf16.xpose.msra.mxu0 %v1220
        %1224 = vmatprep.subr.bf16.mxu0 0
        %1225 = vmatpush1.bf16.xpose.msra.mxu0 0
        %1226 = vmatprep.subr.bf16.mxu0 0
        %1227 = vmatpush1.bf16.xpose.msra.mxu0 0
        %1228 = vmatprep.subr.bf16.mxu0 0
        %1229 = vmatpush1.bf16.xpose.msra.mxu0 0
        %1230 = vmatprep.subr.bf16.mxu0 0
        %1231 = vmatpush1.bf16.xpose.msra.mxu0 0
        %1232 = vmatprep.subr.bf16.mxu0 0
        %1233 = vmatpush1.bf16.xpose.msra.mxu0 0
        %1234 = vmatprep.subr.bf16.mxu0 0
        %1235 = vmatpush1.bf16.xpose.msra.mxu0 0
        %1236 = vmatprep.subr.bf16.mxu0 0
        %1237 = vmatpush1.bf16.xpose.msra.mxu0 0
        %1238 = vmatprep.subr.bf16.mxu0 0
        %1239 = vmatpush1.bf16.xpose.msra.mxu0 0
        %1240 = vmatprep.subr.bf16.mxu0 0
        %1241 = vmatpush1.bf16.xpose.msra.mxu0 0
        %1242 = vmatprep.subr.bf16.mxu0 0
        %1243 = vmatpush1.bf16.xpose.msra.mxu0 0
        %1244 = vmatprep.subr.bf16.mxu0 0
        %1245 = vmatpush1.bf16.xpose.msra.mxu0 0
        %1246 = vmatprep.subr.bf16.mxu0 0
        %1247 = vmatpush1.bf16.xpose.msra.mxu0 0
        %1248 = vmatprep.subr.bf16.mxu0 0
        %1249 = vmatpush1.bf16.xpose.msra.mxu0 0
        %1250 = vmatprep.subr.bf16.mxu0 0
        %1251 = vmatpush1.bf16.xpose.msra.mxu0 0
        %1252 = vmatprep.subr.bf16.mxu0 0
        %1253 = vmatpush1.bf16.xpose.msra.mxu0 0
        %1254 = vmatprep.mubr.bf16.mxu0 0
        %1255 = vmatmul.mubr.bf16.gmra.mrb[0].mxu0 %v1217
        %v1256 = vpop.f32.mrb[0].mxu0
        %v1257 = vadd.f32 %v990, %v1256
        %v1258 = vpop.f32.mrb[0].mxu0
        %v1259 = vpop.f32.mrb[0].mxu0
        %v1260 = vpop.f32.mrb[0].mxu0
        %1261 = vdwg.mxu0
        %1263 = vrot.lane.b32.xlu0 %v980, 96
        %v1264 = vpop.permute.xlu0 %1263
        %1266 = vrot.lane.b32.xlu0 %v982, 96
        %v1267 = vpop.permute.xlu0 %1266
        %v1269 = vsel %vm997, %v1264, 0
        %v1272 = vsel %vm997, %v1267, 0
        %1274 = vmatprep.subr.bf16.mxu0 0
        %1275 = vmatpush1.bf16.xpose.msra.mxu0 %v1272
        %1276 = vmatprep.subr.bf16.mxu0 0
        %1277 = vmatpush1.bf16.xpose.msra.mxu0 0
        %1278 = vmatprep.subr.bf16.mxu0 0
        %1279 = vmatpush1.bf16.xpose.msra.mxu0 0
        %1280 = vmatprep.subr.bf16.mxu0 0
        %1281 = vmatpush1.bf16.xpose.msra.mxu0 0
        %1282 = vmatprep.subr.bf16.mxu0 0
        %1283 = vmatpush1.bf16.xpose.msra.mxu0 0
        %1284 = vmatprep.subr.bf16.mxu0 0
        %1285 = vmatpush1.bf16.xpose.msra.mxu0 0
        %1286 = vmatprep.subr.bf16.mxu0 0
        %1287 = vmatpush1.bf16.xpose.msra.mxu0 0
        %1288 = vmatprep.subr.bf16.mxu0 0
        %1289 = vmatpush1.bf16.xpose.msra.mxu0 0
        %1290 = vmatprep.subr.bf16.mxu0 0
        %1291 = vmatpush1.bf16.xpose.msra.mxu0 0
        %1292 = vmatprep.subr.bf16.mxu0 0
        %1293 = vmatpush1.bf16.xpose.msra.mxu0 0
        %1294 = vmatprep.subr.bf16.mxu0 0
        %1295 = vmatpush1.bf16.xpose.msra.mxu0 0
        %1296 = vmatprep.subr.bf16.mxu0 0
        %1297 = vmatpush1.bf16.xpose.msra.mxu0 0
        %1298 = vmatprep.subr.bf16.mxu0 0
        %1299 = vmatpush1.bf16.xpose.msra.mxu0 0
        %1300 = vmatprep.subr.bf16.mxu0 0
        %1301 = vmatpush1.bf16.xpose.msra.mxu0 0
        %1302 = vmatprep.subr.bf16.mxu0 0
        %1303 = vmatpush1.bf16.xpose.msra.mxu0 0
        %1304 = vmatprep.subr.bf16.mxu0 0
        %1305 = vmatpush1.bf16.xpose.msra.mxu0 0
        %1306 = vmatprep.mubr.bf16.mxu0 0
        %1307 = vmatmul.mubr.bf16.gmra.mrb[0].mxu0 %v1269
        %v1308 = vpop.f32.mrb[0].mxu0
        %v1309 = vadd.f32 %v994, %v1308
        %v1310 = vpop.f32.mrb[0].mxu0
        %v1311 = vpop.f32.mrb[0].mxu0
        %v1312 = vpop.f32.mrb[0].mxu0
        %1313 = vdwg.mxu0
        %v1314 = vsel %vm1090, %v1257, -inf
        %1315 = vmax.xlane.f32.xlu0 %v1314
        %v1316 = vpop.xlane.xlu0 %1315
        %v1317 = vsel %vm1090, %v1309, -inf
        %1318 = vmax.xlane.f32.xlu0 %v1317
        %v1319 = vpop.xlane.xlu0 %1318
        %v1320 = vsub.f32 %v1257, %v1316
        %v1321 = vsub.f32 %v1309, %v1319
        %v1322 = vmul.f32 %v1320, 1.442695
        %v1323 = vpow.pop %v1322
        %v1324 = vmul.f32 %v1321, 1.442695
        %v1325 = vpow.pop %v1324
        %v1326 = vsel %vm1090, %v1323, 0.0
        %1327 = vadd.xlane.f32.xlu0 %v1326
        %v1328 = vpop.xlane.xlu0 %1327
        %v1329 = vsel %vm1090, %v1325, 0.0
        %1330 = vadd.xlane.f32.xlu0 %v1329
        %v1331 = vpop.xlane.xlu0 %1330
        %v1332 = vrcp.pop %v1328
        %v1333 = vrcp.pop %v1331
        %v1334 = vmul.f32 %v1323, %v1332
        %v1335 = vmul.f32 %v1325, %v1333
        %v1336 = vpack.c.bf16 %v1334, %v1334
        %v1337 = vpack.c.bf16 %v1335, %v1335
        %1339 = vrot.lane.b32.xlu0 %v983, 96
        %v1340 = vpop.permute.xlu0 %1339
        %v1342 = vsel %vm1090, %v1336, 0
        %v1345 = vsel %vm1118, %v1340, 0
        %1347 = vmatprep.subr.bf16.mxu0 0
        %1348 = vmatpush1.bf16.msra.mxu0 %v1345
        %1349 = vmatprep.subr.bf16.mxu0 0
        %1350 = vmatpush1.bf16.msra.mxu0 0
        %1351 = vmatprep.subr.bf16.mxu0 0
        %1352 = vmatpush1.bf16.msra.mxu0 0
        %1353 = vmatprep.subr.bf16.mxu0 0
        %1354 = vmatpush1.bf16.msra.mxu0 0
        %1355 = vmatprep.subr.bf16.mxu0 0
        %1356 = vmatpush1.bf16.msra.mxu0 0
        %1357 = vmatprep.subr.bf16.mxu0 0
        %1358 = vmatpush1.bf16.msra.mxu0 0
        %1359 = vmatprep.subr.bf16.mxu0 0
        %1360 = vmatpush1.bf16.msra.mxu0 0
        %1361 = vmatprep.subr.bf16.mxu0 0
        %1362 = vmatpush1.bf16.msra.mxu0 0
        %1363 = vmatprep.subr.bf16.mxu0 0
        %1364 = vmatpush1.bf16.msra.mxu0 0
        %1365 = vmatprep.subr.bf16.mxu0 0
        %1366 = vmatpush1.bf16.msra.mxu0 0
        %1367 = vmatprep.subr.bf16.mxu0 0
        %1368 = vmatpush1.bf16.msra.mxu0 0
        %1369 = vmatprep.subr.bf16.mxu0 0
        %1370 = vmatpush1.bf16.msra.mxu0 0
        %1371 = vmatprep.subr.bf16.mxu0 0
        %1372 = vmatpush1.bf16.msra.mxu0 0
        %1373 = vmatprep.subr.bf16.mxu0 0
        %1374 = vmatpush1.bf16.msra.mxu0 0
        %1375 = vmatprep.subr.bf16.mxu0 0
        %1376 = vmatpush1.bf16.msra.mxu0 0
        %1377 = vmatprep.subr.bf16.mxu0 0
        %1378 = vmatpush1.bf16.msra.mxu0 0
        %1379 = vmatprep.mubr.bf16.mxu0 0
        %1380 = vmatmul.mubr.bf16.gmra.mrb[0].mxu0 %v1342
        %v1381 = vpop.f32.mrb[0].mxu0
        %v1382 = vadd.f32 0.0, %v1381
        %v1383 = vpop.f32.mrb[0].mxu0
        %v1384 = vpop.f32.mrb[0].mxu0
        %v1385 = vpop.f32.mrb[0].mxu0
        %1386 = vdwg.mxu0
        %1388 = vrot.lane.b32.xlu0 %v984, 96
        %v1389 = vpop.permute.xlu0 %1388
        %v1391 = vsel %vm1090, %v1337, 0
        %v1394 = vsel %vm1118, %v1389, 0
        %1396 = vmatprep.subr.bf16.mxu0 0
        %1397 = vmatpush1.bf16.msra.mxu0 %v1394
        %1398 = vmatprep.subr.bf16.mxu0 0
        %1399 = vmatpush1.bf16.msra.mxu0 0
        %1400 = vmatprep.subr.bf16.mxu0 0
        %1401 = vmatpush1.bf16.msra.mxu0 0
        %1402 = vmatprep.subr.bf16.mxu0 0
        %1403 = vmatpush1.bf16.msra.mxu0 0
        %1404 = vmatprep.subr.bf16.mxu0 0
        %1405 = vmatpush1.bf16.msra.mxu0 0
        %1406 = vmatprep.subr.bf16.mxu0 0
        %1407 = vmatpush1.bf16.msra.mxu0 0
        %1408 = vmatprep.subr.bf16.mxu0 0
        %1409 = vmatpush1.bf16.msra.mxu0 0
        %1410 = vmatprep.subr.bf16.mxu0 0
        %1411 = vmatpush1.bf16.msra.mxu0 0
        %1412 = vmatprep.subr.bf16.mxu0 0
        %1413 = vmatpush1.bf16.msra.mxu0 0
        %1414 = vmatprep.subr.bf16.mxu0 0
        %1415 = vmatpush1.bf16.msra.mxu0 0
        %1416 = vmatprep.subr.bf16.mxu0 0
        %1417 = vmatpush1.bf16.msra.mxu0 0
        %1418 = vmatprep.subr.bf16.mxu0 0
        %1419 = vmatpush1.bf16.msra.mxu0 0
        %1420 = vmatprep.subr.bf16.mxu0 0
        %1421 = vmatpush1.bf16.msra.mxu0 0
        %1422 = vmatprep.subr.bf16.mxu0 0
        %1423 = vmatpush1.bf16.msra.mxu0 0
        %1424 = vmatprep.subr.bf16.mxu0 0
        %1425 = vmatpush1.bf16.msra.mxu0 0
        %1426 = vmatprep.subr.bf16.mxu0 0
        %1427 = vmatpush1.bf16.msra.mxu0 0
        %1428 = vmatprep.mubr.bf16.mxu0 0
        %1429 = vmatmul.mubr.bf16.gmra.mrb[0].mxu0 %v1391
        %v1430 = vpop.f32.mrb[0].mxu0
        %v1431 = vadd.f32 0.0, %v1430
        %v1432 = vpop.f32.mrb[0].mxu0
        %v1433 = vpop.f32.mrb[0].mxu0
        %v1434 = vpop.f32.mrb[0].mxu0
        %1435 = vdwg.mxu0
        %v1436 = vpack.c.bf16 %v1431, %v1382
        %1438 = vrot.lane.b32.xlu0 %v1436, 32
        %v1439 = vpop.permute.xlu0 %1438
        %vm1441 = vcmask 523520
        %1442 = vst.msk [vmem:[#allocation2] sm:$0xff] %vm1441, %v1439
        %1443 = vrot.lane.b32.xlu0 %v979, 64
        %v1444 = vpop.permute.xlu0 %1443
        %1445 = vrot.lane.b32.xlu0 %v981, 64
        %v1446 = vpop.permute.xlu0 %1445
        %v1448 = vsel %vm997, %v1444, 0
        %v1451 = vsel %vm997, %v1446, 0
        %1453 = vmatprep.subr.bf16.mxu0 0
        %1454 = vmatpush1.bf16.xpose.msra.mxu0 %v1451
        %1455 = vmatprep.subr.bf16.mxu0 0
        %1456 = vmatpush1.bf16.xpose.msra.mxu0 0
        %1457 = vmatprep.subr.bf16.mxu0 0
        %1458 = vmatpush1.bf16.xpose.msra.mxu0 0
        %1459 = vmatprep.subr.bf16.mxu0 0
        %1460 = vmatpush1.bf16.xpose.msra.mxu0 0
        %1461 = vmatprep.subr.bf16.mxu0 0
        %1462 = vmatpush1.bf16.xpose.msra.mxu0 0
        %1463 = vmatprep.subr.bf16.mxu0 0
        %1464 = vmatpush1.bf16.xpose.msra.mxu0 0
        %1465 = vmatprep.subr.bf16.mxu0 0
        %1466 = vmatpush1.bf16.xpose.msra.mxu0 0
        %1467 = vmatprep.subr.bf16.mxu0 0
        %1468 = vmatpush1.bf16.xpose.msra.mxu0 0
        %1469 = vmatprep.subr.bf16.mxu0 0
        %1470 = vmatpush1.bf16.xpose.msra.mxu0 0
        %1471 = vmatprep.subr.bf16.mxu0 0
        %1472 = vmatpush1.bf16.xpose.msra.mxu0 0
        %1473 = vmatprep.subr.bf16.mxu0 0
        %1474 = vmatpush1.bf16.xpose.msra.mxu0 0
        %1475 = vmatprep.subr.bf16.mxu0 0
        %1476 = vmatpush1.bf16.xpose.msra.mxu0 0
        %1477 = vmatprep.subr.bf16.mxu0 0
        %1478 = vmatpush1.bf16.xpose.msra.mxu0 0
        %1479 = vmatprep.subr.bf16.mxu0 0
        %1480 = vmatpush1.bf16.xpose.msra.mxu0 0
        %1481 = vmatprep.subr.bf16.mxu0 0
        %1482 = vmatpush1.bf16.xpose.msra.mxu0 0
        %1483 = vmatprep.subr.bf16.mxu0 0
        %1484 = vmatpush1.bf16.xpose.msra.mxu0 0
        %1485 = vmatprep.mubr.bf16.mxu0 0
        %1486 = vmatmul.mubr.bf16.gmra.mrb[0].mxu0 %v1448
        %v1487 = vpop.f32.mrb[0].mxu0
        %v1488 = vadd.f32 %v990, %v1487
        %v1489 = vpop.f32.mrb[0].mxu0
        %v1490 = vpop.f32.mrb[0].mxu0
        %v1491 = vpop.f32.mrb[0].mxu0
        %1492 = vdwg.mxu0
        %1493 = vrot.lane.b32.xlu0 %v980, 64
        %v1494 = vpop.permute.xlu0 %1493
        %1495 = vrot.lane.b32.xlu0 %v982, 64
        %v1496 = vpop.permute.xlu0 %1495
        %v1498 = vsel %vm997, %v1494, 0
        %v1501 = vsel %vm997, %v1496, 0
        %1503 = vmatprep.subr.bf16.mxu0 0
        %1504 = vmatpush1.bf16.xpose.msra.mxu0 %v1501
        %1505 = vmatprep.subr.bf16.mxu0 0
        %1506 = vmatpush1.bf16.xpose.msra.mxu0 0
        %1507 = vmatprep.subr.bf16.mxu0 0
        %1508 = vmatpush1.bf16.xpose.msra.mxu0 0
        %1509 = vmatprep.subr.bf16.mxu0 0
        %1510 = vmatpush1.bf16.xpose.msra.mxu0 0
        %1511 = vmatprep.subr.bf16.mxu0 0
        %1512 = vmatpush1.bf16.xpose.msra.mxu0 0
        %1513 = vmatprep.subr.bf16.mxu0 0
        %1514 = vmatpush1.bf16.xpose.msra.mxu0 0
        %1515 = vmatprep.subr.bf16.mxu0 0
        %1516 = vmatpush1.bf16.xpose.msra.mxu0 0
        %1517 = vmatprep.subr.bf16.mxu0 0
        %1518 = vmatpush1.bf16.xpose.msra.mxu0 0
        %1519 = vmatprep.subr.bf16.mxu0 0
        %1520 = vmatpush1.bf16.xpose.msra.mxu0 0
        %1521 = vmatprep.subr.bf16.mxu0 0
        %1522 = vmatpush1.bf16.xpose.msra.mxu0 0
        %1523 = vmatprep.subr.bf16.mxu0 0
        %1524 = vmatpush1.bf16.xpose.msra.mxu0 0
        %1525 = vmatprep.subr.bf16.mxu0 0
        %1526 = vmatpush1.bf16.xpose.msra.mxu0 0
        %1527 = vmatprep.subr.bf16.mxu0 0
        %1528 = vmatpush1.bf16.xpose.msra.mxu0 0
        %1529 = vmatprep.subr.bf16.mxu0 0
        %1530 = vmatpush1.bf16.xpose.msra.mxu0 0
        %1531 = vmatprep.subr.bf16.mxu0 0
        %1532 = vmatpush1.bf16.xpose.msra.mxu0 0
        %1533 = vmatprep.subr.bf16.mxu0 0
        %1534 = vmatpush1.bf16.xpose.msra.mxu0 0
        %1535 = vmatprep.mubr.bf16.mxu0 0
        %1536 = vmatmul.mubr.bf16.gmra.mrb[0].mxu0 %v1498
        %v1537 = vpop.f32.mrb[0].mxu0
        %v1538 = vadd.f32 %v994, %v1537
        %v1539 = vpop.f32.mrb[0].mxu0
        %v1540 = vpop.f32.mrb[0].mxu0
        %v1541 = vpop.f32.mrb[0].mxu0
        %1542 = vdwg.mxu0
        %v1543 = vsel %vm1090, %v1488, -inf
        %1544 = vmax.xlane.f32.xlu0 %v1543
        %v1545 = vpop.xlane.xlu0 %1544
        %v1546 = vsel %vm1090, %v1538, -inf
        %1547 = vmax.xlane.f32.xlu0 %v1546
        %v1548 = vpop.xlane.xlu0 %1547
        %v1549 = vsub.f32 %v1488, %v1545
        %v1550 = vsub.f32 %v1538, %v1548
        %v1551 = vmul.f32 %v1549, 1.442695
        %v1552 = vpow.pop %v1551
        %v1553 = vmul.f32 %v1550, 1.442695
        %v1554 = vpow.pop %v1553
        %v1555 = vsel %vm1090, %v1552, 0.0
        %1556 = vadd.xlane.f32.xlu0 %v1555
        %v1557 = vpop.xlane.xlu0 %1556
        %v1558 = vsel %vm1090, %v1554, 0.0
        %1559 = vadd.xlane.f32.xlu0 %v1558
        %v1560 = vpop.xlane.xlu0 %1559
        %v1561 = vrcp.pop %v1557
        %v1562 = vrcp.pop %v1560
        %v1563 = vmul.f32 %v1552, %v1561
        %v1564 = vmul.f32 %v1554, %v1562
        %v1565 = vpack.c.bf16 %v1563, %v1563
        %v1566 = vpack.c.bf16 %v1564, %v1564
        %1567 = vrot.lane.b32.xlu0 %v983, 64
        %v1568 = vpop.permute.xlu0 %1567
        %v1570 = vsel %vm1090, %v1565, 0
        %v1573 = vsel %vm1118, %v1568, 0
        %1575 = vmatprep.subr.bf16.mxu0 0
        %1576 = vmatpush1.bf16.msra.mxu0 %v1573
        %1577 = vmatprep.subr.bf16.mxu0 0
        %1578 = vmatpush1.bf16.msra.mxu0 0
        %1579 = vmatprep.subr.bf16.mxu0 0
        %1580 = vmatpush1.bf16.msra.mxu0 0
        %1581 = vmatprep.subr.bf16.mxu0 0
        %1582 = vmatpush1.bf16.msra.mxu0 0
        %1583 = vmatprep.subr.bf16.mxu0 0
        %1584 = vmatpush1.bf16.msra.mxu0 0
        %1585 = vmatprep.subr.bf16.mxu0 0
        %1586 = vmatpush1.bf16.msra.mxu0 0
        %1587 = vmatprep.subr.bf16.mxu0 0
        %1588 = vmatpush1.bf16.msra.mxu0 0
        %1589 = vmatprep.subr.bf16.mxu0 0
        %1590 = vmatpush1.bf16.msra.mxu0 0
        %1591 = vmatprep.subr.bf16.mxu0 0
        %1592 = vmatpush1.bf16.msra.mxu0 0
        %1593 = vmatprep.subr.bf16.mxu0 0
        %1594 = vmatpush1.bf16.msra.mxu0 0
        %1595 = vmatprep.subr.bf16.mxu0 0
        %1596 = vmatpush1.bf16.msra.mxu0 0
        %1597 = vmatprep.subr.bf16.mxu0 0
        %1598 = vmatpush1.bf16.msra.mxu0 0
        %1599 = vmatprep.subr.bf16.mxu0 0
        %1600 = vmatpush1.bf16.msra.mxu0 0
        %1601 = vmatprep.subr.bf16.mxu0 0
        %1602 = vmatpush1.bf16.msra.mxu0 0
        %1603 = vmatprep.subr.bf16.mxu0 0
        %1604 = vmatpush1.bf16.msra.mxu0 0
        %1605 = vmatprep.subr.bf16.mxu0 0
        %1606 = vmatpush1.bf16.msra.mxu0 0
        %1607 = vmatprep.mubr.bf16.mxu0 0
        %1608 = vmatmul.mubr.bf16.gmra.mrb[0].mxu0 %v1570
        %v1609 = vpop.f32.mrb[0].mxu0
        %v1610 = vadd.f32 0.0, %v1609
        %v1611 = vpop.f32.mrb[0].mxu0
        %v1612 = vpop.f32.mrb[0].mxu0
        %v1613 = vpop.f32.mrb[0].mxu0
        %1614 = vdwg.mxu0
        %1615 = vrot.lane.b32.xlu0 %v984, 64
        %v1616 = vpop.permute.xlu0 %1615
        %v1618 = vsel %vm1090, %v1566, 0
        %v1621 = vsel %vm1118, %v1616, 0
        %1623 = vmatprep.subr.bf16.mxu0 0
        %1624 = vmatpush1.bf16.msra.mxu0 %v1621
        %1625 = vmatprep.subr.bf16.mxu0 0
        %1626 = vmatpush1.bf16.msra.mxu0 0
        %1627 = vmatprep.subr.bf16.mxu0 0
        %1628 = vmatpush1.bf16.msra.mxu0 0
        %1629 = vmatprep.subr.bf16.mxu0 0
        %1630 = vmatpush1.bf16.msra.mxu0 0
        %1631 = vmatprep.subr.bf16.mxu0 0
        %1632 = vmatpush1.bf16.msra.mxu0 0
        %1633 = vmatprep.subr.bf16.mxu0 0
        %1634 = vmatpush1.bf16.msra.mxu0 0
        %1635 = vmatprep.subr.bf16.mxu0 0
        %1636 = vmatpush1.bf16.msra.mxu0 0
        %1637 = vmatprep.subr.bf16.mxu0 0
        %1638 = vmatpush1.bf16.msra.mxu0 0
        %1639 = vmatprep.subr.bf16.mxu0 0
        %1640 = vmatpush1.bf16.msra.mxu0 0
        %1641 = vmatprep.subr.bf16.mxu0 0
        %1642 = vmatpush1.bf16.msra.mxu0 0
        %1643 = vmatprep.subr.bf16.mxu0 0
        %1644 = vmatpush1.bf16.msra.mxu0 0
        %1645 = vmatprep.subr.bf16.mxu0 0
        %1646 = vmatpush1.bf16.msra.mxu0 0
        %1647 = vmatprep.subr.bf16.mxu0 0
        %1648 = vmatpush1.bf16.msra.mxu0 0
        %1649 = vmatprep.subr.bf16.mxu0 0
        %1650 = vmatpush1.bf16.msra.mxu0 0
        %1651 = vmatprep.subr.bf16.mxu0 0
        %1652 = vmatpush1.bf16.msra.mxu0 0
        %1653 = vmatprep.subr.bf16.mxu0 0
        %1654 = vmatpush1.bf16.msra.mxu0 0
        %1655 = vmatprep.mubr.bf16.mxu0 0
        %1656 = vmatmul.mubr.bf16.gmra.mrb[0].mxu0 %v1618
        %v1657 = vpop.f32.mrb[0].mxu0
        %v1658 = vadd.f32 0.0, %v1657
        %v1659 = vpop.f32.mrb[0].mxu0
        %v1660 = vpop.f32.mrb[0].mxu0
        %v1661 = vpop.f32.mrb[0].mxu0
        %1662 = vdwg.mxu0
        %v1663 = vpack.c.bf16 %v1658, %v1610
        %1665 = vrot.lane.b32.xlu0 %v1663, 64
        %v1666 = vpop.permute.xlu0 %1665
        %vm1668 = vcmask 785920
        %1669 = vst.msk [vmem:[#allocation2] sm:$0xff] %vm1668, %v1666
        %1670 = vrot.lane.b32.xlu0 %v979, 32
        %v1671 = vpop.permute.xlu0 %1670
        %1672 = vrot.lane.b32.xlu0 %v981, 32
        %v1673 = vpop.permute.xlu0 %1672
        %v1675 = vsel %vm997, %v1671, 0
        %v1678 = vsel %vm997, %v1673, 0
        %1680 = vmatprep.subr.bf16.mxu0 0
        %1681 = vmatpush1.bf16.xpose.msra.mxu0 %v1678
        %1682 = vmatprep.subr.bf16.mxu0 0
        %1683 = vmatpush1.bf16.xpose.msra.mxu0 0
        %1684 = vmatprep.subr.bf16.mxu0 0
        %1685 = vmatpush1.bf16.xpose.msra.mxu0 0
        %1686 = vmatprep.subr.bf16.mxu0 0
        %1687 = vmatpush1.bf16.xpose.msra.mxu0 0
        %1688 = vmatprep.subr.bf16.mxu0 0
        %1689 = vmatpush1.bf16.xpose.msra.mxu0 0
        %1690 = vmatprep.subr.bf16.mxu0 0
        %1691 = vmatpush1.bf16.xpose.msra.mxu0 0
        %1692 = vmatprep.subr.bf16.mxu0 0
        %1693 = vmatpush1.bf16.xpose.msra.mxu0 0
        %1694 = vmatprep.subr.bf16.mxu0 0
        %1695 = vmatpush1.bf16.xpose.msra.mxu0 0
        %1696 = vmatprep.subr.bf16.mxu0 0
        %1697 = vmatpush1.bf16.xpose.msra.mxu0 0
        %1698 = vmatprep.subr.bf16.mxu0 0
        %1699 = vmatpush1.bf16.xpose.msra.mxu0 0
        %1700 = vmatprep.subr.bf16.mxu0 0
        %1701 = vmatpush1.bf16.xpose.msra.mxu0 0
        %1702 = vmatprep.subr.bf16.mxu0 0
        %1703 = vmatpush1.bf16.xpose.msra.mxu0 0
        %1704 = vmatprep.subr.bf16.mxu0 0
        %1705 = vmatpush1.bf16.xpose.msra.mxu0 0
        %1706 = vmatprep.subr.bf16.mxu0 0
        %1707 = vmatpush1.bf16.xpose.msra.mxu0 0
        %1708 = vmatprep.subr.bf16.mxu0 0
        %1709 = vmatpush1.bf16.xpose.msra.mxu0 0
        %1710 = vmatprep.subr.bf16.mxu0 0
        %1711 = vmatpush1.bf16.xpose.msra.mxu0 0
        %1712 = vmatprep.mubr.bf16.mxu0 0
        %1713 = vmatmul.mubr.bf16.gmra.mrb[0].mxu0 %v1675
        %v1714 = vpop.f32.mrb[0].mxu0
        %v1715 = vadd.f32 %v990, %v1714
        %v1716 = vpop.f32.mrb[0].mxu0
        %v1717 = vpop.f32.mrb[0].mxu0
        %v1718 = vpop.f32.mrb[0].mxu0
        %1719 = vdwg.mxu0
        %1720 = vrot.lane.b32.xlu0 %v980, 32
        %v1721 = vpop.permute.xlu0 %1720
        %1722 = vrot.lane.b32.xlu0 %v982, 32
        %v1723 = vpop.permute.xlu0 %1722
        %v1725 = vsel %vm997, %v1721, 0
        %v1728 = vsel %vm997, %v1723, 0
        %1730 = vmatprep.subr.bf16.mxu0 0
        %1731 = vmatpush1.bf16.xpose.msra.mxu0 %v1728
        %1732 = vmatprep.subr.bf16.mxu0 0
        %1733 = vmatpush1.bf16.xpose.msra.mxu0 0
        %1734 = vmatprep.subr.bf16.mxu0 0
        %1735 = vmatpush1.bf16.xpose.msra.mxu0 0
        %1736 = vmatprep.subr.bf16.mxu0 0
        %1737 = vmatpush1.bf16.xpose.msra.mxu0 0
        %1738 = vmatprep.subr.bf16.mxu0 0
        %1739 = vmatpush1.bf16.xpose.msra.mxu0 0
        %1740 = vmatprep.subr.bf16.mxu0 0
        %1741 = vmatpush1.bf16.xpose.msra.mxu0 0
        %1742 = vmatprep.subr.bf16.mxu0 0
        %1743 = vmatpush1.bf16.xpose.msra.mxu0 0
        %1744 = vmatprep.subr.bf16.mxu0 0
        %1745 = vmatpush1.bf16.xpose.msra.mxu0 0
        %1746 = vmatprep.subr.bf16.mxu0 0
        %1747 = vmatpush1.bf16.xpose.msra.mxu0 0
        %1748 = vmatprep.subr.bf16.mxu0 0
        %1749 = vmatpush1.bf16.xpose.msra.mxu0 0
        %1750 = vmatprep.subr.bf16.mxu0 0
        %1751 = vmatpush1.bf16.xpose.msra.mxu0 0
        %1752 = vmatprep.subr.bf16.mxu0 0
        %1753 = vmatpush1.bf16.xpose.msra.mxu0 0
        %1754 = vmatprep.subr.bf16.mxu0 0
        %1755 = vmatpush1.bf16.xpose.msra.mxu0 0
        %1756 = vmatprep.subr.bf16.mxu0 0
        %1757 = vmatpush1.bf16.xpose.msra.mxu0 0
        %1758 = vmatprep.subr.bf16.mxu0 0
        %1759 = vmatpush1.bf16.xpose.msra.mxu0 0
        %1760 = vmatprep.subr.bf16.mxu0 0
        %1761 = vmatpush1.bf16.xpose.msra.mxu0 0
        %1762 = vmatprep.mubr.bf16.mxu0 0
        %1763 = vmatmul.mubr.bf16.gmra.mrb[0].mxu0 %v1725
        %v1764 = vpop.f32.mrb[0].mxu0
        %v1765 = vadd.f32 %v994, %v1764
        %v1766 = vpop.f32.mrb[0].mxu0
        %v1767 = vpop.f32.mrb[0].mxu0
        %v1768 = vpop.f32.mrb[0].mxu0
        %1769 = vdwg.mxu0
        %v1770 = vsel %vm1090, %v1715, -inf
        %1771 = vmax.xlane.f32.xlu0 %v1770
        %v1772 = vpop.xlane.xlu0 %1771
        %v1773 = vsel %vm1090, %v1765, -inf
        %1774 = vmax.xlane.f32.xlu0 %v1773
        %v1775 = vpop.xlane.xlu0 %1774
        %v1776 = vsub.f32 %v1715, %v1772
        %v1777 = vsub.f32 %v1765, %v1775
        %v1778 = vmul.f32 %v1776, 1.442695
        %v1779 = vpow.pop %v1778
        %v1780 = vmul.f32 %v1777, 1.442695
        %v1781 = vpow.pop %v1780
        %v1782 = vsel %vm1090, %v1779, 0.0
        %1783 = vadd.xlane.f32.xlu0 %v1782
        %v1784 = vpop.xlane.xlu0 %1783
        %v1785 = vsel %vm1090, %v1781, 0.0
        %1786 = vadd.xlane.f32.xlu0 %v1785
        %v1787 = vpop.xlane.xlu0 %1786
        %v1788 = vrcp.pop %v1784
        %v1789 = vrcp.pop %v1787
        %v1790 = vmul.f32 %v1779, %v1788
        %v1791 = vmul.f32 %v1781, %v1789
        %v1792 = vpack.c.bf16 %v1790, %v1790
        %v1793 = vpack.c.bf16 %v1791, %v1791
        %1794 = vrot.lane.b32.xlu0 %v983, 32
        %v1795 = vpop.permute.xlu0 %1794
        %v1797 = vsel %vm1090, %v1792, 0
        %v1800 = vsel %vm1118, %v1795, 0
        %1802 = vmatprep.subr.bf16.mxu0 0
        %1803 = vmatpush1.bf16.msra.mxu0 %v1800
        %1804 = vmatprep.subr.bf16.mxu0 0
        %1805 = vmatpush1.bf16.msra.mxu0 0
        %1806 = vmatprep.subr.bf16.mxu0 0
        %1807 = vmatpush1.bf16.msra.mxu0 0
        %1808 = vmatprep.subr.bf16.mxu0 0
        %1809 = vmatpush1.bf16.msra.mxu0 0
        %1810 = vmatprep.subr.bf16.mxu0 0
        %1811 = vmatpush1.bf16.msra.mxu0 0
        %1812 = vmatprep.subr.bf16.mxu0 0
        %1813 = vmatpush1.bf16.msra.mxu0 0
        %1814 = vmatprep.subr.bf16.mxu0 0
        %1815 = vmatpush1.bf16.msra.mxu0 0
        %1816 = vmatprep.subr.bf16.mxu0 0
        %1817 = vmatpush1.bf16.msra.mxu0 0
        %1818 = vmatprep.subr.bf16.mxu0 0
        %1819 = vmatpush1.bf16.msra.mxu0 0
        %1820 = vmatprep.subr.bf16.mxu0 0
        %1821 = vmatpush1.bf16.msra.mxu0 0
        %1822 = vmatprep.subr.bf16.mxu0 0
        %1823 = vmatpush1.bf16.msra.mxu0 0
        %1824 = vmatprep.subr.bf16.mxu0 0
        %1825 = vmatpush1.bf16.msra.mxu0 0
        %1826 = vmatprep.subr.bf16.mxu0 0
        %1827 = vmatpush1.bf16.msra.mxu0 0
        %1828 = vmatprep.subr.bf16.mxu0 0
        %1829 = vmatpush1.bf16.msra.mxu0 0
        %1830 = vmatprep.subr.bf16.mxu0 0
        %1831 = vmatpush1.bf16.msra.mxu0 0
        %1832 = vmatprep.subr.bf16.mxu0 0
        %1833 = vmatpush1.bf16.msra.mxu0 0
        %1834 = vmatprep.mubr.bf16.mxu0 0
        %1835 = vmatmul.mubr.bf16.gmra.mrb[0].mxu0 %v1797
        %v1836 = vpop.f32.mrb[0].mxu0
        %v1837 = vadd.f32 0.0, %v1836
        %v1838 = vpop.f32.mrb[0].mxu0
        %v1839 = vpop.f32.mrb[0].mxu0
        %v1840 = vpop.f32.mrb[0].mxu0
        %1841 = vdwg.mxu0
        %1842 = vrot.lane.b32.xlu0 %v984, 32
        %v1843 = vpop.permute.xlu0 %1842
        %v1845 = vsel %vm1090, %v1793, 0
        %v1848 = vsel %vm1118, %v1843, 0
        %1850 = vmatprep.subr.bf16.mxu0 0
        %1851 = vmatpush1.bf16.msra.mxu0 %v1848
        %1852 = vmatprep.subr.bf16.mxu0 0
        %1853 = vmatpush1.bf16.msra.mxu0 0
        %1854 = vmatprep.subr.bf16.mxu0 0
        %1855 = vmatpush1.bf16.msra.mxu0 0
        %1856 = vmatprep.subr.bf16.mxu0 0
        %1857 = vmatpush1.bf16.msra.mxu0 0
        %1858 = vmatprep.subr.bf16.mxu0 0
        %1859 = vmatpush1.bf16.msra.mxu0 0
        %1860 = vmatprep.subr.bf16.mxu0 0
        %1861 = vmatpush1.bf16.msra.mxu0 0
        %1862 = vmatprep.subr.bf16.mxu0 0
        %1863 = vmatpush1.bf16.msra.mxu0 0
        %1864 = vmatprep.subr.bf16.mxu0 0
        %1865 = vmatpush1.bf16.msra.mxu0 0
        %1866 = vmatprep.subr.bf16.mxu0 0
        %1867 = vmatpush1.bf16.msra.mxu0 0
        %1868 = vmatprep.subr.bf16.mxu0 0
        %1869 = vmatpush1.bf16.msra.mxu0 0
        %1870 = vmatprep.subr.bf16.mxu0 0
        %1871 = vmatpush1.bf16.msra.mxu0 0
        %1872 = vmatprep.subr.bf16.mxu0 0
        %1873 = vmatpush1.bf16.msra.mxu0 0
        %1874 = vmatprep.subr.bf16.mxu0 0
        %1875 = vmatpush1.bf16.msra.mxu0 0
        %1876 = vmatprep.subr.bf16.mxu0 0
        %1877 = vmatpush1.bf16.msra.mxu0 0
        %1878 = vmatprep.subr.bf16.mxu0 0
        %1879 = vmatpush1.bf16.msra.mxu0 0
        %1880 = vmatprep.subr.bf16.mxu0 0
        %1881 = vmatpush1.bf16.msra.mxu0 0
        %1882 = vmatprep.mubr.bf16.mxu0 0
        %1883 = vmatmul.mubr.bf16.gmra.mrb[0].mxu0 %v1845
        %v1884 = vpop.f32.mrb[0].mxu0
        %v1885 = vadd.f32 0.0, %v1884
        %v1886 = vpop.f32.mrb[0].mxu0
        %v1887 = vpop.f32.mrb[0].mxu0
        %v1888 = vpop.f32.mrb[0].mxu0
        %1889 = vdwg.mxu0
        %v1890 = vpack.c.bf16 %v1885, %v1837
        %1892 = vrot.lane.b32.xlu0 %v1890, 96
        %v1893 = vpop.permute.xlu0 %1892
        %vm1895 = vcmask 1048320
        %1896 = vst.msk [vmem:[#allocation2] sm:$0xff] %vm1895, %v1893
        %v1897 = vld [vmem:[#allocation2] sm:$0xff]
        %v1898 = vld [vmem:[#allocation9] sm:$0xf]
        %v1899 = vld [vmem:[#allocation9 + $0x4] sm:$0xf]
        %v1900 = vld [vmem:[#allocation9 + $0x8] sm:$0xf]
        %v1901 = vld [vmem:[#allocation9 + $0xc] sm:$0xf]
        %v1902 = vld [vmem:[#allocation9 + $0x10] sm:$0xf]
        %v1903 = vld [vmem:[#allocation9 + $0x14] sm:$0xf]
        %v1904 = vld [vmem:[#allocation9 + $0x18] sm:$0xf]
        %v1905 = vld [vmem:[#allocation9 + $0x1c] sm:$0xf]
        %v1906 = vld [vmem:[#allocation9 + $0x20] sm:$0xf]
        %v1907 = vld [vmem:[#allocation9 + $0x24] sm:$0xf]
        %v1908 = vld [vmem:[#allocation9 + $0x28] sm:$0xf]
        %v1909 = vld [vmem:[#allocation9 + $0x2c] sm:$0xf]
        %v1910 = vld [vmem:[#allocation9 + $0x30] sm:$0xf]
        %v1911 = vld [vmem:[#allocation9 + $0x34] sm:$0xf]
        %v1912 = vld [vmem:[#allocation9 + $0x38] sm:$0xf]
        %v1913 = vld [vmem:[#allocation9 + $0x3c] sm:$0xf]
        %v1914 = vlaneseq
        %v1915 = vshrl.u32 %v1914, 7
        %v1916 = vsub.s32 0, %v1915
        %v1917 = vrot.slane %v697, %v1916
        %v1934 = vunpack.c.l.b16 %v1898
        %v1935 = vunpack.c.l.b16 %v1899
        %v1936 = vunpack.c.l.b16 %v1900
        %v1937 = vunpack.c.l.b16 %v1901
        %v1938 = vunpack.c.l.b16 %v1902
        %v1939 = vunpack.c.l.b16 %v1903
        %v1940 = vunpack.c.l.b16 %v1904
        %v1941 = vunpack.c.l.b16 %v1905
        %v1942 = vunpack.c.l.b16 %v1906
        %v1943 = vunpack.c.l.b16 %v1907
        %v1944 = vunpack.c.l.b16 %v1908
        %v1945 = vunpack.c.l.b16 %v1909
        %v1946 = vunpack.c.l.b16 %v1910
        %v1947 = vunpack.c.l.b16 %v1911
        %v1948 = vunpack.c.l.b16 %v1912
        %v1949 = vunpack.c.l.b16 %v1913
        %v1950 = vpack.c.b16 %v1935, %v1934
        %v1951 = vpack.c.b16 %v1937, %v1936
        %v1952 = vpack.c.b16 %v1939, %v1938
        %v1953 = vpack.c.b16 %v1941, %v1940
        %v1954 = vpack.c.b16 %v1943, %v1942
        %v1955 = vpack.c.b16 %v1945, %v1944
        %v1956 = vpack.c.b16 %v1947, %v1946
        %v1957 = vpack.c.b16 %v1949, %v1948
        %1966 = vmatprep.subr.bf16.mxu0 0
        %1967 = vmatpush1.bf16.msra.mxu0 %v1950
        %1968 = vmatprep.subr.bf16.mxu0 0
        %1969 = vmatpush1.bf16.msra.mxu0 %v1951
        %1970 = vmatprep.subr.bf16.mxu0 0
        %1971 = vmatpush1.bf16.msra.mxu0 %v1952
        %1972 = vmatprep.subr.bf16.mxu0 0
        %1973 = vmatpush1.bf16.msra.mxu0 %v1953
        %1974 = vmatprep.subr.bf16.mxu0 0
        %1975 = vmatpush1.bf16.msra.mxu0 %v1954
        %1976 = vmatprep.subr.bf16.mxu0 0
        %1977 = vmatpush1.bf16.msra.mxu0 %v1955
        %1978 = vmatprep.subr.bf16.mxu0 0
        %1979 = vmatpush1.bf16.msra.mxu0 %v1956
        %1980 = vmatprep.subr.bf16.mxu0 0
        %1981 = vmatpush1.bf16.msra.mxu0 %v1957
        %1982 = vmatprep.subr.bf16.mxu0 0
        %1983 = vmatpush1.bf16.msra.mxu0 0
        %1984 = vmatprep.subr.bf16.mxu0 0
        %1985 = vmatpush1.bf16.msra.mxu0 0
        %1986 = vmatprep.subr.bf16.mxu0 0
        %1987 = vmatpush1.bf16.msra.mxu0 0
        %1988 = vmatprep.subr.bf16.mxu0 0
        %1989 = vmatpush1.bf16.msra.mxu0 0
        %1990 = vmatprep.subr.bf16.mxu0 0
        %1991 = vmatpush1.bf16.msra.mxu0 0
        %1992 = vmatprep.subr.bf16.mxu0 0
        %1993 = vmatpush1.bf16.msra.mxu0 0
        %1994 = vmatprep.subr.bf16.mxu0 0
        %1995 = vmatpush1.bf16.msra.mxu0 0
        %1996 = vmatprep.subr.bf16.mxu0 0
        %1997 = vmatpush1.bf16.msra.mxu0 0
        %1998 = vmatprep.mubr.bf16.mxu0 0
        %1999 = vmatmul.mubr.bf16.gmra.mrb[0].mxu0 %v1897
        %v2000 = vpop.f32.mrb[0].mxu0
        %v2001 = vadd.f32 %v1917, %v2000
        %v2002 = vpop.f32.mrb[0].mxu0
        %v2003 = vpop.f32.mrb[0].mxu0
        %v2004 = vadd.f32 %v1917, %v2003
        %v2005 = vpop.f32.mrb[0].mxu0
        %2006 = vdwg.mxu0
        %v2007 = vadd.f32 %v699, %v2001
        %v2008 = vadd.f32 %v700, %v2004
        %2009 = vadd.xlane.f32.xlu0 %v2007
        %v2010 = vpop.xlane.xlu0 %2009
        %2011 = vadd.xlane.f32.xlu0 %v2008
        %v2012 = vpop.xlane.xlu0 %2011
        %v2013 = vrcp.pop 128.0
        %v2014 = vmul.f32 %v2010, %v2013
        %v2015 = vmul.f32 %v2012, %v2013
        %v2016 = vsub.f32 %v2007, %v2014
        %v2017 = vsub.f32 %v2008, %v2015
        %v2018 = vmul.f32 %v2016, %v2016
        %v2019 = vmul.f32 %v2017, %v2017
        %2020 = vadd.xlane.f32.xlu0 %v2018
        %v2021 = vpop.xlane.xlu0 %2020
        %2022 = vadd.xlane.f32.xlu0 %v2019
        %v2023 = vpop.xlane.xlu0 %2022
        %v2024 = vmul.f32 %v2021, 0.007874016
        %v2025 = vmul.f32 %v2023, 0.007874016
        %v2026 = vrsqrt.pop %v2024
        %v2027 = vmul.f32 %v2024, %v2026
        %vm2028 = vcmp.eq.f32.partialorder %v2024, inf
        %v2029 = vsel %vm2028, %v2024, %v2027
        %vm2030 = vcmp.eq.f32.partialorder %v2024, 0.0
        %v2031 = vand.u32 %v2024, 2147483648
        %v2032 = vsel %vm2030, %v2031, %v2029
        %v2033 = vrsqrt.pop %v2025
        %v2034 = vmul.f32 %v2025, %v2033
        %vm2035 = vcmp.eq.f32.partialorder %v2025, inf
        %v2036 = vsel %vm2035, %v2025, %v2034
        %vm2037 = vcmp.eq.f32.partialorder %v2025, 0.0
        %v2038 = vand.u32 %v2025, 2147483648
        %v2039 = vsel %vm2037, %v2038, %v2036
        %v2040 = vadd.f32 %v2032, 1e-06
        %v2041 = vadd.f32 %v2039, 1e-06
        %v2042 = vrcp.pop %v2040
        %v2043 = vmul.f32 1.0, %v2042
        %v2044 = vrcp.pop %v2041
        %v2045 = vmul.f32 1.0, %v2044
        %v2046 = vmul.f32 %v2016, %v2043
        %v2047 = vmul.f32 %v2017, %v2045
        %v2048 = vlaneseq
        %v2049 = vshrl.u32 %v2048, 7
        %v2050 = vsub.s32 4, %v2049
        %v2051 = vrot.slane %v697, %v2050
        %v2052 = vmul.f32 %v2051, %v2046
        %v2053 = vmul.f32 %v2051, %v2047
        %v2054 = vlaneseq
        %v2055 = vshrl.u32 %v2054, 7
        %v2056 = vsub.s32 5, %v2055
        %v2057 = vrot.slane %v697, %v2056
        %v2058 = vadd.f32 %v2052, %v2057
        %v2059 = vadd.f32 %v2053, %v2057
        %v2060 = vpack.c.bf16 %v2059, %v2058
        %v2061 = vld [vmem:[#allocation11] sm:$0xf]
        %v2062 = vld [vmem:[#allocation11 + $0x4] sm:$0xf]
        %v2063 = vld [vmem:[#allocation11 + $0x8] sm:$0xf]
        %v2064 = vld [vmem:[#allocation11 + $0xc] sm:$0xf]
        %v2065 = vld [vmem:[#allocation11 + $0x10] sm:$0xf]
        %v2066 = vld [vmem:[#allocation11 + $0x14] sm:$0xf]
        %v2067 = vld [vmem:[#allocation11 + $0x18] sm:$0xf]
        %v2068 = vld [vmem:[#allocation11 + $0x1c] sm:$0xf]
        %v2069 = vld [vmem:[#allocation11 + $0x20] sm:$0xf]
        %v2070 = vld [vmem:[#allocation11 + $0x24] sm:$0xf]
        %v2071 = vld [vmem:[#allocation11 + $0x28] sm:$0xf]
        %v2072 = vld [vmem:[#allocation11 + $0x2c] sm:$0xf]
        %v2073 = vld [vmem:[#allocation11 + $0x30] sm:$0xf]
        %v2074 = vld [vmem:[#allocation11 + $0x34] sm:$0xf]
        %v2075 = vld [vmem:[#allocation11 + $0x38] sm:$0xf]
        %v2076 = vld [vmem:[#allocation11 + $0x3c] sm:$0xf]
        %v2077 = vlaneseq
        %v2078 = vshrl.u32 %v2077, 7
        %v2079 = vsub.s32 1, %v2078
        %v2080 = vrot.slane %v697, %v2079
        %v2097 = vunpack.c.l.b16 %v2061
        %v2098 = vunpack.c.l.b16 %v2062
        %v2099 = vunpack.c.l.b16 %v2063
        %v2100 = vunpack.c.l.b16 %v2064
        %v2101 = vunpack.c.l.b16 %v2065
        %v2102 = vunpack.c.l.b16 %v2066
        %v2103 = vunpack.c.l.b16 %v2067
        %v2104 = vunpack.c.l.b16 %v2068
        %v2105 = vunpack.c.l.b16 %v2069
        %v2106 = vunpack.c.l.b16 %v2070
        %v2107 = vunpack.c.l.b16 %v2071
        %v2108 = vunpack.c.l.b16 %v2072
        %v2109 = vunpack.c.l.b16 %v2073
        %v2110 = vunpack.c.l.b16 %v2074
        %v2111 = vunpack.c.l.b16 %v2075
        %v2112 = vunpack.c.l.b16 %v2076
        %v2113 = vpack.c.b16 %v2098, %v2097
        %v2114 = vpack.c.b16 %v2100, %v2099
        %v2115 = vpack.c.b16 %v2102, %v2101
        %v2116 = vpack.c.b16 %v2104, %v2103
        %v2117 = vpack.c.b16 %v2106, %v2105
        %v2118 = vpack.c.b16 %v2108, %v2107
        %v2119 = vpack.c.b16 %v2110, %v2109
        %v2120 = vpack.c.b16 %v2112, %v2111
        %2129 = vmatprep.subr.bf16.mxu0 0
        %2130 = vmatpush1.bf16.msra.mxu0 %v2113
        %2131 = vmatprep.subr.bf16.mxu0 0
        %2132 = vmatpush1.bf16.msra.mxu0 %v2114
        %2133 = vmatprep.subr.bf16.mxu0 0
        %2134 = vmatpush1.bf16.msra.mxu0 %v2115
        %2135 = vmatprep.subr.bf16.mxu0 0
        %2136 = vmatpush1.bf16.msra.mxu0 %v2116
        %2137 = vmatprep.subr.bf16.mxu0 0
        %2138 = vmatpush1.bf16.msra.mxu0 %v2117
        %2139 = vmatprep.subr.bf16.mxu0 0
        %2140 = vmatpush1.bf16.msra.mxu0 %v2118
        %2141 = vmatprep.subr.bf16.mxu0 0
        %2142 = vmatpush1.bf16.msra.mxu0 %v2119
        %2143 = vmatprep.subr.bf16.mxu0 0
        %2144 = vmatpush1.bf16.msra.mxu0 %v2120
        %2145 = vmatprep.subr.bf16.mxu0 0
        %2146 = vmatpush1.bf16.msra.mxu0 0
        %2147 = vmatprep.subr.bf16.mxu0 0
        %2148 = vmatpush1.bf16.msra.mxu0 0
        %2149 = vmatprep.subr.bf16.mxu0 0
        %2150 = vmatpush1.bf16.msra.mxu0 0
        %2151 = vmatprep.subr.bf16.mxu0 0
        %2152 = vmatpush1.bf16.msra.mxu0 0
        %2153 = vmatprep.subr.bf16.mxu0 0
        %2154 = vmatpush1.bf16.msra.mxu0 0
        %2155 = vmatprep.subr.bf16.mxu0 0
        %2156 = vmatpush1.bf16.msra.mxu0 0
        %2157 = vmatprep.subr.bf16.mxu0 0
        %2158 = vmatpush1.bf16.msra.mxu0 0
        %2159 = vmatprep.subr.bf16.mxu0 0
        %2160 = vmatpush1.bf16.msra.mxu0 0
        %2161 = vmatprep.mubr.bf16.mxu0 0
        %2162 = vmatmul.mubr.bf16.gmra.mrb[0].mxu0 %v2060
        %v2163 = vpop.f32.mrb[0].mxu0
        %v2164 = vadd.f32 %v2080, %v2163
        %v2165 = vpop.f32.mrb[0].mxu0
        %v2166 = vpop.f32.mrb[0].mxu0
        %v2167 = vadd.f32 %v2080, %v2166
        %v2168 = vpop.f32.mrb[0].mxu0
        %2169 = vdwg.mxu0
        %v2170 = vld [vmem:[%s9] sm:$0x3]
        %v2171 = vpack.c.bf16 %v702, %v701
        %v2172 = vpack.c.bf16 %v704, %v703
        %v2173 = vld [vmem:[#allocation12] sm:$0xff]
        %v2174 = vld [vmem:[#allocation12 + $0x8] sm:$0xff]
        %v2175 = vld [vmem:[#allocation12 + $0x10] sm:$0xff]
        %v2176 = vld [vmem:[#allocation12 + $0x18] sm:$0xff]
        %v2177 = vld [vmem:[#allocation12 + $0x20] sm:$0xff]
        %v2178 = vld [vmem:[#allocation12 + $0x28] sm:$0xff]
        %v2179 = vld [vmem:[#allocation12 + $0x30] sm:$0xff]
        %v2180 = vld [vmem:[#allocation12 + $0x38] sm:$0xff]
        %v2181 = vld [vmem:[#allocation12 + $0x40] sm:$0xff]
        %v2182 = vld [vmem:[#allocation12 + $0x48] sm:$0xff]
        %v2183 = vld [vmem:[#allocation12 + $0x50] sm:$0xff]
        %v2184 = vld [vmem:[#allocation12 + $0x58] sm:$0xff]
        %v2185 = vld [vmem:[#allocation12 + $0x60] sm:$0xff]
        %v2186 = vld [vmem:[#allocation12 + $0x68] sm:$0xff]
        %v2187 = vld [vmem:[#allocation12 + $0x70] sm:$0xff]
        %v2188 = vld [vmem:[#allocation12 + $0x78] sm:$0xff]
        %v2190 = vlaneseq
        %v2191 = vshrl.u32 %v2190, 7
        %v2192 = vsub.s32 0, %v2191
        %v2193 = vrot.slane %v2170, %v2192
        %v2194 = vlaneseq
        %v2195 = vshrl.u32 %v2194, 7
        %v2196 = vsub.s32 1, %v2195
        %v2197 = vrot.slane %v2170, %v2196
        %v2216 = vunpack.c.l.b16 %v2173
        %v2217 = vunpack.c.h.b16 %v2173
        %v2218 = vunpack.c.l.b16 %v2174
        %v2219 = vunpack.c.h.b16 %v2174
        %v2220 = vunpack.c.l.b16 %v2175
        %v2221 = vunpack.c.h.b16 %v2175
        %v2222 = vunpack.c.l.b16 %v2176
        %v2223 = vunpack.c.h.b16 %v2176
        %v2224 = vunpack.c.l.b16 %v2177
        %v2225 = vunpack.c.h.b16 %v2177
        %v2226 = vunpack.c.l.b16 %v2178
        %v2227 = vunpack.c.h.b16 %v2178
        %v2228 = vunpack.c.l.b16 %v2179
        %v2229 = vunpack.c.h.b16 %v2179
        %v2230 = vunpack.c.l.b16 %v2180
        %v2231 = vunpack.c.h.b16 %v2180
        %v2232 = vunpack.c.l.b16 %v2181
        %v2233 = vunpack.c.h.b16 %v2181
        %v2234 = vunpack.c.l.b16 %v2182
        %v2235 = vunpack.c.h.b16 %v2182
        %v2236 = vunpack.c.l.b16 %v2183
        %v2237 = vunpack.c.h.b16 %v2183
        %v2238 = vunpack.c.l.b16 %v2184
        %v2239 = vunpack.c.h.b16 %v2184
        %v2240 = vunpack.c.l.b16 %v2185
        %v2241 = vunpack.c.h.b16 %v2185
        %v2242 = vunpack.c.l.b16 %v2186
        %v2243 = vunpack.c.h.b16 %v2186
        %v2244 = vunpack.c.l.b16 %v2187
        %v2245 = vunpack.c.h.b16 %v2187
        %v2246 = vunpack.c.l.b16 %v2188
        %v2247 = vunpack.c.h.b16 %v2188
        %v2248 = vpack.c.b16 %v2218, %v2216
        %v2249 = vpack.c.b16 %v2219, %v2217
        %v2250 = vpack.c.b16 %v2222, %v2220
        %v2251 = vpack.c.b16 %v2223, %v2221
        %v2252 = vpack.c.b16 %v2226, %v2224
        %v2253 = vpack.c.b16 %v2227, %v2225
        %v2254 = vpack.c.b16 %v2230, %v2228
        %v2255 = vpack.c.b16 %v2231, %v2229
        %v2256 = vpack.c.b16 %v2234, %v2232
        %v2257 = vpack.c.b16 %v2235, %v2233
        %v2258 = vpack.c.b16 %v2238, %v2236
        %v2259 = vpack.c.b16 %v2239, %v2237
        %v2260 = vpack.c.b16 %v2242, %v2240
        %v2261 = vpack.c.b16 %v2243, %v2241
        %v2262 = vpack.c.b16 %v2246, %v2244
        %v2263 = vpack.c.b16 %v2247, %v2245
        %2280 = vmatprep.subr.bf16.mxu0 %v2249
        %2281 = vmatpush1.bf16.msra.mxu0 %v2248
        %2282 = vmatprep.subr.bf16.mxu0 %v2251
        %2283 = vmatpush1.bf16.msra.mxu0 %v2250
        %2284 = vmatprep.subr.bf16.mxu0 %v2253
        %2285 = vmatpush1.bf16.msra.mxu0 %v2252
        %2286 = vmatprep.subr.bf16.mxu0 %v2255
        %2287 = vmatpush1.bf16.msra.mxu0 %v2254
        %2288 = vmatprep.subr.bf16.mxu0 %v2257
        %2289 = vmatpush1.bf16.msra.mxu0 %v2256
        %2290 = vmatprep.subr.bf16.mxu0 %v2259
        %2291 = vmatpush1.bf16.msra.mxu0 %v2258
        %2292 = vmatprep.subr.bf16.mxu0 %v2261
        %2293 = vmatpush1.bf16.msra.mxu0 %v2260
        %2294 = vmatprep.subr.bf16.mxu0 %v2263
        %2295 = vmatpush1.bf16.msra.mxu0 %v2262
        %2296 = vmatprep.subr.bf16.mxu0 0
        %2297 = vmatpush1.bf16.msra.mxu0 0
        %2298 = vmatprep.subr.bf16.mxu0 0
        %2299 = vmatpush1.bf16.msra.mxu0 0
        %2300 = vmatprep.subr.bf16.mxu0 0
        %2301 = vmatpush1.bf16.msra.mxu0 0
        %2302 = vmatprep.subr.bf16.mxu0 0
        %2303 = vmatpush1.bf16.msra.mxu0 0
        %2304 = vmatprep.subr.bf16.mxu0 0
        %2305 = vmatpush1.bf16.msra.mxu0 0
        %2306 = vmatprep.subr.bf16.mxu0 0
        %2307 = vmatpush1.bf16.msra.mxu0 0
        %2308 = vmatprep.subr.bf16.mxu0 0
        %2309 = vmatpush1.bf16.msra.mxu0 0
        %2310 = vmatprep.subr.bf16.mxu0 0
        %2311 = vmatpush1.bf16.msra.mxu0 0
        %2312 = vmatprep.mubr.bf16.mxu0 0
        %2313 = vmatmul.mubr.bf16.gmra.mrb[0].mxu0 %v2171
        %v2314 = vpop.f32.mrb[0].mxu0
        %v2315 = vadd.f32 %v2193, %v2314
        %v2316 = vpop.f32.mrb[0].mxu0
        %v2317 = vadd.f32 %v2197, %v2316
        %v2318 = vpop.f32.mrb[0].mxu0
        %v2319 = vadd.f32 %v2193, %v2318
        %v2320 = vpop.f32.mrb[0].mxu0
        %v2321 = vadd.f32 %v2197, %v2320
        %2322 = vmatprep.mubr.bf16.mxu0 0
        %2323 = vmatmul.mubr.bf16.gmra.mrb[0].mxu0 %v2172
        %v2324 = vpop.f32.mrb[0].mxu0
        %v2325 = vadd.f32 %v2193, %v2324
        %v2326 = vpop.f32.mrb[0].mxu0
        %v2327 = vadd.f32 %v2197, %v2326
        %v2328 = vpop.f32.mrb[0].mxu0
        %v2329 = vadd.f32 %v2193, %v2328
        %v2330 = vpop.f32.mrb[0].mxu0
        %v2331 = vadd.f32 %v2197, %v2330
        %2332 = vdwg.mxu0
        %v2333 = vpack.c.bf16 %v2164, %v2164
        %v2334 = vpack.c.bf16 %v2167, %v2167
        %v2335 = vpack.c.bf16 %v2319, %v2315
        %v2336 = vpack.c.bf16 %v2329, %v2325
        %v2337 = vpack.c.bf16 %v2321, %v2317
        %v2338 = vpack.c.bf16 %v2331, %v2327
        %v2341 = vlaneseq
        %v2342 = vshrl.u32 %v2341, 7
        %v2343 = vsub.s32 0, %v2342
        %v2344 = vrot.slane %v715, %v2343
        %v2345 = vlaneseq
        %v2346 = vshrl.u32 %v2345, 7
        %v2347 = vsub.s32 0, %v2346
        %v2348 = vrot.slane %v716, %v2347
        %v2352 = vsel %vm997, %v2333, 0
        %v2355 = vsel %vm997, %v2335, 0
        %2357 = vmatprep.subr.bf16.mxu0 0
        %2358 = vmatpush1.bf16.xpose.msra.mxu0 %v2355
        %2359 = vmatprep.subr.bf16.mxu0 0
        %2360 = vmatpush1.bf16.xpose.msra.mxu0 0
        %2361 = vmatprep.subr.bf16.mxu0 0
        %2362 = vmatpush1.bf16.xpose.msra.mxu0 0
        %2363 = vmatprep.subr.bf16.mxu0 0
        %2364 = vmatpush1.bf16.xpose.msra.mxu0 0
        %2365 = vmatprep.subr.bf16.mxu0 0
        %2366 = vmatpush1.bf16.xpose.msra.mxu0 0
        %2367 = vmatprep.subr.bf16.mxu0 0
        %2368 = vmatpush1.bf16.xpose.msra.mxu0 0
        %2369 = vmatprep.subr.bf16.mxu0 0
        %2370 = vmatpush1.bf16.xpose.msra.mxu0 0
        %2371 = vmatprep.subr.bf16.mxu0 0
        %2372 = vmatpush1.bf16.xpose.msra.mxu0 0
        %2373 = vmatprep.subr.bf16.mxu0 0
        %2374 = vmatpush1.bf16.xpose.msra.mxu0 0
        %2375 = vmatprep.subr.bf16.mxu0 0
        %2376 = vmatpush1.bf16.xpose.msra.mxu0 0
        %2377 = vmatprep.subr.bf16.mxu0 0
        %2378 = vmatpush1.bf16.xpose.msra.mxu0 0
        %2379 = vmatprep.subr.bf16.mxu0 0
        %2380 = vmatpush1.bf16.xpose.msra.mxu0 0
        %2381 = vmatprep.subr.bf16.mxu0 0
        %2382 = vmatpush1.bf16.xpose.msra.mxu0 0
        %2383 = vmatprep.subr.bf16.mxu0 0
        %2384 = vmatpush1.bf16.xpose.msra.mxu0 0
        %2385 = vmatprep.subr.bf16.mxu0 0
        %2386 = vmatpush1.bf16.xpose.msra.mxu0 0
        %2387 = vmatprep.subr.bf16.mxu0 0
        %2388 = vmatpush1.bf16.xpose.msra.mxu0 0
        %2389 = vmatprep.mubr.bf16.mxu0 0
        %2390 = vmatmul.mubr.bf16.gmra.mrb[0].mxu0 %v2352
        %v2391 = vpop.f32.mrb[0].mxu0
        %v2392 = vadd.f32 %v2344, %v2391
        %v2393 = vpop.f32.mrb[0].mxu0
        %v2394 = vpop.f32.mrb[0].mxu0
        %v2395 = vpop.f32.mrb[0].mxu0
        %2396 = vdwg.mxu0
        %v2398 = vsel %vm997, %v2334, 0
        %v2401 = vsel %vm997, %v2336, 0
        %2403 = vmatprep.subr.bf16.mxu0 0
        %2404 = vmatpush1.bf16.xpose.msra.mxu0 %v2401
        %2405 = vmatprep.subr.bf16.mxu0 0
        %2406 = vmatpush1.bf16.xpose.msra.mxu0 0
        %2407 = vmatprep.subr.bf16.mxu0 0
        %2408 = vmatpush1.bf16.xpose.msra.mxu0 0
        %2409 = vmatprep.subr.bf16.mxu0 0
        %2410 = vmatpush1.bf16.xpose.msra.mxu0 0
        %2411 = vmatprep.subr.bf16.mxu0 0
        %2412 = vmatpush1.bf16.xpose.msra.mxu0 0
        %2413 = vmatprep.subr.bf16.mxu0 0
        %2414 = vmatpush1.bf16.xpose.msra.mxu0 0
        %2415 = vmatprep.subr.bf16.mxu0 0
        %2416 = vmatpush1.bf16.xpose.msra.mxu0 0
        %2417 = vmatprep.subr.bf16.mxu0 0
        %2418 = vmatpush1.bf16.xpose.msra.mxu0 0
        %2419 = vmatprep.subr.bf16.mxu0 0
        %2420 = vmatpush1.bf16.xpose.msra.mxu0 0
        %2421 = vmatprep.subr.bf16.mxu0 0
        %2422 = vmatpush1.bf16.xpose.msra.mxu0 0
        %2423 = vmatprep.subr.bf16.mxu0 0
        %2424 = vmatpush1.bf16.xpose.msra.mxu0 0
        %2425 = vmatprep.subr.bf16.mxu0 0
        %2426 = vmatpush1.bf16.xpose.msra.mxu0 0
        %2427 = vmatprep.subr.bf16.mxu0 0
        %2428 = vmatpush1.bf16.xpose.msra.mxu0 0
        %2429 = vmatprep.subr.bf16.mxu0 0
        %2430 = vmatpush1.bf16.xpose.msra.mxu0 0
        %2431 = vmatprep.subr.bf16.mxu0 0
        %2432 = vmatpush1.bf16.xpose.msra.mxu0 0
        %2433 = vmatprep.subr.bf16.mxu0 0
        %2434 = vmatpush1.bf16.xpose.msra.mxu0 0
        %2435 = vmatprep.mubr.bf16.mxu0 0
        %2436 = vmatmul.mubr.bf16.gmra.mrb[0].mxu0 %v2398
        %v2437 = vpop.f32.mrb[0].mxu0
        %v2438 = vadd.f32 %v2348, %v2437
        %v2439 = vpop.f32.mrb[0].mxu0
        %v2440 = vpop.f32.mrb[0].mxu0
        %v2441 = vpop.f32.mrb[0].mxu0
        %2442 = vdwg.mxu0
        %vm2443 = vcmask 130048
        %v2444 = vsel %vm2443, %v2392, -inf
        %2445 = vmax.xlane.f32.xlu0 %v2444
        %v2446 = vpop.xlane.xlu0 %2445
        %v2447 = vsel %vm2443, %v2438, -inf
        %2448 = vmax.xlane.f32.xlu0 %v2447
        %v2449 = vpop.xlane.xlu0 %2448
        %v2450 = vsub.f32 %v2392, %v2446
        %v2451 = vsub.f32 %v2438, %v2449
        %v2452 = vmul.f32 %v2450, 1.442695
        %v2453 = vpow.pop %v2452
        %v2454 = vmul.f32 %v2451, 1.442695
        %v2455 = vpow.pop %v2454
        %v2456 = vsel %vm2443, %v2453, 0.0
        %2457 = vadd.xlane.f32.xlu0 %v2456
        %v2458 = vpop.xlane.xlu0 %2457
        %v2459 = vsel %vm2443, %v2455, 0.0
        %2460 = vadd.xlane.f32.xlu0 %v2459
        %v2461 = vpop.xlane.xlu0 %2460
        %v2462 = vrcp.pop %v2458
        %v2463 = vrcp.pop %v2461
        %v2464 = vmul.f32 %v2453, %v2462
        %v2465 = vmul.f32 %v2455, %v2463
        %v2466 = vpack.c.bf16 %v2464, %v2464
        %v2467 = vpack.c.bf16 %v2465, %v2465
        %v2469 = vsel %vm2443, %v2466, 0
        %2471 = vmatprep.subr.bf16.mxu0 0
        %2472 = vmatpush1.bf16.msra.mxu0 %v2337
        %2473 = vmatprep.subr.bf16.mxu0 0
        %2474 = vmatpush1.bf16.msra.mxu0 0
        %2475 = vmatprep.subr.bf16.mxu0 0
        %2476 = vmatpush1.bf16.msra.mxu0 0
        %2477 = vmatprep.subr.bf16.mxu0 0
        %2478 = vmatpush1.bf16.msra.mxu0 0
        %2479 = vmatprep.subr.bf16.mxu0 0
        %2480 = vmatpush1.bf16.msra.mxu0 0
        %2481 = vmatprep.subr.bf16.mxu0 0
        %2482 = vmatpush1.bf16.msra.mxu0 0
        %2483 = vmatprep.subr.bf16.mxu0 0
        %2484 = vmatpush1.bf16.msra.mxu0 0
        %2485 = vmatprep.subr.bf16.mxu0 0
        %2486 = vmatpush1.bf16.msra.mxu0 0
        %2487 = vmatprep.subr.bf16.mxu0 0
        %2488 = vmatpush1.bf16.msra.mxu0 0
        %2489 = vmatprep.subr.bf16.mxu0 0
        %2490 = vmatpush1.bf16.msra.mxu0 0
        %2491 = vmatprep.subr.bf16.mxu0 0
        %2492 = vmatpush1.bf16.msra.mxu0 0
        %2493 = vmatprep.subr.bf16.mxu0 0
        %2494 = vmatpush1.bf16.msra.mxu0 0
        %2495 = vmatprep.subr.bf16.mxu0 0
        %2496 = vmatpush1.bf16.msra.mxu0 0
        %2497 = vmatprep.subr.bf16.mxu0 0
        %2498 = vmatpush1.bf16.msra.mxu0 0
        %2499 = vmatprep.subr.bf16.mxu0 0
        %2500 = vmatpush1.bf16.msra.mxu0 0
        %2501 = vmatprep.subr.bf16.mxu0 0
        %2502 = vmatpush1.bf16.msra.mxu0 0
        %2503 = vmatprep.mubr.bf16.mxu0 0
        %2504 = vmatmul.mubr.bf16.gmra.mrb[0].mxu0 %v2469
        %v2505 = vpop.f32.mrb[0].mxu0
        %v2506 = vadd.f32 0.0, %v2505
        %v2507 = vpop.f32.mrb[0].mxu0
        %v2508 = vpop.f32.mrb[0].mxu0
        %v2509 = vpop.f32.mrb[0].mxu0
        %2510 = vdwg.mxu0
        %v2512 = vsel %vm2443, %v2467, 0
        %2514 = vmatprep.subr.bf16.mxu0 0
        %2515 = vmatpush1.bf16.msra.mxu0 %v2338
        %2516 = vmatprep.subr.bf16.mxu0 0
        %2517 = vmatpush1.bf16.msra.mxu0 0
        %2518 = vmatprep.subr.bf16.mxu0 0
        %2519 = vmatpush1.bf16.msra.mxu0 0
        %2520 = vmatprep.subr.bf16.mxu0 0
        %2521 = vmatpush1.bf16.msra.mxu0 0
        %2522 = vmatprep.subr.bf16.mxu0 0
        %2523 = vmatpush1.bf16.msra.mxu0 0
        %2524 = vmatprep.subr.bf16.mxu0 0
        %2525 = vmatpush1.bf16.msra.mxu0 0
        %2526 = vmatprep.subr.bf16.mxu0 0
        %2527 = vmatpush1.bf16.msra.mxu0 0
        %2528 = vmatprep.subr.bf16.mxu0 0
        %2529 = vmatpush1.bf16.msra.mxu0 0
        %2530 = vmatprep.subr.bf16.mxu0 0
        %2531 = vmatpush1.bf16.msra.mxu0 0
        %2532 = vmatprep.subr.bf16.mxu0 0
        %2533 = vmatpush1.bf16.msra.mxu0 0
        %2534 = vmatprep.subr.bf16.mxu0 0
        %2535 = vmatpush1.bf16.msra.mxu0 0
        %2536 = vmatprep.subr.bf16.mxu0 0
        %2537 = vmatpush1.bf16.msra.mxu0 0
        %2538 = vmatprep.subr.bf16.mxu0 0
        %2539 = vmatpush1.bf16.msra.mxu0 0
        %2540 = vmatprep.subr.bf16.mxu0 0
        %2541 = vmatpush1.bf16.msra.mxu0 0
        %2542 = vmatprep.subr.bf16.mxu0 0
        %2543 = vmatpush1.bf16.msra.mxu0 0
        %2544 = vmatprep.subr.bf16.mxu0 0
        %2545 = vmatpush1.bf16.msra.mxu0 0
        %2546 = vmatprep.mubr.bf16.mxu0 0
        %2547 = vmatmul.mubr.bf16.gmra.mrb[0].mxu0 %v2512
        %v2548 = vpop.f32.mrb[0].mxu0
        %v2549 = vadd.f32 0.0, %v2548
        %v2550 = vpop.f32.mrb[0].mxu0
        %v2551 = vpop.f32.mrb[0].mxu0
        %v2552 = vpop.f32.mrb[0].mxu0
        %2553 = vdwg.mxu0
        %v2554 = vpack.c.bf16 %v2549, %v2506
        %2555 = vst.msk [vmem:[#allocation2] sm:$0xff] %vm997, %v2554
        %2557 = vrot.lane.b32.xlu0 %v2333, 96
        %v2558 = vpop.permute.xlu0 %2557
        %2560 = vrot.lane.b32.xlu0 %v2335, 96
        %v2561 = vpop.permute.xlu0 %2560
        %v2563 = vsel %vm997, %v2558, 0
        %v2566 = vsel %vm997, %v2561, 0
        %2568 = vmatprep.subr.bf16.mxu0 0
        %2569 = vmatpush1.bf16.xpose.msra.mxu0 %v2566
        %2570 = vmatprep.subr.bf16.mxu0 0
        %2571 = vmatpush1.bf16.xpose.msra.mxu0 0
        %2572 = vmatprep.subr.bf16.mxu0 0
        %2573 = vmatpush1.bf16.xpose.msra.mxu0 0
        %2574 = vmatprep.subr.bf16.mxu0 0
        %2575 = vmatpush1.bf16.xpose.msra.mxu0 0
        %2576 = vmatprep.subr.bf16.mxu0 0
        %2577 = vmatpush1.bf16.xpose.msra.mxu0 0
        %2578 = vmatprep.subr.bf16.mxu0 0
        %2579 = vmatpush1.bf16.xpose.msra.mxu0 0
        %2580 = vmatprep.subr.bf16.mxu0 0
        %2581 = vmatpush1.bf16.xpose.msra.mxu0 0
        %2582 = vmatprep.subr.bf16.mxu0 0
        %2583 = vmatpush1.bf16.xpose.msra.mxu0 0
        %2584 = vmatprep.subr.bf16.mxu0 0
        %2585 = vmatpush1.bf16.xpose.msra.mxu0 0
        %2586 = vmatprep.subr.bf16.mxu0 0
        %2587 = vmatpush1.bf16.xpose.msra.mxu0 0
        %2588 = vmatprep.subr.bf16.mxu0 0
        %2589 = vmatpush1.bf16.xpose.msra.mxu0 0
        %2590 = vmatprep.subr.bf16.mxu0 0
        %2591 = vmatpush1.bf16.xpose.msra.mxu0 0
        %2592 = vmatprep.subr.bf16.mxu0 0
        %2593 = vmatpush1.bf16.xpose.msra.mxu0 0
        %2594 = vmatprep.subr.bf16.mxu0 0
        %2595 = vmatpush1.bf16.xpose.msra.mxu0 0
        %2596 = vmatprep.subr.bf16.mxu0 0
        %2597 = vmatpush1.bf16.xpose.msra.mxu0 0
        %2598 = vmatprep.subr.bf16.mxu0 0
        %2599 = vmatpush1.bf16.xpose.msra.mxu0 0
        %2600 = vmatprep.mubr.bf16.mxu0 0
        %2601 = vmatmul.mubr.bf16.gmra.mrb[0].mxu0 %v2563
        %v2602 = vpop.f32.mrb[0].mxu0
        %v2603 = vadd.f32 %v2344, %v2602
        %v2604 = vpop.f32.mrb[0].mxu0
        %v2605 = vpop.f32.mrb[0].mxu0
        %v2606 = vpop.f32.mrb[0].mxu0
        %2607 = vdwg.mxu0
        %2609 = vrot.lane.b32.xlu0 %v2334, 96
        %v2610 = vpop.permute.xlu0 %2609
        %2612 = vrot.lane.b32.xlu0 %v2336, 96
        %v2613 = vpop.permute.xlu0 %2612
        %v2615 = vsel %vm997, %v2610, 0
        %v2618 = vsel %vm997, %v2613, 0
        %2620 = vmatprep.subr.bf16.mxu0 0
        %2621 = vmatpush1.bf16.xpose.msra.mxu0 %v2618
        %2622 = vmatprep.subr.bf16.mxu0 0
        %2623 = vmatpush1.bf16.xpose.msra.mxu0 0
        %2624 = vmatprep.subr.bf16.mxu0 0
        %2625 = vmatpush1.bf16.xpose.msra.mxu0 0
        %2626 = vmatprep.subr.bf16.mxu0 0
        %2627 = vmatpush1.bf16.xpose.msra.mxu0 0
        %2628 = vmatprep.subr.bf16.mxu0 0
        %2629 = vmatpush1.bf16.xpose.msra.mxu0 0
        %2630 = vmatprep.subr.bf16.mxu0 0
        %2631 = vmatpush1.bf16.xpose.msra.mxu0 0
        %2632 = vmatprep.subr.bf16.mxu0 0
        %2633 = vmatpush1.bf16.xpose.msra.mxu0 0
        %2634 = vmatprep.subr.bf16.mxu0 0
        %2635 = vmatpush1.bf16.xpose.msra.mxu0 0
        %2636 = vmatprep.subr.bf16.mxu0 0
        %2637 = vmatpush1.bf16.xpose.msra.mxu0 0
        %2638 = vmatprep.subr.bf16.mxu0 0
        %2639 = vmatpush1.bf16.xpose.msra.mxu0 0
        %2640 = vmatprep.subr.bf16.mxu0 0
        %2641 = vmatpush1.bf16.xpose.msra.mxu0 0
        %2642 = vmatprep.subr.bf16.mxu0 0
        %2643 = vmatpush1.bf16.xpose.msra.mxu0 0
        %2644 = vmatprep.subr.bf16.mxu0 0
        %2645 = vmatpush1.bf16.xpose.msra.mxu0 0
        %2646 = vmatprep.subr.bf16.mxu0 0
        %2647 = vmatpush1.bf16.xpose.msra.mxu0 0
        %2648 = vmatprep.subr.bf16.mxu0 0
        %2649 = vmatpush1.bf16.xpose.msra.mxu0 0
        %2650 = vmatprep.subr.bf16.mxu0 0
        %2651 = vmatpush1.bf16.xpose.msra.mxu0 0
        %2652 = vmatprep.mubr.bf16.mxu0 0
        %2653 = vmatmul.mubr.bf16.gmra.mrb[0].mxu0 %v2615
        %v2654 = vpop.f32.mrb[0].mxu0
        %v2655 = vadd.f32 %v2348, %v2654
        %v2656 = vpop.f32.mrb[0].mxu0
        %v2657 = vpop.f32.mrb[0].mxu0
        %v2658 = vpop.f32.mrb[0].mxu0
        %2659 = vdwg.mxu0
        %v2660 = vsel %vm2443, %v2603, -inf
        %2661 = vmax.xlane.f32.xlu0 %v2660
        %v2662 = vpop.xlane.xlu0 %2661
        %v2663 = vsel %vm2443, %v2655, -inf
        %2664 = vmax.xlane.f32.xlu0 %v2663
        %v2665 = vpop.xlane.xlu0 %2664
        %v2666 = vsub.f32 %v2603, %v2662
        %v2667 = vsub.f32 %v2655, %v2665
        %v2668 = vmul.f32 %v2666, 1.442695
        %v2669 = vpow.pop %v2668
        %v2670 = vmul.f32 %v2667, 1.442695
        %v2671 = vpow.pop %v2670
        %v2672 = vsel %vm2443, %v2669, 0.0
        %2673 = vadd.xlane.f32.xlu0 %v2672
        %v2674 = vpop.xlane.xlu0 %2673
        %v2675 = vsel %vm2443, %v2671, 0.0
        %2676 = vadd.xlane.f32.xlu0 %v2675
        %v2677 = vpop.xlane.xlu0 %2676
        %v2678 = vrcp.pop %v2674
        %v2679 = vrcp.pop %v2677
        %v2680 = vmul.f32 %v2669, %v2678
        %v2681 = vmul.f32 %v2671, %v2679
        %v2682 = vpack.c.bf16 %v2680, %v2680
        %v2683 = vpack.c.bf16 %v2681, %v2681
        %2685 = vrot.lane.b32.xlu0 %v2337, 96
        %v2686 = vpop.permute.xlu0 %2685
        %v2689 = vsel %vm2443, %v2682, 0
        %2691 = vmatprep.subr.bf16.mxu0 0
        %2692 = vmatpush1.bf16.msra.mxu0 %v2686
        %2693 = vmatprep.subr.bf16.mxu0 0
        %2694 = vmatpush1.bf16.msra.mxu0 0
        %2695 = vmatprep.subr.bf16.mxu0 0
        %2696 = vmatpush1.bf16.msra.mxu0 0
        %2697 = vmatprep.subr.bf16.mxu0 0
        %2698 = vmatpush1.bf16.msra.mxu0 0
        %2699 = vmatprep.subr.bf16.mxu0 0
        %2700 = vmatpush1.bf16.msra.mxu0 0
        %2701 = vmatprep.subr.bf16.mxu0 0
        %2702 = vmatpush1.bf16.msra.mxu0 0
        %2703 = vmatprep.subr.bf16.mxu0 0
        %2704 = vmatpush1.bf16.msra.mxu0 0
        %2705 = vmatprep.subr.bf16.mxu0 0
        %2706 = vmatpush1.bf16.msra.mxu0 0
        %2707 = vmatprep.subr.bf16.mxu0 0
        %2708 = vmatpush1.bf16.msra.mxu0 0
        %2709 = vmatprep.subr.bf16.mxu0 0
        %2710 = vmatpush1.bf16.msra.mxu0 0
        %2711 = vmatprep.subr.bf16.mxu0 0
        %2712 = vmatpush1.bf16.msra.mxu0 0
        %2713 = vmatprep.subr.bf16.mxu0 0
        %2714 = vmatpush1.bf16.msra.mxu0 0
        %2715 = vmatprep.subr.bf16.mxu0 0
        %2716 = vmatpush1.bf16.msra.mxu0 0
        %2717 = vmatprep.subr.bf16.mxu0 0
        %2718 = vmatpush1.bf16.msra.mxu0 0
        %2719 = vmatprep.subr.bf16.mxu0 0
        %2720 = vmatpush1.bf16.msra.mxu0 0
        %2721 = vmatprep.subr.bf16.mxu0 0
        %2722 = vmatpush1.bf16.msra.mxu0 0
        %2723 = vmatprep.mubr.bf16.mxu0 0
        %2724 = vmatmul.mubr.bf16.gmra.mrb[0].mxu0 %v2689
        %v2725 = vpop.f32.mrb[0].mxu0
        %v2726 = vadd.f32 0.0, %v2725
        %v2727 = vpop.f32.mrb[0].mxu0
        %v2728 = vpop.f32.mrb[0].mxu0
        %v2729 = vpop.f32.mrb[0].mxu0
        %2730 = vdwg.mxu0
        %2732 = vrot.lane.b32.xlu0 %v2338, 96
        %v2733 = vpop.permute.xlu0 %2732
        %v2736 = vsel %vm2443, %v2683, 0
        %2738 = vmatprep.subr.bf16.mxu0 0
        %2739 = vmatpush1.bf16.msra.mxu0 %v2733
        %2740 = vmatprep.subr.bf16.mxu0 0
        %2741 = vmatpush1.bf16.msra.mxu0 0
        %2742 = vmatprep.subr.bf16.mxu0 0
        %2743 = vmatpush1.bf16.msra.mxu0 0
        %2744 = vmatprep.subr.bf16.mxu0 0
        %2745 = vmatpush1.bf16.msra.mxu0 0
        %2746 = vmatprep.subr.bf16.mxu0 0
        %2747 = vmatpush1.bf16.msra.mxu0 0
        %2748 = vmatprep.subr.bf16.mxu0 0
        %2749 = vmatpush1.bf16.msra.mxu0 0
        %2750 = vmatprep.subr.bf16.mxu0 0
        %2751 = vmatpush1.bf16.msra.mxu0 0
        %2752 = vmatprep.subr.bf16.mxu0 0
        %2753 = vmatpush1.bf16.msra.mxu0 0
        %2754 = vmatprep.subr.bf16.mxu0 0
        %2755 = vmatpush1.bf16.msra.mxu0 0
        %2756 = vmatprep.subr.bf16.mxu0 0
        %2757 = vmatpush1.bf16.msra.mxu0 0
        %2758 = vmatprep.subr.bf16.mxu0 0
        %2759 = vmatpush1.bf16.msra.mxu0 0
        %2760 = vmatprep.subr.bf16.mxu0 0
        %2761 = vmatpush1.bf16.msra.mxu0 0
        %2762 = vmatprep.subr.bf16.mxu0 0
        %2763 = vmatpush1.bf16.msra.mxu0 0
        %2764 = vmatprep.subr.bf16.mxu0 0
        %2765 = vmatpush1.bf16.msra.mxu0 0
        %2766 = vmatprep.subr.bf16.mxu0 0
        %2767 = vmatpush1.bf16.msra.mxu0 0
        %2768 = vmatprep.subr.bf16.mxu0 0
        %2769 = vmatpush1.bf16.msra.mxu0 0
        %2770 = vmatprep.mubr.bf16.mxu0 0
        %2771 = vmatmul.mubr.bf16.gmra.mrb[0].mxu0 %v2736
        %v2772 = vpop.f32.mrb[0].mxu0
        %v2773 = vadd.f32 0.0, %v2772
        %v2774 = vpop.f32.mrb[0].mxu0
        %v2775 = vpop.f32.mrb[0].mxu0
        %v2776 = vpop.f32.mrb[0].mxu0
        %2777 = vdwg.mxu0
        %v2778 = vpack.c.bf16 %v2773, %v2726
        %2780 = vrot.lane.b32.xlu0 %v2778, 32
        %v2781 = vpop.permute.xlu0 %2780
        %2783 = vst.msk [vmem:[#allocation2] sm:$0xff] %vm1441, %v2781
        %2784 = vrot.lane.b32.xlu0 %v2333, 64
        %v2785 = vpop.permute.xlu0 %2784
        %2786 = vrot.lane.b32.xlu0 %v2335, 64
        %v2787 = vpop.permute.xlu0 %2786
        %v2789 = vsel %vm997, %v2785, 0
        %v2792 = vsel %vm997, %v2787, 0
        %2794 = vmatprep.subr.bf16.mxu0 0
        %2795 = vmatpush1.bf16.xpose.msra.mxu0 %v2792
        %2796 = vmatprep.subr.bf16.mxu0 0
        %2797 = vmatpush1.bf16.xpose.msra.mxu0 0
        %2798 = vmatprep.subr.bf16.mxu0 0
        %2799 = vmatpush1.bf16.xpose.msra.mxu0 0
        %2800 = vmatprep.subr.bf16.mxu0 0
        %2801 = vmatpush1.bf16.xpose.msra.mxu0 0
        %2802 = vmatprep.subr.bf16.mxu0 0
        %2803 = vmatpush1.bf16.xpose.msra.mxu0 0
        %2804 = vmatprep.subr.bf16.mxu0 0
        %2805 = vmatpush1.bf16.xpose.msra.mxu0 0
        %2806 = vmatprep.subr.bf16.mxu0 0
        %2807 = vmatpush1.bf16.xpose.msra.mxu0 0
        %2808 = vmatprep.subr.bf16.mxu0 0
        %2809 = vmatpush1.bf16.xpose.msra.mxu0 0
        %2810 = vmatprep.subr.bf16.mxu0 0
        %2811 = vmatpush1.bf16.xpose.msra.mxu0 0
        %2812 = vmatprep.subr.bf16.mxu0 0
        %2813 = vmatpush1.bf16.xpose.msra.mxu0 0
        %2814 = vmatprep.subr.bf16.mxu0 0
        %2815 = vmatpush1.bf16.xpose.msra.mxu0 0
        %2816 = vmatprep.subr.bf16.mxu0 0
        %2817 = vmatpush1.bf16.xpose.msra.mxu0 0
        %2818 = vmatprep.subr.bf16.mxu0 0
        %2819 = vmatpush1.bf16.xpose.msra.mxu0 0
        %2820 = vmatprep.subr.bf16.mxu0 0
        %2821 = vmatpush1.bf16.xpose.msra.mxu0 0
        %2822 = vmatprep.subr.bf16.mxu0 0
        %2823 = vmatpush1.bf16.xpose.msra.mxu0 0
        %2824 = vmatprep.subr.bf16.mxu0 0
        %2825 = vmatpush1.bf16.xpose.msra.mxu0 0
        %2826 = vmatprep.mubr.bf16.mxu0 0
        %2827 = vmatmul.mubr.bf16.gmra.mrb[0].mxu0 %v2789
        %v2828 = vpop.f32.mrb[0].mxu0
        %v2829 = vadd.f32 %v2344, %v2828
        %v2830 = vpop.f32.mrb[0].mxu0
        %v2831 = vpop.f32.mrb[0].mxu0
        %v2832 = vpop.f32.mrb[0].mxu0
        %2833 = vdwg.mxu0
        %2834 = vrot.lane.b32.xlu0 %v2334, 64
        %v2835 = vpop.permute.xlu0 %2834
        %2836 = vrot.lane.b32.xlu0 %v2336, 64
        %v2837 = vpop.permute.xlu0 %2836
        %v2839 = vsel %vm997, %v2835, 0
        %v2842 = vsel %vm997, %v2837, 0
        %2844 = vmatprep.subr.bf16.mxu0 0
        %2845 = vmatpush1.bf16.xpose.msra.mxu0 %v2842
        %2846 = vmatprep.subr.bf16.mxu0 0
        %2847 = vmatpush1.bf16.xpose.msra.mxu0 0
        %2848 = vmatprep.subr.bf16.mxu0 0
        %2849 = vmatpush1.bf16.xpose.msra.mxu0 0
        %2850 = vmatprep.subr.bf16.mxu0 0
        %2851 = vmatpush1.bf16.xpose.msra.mxu0 0
        %2852 = vmatprep.subr.bf16.mxu0 0
        %2853 = vmatpush1.bf16.xpose.msra.mxu0 0
        %2854 = vmatprep.subr.bf16.mxu0 0
        %2855 = vmatpush1.bf16.xpose.msra.mxu0 0
        %2856 = vmatprep.subr.bf16.mxu0 0
        %2857 = vmatpush1.bf16.xpose.msra.mxu0 0
        %2858 = vmatprep.subr.bf16.mxu0 0
        %2859 = vmatpush1.bf16.xpose.msra.mxu0 0
        %2860 = vmatprep.subr.bf16.mxu0 0
        %2861 = vmatpush1.bf16.xpose.msra.mxu0 0
        %2862 = vmatprep.subr.bf16.mxu0 0
        %2863 = vmatpush1.bf16.xpose.msra.mxu0 0
        %2864 = vmatprep.subr.bf16.mxu0 0
        %2865 = vmatpush1.bf16.xpose.msra.mxu0 0
        %2866 = vmatprep.subr.bf16.mxu0 0
        %2867 = vmatpush1.bf16.xpose.msra.mxu0 0
        %2868 = vmatprep.subr.bf16.mxu0 0
        %2869 = vmatpush1.bf16.xpose.msra.mxu0 0
        %2870 = vmatprep.subr.bf16.mxu0 0
        %2871 = vmatpush1.bf16.xpose.msra.mxu0 0
        %2872 = vmatprep.subr.bf16.mxu0 0
        %2873 = vmatpush1.bf16.xpose.msra.mxu0 0
        %2874 = vmatprep.subr.bf16.mxu0 0
        %2875 = vmatpush1.bf16.xpose.msra.mxu0 0
        %2876 = vmatprep.mubr.bf16.mxu0 0
        %2877 = vmatmul.mubr.bf16.gmra.mrb[0].mxu0 %v2839
        %v2878 = vpop.f32.mrb[0].mxu0
        %v2879 = vadd.f32 %v2348, %v2878
        %v2880 = vpop.f32.mrb[0].mxu0
        %v2881 = vpop.f32.mrb[0].mxu0
        %v2882 = vpop.f32.mrb[0].mxu0
        %2883 = vdwg.mxu0
        %v2884 = vsel %vm2443, %v2829, -inf
        %2885 = vmax.xlane.f32.xlu0 %v2884
        %v2886 = vpop.xlane.xlu0 %2885
        %v2887 = vsel %vm2443, %v2879, -inf
        %2888 = vmax.xlane.f32.xlu0 %v2887
        %v2889 = vpop.xlane.xlu0 %2888
        %v2890 = vsub.f32 %v2829, %v2886
        %v2891 = vsub.f32 %v2879, %v2889
        %v2892 = vmul.f32 %v2890, 1.442695
        %v2893 = vpow.pop %v2892
        %v2894 = vmul.f32 %v2891, 1.442695
        %v2895 = vpow.pop %v2894
        %v2896 = vsel %vm2443, %v2893, 0.0
        %2897 = vadd.xlane.f32.xlu0 %v2896
        %v2898 = vpop.xlane.xlu0 %2897
        %v2899 = vsel %vm2443, %v2895, 0.0
        %2900 = vadd.xlane.f32.xlu0 %v2899
        %v2901 = vpop.xlane.xlu0 %2900
        %v2902 = vrcp.pop %v2898
        %v2903 = vrcp.pop %v2901
        %v2904 = vmul.f32 %v2893, %v2902
        %v2905 = vmul.f32 %v2895, %v2903
        %v2906 = vpack.c.bf16 %v2904, %v2904
        %v2907 = vpack.c.bf16 %v2905, %v2905
        %2908 = vrot.lane.b32.xlu0 %v2337, 64
        %v2909 = vpop.permute.xlu0 %2908
        %v2912 = vsel %vm2443, %v2906, 0
        %2914 = vmatprep.subr.bf16.mxu0 0
        %2915 = vmatpush1.bf16.msra.mxu0 %v2909
        %2916 = vmatprep.subr.bf16.mxu0 0
        %2917 = vmatpush1.bf16.msra.mxu0 0
        %2918 = vmatprep.subr.bf16.mxu0 0
        %2919 = vmatpush1.bf16.msra.mxu0 0
        %2920 = vmatprep.subr.bf16.mxu0 0
        %2921 = vmatpush1.bf16.msra.mxu0 0
        %2922 = vmatprep.subr.bf16.mxu0 0
        %2923 = vmatpush1.bf16.msra.mxu0 0
        %2924 = vmatprep.subr.bf16.mxu0 0
        %2925 = vmatpush1.bf16.msra.mxu0 0
        %2926 = vmatprep.subr.bf16.mxu0 0
        %2927 = vmatpush1.bf16.msra.mxu0 0
        %2928 = vmatprep.subr.bf16.mxu0 0
        %2929 = vmatpush1.bf16.msra.mxu0 0
        %2930 = vmatprep.subr.bf16.mxu0 0
        %2931 = vmatpush1.bf16.msra.mxu0 0
        %2932 = vmatprep.subr.bf16.mxu0 0
        %2933 = vmatpush1.bf16.msra.mxu0 0
        %2934 = vmatprep.subr.bf16.mxu0 0
        %2935 = vmatpush1.bf16.msra.mxu0 0
        %2936 = vmatprep.subr.bf16.mxu0 0
        %2937 = vmatpush1.bf16.msra.mxu0 0
        %2938 = vmatprep.subr.bf16.mxu0 0
        %2939 = vmatpush1.bf16.msra.mxu0 0
        %2940 = vmatprep.subr.bf16.mxu0 0
        %2941 = vmatpush1.bf16.msra.mxu0 0
        %2942 = vmatprep.subr.bf16.mxu0 0
        %2943 = vmatpush1.bf16.msra.mxu0 0
        %2944 = vmatprep.subr.bf16.mxu0 0
        %2945 = vmatpush1.bf16.msra.mxu0 0
        %2946 = vmatprep.mubr.bf16.mxu0 0
        %2947 = vmatmul.mubr.bf16.gmra.mrb[0].mxu0 %v2912
        %v2948 = vpop.f32.mrb[0].mxu0
        %v2949 = vadd.f32 0.0, %v2948
        %v2950 = vpop.f32.mrb[0].mxu0
        %v2951 = vpop.f32.mrb[0].mxu0
        %v2952 = vpop.f32.mrb[0].mxu0
        %2953 = vdwg.mxu0
        %2954 = vrot.lane.b32.xlu0 %v2338, 64
        %v2955 = vpop.permute.xlu0 %2954
        %v2958 = vsel %vm2443, %v2907, 0
        %2960 = vmatprep.subr.bf16.mxu0 0
        %2961 = vmatpush1.bf16.msra.mxu0 %v2955
        %2962 = vmatprep.subr.bf16.mxu0 0
        %2963 = vmatpush1.bf16.msra.mxu0 0
        %2964 = vmatprep.subr.bf16.mxu0 0
        %2965 = vmatpush1.bf16.msra.mxu0 0
        %2966 = vmatprep.subr.bf16.mxu0 0
        %2967 = vmatpush1.bf16.msra.mxu0 0
        %2968 = vmatprep.subr.bf16.mxu0 0
        %2969 = vmatpush1.bf16.msra.mxu0 0
        %2970 = vmatprep.subr.bf16.mxu0 0
        %2971 = vmatpush1.bf16.msra.mxu0 0
        %2972 = vmatprep.subr.bf16.mxu0 0
        %2973 = vmatpush1.bf16.msra.mxu0 0
        %2974 = vmatprep.subr.bf16.mxu0 0
        %2975 = vmatpush1.bf16.msra.mxu0 0
        %2976 = vmatprep.subr.bf16.mxu0 0
        %2977 = vmatpush1.bf16.msra.mxu0 0
        %2978 = vmatprep.subr.bf16.mxu0 0
        %2979 = vmatpush1.bf16.msra.mxu0 0
        %2980 = vmatprep.subr.bf16.mxu0 0
        %2981 = vmatpush1.bf16.msra.mxu0 0
        %2982 = vmatprep.subr.bf16.mxu0 0
        %2983 = vmatpush1.bf16.msra.mxu0 0
        %2984 = vmatprep.subr.bf16.mxu0 0
        %2985 = vmatpush1.bf16.msra.mxu0 0
        %2986 = vmatprep.subr.bf16.mxu0 0
        %2987 = vmatpush1.bf16.msra.mxu0 0
        %2988 = vmatprep.subr.bf16.mxu0 0
        %2989 = vmatpush1.bf16.msra.mxu0 0
        %2990 = vmatprep.subr.bf16.mxu0 0
        %2991 = vmatpush1.bf16.msra.mxu0 0
        %2992 = vmatprep.mubr.bf16.mxu0 0
        %2993 = vmatmul.mubr.bf16.gmra.mrb[0].mxu0 %v2958
        %v2994 = vpop.f32.mrb[0].mxu0
        %v2995 = vadd.f32 0.0, %v2994
        %v2996 = vpop.f32.mrb[0].mxu0
        %v2997 = vpop.f32.mrb[0].mxu0
        %v2998 = vpop.f32.mrb[0].mxu0
        %2999 = vdwg.mxu0
        %v3000 = vpack.c.bf16 %v2995, %v2949
        %3002 = vrot.lane.b32.xlu0 %v3000, 64
        %v3003 = vpop.permute.xlu0 %3002
        %3005 = vst.msk [vmem:[#allocation2] sm:$0xff] %vm1668, %v3003
        %3006 = vrot.lane.b32.xlu0 %v2333, 32
        %v3007 = vpop.permute.xlu0 %3006
        %3008 = vrot.lane.b32.xlu0 %v2335, 32
        %v3009 = vpop.permute.xlu0 %3008
        %v3011 = vsel %vm997, %v3007, 0
        %v3014 = vsel %vm997, %v3009, 0
        %3016 = vmatprep.subr.bf16.mxu0 0
        %3017 = vmatpush1.bf16.xpose.msra.mxu0 %v3014
        %3018 = vmatprep.subr.bf16.mxu0 0
        %3019 = vmatpush1.bf16.xpose.msra.mxu0 0
        %3020 = vmatprep.subr.bf16.mxu0 0
        %3021 = vmatpush1.bf16.xpose.msra.mxu0 0
        %3022 = vmatprep.subr.bf16.mxu0 0
        %3023 = vmatpush1.bf16.xpose.msra.mxu0 0
        %3024 = vmatprep.subr.bf16.mxu0 0
        %3025 = vmatpush1.bf16.xpose.msra.mxu0 0
        %3026 = vmatprep.subr.bf16.mxu0 0
        %3027 = vmatpush1.bf16.xpose.msra.mxu0 0
        %3028 = vmatprep.subr.bf16.mxu0 0
        %3029 = vmatpush1.bf16.xpose.msra.mxu0 0
        %3030 = vmatprep.subr.bf16.mxu0 0
        %3031 = vmatpush1.bf16.xpose.msra.mxu0 0
        %3032 = vmatprep.subr.bf16.mxu0 0
        %3033 = vmatpush1.bf16.xpose.msra.mxu0 0
        %3034 = vmatprep.subr.bf16.mxu0 0
        %3035 = vmatpush1.bf16.xpose.msra.mxu0 0
        %3036 = vmatprep.subr.bf16.mxu0 0
        %3037 = vmatpush1.bf16.xpose.msra.mxu0 0
        %3038 = vmatprep.subr.bf16.mxu0 0
        %3039 = vmatpush1.bf16.xpose.msra.mxu0 0
        %3040 = vmatprep.subr.bf16.mxu0 0
        %3041 = vmatpush1.bf16.xpose.msra.mxu0 0
        %3042 = vmatprep.subr.bf16.mxu0 0
        %3043 = vmatpush1.bf16.xpose.msra.mxu0 0
        %3044 = vmatprep.subr.bf16.mxu0 0
        %3045 = vmatpush1.bf16.xpose.msra.mxu0 0
        %3046 = vmatprep.subr.bf16.mxu0 0
        %3047 = vmatpush1.bf16.xpose.msra.mxu0 0
        %3048 = vmatprep.mubr.bf16.mxu0 0
        %3049 = vmatmul.mubr.bf16.gmra.mrb[0].mxu0 %v3011
        %v3050 = vpop.f32.mrb[0].mxu0
        %v3051 = vadd.f32 %v2344, %v3050
        %v3052 = vpop.f32.mrb[0].mxu0
        %v3053 = vpop.f32.mrb[0].mxu0
        %v3054 = vpop.f32.mrb[0].mxu0
        %3055 = vdwg.mxu0
        %3056 = vrot.lane.b32.xlu0 %v2334, 32
        %v3057 = vpop.permute.xlu0 %3056
        %3058 = vrot.lane.b32.xlu0 %v2336, 32
        %v3059 = vpop.permute.xlu0 %3058
        %v3061 = vsel %vm997, %v3057, 0
        %v3064 = vsel %vm997, %v3059, 0
        %3066 = vmatprep.subr.bf16.mxu0 0
        %3067 = vmatpush1.bf16.xpose.msra.mxu0 %v3064
        %3068 = vmatprep.subr.bf16.mxu0 0
        %3069 = vmatpush1.bf16.xpose.msra.mxu0 0
        %3070 = vmatprep.subr.bf16.mxu0 0
        %3071 = vmatpush1.bf16.xpose.msra.mxu0 0
        %3072 = vmatprep.subr.bf16.mxu0 0
        %3073 = vmatpush1.bf16.xpose.msra.mxu0 0
        %3074 = vmatprep.subr.bf16.mxu0 0
        %3075 = vmatpush1.bf16.xpose.msra.mxu0 0
        %3076 = vmatprep.subr.bf16.mxu0 0
        %3077 = vmatpush1.bf16.xpose.msra.mxu0 0
        %3078 = vmatprep.subr.bf16.mxu0 0
        %3079 = vmatpush1.bf16.xpose.msra.mxu0 0
        %3080 = vmatprep.subr.bf16.mxu0 0
        %3081 = vmatpush1.bf16.xpose.msra.mxu0 0
        %3082 = vmatprep.subr.bf16.mxu0 0
        %3083 = vmatpush1.bf16.xpose.msra.mxu0 0
        %3084 = vmatprep.subr.bf16.mxu0 0
        %3085 = vmatpush1.bf16.xpose.msra.mxu0 0
        %3086 = vmatprep.subr.bf16.mxu0 0
        %3087 = vmatpush1.bf16.xpose.msra.mxu0 0
        %3088 = vmatprep.subr.bf16.mxu0 0
        %3089 = vmatpush1.bf16.xpose.msra.mxu0 0
        %3090 = vmatprep.subr.bf16.mxu0 0
        %3091 = vmatpush1.bf16.xpose.msra.mxu0 0
        %3092 = vmatprep.subr.bf16.mxu0 0
        %3093 = vmatpush1.bf16.xpose.msra.mxu0 0
        %3094 = vmatprep.subr.bf16.mxu0 0
        %3095 = vmatpush1.bf16.xpose.msra.mxu0 0
        %3096 = vmatprep.subr.bf16.mxu0 0
        %3097 = vmatpush1.bf16.xpose.msra.mxu0 0
        %3098 = vmatprep.mubr.bf16.mxu0 0
        %3099 = vmatmul.mubr.bf16.gmra.mrb[0].mxu0 %v3061
        %v3100 = vpop.f32.mrb[0].mxu0
        %v3101 = vadd.f32 %v2348, %v3100
        %v3102 = vpop.f32.mrb[0].mxu0
        %v3103 = vpop.f32.mrb[0].mxu0
        %v3104 = vpop.f32.mrb[0].mxu0
        %3105 = vdwg.mxu0
        %v3106 = vsel %vm2443, %v3051, -inf
        %3107 = vmax.xlane.f32.xlu0 %v3106
        %v3108 = vpop.xlane.xlu0 %3107
        %v3109 = vsel %vm2443, %v3101, -inf
        %3110 = vmax.xlane.f32.xlu0 %v3109
        %v3111 = vpop.xlane.xlu0 %3110
        %v3112 = vsub.f32 %v3051, %v3108
        %v3113 = vsub.f32 %v3101, %v3111
        %v3114 = vmul.f32 %v3112, 1.442695
        %v3115 = vpow.pop %v3114
        %v3116 = vmul.f32 %v3113, 1.442695
        %v3117 = vpow.pop %v3116
        %v3118 = vsel %vm2443, %v3115, 0.0
        %3119 = vadd.xlane.f32.xlu0 %v3118
        %v3120 = vpop.xlane.xlu0 %3119
        %v3121 = vsel %vm2443, %v3117, 0.0
        %3122 = vadd.xlane.f32.xlu0 %v3121
        %v3123 = vpop.xlane.xlu0 %3122
        %v3124 = vrcp.pop %v3120
        %v3125 = vrcp.pop %v3123
        %v3126 = vmul.f32 %v3115, %v3124
        %v3127 = vmul.f32 %v3117, %v3125
        %v3128 = vpack.c.bf16 %v3126, %v3126
        %v3129 = vpack.c.bf16 %v3127, %v3127
        %3130 = vrot.lane.b32.xlu0 %v2337, 32
        %v3131 = vpop.permute.xlu0 %3130
        %v3134 = vsel %vm2443, %v3128, 0
        %3136 = vmatprep.subr.bf16.mxu0 0
        %3137 = vmatpush1.bf16.msra.mxu0 %v3131
        %3138 = vmatprep.subr.bf16.mxu0 0
        %3139 = vmatpush1.bf16.msra.mxu0 0
        %3140 = vmatprep.subr.bf16.mxu0 0
        %3141 = vmatpush1.bf16.msra.mxu0 0
        %3142 = vmatprep.subr.bf16.mxu0 0
        %3143 = vmatpush1.bf16.msra.mxu0 0
        %3144 = vmatprep.subr.bf16.mxu0 0
        %3145 = vmatpush1.bf16.msra.mxu0 0
        %3146 = vmatprep.subr.bf16.mxu0 0
        %3147 = vmatpush1.bf16.msra.mxu0 0
        %3148 = vmatprep.subr.bf16.mxu0 0
        %3149 = vmatpush1.bf16.msra.mxu0 0
        %3150 = vmatprep.subr.bf16.mxu0 0
        %3151 = vmatpush1.bf16.msra.mxu0 0
        %3152 = vmatprep.subr.bf16.mxu0 0
        %3153 = vmatpush1.bf16.msra.mxu0 0
        %3154 = vmatprep.subr.bf16.mxu0 0
        %3155 = vmatpush1.bf16.msra.mxu0 0
        %3156 = vmatprep.subr.bf16.mxu0 0
        %3157 = vmatpush1.bf16.msra.mxu0 0
        %3158 = vmatprep.subr.bf16.mxu0 0
        %3159 = vmatpush1.bf16.msra.mxu0 0
        %3160 = vmatprep.subr.bf16.mxu0 0
        %3161 = vmatpush1.bf16.msra.mxu0 0
        %3162 = vmatprep.subr.bf16.mxu0 0
        %3163 = vmatpush1.bf16.msra.mxu0 0
        %3164 = vmatprep.subr.bf16.mxu0 0
        %3165 = vmatpush1.bf16.msra.mxu0 0
        %3166 = vmatprep.subr.bf16.mxu0 0
        %3167 = vmatpush1.bf16.msra.mxu0 0
        %3168 = vmatprep.mubr.bf16.mxu0 0
        %3169 = vmatmul.mubr.bf16.gmra.mrb[0].mxu0 %v3134
        %v3170 = vpop.f32.mrb[0].mxu0
        %v3171 = vadd.f32 0.0, %v3170
        %v3172 = vpop.f32.mrb[0].mxu0
        %v3173 = vpop.f32.mrb[0].mxu0
        %v3174 = vpop.f32.mrb[0].mxu0
        %3175 = vdwg.mxu0
        %3176 = vrot.lane.b32.xlu0 %v2338, 32
        %v3177 = vpop.permute.xlu0 %3176
        %v3180 = vsel %vm2443, %v3129, 0
        %3182 = vmatprep.subr.bf16.mxu0 0
        %3183 = vmatpush1.bf16.msra.mxu0 %v3177
        %3184 = vmatprep.subr.bf16.mxu0 0
        %3185 = vmatpush1.bf16.msra.mxu0 0
        %3186 = vmatprep.subr.bf16.mxu0 0
        %3187 = vmatpush1.bf16.msra.mxu0 0
        %3188 = vmatprep.subr.bf16.mxu0 0
        %3189 = vmatpush1.bf16.msra.mxu0 0
        %3190 = vmatprep.subr.bf16.mxu0 0
        %3191 = vmatpush1.bf16.msra.mxu0 0
        %3192 = vmatprep.subr.bf16.mxu0 0
        %3193 = vmatpush1.bf16.msra.mxu0 0
        %3194 = vmatprep.subr.bf16.mxu0 0
        %3195 = vmatpush1.bf16.msra.mxu0 0
        %3196 = vmatprep.subr.bf16.mxu0 0
        %3197 = vmatpush1.bf16.msra.mxu0 0
        %3198 = vmatprep.subr.bf16.mxu0 0
        %3199 = vmatpush1.bf16.msra.mxu0 0
        %3200 = vmatprep.subr.bf16.mxu0 0
        %3201 = vmatpush1.bf16.msra.mxu0 0
        %3202 = vmatprep.subr.bf16.mxu0 0
        %3203 = vmatpush1.bf16.msra.mxu0 0
        %3204 = vmatprep.subr.bf16.mxu0 0
        %3205 = vmatpush1.bf16.msra.mxu0 0
        %3206 = vmatprep.subr.bf16.mxu0 0
        %3207 = vmatpush1.bf16.msra.mxu0 0
        %3208 = vmatprep.subr.bf16.mxu0 0
        %3209 = vmatpush1.bf16.msra.mxu0 0
        %3210 = vmatprep.subr.bf16.mxu0 0
        %3211 = vmatpush1.bf16.msra.mxu0 0
        %3212 = vmatprep.subr.bf16.mxu0 0
        %3213 = vmatpush1.bf16.msra.mxu0 0
        %3214 = vmatprep.mubr.bf16.mxu0 0
        %3215 = vmatmul.mubr.bf16.gmra.mrb[0].mxu0 %v3180
        %v3216 = vpop.f32.mrb[0].mxu0
        %v3217 = vadd.f32 0.0, %v3216
        %v3218 = vpop.f32.mrb[0].mxu0
        %v3219 = vpop.f32.mrb[0].mxu0
        %v3220 = vpop.f32.mrb[0].mxu0
        %3221 = vdwg.mxu0
        %v3222 = vpack.c.bf16 %v3217, %v3171
        %3224 = vrot.lane.b32.xlu0 %v3222, 96
        %v3225 = vpop.permute.xlu0 %3224
        %3227 = vst.msk [vmem:[#allocation2] sm:$0xff] %vm1895, %v3225
        %v3228 = vld [vmem:[#allocation2] sm:$0xff]
        %v3229 = vld [vmem:[#allocation14] sm:$0xf]
        %v3230 = vld [vmem:[#allocation14 + $0x4] sm:$0xf]
        %v3231 = vld [vmem:[#allocation14 + $0x8] sm:$0xf]
        %v3232 = vld [vmem:[#allocation14 + $0xc] sm:$0xf]
        %v3233 = vld [vmem:[#allocation14 + $0x10] sm:$0xf]
        %v3234 = vld [vmem:[#allocation14 + $0x14] sm:$0xf]
        %v3235 = vld [vmem:[#allocation14 + $0x18] sm:$0xf]
        %v3236 = vld [vmem:[#allocation14 + $0x1c] sm:$0xf]
        %v3237 = vld [vmem:[#allocation14 + $0x20] sm:$0xf]
        %v3238 = vld [vmem:[#allocation14 + $0x24] sm:$0xf]
        %v3239 = vld [vmem:[#allocation14 + $0x28] sm:$0xf]
        %v3240 = vld [vmem:[#allocation14 + $0x2c] sm:$0xf]
        %v3241 = vld [vmem:[#allocation14 + $0x30] sm:$0xf]
        %v3242 = vld [vmem:[#allocation14 + $0x34] sm:$0xf]
        %v3243 = vld [vmem:[#allocation14 + $0x38] sm:$0xf]
        %v3244 = vld [vmem:[#allocation14 + $0x3c] sm:$0xf]
        %v3245 = vlaneseq
        %v3246 = vshrl.u32 %v3245, 7
        %v3247 = vsub.s32 2, %v3246
        %v3248 = vrot.slane %v697, %v3247
        %v3265 = vunpack.c.l.b16 %v3229
        %v3266 = vunpack.c.l.b16 %v3230
        %v3267 = vunpack.c.l.b16 %v3231
        %v3268 = vunpack.c.l.b16 %v3232
        %v3269 = vunpack.c.l.b16 %v3233
        %v3270 = vunpack.c.l.b16 %v3234
        %v3271 = vunpack.c.l.b16 %v3235
        %v3272 = vunpack.c.l.b16 %v3236
        %v3273 = vunpack.c.l.b16 %v3237
        %v3274 = vunpack.c.l.b16 %v3238
        %v3275 = vunpack.c.l.b16 %v3239
        %v3276 = vunpack.c.l.b16 %v3240
        %v3277 = vunpack.c.l.b16 %v3241
        %v3278 = vunpack.c.l.b16 %v3242
        %v3279 = vunpack.c.l.b16 %v3243
        %v3280 = vunpack.c.l.b16 %v3244
        %v3281 = vpack.c.b16 %v3266, %v3265
        %v3282 = vpack.c.b16 %v3268, %v3267
        %v3283 = vpack.c.b16 %v3270, %v3269
        %v3284 = vpack.c.b16 %v3272, %v3271
        %v3285 = vpack.c.b16 %v3274, %v3273
        %v3286 = vpack.c.b16 %v3276, %v3275
        %v3287 = vpack.c.b16 %v3278, %v3277
        %v3288 = vpack.c.b16 %v3280, %v3279
        %3297 = vmatprep.subr.bf16.mxu0 0
        %3298 = vmatpush1.bf16.msra.mxu0 %v3281
        %3299 = vmatprep.subr.bf16.mxu0 0
        %3300 = vmatpush1.bf16.msra.mxu0 %v3282
        %3301 = vmatprep.subr.bf16.mxu0 0
        %3302 = vmatpush1.bf16.msra.mxu0 %v3283
        %3303 = vmatprep.subr.bf16.mxu0 0
        %3304 = vmatpush1.bf16.msra.mxu0 %v3284
        %3305 = vmatprep.subr.bf16.mxu0 0
        %3306 = vmatpush1.bf16.msra.mxu0 %v3285
        %3307 = vmatprep.subr.bf16.mxu0 0
        %3308 = vmatpush1.bf16.msra.mxu0 %v3286
        %3309 = vmatprep.subr.bf16.mxu0 0
        %3310 = vmatpush1.bf16.msra.mxu0 %v3287
        %3311 = vmatprep.subr.bf16.mxu0 0
        %3312 = vmatpush1.bf16.msra.mxu0 %v3288
        %3313 = vmatprep.subr.bf16.mxu0 0
        %3314 = vmatpush1.bf16.msra.mxu0 0
        %3315 = vmatprep.subr.bf16.mxu0 0
        %3316 = vmatpush1.bf16.msra.mxu0 0
        %3317 = vmatprep.subr.bf16.mxu0 0
        %3318 = vmatpush1.bf16.msra.mxu0 0
        %3319 = vmatprep.subr.bf16.mxu0 0
        %3320 = vmatpush1.bf16.msra.mxu0 0
        %3321 = vmatprep.subr.bf16.mxu0 0
        %3322 = vmatpush1.bf16.msra.mxu0 0
        %3323 = vmatprep.subr.bf16.mxu0 0
        %3324 = vmatpush1.bf16.msra.mxu0 0
        %3325 = vmatprep.subr.bf16.mxu0 0
        %3326 = vmatpush1.bf16.msra.mxu0 0
        %3327 = vmatprep.subr.bf16.mxu0 0
        %3328 = vmatpush1.bf16.msra.mxu0 0
        %3329 = vmatprep.mubr.bf16.mxu0 0
        %3330 = vmatmul.mubr.bf16.gmra.mrb[0].mxu0 %v3228
        %v3331 = vpop.f32.mrb[0].mxu0
        %v3332 = vadd.f32 %v3248, %v3331
        %v3333 = vpop.f32.mrb[0].mxu0
        %v3334 = vpop.f32.mrb[0].mxu0
        %v3335 = vadd.f32 %v3248, %v3334
        %v3336 = vpop.f32.mrb[0].mxu0
        %3337 = vdwg.mxu0
        %v3338 = vadd.f32 %v2058, %v3332
        %v3339 = vadd.f32 %v2059, %v3335
        %3340 = vadd.xlane.f32.xlu0 %v3338
        %v3341 = vpop.xlane.xlu0 %3340
        %3342 = vadd.xlane.f32.xlu0 %v3339
        %v3343 = vpop.xlane.xlu0 %3342
        %v3344 = vmul.f32 %v3341, %v2013
        %v3345 = vmul.f32 %v3343, %v2013
        %v3346 = vsub.f32 %v3338, %v3344
        %v3347 = vsub.f32 %v3339, %v3345
        %v3348 = vmul.f32 %v3346, %v3346
        %v3349 = vmul.f32 %v3347, %v3347
        %3350 = vadd.xlane.f32.xlu0 %v3348
        %v3351 = vpop.xlane.xlu0 %3350
        %3352 = vadd.xlane.f32.xlu0 %v3349
        %v3353 = vpop.xlane.xlu0 %3352
        %v3354 = vmul.f32 %v3351, 0.007874016
        %v3355 = vmul.f32 %v3353, 0.007874016
        %v3356 = vrsqrt.pop %v3354
        %v3357 = vmul.f32 %v3354, %v3356
        %vm3358 = vcmp.eq.f32.partialorder %v3354, inf
        %v3359 = vsel %vm3358, %v3354, %v3357
        %vm3360 = vcmp.eq.f32.partialorder %v3354, 0.0
        %v3361 = vand.u32 %v3354, 2147483648
        %v3362 = vsel %vm3360, %v3361, %v3359
        %v3363 = vrsqrt.pop %v3355
        %v3364 = vmul.f32 %v3355, %v3363
        %vm3365 = vcmp.eq.f32.partialorder %v3355, inf
        %v3366 = vsel %vm3365, %v3355, %v3364
        %vm3367 = vcmp.eq.f32.partialorder %v3355, 0.0
        %v3368 = vand.u32 %v3355, 2147483648
        %v3369 = vsel %vm3367, %v3368, %v3366
        %v3370 = vadd.f32 %v3362, 1e-06
        %v3371 = vadd.f32 %v3369, 1e-06
        %v3372 = vrcp.pop %v3370
        %v3373 = vmul.f32 1.0, %v3372
        %v3374 = vrcp.pop %v3371
        %v3375 = vmul.f32 1.0, %v3374
        %v3376 = vmul.f32 %v3346, %v3373
        %v3377 = vmul.f32 %v3347, %v3375
        %v3378 = vlaneseq
        %v3379 = vshrl.u32 %v3378, 7
        %v3380 = vsub.s32 6, %v3379
        %v3381 = vrot.slane %v697, %v3380
        %v3382 = vmul.f32 %v3381, %v3376
        %v3383 = vmul.f32 %v3381, %v3377
        %v3384 = vlaneseq
        %v3385 = vshrl.u32 %v3384, 7
        %v3386 = vsub.s32 7, %v3385
        %v3387 = vrot.slane %v697, %v3386
        %v3388 = vadd.f32 %v3382, %v3387
        %v3389 = vadd.f32 %v3383, %v3387
        %v3390 = vld [vmem:[%s12] sm:$0x3]
        %v3391 = vpack.c.bf16 %v3389, %v3388
        %v3392 = vld [vmem:[#allocation15] sm:$0xff]
        %v3393 = vld [vmem:[#allocation15 + $0x8] sm:$0xff]
        %v3394 = vld [vmem:[#allocation15 + $0x10] sm:$0xff]
        %v3395 = vld [vmem:[#allocation15 + $0x18] sm:$0xff]
        %v3396 = vld [vmem:[#allocation15 + $0x20] sm:$0xff]
        %v3397 = vld [vmem:[#allocation15 + $0x28] sm:$0xff]
        %v3398 = vld [vmem:[#allocation15 + $0x30] sm:$0xff]
        %v3399 = vld [vmem:[#allocation15 + $0x38] sm:$0xff]
        %v3400 = vld [vmem:[#allocation15 + $0x40] sm:$0xff]
        %v3401 = vld [vmem:[#allocation15 + $0x48] sm:$0xff]
        %v3402 = vld [vmem:[#allocation15 + $0x50] sm:$0xff]
        %v3403 = vld [vmem:[#allocation15 + $0x58] sm:$0xff]
        %v3404 = vld [vmem:[#allocation15 + $0x60] sm:$0xff]
        %v3405 = vld [vmem:[#allocation15 + $0x68] sm:$0xff]
        %v3406 = vld [vmem:[#allocation15 + $0x70] sm:$0xff]
        %v3407 = vld [vmem:[#allocation15 + $0x78] sm:$0xff]
        %v3409 = vlaneseq
        %v3410 = vshrl.u32 %v3409, 7
        %v3411 = vsub.s32 0, %v3410
        %v3412 = vrot.slane %v3390, %v3411
        %v3413 = vlaneseq
        %v3414 = vshrl.u32 %v3413, 7
        %v3415 = vsub.s32 1, %v3414
        %v3416 = vrot.slane %v3390, %v3415
        %v3435 = vunpack.c.l.b16 %v3392
        %v3436 = vunpack.c.h.b16 %v3392
        %v3437 = vunpack.c.l.b16 %v3393
        %v3438 = vunpack.c.h.b16 %v3393
        %v3439 = vunpack.c.l.b16 %v3394
        %v3440 = vunpack.c.h.b16 %v3394
        %v3441 = vunpack.c.l.b16 %v3395
        %v3442 = vunpack.c.h.b16 %v3395
        %v3443 = vunpack.c.l.b16 %v3396
        %v3444 = vunpack.c.h.b16 %v3396
        %v3445 = vunpack.c.l.b16 %v3397
        %v3446 = vunpack.c.h.b16 %v3397
        %v3447 = vunpack.c.l.b16 %v3398
        %v3448 = vunpack.c.h.b16 %v3398
        %v3449 = vunpack.c.l.b16 %v3399
        %v3450 = vunpack.c.h.b16 %v3399
        %v3451 = vunpack.c.l.b16 %v3400
        %v3452 = vunpack.c.h.b16 %v3400
        %v3453 = vunpack.c.l.b16 %v3401
        %v3454 = vunpack.c.h.b16 %v3401
        %v3455 = vunpack.c.l.b16 %v3402
        %v3456 = vunpack.c.h.b16 %v3402
        %v3457 = vunpack.c.l.b16 %v3403
        %v3458 = vunpack.c.h.b16 %v3403
        %v3459 = vunpack.c.l.b16 %v3404
        %v3460 = vunpack.c.h.b16 %v3404
        %v3461 = vunpack.c.l.b16 %v3405
        %v3462 = vunpack.c.h.b16 %v3405
        %v3463 = vunpack.c.l.b16 %v3406
        %v3464 = vunpack.c.h.b16 %v3406
        %v3465 = vunpack.c.l.b16 %v3407
        %v3466 = vunpack.c.h.b16 %v3407
        %v3467 = vpack.c.b16 %v3437, %v3435
        %v3468 = vpack.c.b16 %v3438, %v3436
        %v3469 = vpack.c.b16 %v3441, %v3439
        %v3470 = vpack.c.b16 %v3442, %v3440
        %v3471 = vpack.c.b16 %v3445, %v3443
        %v3472 = vpack.c.b16 %v3446, %v3444
        %v3473 = vpack.c.b16 %v3449, %v3447
        %v3474 = vpack.c.b16 %v3450, %v3448
        %v3475 = vpack.c.b16 %v3453, %v3451
        %v3476 = vpack.c.b16 %v3454, %v3452
        %v3477 = vpack.c.b16 %v3457, %v3455
        %v3478 = vpack.c.b16 %v3458, %v3456
        %v3479 = vpack.c.b16 %v3461, %v3459
        %v3480 = vpack.c.b16 %v3462, %v3460
        %v3481 = vpack.c.b16 %v3465, %v3463
        %v3482 = vpack.c.b16 %v3466, %v3464
        %3499 = vmatprep.subr.bf16.mxu0 %v3468
        %3500 = vmatpush1.bf16.msra.mxu0 %v3467
        %3501 = vmatprep.subr.bf16.mxu0 %v3470
        %3502 = vmatpush1.bf16.msra.mxu0 %v3469
        %3503 = vmatprep.subr.bf16.mxu0 %v3472
        %3504 = vmatpush1.bf16.msra.mxu0 %v3471
        %3505 = vmatprep.subr.bf16.mxu0 %v3474
        %3506 = vmatpush1.bf16.msra.mxu0 %v3473
        %3507 = vmatprep.subr.bf16.mxu0 %v3476
        %3508 = vmatpush1.bf16.msra.mxu0 %v3475
        %3509 = vmatprep.subr.bf16.mxu0 %v3478
        %3510 = vmatpush1.bf16.msra.mxu0 %v3477
        %3511 = vmatprep.subr.bf16.mxu0 %v3480
        %3512 = vmatpush1.bf16.msra.mxu0 %v3479
        %3513 = vmatprep.subr.bf16.mxu0 %v3482
        %3514 = vmatpush1.bf16.msra.mxu0 %v3481
        %3515 = vmatprep.subr.bf16.mxu0 0
        %3516 = vmatpush1.bf16.msra.mxu0 0
        %3517 = vmatprep.subr.bf16.mxu0 0
        %3518 = vmatpush1.bf16.msra.mxu0 0
        %3519 = vmatprep.subr.bf16.mxu0 0
        %3520 = vmatpush1.bf16.msra.mxu0 0
        %3521 = vmatprep.subr.bf16.mxu0 0
        %3522 = vmatpush1.bf16.msra.mxu0 0
        %3523 = vmatprep.subr.bf16.mxu0 0
        %3524 = vmatpush1.bf16.msra.mxu0 0
        %3525 = vmatprep.subr.bf16.mxu0 0
        %3526 = vmatpush1.bf16.msra.mxu0 0
        %3527 = vmatprep.subr.bf16.mxu0 0
        %3528 = vmatpush1.bf16.msra.mxu0 0
        %3529 = vmatprep.subr.bf16.mxu0 0
        %3530 = vmatpush1.bf16.msra.mxu0 0
        %3531 = vmatprep.mubr.bf16.mxu0 0
        %3532 = vmatmul.mubr.bf16.gmra.mrb[0].mxu0 %v3391
        %v3533 = vpop.f32.mrb[0].mxu0
        %v3534 = vadd.f32 %v3412, %v3533
        %v3535 = vpop.f32.mrb[0].mxu0
        %v3536 = vadd.f32 %v3416, %v3535
        %v3537 = vpop.f32.mrb[0].mxu0
        %v3538 = vadd.f32 %v3412, %v3537
        %v3539 = vpop.f32.mrb[0].mxu0
        %v3540 = vadd.f32 %v3416, %v3539
        %3541 = vdwg.mxu0
        %v3542 = vmax.f32 %v3534, 0.0
        %v3543 = vmax.f32 %v3536, 0.0
        %v3544 = vmax.f32 %v3538, 0.0
        %v3545 = vmax.f32 %v3540, 0.0
        %v3546 = vpack.c.bf16 %v3544, %v3542
        %v3547 = vpack.c.bf16 %v3545, %v3543
        %v3548 = vld [vmem:[#allocation17] sm:$0xf]
        %v3549 = vld [vmem:[#allocation17 + $0x4] sm:$0xf]
        %v3550 = vld [vmem:[#allocation17 + $0x8] sm:$0xf]
        %v3551 = vld [vmem:[#allocation17 + $0xc] sm:$0xf]
        %v3552 = vld [vmem:[#allocation17 + $0x10] sm:$0xf]
        %v3553 = vld [vmem:[#allocation17 + $0x14] sm:$0xf]
        %v3554 = vld [vmem:[#allocation17 + $0x18] sm:$0xf]
        %v3555 = vld [vmem:[#allocation17 + $0x1c] sm:$0xf]
        %v3556 = vld [vmem:[#allocation17 + $0x20] sm:$0xf]
        %v3557 = vld [vmem:[#allocation17 + $0x24] sm:$0xf]
        %v3558 = vld [vmem:[#allocation17 + $0x28] sm:$0xf]
        %v3559 = vld [vmem:[#allocation17 + $0x2c] sm:$0xf]
        %v3560 = vld [vmem:[#allocation17 + $0x30] sm:$0xf]
        %v3561 = vld [vmem:[#allocation17 + $0x34] sm:$0xf]
        %v3562 = vld [vmem:[#allocation17 + $0x38] sm:$0xf]
        %v3563 = vld [vmem:[#allocation17 + $0x3c] sm:$0xf]
        %v3564 = vld [vmem:[#allocation17 + $0x40] sm:$0xf]
        %v3565 = vld [vmem:[#allocation17 + $0x44] sm:$0xf]
        %v3566 = vld [vmem:[#allocation17 + $0x48] sm:$0xf]
        %v3567 = vld [vmem:[#allocation17 + $0x4c] sm:$0xf]
        %v3568 = vld [vmem:[#allocation17 + $0x50] sm:$0xf]
        %v3569 = vld [vmem:[#allocation17 + $0x54] sm:$0xf]
        %v3570 = vld [vmem:[#allocation17 + $0x58] sm:$0xf]
        %v3571 = vld [vmem:[#allocation17 + $0x5c] sm:$0xf]
        %v3572 = vld [vmem:[#allocation17 + $0x60] sm:$0xf]
        %v3573 = vld [vmem:[#allocation17 + $0x64] sm:$0xf]
        %v3574 = vld [vmem:[#allocation17 + $0x68] sm:$0xf]
        %v3575 = vld [vmem:[#allocation17 + $0x6c] sm:$0xf]
        %v3576 = vld [vmem:[#allocation17 + $0x70] sm:$0xf]
        %v3577 = vld [vmem:[#allocation17 + $0x74] sm:$0xf]
        %v3578 = vld [vmem:[#allocation17 + $0x78] sm:$0xf]
        %v3579 = vld [vmem:[#allocation17 + $0x7c] sm:$0xf]
        %v3580 = vlaneseq
        %v3581 = vshrl.u32 %v3580, 7
        %v3582 = vsub.s32 3, %v3581
        %v3583 = vrot.slane %v697, %v3582
        %v3616 = vunpack.c.l.b16 %v3548
        %v3617 = vunpack.c.l.b16 %v3549
        %v3618 = vunpack.c.l.b16 %v3550
        %v3619 = vunpack.c.l.b16 %v3551
        %v3620 = vunpack.c.l.b16 %v3552
        %v3621 = vunpack.c.l.b16 %v3553
        %v3622 = vunpack.c.l.b16 %v3554
        %v3623 = vunpack.c.l.b16 %v3555
        %v3624 = vunpack.c.l.b16 %v3556
        %v3625 = vunpack.c.l.b16 %v3557
        %v3626 = vunpack.c.l.b16 %v3558
        %v3627 = vunpack.c.l.b16 %v3559
        %v3628 = vunpack.c.l.b16 %v3560
        %v3629 = vunpack.c.l.b16 %v3561
        %v3630 = vunpack.c.l.b16 %v3562
        %v3631 = vunpack.c.l.b16 %v3563
        %v3632 = vunpack.c.l.b16 %v3564
        %v3633 = vunpack.c.l.b16 %v3565
        %v3634 = vunpack.c.l.b16 %v3566
        %v3635 = vunpack.c.l.b16 %v3567
        %v3636 = vunpack.c.l.b16 %v3568
        %v3637 = vunpack.c.l.b16 %v3569
        %v3638 = vunpack.c.l.b16 %v3570
        %v3639 = vunpack.c.l.b16 %v3571
        %v3640 = vunpack.c.l.b16 %v3572
        %v3641 = vunpack.c.l.b16 %v3573
        %v3642 = vunpack.c.l.b16 %v3574
        %v3643 = vunpack.c.l.b16 %v3575
        %v3644 = vunpack.c.l.b16 %v3576
        %v3645 = vunpack.c.l.b16 %v3577
        %v3646 = vunpack.c.l.b16 %v3578
        %v3647 = vunpack.c.l.b16 %v3579
        %v3648 = vpack.c.b16 %v3617, %v3616
        %v3649 = vpack.c.b16 %v3619, %v3618
        %v3650 = vpack.c.b16 %v3621, %v3620
        %v3651 = vpack.c.b16 %v3623, %v3622
        %v3652 = vpack.c.b16 %v3625, %v3624
        %v3653 = vpack.c.b16 %v3627, %v3626
        %v3654 = vpack.c.b16 %v3629, %v3628
        %v3655 = vpack.c.b16 %v3631, %v3630
        %v3656 = vpack.c.b16 %v3633, %v3632
        %v3657 = vpack.c.b16 %v3635, %v3634
        %v3658 = vpack.c.b16 %v3637, %v3636
        %v3659 = vpack.c.b16 %v3639, %v3638
        %v3660 = vpack.c.b16 %v3641, %v3640
        %v3661 = vpack.c.b16 %v3643, %v3642
        %v3662 = vpack.c.b16 %v3645, %v3644
        %v3663 = vpack.c.b16 %v3647, %v3646
        %3680 = vmatprep.subr.bf16.mxu0 0
        %3681 = vmatpush1.bf16.msra.mxu0 %v3648
        %3682 = vmatprep.subr.bf16.mxu0 0
        %3683 = vmatpush1.bf16.msra.mxu0 %v3649
        %3684 = vmatprep.subr.bf16.mxu0 0
        %3685 = vmatpush1.bf16.msra.mxu0 %v3650
        %3686 = vmatprep.subr.bf16.mxu0 0
        %3687 = vmatpush1.bf16.msra.mxu0 %v3651
        %3688 = vmatprep.subr.bf16.mxu0 0
        %3689 = vmatpush1.bf16.msra.mxu0 %v3652
        %3690 = vmatprep.subr.bf16.mxu0 0
        %3691 = vmatpush1.bf16.msra.mxu0 %v3653
        %3692 = vmatprep.subr.bf16.mxu0 0
        %3693 = vmatpush1.bf16.msra.mxu0 %v3654
        %3694 = vmatprep.subr.bf16.mxu0 0
        %3695 = vmatpush1.bf16.msra.mxu0 %v3655
        %3696 = vmatprep.subr.bf16.mxu0 0
        %3697 = vmatpush1.bf16.msra.mxu0 %v3656
        %3698 = vmatprep.subr.bf16.mxu0 0
        %3699 = vmatpush1.bf16.msra.mxu0 %v3657
        %3700 = vmatprep.subr.bf16.mxu0 0
        %3701 = vmatpush1.bf16.msra.mxu0 %v3658
        %3702 = vmatprep.subr.bf16.mxu0 0
        %3703 = vmatpush1.bf16.msra.mxu0 %v3659
        %3704 = vmatprep.subr.bf16.mxu0 0
        %3705 = vmatpush1.bf16.msra.mxu0 %v3660
        %3706 = vmatprep.subr.bf16.mxu0 0
        %3707 = vmatpush1.bf16.msra.mxu0 %v3661
        %3708 = vmatprep.subr.bf16.mxu0 0
        %3709 = vmatpush1.bf16.msra.mxu0 %v3662
        %3710 = vmatprep.subr.bf16.mxu0 0
        %3711 = vmatpush1.bf16.msra.mxu0 %v3663
        %3712 = vmatprep.mubr.bf16.mxu0 %v3547
        %3713 = vmatmul.mubr.bf16.gmra.mrb[0].mxu0 %v3546
        %v3714 = vpop.f32.mrb[0].mxu0
        %v3715 = vadd.f32 %v3583, %v3714
        %v3716 = vpop.f32.mrb[0].mxu0
        %v3717 = vpop.f32.mrb[0].mxu0
        %v3718 = vadd.f32 %v3583, %v3717
        %v3719 = vpop.f32.mrb[0].mxu0
        %3720 = vdwg.mxu0
        %v3721 = vadd.f32 %v3388, %v3715
        %v3722 = vadd.f32 %v3389, %v3718
        %3723 = vadd.xlane.f32.xlu0 %v3721
        %v3724 = vpop.xlane.xlu0 %3723
        %3725 = vadd.xlane.f32.xlu0 %v3722
        %v3726 = vpop.xlane.xlu0 %3725
        %v3727 = vmul.f32 %v3724, %v2013
        %v3728 = vmul.f32 %v3726, %v2013
        %v3729 = vsub.f32 %v3721, %v3727
        %v3730 = vsub.f32 %v3722, %v3728
        %v3731 = vmul.f32 %v3729, %v3729
        %v3732 = vmul.f32 %v3730, %v3730
        %3733 = vadd.xlane.f32.xlu0 %v3731
        %v3734 = vpop.xlane.xlu0 %3733
        %3735 = vadd.xlane.f32.xlu0 %v3732
        %v3736 = vpop.xlane.xlu0 %3735
        %v3737 = vmul.f32 %v3734, 0.007874016
        %v3738 = vmul.f32 %v3736, 0.007874016
        %v3739 = vrsqrt.pop %v3737
        %v3740 = vmul.f32 %v3737, %v3739
        %vm3741 = vcmp.eq.f32.partialorder %v3737, inf
        %v3742 = vsel %vm3741, %v3737, %v3740
        %vm3743 = vcmp.eq.f32.partialorder %v3737, 0.0
        %v3744 = vand.u32 %v3737, 2147483648
        %v3745 = vsel %vm3743, %v3744, %v3742
        %v3746 = vrsqrt.pop %v3738
        %v3747 = vmul.f32 %v3738, %v3746
        %vm3748 = vcmp.eq.f32.partialorder %v3738, inf
        %v3749 = vsel %vm3748, %v3738, %v3747
        %vm3750 = vcmp.eq.f32.partialorder %v3738, 0.0
        %v3751 = vand.u32 %v3738, 2147483648
        %v3752 = vsel %vm3750, %v3751, %v3749
        %v3753 = vadd.f32 %v3745, 1e-06
        %v3754 = vadd.f32 %v3752, 1e-06
        %v3755 = vrcp.pop %v3753
        %v3756 = vmul.f32 1.0, %v3755
        %v3757 = vrcp.pop %v3754
        %v3758 = vmul.f32 1.0, %v3757
        %v3759 = vmul.f32 %v3729, %v3756
        %v3760 = vmul.f32 %v3730, %v3758
        %v3761 = vlaneseq
        %v3762 = vshrl.u32 %v3761, 7
        %v3763 = vsub.s32 0, %v3762
        %v3764 = vrot.slane %v698, %v3763
        %v3765 = vmul.f32 %v3764, %v3759
        %v3766 = vmul.f32 %v3764, %v3760
        %v3767 = vlaneseq
        %v3768 = vshrl.u32 %v3767, 7
        %v3769 = vsub.s32 1, %v3768
        %v3770 = vrot.slane %v698, %v3769
        %v3771 = vadd.f32 %v3765, %v3770
        %v3772 = vadd.f32 %v3766, %v3770
        %3773 = vst [vmem:[%s682] sm:$0xff] %v3771
        %3774 = vst [vmem:[%s682 + $0x8] sm:$0xff] %v3772
        %s3775 = sand.u32 %s381, 1
        %s3776 = scalar_lea.sflag [#allocation5], %s3775
        %s3777 = sand.u32 %s381, 1
        %s3778 = smul.addr %s3777, 16
        %s3779 = scalar_lea.vmem [#allocation18], %s3778
        // Predicated region
        $region117: #{tpu_custom_call.1} parent=79 // pred_check
          %p3780 = pneg %p391
        $region118: #{tpu_custom_call.1} parent=79 // pred_check_branch
          %3782 = sbr.rel (%p3780) target = $region120
        $region119: #{tpu_custom_call.1} parent=79 // pred_region
          %s3783 = smul.u32 2, %s38
          %s3785 = ssub.s32 256, 256
          %3786 = vsyncadd %s3776, %s3785
          %s3787 = smul.addr %s3783, 128
          %s3788 = scalar_lea.hbm %s15, %s3787
          %s3789 = sshll.u32 %s3779, 4
          %s3790 = int_to_ptr.vmem [resolvable:$true] %s3789
          %3795 = dma.vmem_to_hbm [thread:$0]  %s3790, 256, %s3788, %s3776, 128, 128, 8
        $region120: #{tpu_custom_call.1} parent=79 // pred_fallthru
          _
      $region80: #{tpu_custom_call.1} parent=5 // pred_fallthru
        _
      %p3796 = scmp.le.s32.totalorder 2, %s33
      // Predicated region
      $region121: #{tpu_custom_call.1} parent=5 // pred_check
        %p3797 = pneg %p3796
      $region122: #{tpu_custom_call.1} parent=5 // pred_check_branch
        %3799 = sbr.rel (%p3797) target = $region124
      $region123: #{tpu_custom_call.1} parent=5 // pred_region
        %s3800 = ssub.s32 %s33, 2
        // Predicated region
        $region125: #{tpu_custom_call.1} parent=123 // pred_check
          %p3801 = pneg %p397
        $region126: #{tpu_custom_call.1} parent=123 // pred_check_branch
          %3803 = sbr.rel (%p3801) target = $region128
        $region127: #{tpu_custom_call.1} parent=123 // pred_region
          %s3804 = sand.u32 %s382, 1
          %s3805 = scalar_lea.sflag [#allocation5], %s3804
          %s3806 = sand.u32 %s382, 1
          %s3807 = smul.addr %s3806, 16
          %s3808 = scalar_lea.vmem [#allocation18], %s3807
          %3809 = dma.done %s3805, 256
        $region128: #{tpu_custom_call.1} parent=123 // pred_fallthru
          _
      $region124: #{tpu_custom_call.1} parent=5 // pred_fallthru
        _
    $region6: #{tpu_custom_call.1} parent=1 // loop_footer
      %s37 = sadd.s32 1, %s33
    $region7: #{tpu_custom_call.1} parent=1 // loop_footer_branch
      %32 = sbr.rel target = $region3
    $region8: #{tpu_custom_call.1} parent=1 // loop_exit
      _
    %3810 = vsyncpa [#allocation4], 1
    %s3811 = scalar_lea.sflag [#allocation4], 1
    %3812 = vsyncpa %s3811, 1
    %3813 = vsyncpa [#allocation7], 1
    %s3814 = scalar_lea.sflag [#allocation7], 1
    %3815 = vsyncpa %s3814, 1
    %3816 = vsyncpa [#allocation10], 1
    %3817 = vsyncpa [#allocation13], 1
    %3818 = vsyncpa [#allocation16], 1
    %3819 = vsyncpa [#allocation5], 1
    %s3820 = scalar_lea.sflag [#allocation5], 1
    %3821 = vsyncpa %s3820, 1

// kernel: tpu_custom_call.1
$region0: #{tpu_custom_call.1}
  #allocation0 [shape = 'u32[]', space=smem, size = 0x4, offset = 0x4, fixed_abs, tag = 'smem constant byte address 0x4 - core index']
  #allocation1 [shape = 'u32[144,128]{1,0:T(1,128)}', space=vmem, size = 0x12000, scoped, tag = 'internal scratch']
  #allocation2 [shape = 'bf16[16,128]{1,0:T(16,128)(2,1)}', space=vmem, size = 0x1000, scoped, tag = 'scratch operand']
  %s0 = inlined_call_operand.hbm [shape: f32[4,8,128], index: 0, kind: input, shape index: {}]
  %s1 = inlined_call_operand.hbm [shape: f32[4,16,128], index: 1, kind: input, shape index: {}]
  %s2 = inlined_call_operand.vmem [shape: f32[4,1,8], index: 2, kind: input, shape index: {}]
  %s3 = inlined_call_operand.vmem [shape: f32[4,1,16], index: 3, kind: input, shape index: {}]
  %s4 = inlined_call_operand.hbm [shape: bf16[128,384], index: 4, kind: input, shape index: {}]
  %s5 = inlined_call_operand.vmem [shape: f32[1,384], index: 5, kind: input, shape index: {}]
  %s6 = inlined_call_operand.hbm [shape: bf16[128,128], index: 6, kind: input, shape index: {}]
  %s7 = inlined_call_operand.hbm [shape: bf16[128,128], index: 7, kind: input, shape index: {}]
  %s8 = inlined_call_operand.hbm [shape: bf16[128,256], index: 8, kind: input, shape index: {}]
  %s9 = inlined_call_operand.vmem [shape: f32[1,256], index: 9, kind: input, shape index: {}]
  %s10 = inlined_call_operand.hbm [shape: bf16[128,128], index: 10, kind: input, shape index: {}]
  %s11 = inlined_call_operand.hbm [shape: bf16[128,256], index: 11, kind: input, shape index: {}]
  %s12 = inlined_call_operand.vmem [shape: f32[1,256], index: 12, kind: input, shape index: {}]
  %s13 = inlined_call_operand.hbm [shape: bf16[256,128], index: 13, kind: input, shape index: {}]
  %s14 = inlined_call_operand.vmem [shape: f32[10,128], index: 14, kind: input, shape index: {}]
  %s15 = inlined_call_operand.hbm [shape: f32[4,8,128], index: 15, kind: output, shape index: {}]
  %s16 = sld [smem:[#allocation0]]
  $region129: #{tpu_custom_call.1} parent=0
    _
  %s18 = ssub.s32 1, %s16
  %s19 = scalar_select 0, %s18, %s16
  $region1: #{tpu_custom_call.1} parent=0
    #allocation3 [shape = 'u8[16384]{0}', space=vmem, size = 0x4000, scoped, tag = 'input window, operand 0']
    #allocation4 [shape = 's32[2]{0}', space=sflag, size = 0x8, scoped, tag = 'scoped memory for tpu_custom_call.1']
    #allocation5 [shape = 's32[2]{0}', space=sflag, size = 0x8, scoped, tag = 'scoped memory for tpu_custom_call.1']
    #allocation6 [shape = 'u8[32768]{0}', space=vmem, size = 0x8000, scoped, tag = 'input window, operand 1']
    #allocation7 [shape = 's32[2]{0}', space=sflag, size = 0x8, scoped, tag = 'scoped memory for tpu_custom_call.1']
    #allocation8 [shape = 'u8[98304]{0}', space=vmem, size = 0x18000, scoped, tag = 'input window, operand 4, single buffered']
    #allocation9 [shape = 'u8[32768]{0}', space=vmem, size = 0x8000, scoped, tag = 'input window, operand 6, single buffered']
    #allocation10 [shape = 's32[1]{0}', space=sflag, size = 0x4, scoped, tag = 'scoped memory for tpu_custom_call.1']
    #allocation11 [shape = 'u8[32768]{0}', space=vmem, size = 0x8000, scoped, tag = 'input window, operand 7, single buffered']
    #allocation12 [shape = 'u8[65536]{0}', space=vmem, size = 0x10000, scoped, tag = 'input window, operand 8, single buffered']
    #allocation13 [shape = 's32[1]{0}', space=sflag, size = 0x4, scoped, tag = 'scoped memory for tpu_custom_call.1']
    #allocation14 [shape = 'u8[32768]{0}', space=vmem, size = 0x8000, scoped, tag = 'input window, operand 10, single buffered']
    #allocation15 [shape = 'u8[65536]{0}', space=vmem, size = 0x10000, scoped, tag = 'input window, operand 11, single buffered']
    #allocation16 [shape = 's32[1]{0}', space=sflag, size = 0x4, scoped, tag = 'scoped memory for tpu_custom_call.1']
    #allocation17 [shape = 'u8[65536]{0}', space=vmem, size = 0x10000, scoped, tag = 'input window, operand 13, single buffered']
    #allocation18 [shape = 'u8[16384]{0}', space=vmem, size = 0x4000, scoped, tag = 'output window, operand 0']
    %20 = vsyncpa [#allocation4], 0
    %s21 = scalar_lea.sflag [#allocation4], 1
    %22 = vsyncpa %s21, 0
    %23 = vsyncpa [#allocation7], 0
    %s24 = scalar_lea.sflag [#allocation7], 1
    %25 = vsyncpa %s24, 0
    %26 = vsyncpa [#allocation10], 0
    %27 = vsyncpa [#allocation13], 0
    %28 = vsyncpa [#allocation16], 0
    %29 = vsyncpa [#allocation5], 0
    %s30 = scalar_lea.sflag [#allocation5], 1
    %31 = vsyncpa %s30, 0
    loop: start=0, step=1, limit=4
    $region2: #{tpu_custom_call.1} parent=1 // loop_pre_header
      _
    $region3: #{tpu_custom_call.1} parent=1 // loop_header
      %s33 = sphi 0, %s37
      %p34 = scmp.ge.s32.totalorder %s33, 4
      %s43 = sphi 0, %s45
      %s46 = sphi 0, %s43
      %s47 = sphi 0, %s46
      %s63 = sphi 0, %s47
      %s69 = sphi 0, %s71
      %s72 = sphi 0, %s69
      %s73 = sphi 0, %s72
      %s89 = sphi 0, %s73
      %s95 = sphi 0, %s97
      %s98 = sphi 0, %s95
      %s99 = sphi 0, %s98
      %s115 = sphi 0, %s99
      %s121 = sphi 0, %s123
      %s124 = sphi 0, %s121
      %s125 = sphi 0, %s124
      %s141 = sphi 0, %s125
      %s145 = sphi 0, %s145
      %s147 = sphi 0, %s145
      %s148 = sphi 0, %s147
      %s162 = sphi 0, %s148
      %s166 = sphi 0, %s166
      %s168 = sphi 0, %s166
      %s169 = sphi 0, %s168
      %s183 = sphi 0, %s169
      %s187 = sphi 0, %s187
      %s189 = sphi 0, %s187
      %s190 = sphi 0, %s189
      %s204 = sphi 0, %s190
      %s208 = sphi 0, %s208
      %s210 = sphi 0, %s208
      %s211 = sphi 0, %s210
      %s225 = sphi 0, %s211
      %s229 = sphi 0, %s229
      %s231 = sphi 0, %s229
      %s232 = sphi 0, %s231
      %s246 = sphi 0, %s232
      %s250 = sphi 0, %s250
      %s252 = sphi 0, %s250
      %s253 = sphi 0, %s252
      %s267 = sphi 0, %s253
      %s271 = sphi 0, %s271
      %s273 = sphi 0, %s271
      %s274 = sphi 0, %s273
      %s288 = sphi 0, %s274
      %s292 = sphi 0, %s292
      %s294 = sphi 0, %s292
      %s295 = sphi 0, %s294
      %s309 = sphi 0, %s295
      %s313 = sphi 0, %s313
      %s315 = sphi 0, %s313
      %s316 = sphi 0, %s315
      %s330 = sphi 0, %s316
      %s334 = sphi 0, %s334
      %s336 = sphi 0, %s334
      %s337 = sphi 0, %s336
      %s351 = sphi 0, %s337
      %s355 = sphi 0, %s355
      %s357 = sphi 0, %s355
      %s358 = sphi 0, %s357
      %s372 = sphi 0, %s358
      %s378 = sphi 0, %s380
      %s381 = sphi 0, %s378
      %s382 = sphi 0, %s381
      %s398 = sphi 0, %s382
    $region4: #{tpu_custom_call.1} parent=1 // loop_header_branch
      %36 = sbr.rel (%p34) target = $region8
    $region5: #{tpu_custom_call.1} parent=1 // loop_body
      %s38 = ssub.s32 %s33, 1
      %s39 = ssub.s32 %s33, 2
      %s40 = sadd.s32 %s33, 1
      %s41 = ssub.s32 %s33, %s40
      %p42 = scmp.eq.s32.totalorder %s41, 0
      %s44 = sadd.s32 %s43, 1
      %s45 = scalar_select %p42, %s43, %s44
      %p48 = pneg %p42
      %p49 = scmp.eq.s32.totalorder %s33, 1
      %p50 = por %p48, %p49
      %p51 = scmp.ne.s32.totalorder %s43, %s46
      %p52 = scmp.eq.s32.totalorder %s33, 0
      %p53 = por %p51, %p52
      %p54 = scmp.ne.s32.totalorder %s43, %s46
      %p55 = scmp.eq.s32.totalorder %s38, 1
      %p56 = por %p54, %p55
      %p57 = scmp.ne.s32.totalorder %s46, %s47
      %p58 = scmp.eq.s32.totalorder %s38, 0
      %p59 = por %p57, %p58
      %p60 = scmp.ne.s32.totalorder %s46, %s47
      %p61 = scmp.eq.s32.totalorder %s39, 1
      %p62 = por %p60, %p61
      %p64 = scmp.ne.s32.totalorder %s47, %s63
      %p65 = scmp.eq.s32.totalorder %s39, 0
      %p66 = por %p64, %p65
      %s67 = ssub.s32 %s33, %s40
      %p68 = scmp.eq.s32.totalorder %s67, 0
      %s70 = sadd.s32 %s69, 1
      %s71 = scalar_select %p68, %s69, %s70
      %p74 = pneg %p68
      %p75 = scmp.eq.s32.totalorder %s33, 1
      %p76 = por %p74, %p75
      %p77 = scmp.ne.s32.totalorder %s69, %s72
      %p78 = scmp.eq.s32.totalorder %s33, 0
      %p79 = por %p77, %p78
      %p80 = scmp.ne.s32.totalorder %s69, %s72
      %p81 = scmp.eq.s32.totalorder %s38, 1
      %p82 = por %p80, %p81
      %p83 = scmp.ne.s32.totalorder %s72, %s73
      %p84 = scmp.eq.s32.totalorder %s38, 0
      %p85 = por %p83, %p84
      %p86 = scmp.ne.s32.totalorder %s72, %s73
      %p87 = scmp.eq.s32.totalorder %s39, 1
      %p88 = por %p86, %p87
      %p90 = scmp.ne.s32.totalorder %s73, %s89
      %p91 = scmp.eq.s32.totalorder %s39, 0
      %p92 = por %p90, %p91
      %s93 = ssub.s32 %s33, %s40
      %p94 = scmp.eq.s32.totalorder %s93, 0
      %s96 = sadd.s32 %s95, 1
      %s97 = scalar_select %p94, %s95, %s96
      %p100 = pneg %p94
      %p101 = scmp.eq.s32.totalorder %s33, 1
      %p102 = por %p100, %p101
      %p103 = scmp.ne.s32.totalorder %s95, %s98
      %p104 = scmp.eq.s32.totalorder %s33, 0
      %p105 = por %p103, %p104
      %p106 = scmp.ne.s32.totalorder %s95, %s98
      %p107 = scmp.eq.s32.totalorder %s38, 1
      %p108 = por %p106, %p107
      %p109 = scmp.ne.s32.totalorder %s98, %s99
      %p110 = scmp.eq.s32.totalorder %s38, 0
      %p111 = por %p109, %p110
      %p112 = scmp.ne.s32.totalorder %s98, %s99
      %p113 = scmp.eq.s32.totalorder %s39, 1
      %p114 = por %p112, %p113
      %p116 = scmp.ne.s32.totalorder %s99, %s115
      %p117 = scmp.eq.s32.totalorder %s39, 0
      %p118 = por %p116, %p117
      %s119 = ssub.s32 %s33, %s40
      %p120 = scmp.eq.s32.totalorder %s119, 0
      %s122 = sadd.s32 %s121, 1
      %s123 = scalar_select %p120, %s121, %s122
      %p126 = pneg %p120
      %p127 = scmp.eq.s32.totalorder %s33, 1
      %p128 = por %p126, %p127
      %p129 = scmp.ne.s32.totalorder %s121, %s124
      %p130 = scmp.eq.s32.totalorder %s33, 0
      %p131 = por %p129, %p130
      %p132 = scmp.ne.s32.totalorder %s121, %s124
      %p133 = scmp.eq.s32.totalorder %s38, 1
      %p134 = por %p132, %p133
      %p135 = scmp.ne.s32.totalorder %s124, %s125
      %p136 = scmp.eq.s32.totalorder %s38, 0
      %p137 = por %p135, %p136
      %p138 = scmp.ne.s32.totalorder %s124, %s125
      %p139 = scmp.eq.s32.totalorder %s39, 1
      %p140 = por %p138, %p139
      %p142 = scmp.ne.s32.totalorder %s125, %s141
      %p143 = scmp.eq.s32.totalorder %s39, 0
      %p144 = por %p142, %p143
      %s146 = sadd.s32 %s145, 1
      %p149 = scmp.eq.s32.totalorder %s33, 1
      %p150 = scmp.ne.s32.totalorder %s145, %s147
      %p151 = scmp.eq.s32.totalorder %s33, 0
      %p152 = por %p150, %p151
      %p153 = scmp.ne.s32.totalorder %s145, %s147
      %p154 = scmp.eq.s32.totalorder %s38, 1
      %p155 = por %p153, %p154
      %p156 = scmp.ne.s32.totalorder %s147, %s148
      %p157 = scmp.eq.s32.totalorder %s38, 0
      %p158 = por %p156, %p157
      %p159 = scmp.ne.s32.totalorder %s147, %s148
      %p160 = scmp.eq.s32.totalorder %s39, 1
      %p161 = por %p159, %p160
      %p163 = scmp.ne.s32.totalorder %s148, %s162
      %p164 = scmp.eq.s32.totalorder %s39, 0
      %p165 = por %p163, %p164
      %s167 = sadd.s32 %s166, 1
      %p170 = scmp.eq.s32.totalorder %s33, 1
      %p171 = scmp.ne.s32.totalorder %s166, %s168
      %p172 = scmp.eq.s32.totalorder %s33, 0
      %p173 = por %p171, %p172
      %p174 = scmp.ne.s32.totalorder %s166, %s168
      %p175 = scmp.eq.s32.totalorder %s38, 1
      %p176 = por %p174, %p175
      %p177 = scmp.ne.s32.totalorder %s168, %s169
      %p178 = scmp.eq.s32.totalorder %s38, 0
      %p179 = por %p177, %p178
      %p180 = scmp.ne.s32.totalorder %s168, %s169
      %p181 = scmp.eq.s32.totalorder %s39, 1
      %p182 = por %p180, %p181
      %p184 = scmp.ne.s32.totalorder %s169, %s183
      %p185 = scmp.eq.s32.totalorder %s39, 0
      %p186 = por %p184, %p185
      %s188 = sadd.s32 %s187, 1
      %p191 = scmp.eq.s32.totalorder %s33, 1
      %p192 = scmp.ne.s32.totalorder %s187, %s189
      %p193 = scmp.eq.s32.totalorder %s33, 0
      %p194 = por %p192, %p193
      %p195 = scmp.ne.s32.totalorder %s187, %s189
      %p196 = scmp.eq.s32.totalorder %s38, 1
      %p197 = por %p195, %p196
      %p198 = scmp.ne.s32.totalorder %s189, %s190
      %p199 = scmp.eq.s32.totalorder %s38, 0
      %p200 = por %p198, %p199
      %p201 = scmp.ne.s32.totalorder %s189, %s190
      %p202 = scmp.eq.s32.totalorder %s39, 1
      %p203 = por %p201, %p202
      %p205 = scmp.ne.s32.totalorder %s190, %s204
      %p206 = scmp.eq.s32.totalorder %s39, 0
      %p207 = por %p205, %p206
      %s209 = sadd.s32 %s208, 1
      %p212 = scmp.eq.s32.totalorder %s33, 1
      %p213 = scmp.ne.s32.totalorder %s208, %s210
      %p214 = scmp.eq.s32.totalorder %s33, 0
      %p215 = por %p213, %p214
      %p216 = scmp.ne.s32.totalorder %s208, %s210
      %p217 = scmp.eq.s32.totalorder %s38, 1
      %p218 = por %p216, %p217
      %p219 = scmp.ne.s32.totalorder %s210, %s211
      %p220 = scmp.eq.s32.totalorder %s38, 0
      %p221 = por %p219, %p220
      %p222 = scmp.ne.s32.totalorder %s210, %s211
      %p223 = scmp.eq.s32.totalorder %s39, 1
      %p224 = por %p222, %p223
      %p226 = scmp.ne.s32.totalorder %s211, %s225
      %p227 = scmp.eq.s32.totalorder %s39, 0
      %p228 = por %p226, %p227
      %s230 = sadd.s32 %s229, 1
      %p233 = scmp.eq.s32.totalorder %s33, 1
      %p234 = scmp.ne.s32.totalorder %s229, %s231
      %p235 = scmp.eq.s32.totalorder %s33, 0
      %p236 = por %p234, %p235
      %p237 = scmp.ne.s32.totalorder %s229, %s231
      %p238 = scmp.eq.s32.totalorder %s38, 1
      %p239 = por %p237, %p238
      %p240 = scmp.ne.s32.totalorder %s231, %s232
      %p241 = scmp.eq.s32.totalorder %s38, 0
      %p242 = por %p240, %p241
      %p243 = scmp.ne.s32.totalorder %s231, %s232
      %p244 = scmp.eq.s32.totalorder %s39, 1
      %p245 = por %p243, %p244
      %p247 = scmp.ne.s32.totalorder %s232, %s246
      %p248 = scmp.eq.s32.totalorder %s39, 0
      %p249 = por %p247, %p248
      %s251 = sadd.s32 %s250, 1
      %p254 = scmp.eq.s32.totalorder %s33, 1
      %p255 = scmp.ne.s32.totalorder %s250, %s252
      %p256 = scmp.eq.s32.totalorder %s33, 0
      %p257 = por %p255, %p256
      %p258 = scmp.ne.s32.totalorder %s250, %s252
      %p259 = scmp.eq.s32.totalorder %s38, 1
      %p260 = por %p258, %p259
      %p261 = scmp.ne.s32.totalorder %s252, %s253
      %p262 = scmp.eq.s32.totalorder %s38, 0
      %p263 = por %p261, %p262
      %p264 = scmp.ne.s32.totalorder %s252, %s253
      %p265 = scmp.eq.s32.totalorder %s39, 1
      %p266 = por %p264, %p265
      %p268 = scmp.ne.s32.totalorder %s253, %s267
      %p269 = scmp.eq.s32.totalorder %s39, 0
      %p270 = por %p268, %p269
      %s272 = sadd.s32 %s271, 1
      %p275 = scmp.eq.s32.totalorder %s33, 1
      %p276 = scmp.ne.s32.totalorder %s271, %s273
      %p277 = scmp.eq.s32.totalorder %s33, 0
      %p278 = por %p276, %p277
      %p279 = scmp.ne.s32.totalorder %s271, %s273
      %p280 = scmp.eq.s32.totalorder %s38, 1
      %p281 = por %p279, %p280
      %p282 = scmp.ne.s32.totalorder %s273, %s274
      %p283 = scmp.eq.s32.totalorder %s38, 0
      %p284 = por %p282, %p283
      %p285 = scmp.ne.s32.totalorder %s273, %s274
      %p286 = scmp.eq.s32.totalorder %s39, 1
      %p287 = por %p285, %p286
      %p289 = scmp.ne.s32.totalorder %s274, %s288
      %p290 = scmp.eq.s32.totalorder %s39, 0
      %p291 = por %p289, %p290
      %s293 = sadd.s32 %s292, 1
      %p296 = scmp.eq.s32.totalorder %s33, 1
      %p297 = scmp.ne.s32.totalorder %s292, %s294
      %p298 = scmp.eq.s32.totalorder %s33, 0
      %p299 = por %p297, %p298
      %p300 = scmp.ne.s32.totalorder %s292, %s294
      %p301 = scmp.eq.s32.totalorder %s38, 1
      %p302 = por %p300, %p301
      %p303 = scmp.ne.s32.totalorder %s294, %s295
      %p304 = scmp.eq.s32.totalorder %s38, 0
      %p305 = por %p303, %p304
      %p306 = scmp.ne.s32.totalorder %s294, %s295
      %p307 = scmp.eq.s32.totalorder %s39, 1
      %p308 = por %p306, %p307
      %p310 = scmp.ne.s32.totalorder %s295, %s309
      %p311 = scmp.eq.s32.totalorder %s39, 0
      %p312 = por %p310, %p311
      %s314 = sadd.s32 %s313, 1
      %p317 = scmp.eq.s32.totalorder %s33, 1
      %p318 = scmp.ne.s32.totalorder %s313, %s315
      %p319 = scmp.eq.s32.totalorder %s33, 0
      %p320 = por %p318, %p319
      %p321 = scmp.ne.s32.totalorder %s313, %s315
      %p322 = scmp.eq.s32.totalorder %s38, 1
      %p323 = por %p321, %p322
      %p324 = scmp.ne.s32.totalorder %s315, %s316
      %p325 = scmp.eq.s32.totalorder %s38, 0
      %p326 = por %p324, %p325
      %p327 = scmp.ne.s32.totalorder %s315, %s316
      %p328 = scmp.eq.s32.totalorder %s39, 1
      %p329 = por %p327, %p328
      %p331 = scmp.ne.s32.totalorder %s316, %s330
      %p332 = scmp.eq.s32.totalorder %s39, 0
      %p333 = por %p331, %p332
      %s335 = sadd.s32 %s334, 1
      %p338 = scmp.eq.s32.totalorder %s33, 1
      %p339 = scmp.ne.s32.totalorder %s334, %s336
      %p340 = scmp.eq.s32.totalorder %s33, 0
      %p341 = por %p339, %p340
      %p342 = scmp.ne.s32.totalorder %s334, %s336
      %p343 = scmp.eq.s32.totalorder %s38, 1
      %p344 = por %p342, %p343
      %p345 = scmp.ne.s32.totalorder %s336, %s337
      %p346 = scmp.eq.s32.totalorder %s38, 0
      %p347 = por %p345, %p346
      %p348 = scmp.ne.s32.totalorder %s336, %s337
      %p349 = scmp.eq.s32.totalorder %s39, 1
      %p350 = por %p348, %p349
      %p352 = scmp.ne.s32.totalorder %s337, %s351
      %p353 = scmp.eq.s32.totalorder %s39, 0
      %p354 = por %p352, %p353
      %s356 = sadd.s32 %s355, 1
      %p359 = scmp.eq.s32.totalorder %s33, 1
      %p360 = scmp.ne.s32.totalorder %s355, %s357
      %p361 = scmp.eq.s32.totalorder %s33, 0
      %p362 = por %p360, %p361
      %p363 = scmp.ne.s32.totalorder %s355, %s357
      %p364 = scmp.eq.s32.totalorder %s38, 1
      %p365 = por %p363, %p364
      %p366 = scmp.ne.s32.totalorder %s357, %s358
      %p367 = scmp.eq.s32.totalorder %s38, 0
      %p368 = por %p366, %p367
      %p369 = scmp.ne.s32.totalorder %s357, %s358
      %p370 = scmp.eq.s32.totalorder %s39, 1
      %p371 = por %p369, %p370
      %p373 = scmp.ne.s32.totalorder %s358, %s372
      %p374 = scmp.eq.s32.totalorder %s39, 0
      %p375 = por %p373, %p374
      %s376 = ssub.s32 %s33, %s40
      %p377 = scmp.eq.s32.totalorder %s376, 0
      %s379 = sadd.s32 %s378, 1
      %s380 = scalar_select %p377, %s378, %s379
      %p383 = pneg %p377
      %p384 = scmp.eq.s32.totalorder %s33, 1
      %p385 = por %p383, %p384
      %p386 = scmp.ne.s32.totalorder %s378, %s381
      %p387 = scmp.eq.s32.totalorder %s33, 0
      %p388 = por %p386, %p387
      %p389 = scmp.ne.s32.totalorder %s378, %s381
      %p390 = scmp.eq.s32.totalorder %s38, 1
      %p391 = por %p389, %p390
      %p392 = scmp.ne.s32.totalorder %s381, %s382
      %p393 = scmp.eq.s32.totalorder %s38, 0
      %p394 = por %p392, %p393
      %p395 = scmp.ne.s32.totalorder %s381, %s382
      %p396 = scmp.eq.s32.totalorder %s39, 1
      %p397 = por %p395, %p396
      %p399 = scmp.ne.s32.totalorder %s382, %s398
      %p400 = scmp.eq.s32.totalorder %s39, 0
      %p401 = por %p399, %p400
      %p402 = scmp.le.s32.totalorder 1, %s33
      %p403 = scmp.lt.s32.totalorder %s33, 3
      %p404 = pnand %p402, %p403
      %p405 = pneg %p404
      // Predicated region
      $region9: #{tpu_custom_call.1} parent=5 // pred_check
        _
      $region10: #{tpu_custom_call.1} parent=5 // pred_check_branch
        %407 = sbr.rel (%p404) target = $region12
      $region11: #{tpu_custom_call.1} parent=5 // pred_region
        %s408 = ssub.s32 %s33, 1
        // Predicated region
        $region13: #{tpu_custom_call.1} parent=11 // pred_check
          %p409 = pneg %p158
        $region14: #{tpu_custom_call.1} parent=11 // pred_check_branch
          %411 = sbr.rel (%p409) target = $region16
        $region15: #{tpu_custom_call.1} parent=11 // pred_region
          %s413 = ssub.s32 3072, 3072
          %414 = vsyncadd [#allocation7], %s413
          %s415 = sshll.u32 [#allocation8], 4
          %s416 = int_to_ptr.vmem [resolvable:$true] %s415
          %421 = dma.hbm_to_vmem [thread:$0]  %s4, 3072, %s416, [#allocation7], 192, 192, 12
        $region16: #{tpu_custom_call.1} parent=11 // pred_fallthru
          _
        // Predicated region
        $region17: #{tpu_custom_call.1} parent=11 // pred_check
          %p422 = pneg %p179
        $region18: #{tpu_custom_call.1} parent=11 // pred_check_branch
          %424 = sbr.rel (%p422) target = $region20
        $region19: #{tpu_custom_call.1} parent=11 // pred_region
          _
        $region20: #{tpu_custom_call.1} parent=11 // pred_fallthru
          _
        // Predicated region
        $region21: #{tpu_custom_call.1} parent=11 // pred_check
          %p425 = pneg %p200
        $region22: #{tpu_custom_call.1} parent=11 // pred_check_branch
          %427 = sbr.rel (%p425) target = $region24
        $region23: #{tpu_custom_call.1} parent=11 // pred_region
          %s429 = ssub.s32 1024, 1024
          %430 = vsyncadd [#allocation10], %s429
          %s431 = sshll.u32 [#allocation9], 4
          %s432 = int_to_ptr.vmem [resolvable:$true] %s431
          %437 = dma.hbm_to_vmem [thread:$0]  %s6, 1024, %s432, [#allocation10], 64, 64, 4
        $region24: #{tpu_custom_call.1} parent=11 // pred_fallthru
          _
        // Predicated region
        $region25: #{tpu_custom_call.1} parent=11 // pred_check
          %p438 = pneg %p221
        $region26: #{tpu_custom_call.1} parent=11 // pred_check_branch
          %440 = sbr.rel (%p438) target = $region28
        $region27: #{tpu_custom_call.1} parent=11 // pred_region
          %s442 = ssub.s32 1024, 1024
          %443 = vsyncadd [#allocation10], %s442
          %s444 = sshll.u32 [#allocation11], 4
          %s445 = int_to_ptr.vmem [resolvable:$true] %s444
          %450 = dma.hbm_to_vmem [thread:$0]  %s7, 1024, %s445, [#allocation10], 64, 64, 4
        $region28: #{tpu_custom_call.1} parent=11 // pred_fallthru
          _
        // Predicated region
        $region29: #{tpu_custom_call.1} parent=11 // pred_check
          %p451 = pneg %p242
        $region30: #{tpu_custom_call.1} parent=11 // pred_check_branch
          %453 = sbr.rel (%p451) target = $region32
        $region31: #{tpu_custom_call.1} parent=11 // pred_region
          %s455 = ssub.s32 2048, 2048
          %456 = vsyncadd [#allocation13], %s455
          %s457 = sshll.u32 [#allocation12], 4
          %s458 = int_to_ptr.vmem [resolvable:$true] %s457
          %463 = dma.hbm_to_vmem [thread:$0]  %s8, 2048, %s458, [#allocation13], 128, 128, 8
        $region32: #{tpu_custom_call.1} parent=11 // pred_fallthru
          _
        // Predicated region
        $region33: #{tpu_custom_call.1} parent=11 // pred_check
          %p464 = pneg %p263
        $region34: #{tpu_custom_call.1} parent=11 // pred_check_branch
          %466 = sbr.rel (%p464) target = $region36
        $region35: #{tpu_custom_call.1} parent=11 // pred_region
          _
        $region36: #{tpu_custom_call.1} parent=11 // pred_fallthru
          _
        // Predicated region
        $region37: #{tpu_custom_call.1} parent=11 // pred_check
          %p467 = pneg %p284
        $region38: #{tpu_custom_call.1} parent=11 // pred_check_branch
          %469 = sbr.rel (%p467) target = $region40
        $region39: #{tpu_custom_call.1} parent=11 // pred_region
          %s471 = ssub.s32 1024, 1024
          %472 = vsyncadd [#allocation13], %s471
          %s473 = sshll.u32 [#allocation14], 4
          %s474 = int_to_ptr.vmem [resolvable:$true] %s473
          %479 = dma.hbm_to_vmem [thread:$0]  %s10, 1024, %s474, [#allocation13], 64, 64, 4
        $region40: #{tpu_custom_call.1} parent=11 // pred_fallthru
          _
        // Predicated region
        $region41: #{tpu_custom_call.1} parent=11 // pred_check
          %p480 = pneg %p305
        $region42: #{tpu_custom_call.1} parent=11 // pred_check_branch
          %482 = sbr.rel (%p480) target = $region44
        $region43: #{tpu_custom_call.1} parent=11 // pred_region
          %s484 = ssub.s32 2048, 2048
          %485 = vsyncadd [#allocation16], %s484
          %s486 = sshll.u32 [#allocation15], 4
          %s487 = int_to_ptr.vmem [resolvable:$true] %s486
          %492 = dma.hbm_to_vmem [thread:$0]  %s11, 2048, %s487, [#allocation16], 128, 128, 8
        $region44: #{tpu_custom_call.1} parent=11 // pred_fallthru
          _
        // Predicated region
        $region45: #{tpu_custom_call.1} parent=11 // pred_check
          %p493 = pneg %p326
        $region46: #{tpu_custom_call.1} parent=11 // pred_check_branch
          %495 = sbr.rel (%p493) target = $region48
        $region47: #{tpu_custom_call.1} parent=11 // pred_region
          _
        $region48: #{tpu_custom_call.1} parent=11 // pred_fallthru
          _
        // Predicated region
        $region49: #{tpu_custom_call.1} parent=11 // pred_check
          %p496 = pneg %p347
        $region50: #{tpu_custom_call.1} parent=11 // pred_check_branch
          %498 = sbr.rel (%p496) target = $region52
        $region51: #{tpu_custom_call.1} parent=11 // pred_region
          %s500 = ssub.s32 2048, 2048
          %501 = vsyncadd [#allocation16], %s500
          %s502 = sshll.u32 [#allocation17], 4
          %s503 = int_to_ptr.vmem [resolvable:$true] %s502
          %508 = dma.hbm_to_vmem [thread:$0]  %s13, 2048, %s503, [#allocation16], 64, 64, 4
        $region52: #{tpu_custom_call.1} parent=11 // pred_fallthru
          _
        // Predicated region
        $region53: #{tpu_custom_call.1} parent=11 // pred_check
          %p509 = pneg %p368
        $region54: #{tpu_custom_call.1} parent=11 // pred_check_branch
          %511 = sbr.rel (%p509) target = $region56
        $region55: #{tpu_custom_call.1} parent=11 // pred_region
          _
        $region56: #{tpu_custom_call.1} parent=11 // pred_fallthru
          _
      $region12: #{tpu_custom_call.1} parent=5 // pred_fallthru
        _
      %p512 = scmp.lt.s32.totalorder %s33, 2
      // Predicated region
      $region57: #{tpu_custom_call.1} parent=5 // pred_check
        %p513 = pneg %p512
      $region58: #{tpu_custom_call.1} parent=5 // pred_check_branch
        %515 = sbr.rel (%p513) target = $region60
      $region59: #{tpu_custom_call.1} parent=5 // pred_region
        // Predicated region
        $region61: #{tpu_custom_call.1} parent=59 // pred_check
          %p516 = pneg %p53
        $region62: #{tpu_custom_call.1} parent=59 // pred_check_branch
          %518 = sbr.rel (%p516) target = $region64
        $region63: #{tpu_custom_call.1} parent=59 // pred_region
          %s519 = sand.u32 %s43, 1
          %s520 = scalar_lea.sflag [#allocation4], %s519
          %s521 = sand.u32 %s43, 1
          %s522 = smul.addr %s521, 16
          %s523 = scalar_lea.vmem [#allocation3], %s522
          %s524 = smul.u32 2, %s33
          %s526 = ssub.s32 256, 256
          %527 = vsyncadd %s520, %s526
          %s528 = smul.addr %s524, 128
          %s529 = scalar_lea.hbm %s0, %s528
          %s530 = sshll.u32 %s523, 4
          %s531 = int_to_ptr.vmem [resolvable:$true] %s530
          %536 = dma.hbm_to_vmem [thread:$0]  %s529, 256, %s531, %s520, 128, 128, 8
        $region64: #{tpu_custom_call.1} parent=59 // pred_fallthru
          _
        // Predicated region
        $region65: #{tpu_custom_call.1} parent=59 // pred_check
          %p537 = pneg %p79
        $region66: #{tpu_custom_call.1} parent=59 // pred_check_branch
          %539 = sbr.rel (%p537) target = $region68
        $region67: #{tpu_custom_call.1} parent=59 // pred_region
          %s540 = sand.u32 %s33, 1
          %s541 = scalar_lea.sflag [#allocation7], %s540
          %s542 = sand.u32 %s69, 1
          %s543 = smul.addr %s542, 32
          %s544 = scalar_lea.vmem [#allocation6], %s543
          %s545 = smul.u32 2, %s33
          %s547 = ssub.s32 512, 512
          %548 = vsyncadd %s541, %s547
          %s549 = smul.addr %s545, 2
          %s550 = smul.addr %s549, 128
          %s551 = scalar_lea.hbm %s1, %s550
          %s552 = sshll.u32 %s544, 4
          %s553 = int_to_ptr.vmem [resolvable:$true] %s552
          %558 = dma.hbm_to_vmem [thread:$0]  %s551, 512, %s553, %s541, 128, 128, 8
        $region68: #{tpu_custom_call.1} parent=59 // pred_fallthru
          _
        // Predicated region
        $region69: #{tpu_custom_call.1} parent=59 // pred_check
          %p559 = pneg %p105
        $region70: #{tpu_custom_call.1} parent=59 // pred_check_branch
          %561 = sbr.rel (%p559) target = $region72
        $region71: #{tpu_custom_call.1} parent=59 // pred_region
          %s562 = smul.u32 2, %s33
          %p563 = scmp.lt.s32.totalorder %s562, 3
          %s564 = scalar_select %p563, %s562, 3
          %s565 = scalar_lea.vmem %s2, %s564
          %s566 = smul.u32 2, %s33
        $region72: #{tpu_custom_call.1} parent=59 // pred_fallthru
          _
        // Predicated region
        $region73: #{tpu_custom_call.1} parent=59 // pred_check
          %p567 = pneg %p131
        $region74: #{tpu_custom_call.1} parent=59 // pred_check_branch
          %569 = sbr.rel (%p567) target = $region76
        $region75: #{tpu_custom_call.1} parent=59 // pred_region
          %s570 = smul.u32 2, %s33
          %p571 = scmp.lt.s32.totalorder %s570, 3
          %s572 = scalar_select %p571, %s570, 3
          %s573 = scalar_lea.vmem %s3, %s572
          %s574 = smul.u32 2, %s33
        $region76: #{tpu_custom_call.1} parent=59 // pred_fallthru
          _
      $region60: #{tpu_custom_call.1} parent=5 // pred_fallthru
        _
      %p575 = scmp.le.s32.totalorder 1, %s33
      %p576 = scmp.lt.s32.totalorder %s33, 3
      %p577 = pnand %p575, %p576
      %p578 = pneg %p577
      // Predicated region
      $region77: #{tpu_custom_call.1} parent=5 // pred_check
        _
      $region78: #{tpu_custom_call.1} parent=5 // pred_check_branch
        %580 = sbr.rel (%p577) target = $region80
      $region79: #{tpu_custom_call.1} parent=5 // pred_region
        %s581 = ssub.s32 %s33, 1
        %s582 = sand.u32 %s46, 1
        %s583 = scalar_lea.sflag [#allocation4], %s582
        %s584 = sand.u32 %s46, 1
        %s585 = smul.addr %s584, 16
        %s586 = scalar_lea.vmem [#allocation3], %s585
        // Predicated region
        $region81: #{tpu_custom_call.1} parent=79 // pred_check
          %p587 = pneg %p59
        $region82: #{tpu_custom_call.1} parent=79 // pred_check_branch
          %589 = sbr.rel (%p587) target = $region84
        $region83: #{tpu_custom_call.1} parent=79 // pred_region
          %590 = dma.done %s583, 256
        $region84: #{tpu_custom_call.1} parent=79 // pred_fallthru
          _
        %s591 = sand.u32 %s38, 1
        %s592 = scalar_lea.sflag [#allocation7], %s591
        %s593 = sand.u32 %s72, 1
        %s594 = smul.addr %s593, 32
        %s595 = scalar_lea.vmem [#allocation6], %s594
        // Predicated region
        $region85: #{tpu_custom_call.1} parent=79 // pred_check
          %p596 = pneg %p85
        $region86: #{tpu_custom_call.1} parent=79 // pred_check_branch
          %598 = sbr.rel (%p596) target = $region88
        $region87: #{tpu_custom_call.1} parent=79 // pred_region
          %599 = dma.done %s592, 512
        $region88: #{tpu_custom_call.1} parent=79 // pred_fallthru
          _
        // Predicated region
        $region89: #{tpu_custom_call.1} parent=79 // pred_check
          %p600 = pneg %p158
        $region90: #{tpu_custom_call.1} parent=79 // pred_check_branch
          %602 = sbr.rel (%p600) target = $region92
        $region91: #{tpu_custom_call.1} parent=79 // pred_region
          %603 = dma.done [#allocation7], 3072
        $region92: #{tpu_custom_call.1} parent=79 // pred_fallthru
          _
        // Predicated region
        $region93: #{tpu_custom_call.1} parent=79 // pred_check
          %p604 = pneg %p200
        $region94: #{tpu_custom_call.1} parent=79 // pred_check_branch
          %606 = sbr.rel (%p604) target = $region96
        $region95: #{tpu_custom_call.1} parent=79 // pred_region
          %607 = dma.done [#allocation10], 1024
        $region96: #{tpu_custom_call.1} parent=79 // pred_fallthru
          _
        // Predicated region
        $region97: #{tpu_custom_call.1} parent=79 // pred_check
          %p608 = pneg %p221
        $region98: #{tpu_custom_call.1} parent=79 // pred_check_branch
          %610 = sbr.rel (%p608) target = $region100
        $region99: #{tpu_custom_call.1} parent=79 // pred_region
          %611 = dma.done [#allocation10], 1024
        $region100: #{tpu_custom_call.1} parent=79 // pred_fallthru
          _
        // Predicated region
        $region101: #{tpu_custom_call.1} parent=79 // pred_check
          %p612 = pneg %p242
        $region102: #{tpu_custom_call.1} parent=79 // pred_check_branch
          %614 = sbr.rel (%p612) target = $region104
        $region103: #{tpu_custom_call.1} parent=79 // pred_region
          %615 = dma.done [#allocation13], 2048
        $region104: #{tpu_custom_call.1} parent=79 // pred_fallthru
          _
        // Predicated region
        $region105: #{tpu_custom_call.1} parent=79 // pred_check
          %p616 = pneg %p284
        $region106: #{tpu_custom_call.1} parent=79 // pred_check_branch
          %618 = sbr.rel (%p616) target = $region108
        $region107: #{tpu_custom_call.1} parent=79 // pred_region
          %619 = dma.done [#allocation13], 1024
        $region108: #{tpu_custom_call.1} parent=79 // pred_fallthru
          _
        // Predicated region
        $region109: #{tpu_custom_call.1} parent=79 // pred_check
          %p620 = pneg %p305
        $region110: #{tpu_custom_call.1} parent=79 // pred_check_branch
          %622 = sbr.rel (%p620) target = $region112
        $region111: #{tpu_custom_call.1} parent=79 // pred_region
          %623 = dma.done [#allocation16], 2048
        $region112: #{tpu_custom_call.1} parent=79 // pred_fallthru
          _
        // Predicated region
        $region113: #{tpu_custom_call.1} parent=79 // pred_check
          %p624 = pneg %p347
        $region114: #{tpu_custom_call.1} parent=79 // pred_check_branch
          %626 = sbr.rel (%p624) target = $region116
        $region115: #{tpu_custom_call.1} parent=79 // pred_region
          %627 = dma.done [#allocation16], 2048
        $region116: #{tpu_custom_call.1} parent=79 // pred_fallthru
          _
        %s628 = sand.u32 %s46, 1
        %s629 = scalar_lea.sflag [#allocation4], %s628
        %s630 = sand.u32 %s46, 1
        %s631 = smul.addr %s630, 16
        %s632 = scalar_lea.vmem [#allocation3], %s631
        %p633 = pneg %p59
        %p634 = pneg %p56
        %s635 = sand.u32 %s38, 1
        %s636 = scalar_lea.sflag [#allocation7], %s635
        %s637 = sand.u32 %s72, 1
        %s638 = smul.addr %s637, 32
        %s639 = scalar_lea.vmem [#allocation6], %s638
        %p640 = pneg %p85
        %p641 = pneg %p82
        %s642 = smul.u32 2, %s38
        %p643 = scmp.lt.s32.totalorder %s642, 3
        %s644 = scalar_select %p643, %s642, 3
        %s645 = scalar_lea.vmem %s2, %s644
        %p646 = pneg %p111
        %p647 = pneg %p108
        %s648 = smul.u32 2, %s38
        %p649 = scmp.lt.s32.totalorder %s648, 3
        %s650 = scalar_select %p649, %s648, 3
        %s651 = scalar_lea.vmem %s3, %s650
        %p652 = pneg %p137
        %p653 = pneg %p134
        %p654 = pneg %p158
        %p655 = pneg %p155
        %p656 = pneg %p179
        %p657 = pneg %p176
        %p658 = pneg %p200
        %p659 = pneg %p197
        %p660 = pneg %p221
        %p661 = pneg %p218
        %p662 = pneg %p242
        %p663 = pneg %p239
        %p664 = pneg %p263
        %p665 = pneg %p260
        %p666 = pneg %p284
        %p667 = pneg %p281
        %p668 = pneg %p305
        %p669 = pneg %p302
        %p670 = pneg %p326
        %p671 = pneg %p323
        %p672 = pneg %p347
        %p673 = pneg %p344
        %p674 = pneg %p368
        %p675 = pneg %p365
        %p676 = pneg %p394
        %p677 = pneg %p391
        %s678 = sand.u32 %s381, 1
        %s679 = scalar_lea.sflag [#allocation5], %s678
        %s680 = sand.u32 %s381, 1
        %s681 = smul.addr %s680, 16
        %s682 = scalar_lea.vmem [#allocation18], %s681
        %s683 = smul.u32 2, %s38
        %s684 = smul.u32 2, %s38
        %s685 = smul.u32 2, %s38
        %p686 = scmp.lt.s32.totalorder %s685, 3
        %s687 = scalar_select %p686, %s685, 3
        %s688 = scalar_lea.vmem %s2, %s687
        %s689 = smul.u32 2, %s38
        %s690 = smul.u32 2, %s38
        %p691 = scmp.lt.s32.totalorder %s690, 3
        %s692 = scalar_select %p691, %s690, 3
        %s693 = scalar_lea.vmem %s3, %s692
        %s694 = smul.u32 2, %s38
        %s695 = smul.u32 2, %s38
        %v697 = vld [vmem:[%s14] sm:$0xff]
        %v698 = vld [vmem:[%s14 + $0x8] sm:$0x3]
        %v699 = vld [vmem:[%s586] sm:$0xff]
        %v700 = vld [vmem:[%s586 + $0x8] sm:$0xff]
        %v701 = vld [vmem:[%s595] sm:$0xff]
        %v702 = vld [vmem:[%s595 + $0x8] sm:$0xff]
        %v703 = vld [vmem:[%s595 + $0x10] sm:$0xff]
        %v704 = vld [vmem:[%s595 + $0x18] sm:$0xff]
        %v705 = vld [vmem:[%s688] sm:$0x1]
        %v706 = vld [vmem:[%s688 + $0x1] sm:$0x1]
        %vm707 = vcmp.gt.f32.partialorder %v705, 0.0
        %vm708 = vcmp.gt.f32.partialorder %v706, 0.0
        %v709 = vsel %vm707, -1e+09, 0.0
        %v710 = vsel %vm708, -1e+09, 0.0
        %v711 = vld [vmem:[%s693] sm:$0x1]
        %v712 = vld [vmem:[%s693 + $0x1] sm:$0x1]
        %vm713 = vcmp.gt.f32.partialorder %v711, 0.0
        %vm714 = vcmp.gt.f32.partialorder %v712, 0.0
        %v715 = vsel %vm713, -1e+09, 0.0
        %v716 = vsel %vm714, -1e+09, 0.0
        %v717 = vld [vmem:[%s5] sm:$0x7]
        %v718 = vpack.c.bf16 %v700, %v699
        %v719 = vld [vmem:[#allocation8] sm:$0xff]
        %v720 = vld [vmem:[#allocation8 + $0x8] sm:$0xf]
        %v721 = vld [vmem:[#allocation8 + $0xc] sm:$0xff]
        %v722 = vld [vmem:[#allocation8 + $0x14] sm:$0xf]
        %v723 = vld [vmem:[#allocation8 + $0x18] sm:$0xff]
        %v724 = vld [vmem:[#allocation8 + $0x20] sm:$0xf]
        %v725 = vld [vmem:[#allocation8 + $0x24] sm:$0xff]
        %v726 = vld [vmem:[#allocation8 + $0x2c] sm:$0xf]
        %v727 = vld [vmem:[#allocation8 + $0x30] sm:$0xff]
        %v728 = vld [vmem:[#allocation8 + $0x38] sm:$0xf]
        %v729 = vld [vmem:[#allocation8 + $0x3c] sm:$0xff]
        %v730 = vld [vmem:[#allocation8 + $0x44] sm:$0xf]
        %v731 = vld [vmem:[#allocation8 + $0x48] sm:$0xff]
        %v732 = vld [vmem:[#allocation8 + $0x50] sm:$0xf]
        %v733 = vld [vmem:[#allocation8 + $0x54] sm:$0xff]
        %v734 = vld [vmem:[#allocation8 + $0x5c] sm:$0xf]
        %v735 = vld [vmem:[#allocation8 + $0x60] sm:$0xff]
        %v736 = vld [vmem:[#allocation8 + $0x68] sm:$0xf]
        %v737 = vld [vmem:[#allocation8 + $0x6c] sm:$0xff]
        %v738 = vld [vmem:[#allocation8 + $0x74] sm:$0xf]
        %v739 = vld [vmem:[#allocation8 + $0x78] sm:$0xff]
        %v740 = vld [vmem:[#allocation8 + $0x80] sm:$0xf]
        %v741 = vld [vmem:[#allocation8 + $0x84] sm:$0xff]
        %v742 = vld [vmem:[#allocation8 + $0x8c] sm:$0xf]
        %v743 = vld [vmem:[#allocation8 + $0x90] sm:$0xff]
        %v744 = vld [vmem:[#allocation8 + $0x98] sm:$0xf]
        %v745 = vld [vmem:[#allocation8 + $0x9c] sm:$0xff]
        %v746 = vld [vmem:[#allocation8 + $0xa4] sm:$0xf]
        %v747 = vld [vmem:[#allocation8 + $0xa8] sm:$0xff]
        %v748 = vld [vmem:[#allocation8 + $0xb0] sm:$0xf]
        %v749 = vld [vmem:[#allocation8 + $0xb4] sm:$0xff]
        %v750 = vld [vmem:[#allocation8 + $0xbc] sm:$0xf]
        %v752 = vlaneseq
        %v753 = vshrl.u32 %v752, 7
        %v754 = vsub.s32 0, %v753
        %v755 = vrot.slane %v717, %v754
        %v756 = vlaneseq
        %v757 = vshrl.u32 %v756, 7
        %v758 = vsub.s32 1, %v757
        %v759 = vrot.slane %v717, %v758
        %v760 = vlaneseq
        %v761 = vshrl.u32 %v760, 7
        %v762 = vsub.s32 2, %v761
        %v763 = vrot.slane %v717, %v762
        %v799 = vunpack.c.l.b16 %v719
        %v800 = vunpack.c.h.b16 %v719
        %v801 = vunpack.c.l.b16 %v720
        %v802 = vunpack.c.l.b16 %v721
        %v803 = vunpack.c.h.b16 %v721
        %v804 = vunpack.c.l.b16 %v722
        %v805 = vunpack.c.l.b16 %v723
        %v806 = vunpack.c.h.b16 %v723
        %v807 = vunpack.c.l.b16 %v724
        %v808 = vunpack.c.l.b16 %v725
        %v809 = vunpack.c.h.b16 %v725
        %v810 = vunpack.c.l.b16 %v726
        %v811 = vunpack.c.l.b16 %v727
        %v812 = vunpack.c.h.b16 %v727
        %v813 = vunpack.c.l.b16 %v728
        %v814 = vunpack.c.l.b16 %v729
        %v815 = vunpack.c.h.b16 %v729
        %v816 = vunpack.c.l.b16 %v730
        %v817 = vunpack.c.l.b16 %v731
        %v818 = vunpack.c.h.b16 %v731
        %v819 = vunpack.c.l.b16 %v732
        %v820 = vunpack.c.l.b16 %v733
        %v821 = vunpack.c.h.b16 %v733
        %v822 = vunpack.c.l.b16 %v734
        %v823 = vunpack.c.l.b16 %v735
        %v824 = vunpack.c.h.b16 %v735
        %v825 = vunpack.c.l.b16 %v736
        %v826 = vunpack.c.l.b16 %v737
        %v827 = vunpack.c.h.b16 %v737
        %v828 = vunpack.c.l.b16 %v738
        %v829 = vunpack.c.l.b16 %v739
        %v830 = vunpack.c.h.b16 %v739
        %v831 = vunpack.c.l.b16 %v740
        %v832 = vunpack.c.l.b16 %v741
        %v833 = vunpack.c.h.b16 %v741
        %v834 = vunpack.c.l.b16 %v742
        %v835 = vunpack.c.l.b16 %v743
        %v836 = vunpack.c.h.b16 %v743
        %v837 = vunpack.c.l.b16 %v744
        %v838 = vunpack.c.l.b16 %v745
        %v839 = vunpack.c.h.b16 %v745
        %v840 = vunpack.c.l.b16 %v746
        %v841 = vunpack.c.l.b16 %v747
        %v842 = vunpack.c.h.b16 %v747
        %v843 = vunpack.c.l.b16 %v748
        %v844 = vunpack.c.l.b16 %v749
        %v845 = vunpack.c.h.b16 %v749
        %v846 = vunpack.c.l.b16 %v750
        %v847 = vpack.c.b16 %v802, %v799
        %v848 = vpack.c.b16 %v803, %v800
        %v849 = vpack.c.b16 %v804, %v801
        %v850 = vpack.c.b16 %v808, %v805
        %v851 = vpack.c.b16 %v809, %v806
        %v852 = vpack.c.b16 %v810, %v807
        %v853 = vpack.c.b16 %v814, %v811
        %v854 = vpack.c.b16 %v815, %v812
        %v855 = vpack.c.b16 %v816, %v813
        %v856 = vpack.c.b16 %v820, %v817
        %v857 = vpack.c.b16 %v821, %v818
        %v858 = vpack.c.b16 %v822, %v819
        %v859 = vpack.c.b16 %v826, %v823
        %v860 = vpack.c.b16 %v827, %v824
        %v861 = vpack.c.b16 %v828, %v825
        %v862 = vpack.c.b16 %v832, %v829
        %v863 = vpack.c.b16 %v833, %v830
        %v864 = vpack.c.b16 %v834, %v831
        %v865 = vpack.c.b16 %v838, %v835
        %v866 = vpack.c.b16 %v839, %v836
        %v867 = vpack.c.b16 %v840, %v837
        %v868 = vpack.c.b16 %v844, %v841
        %v869 = vpack.c.b16 %v845, %v842
        %v870 = vpack.c.b16 %v846, %v843
        %895 = vmatprep.subr.bf16.mxu0 %v848
        %896 = vmatpush1.bf16.msra.mxu0 %v847
        %897 = vmatprep.subr.bf16.mxu0 %v851
        %898 = vmatpush1.bf16.msra.mxu0 %v850
        %899 = vmatprep.subr.bf16.mxu0 %v854
        %900 = vmatpush1.bf16.msra.mxu0 %v853
        %901 = vmatprep.subr.bf16.mxu0 %v857
        %902 = vmatpush1.bf16.msra.mxu0 %v856
        %903 = vmatprep.subr.bf16.mxu0 %v860
        %904 = vmatpush1.bf16.msra.mxu0 %v859
        %905 = vmatprep.subr.bf16.mxu0 %v863
        %906 = vmatpush1.bf16.msra.mxu0 %v862
        %907 = vmatprep.subr.bf16.mxu0 %v866
        %908 = vmatpush1.bf16.msra.mxu0 %v865
        %909 = vmatprep.subr.bf16.mxu0 %v869
        %910 = vmatpush1.bf16.msra.mxu0 %v868
        %911 = vmatprep.subr.bf16.mxu0 0
        %912 = vmatpush1.bf16.msra.mxu0 0
        %913 = vmatprep.subr.bf16.mxu0 0
        %914 = vmatpush1.bf16.msra.mxu0 0
        %915 = vmatprep.subr.bf16.mxu0 0
        %916 = vmatpush1.bf16.msra.mxu0 0
        %917 = vmatprep.subr.bf16.mxu0 0
        %918 = vmatpush1.bf16.msra.mxu0 0
        %919 = vmatprep.subr.bf16.mxu0 0
        %920 = vmatpush1.bf16.msra.mxu0 0
        %921 = vmatprep.subr.bf16.mxu0 0
        %922 = vmatpush1.bf16.msra.mxu0 0
        %923 = vmatprep.subr.bf16.mxu0 0
        %924 = vmatpush1.bf16.msra.mxu0 0
        %925 = vmatprep.subr.bf16.mxu0 0
        %926 = vmatpush1.bf16.msra.mxu0 0
        %927 = vmatprep.mubr.bf16.mxu0 0
        %928 = vmatmul.mubr.bf16.gmra.mrb[0].mxu0 %v718
        %v929 = vpop.f32.mrb[0].mxu0
        %v930 = vadd.f32 %v755, %v929
        %v931 = vpop.f32.mrb[0].mxu0
        %v932 = vadd.f32 %v759, %v931
        %v933 = vpop.f32.mrb[0].mxu0
        %v934 = vadd.f32 %v755, %v933
        %v935 = vpop.f32.mrb[0].mxu0
        %v936 = vadd.f32 %v759, %v935
        %937 = vdwg.mxu0
        %938 = vmatprep.subr.bf16.mxu0 0
        %939 = vmatpush1.bf16.msra.mxu0 %v849
        %940 = vmatprep.subr.bf16.mxu0 0
        %941 = vmatpush1.bf16.msra.mxu0 %v852
        %942 = vmatprep.subr.bf16.mxu0 0
        %943 = vmatpush1.bf16.msra.mxu0 %v855
        %944 = vmatprep.subr.bf16.mxu0 0
        %945 = vmatpush1.bf16.msra.mxu0 %v858
        %946 = vmatprep.subr.bf16.mxu0 0
        %947 = vmatpush1.bf16.msra.mxu0 %v861
        %948 = vmatprep.subr.bf16.mxu0 0
        %949 = vmatpush1.bf16.msra.mxu0 %v864
        %950 = vmatprep.subr.bf16.mxu0 0
        %951 = vmatpush1.bf16.msra.mxu0 %v867
        %952 = vmatprep.subr.bf16.mxu0 0
        %953 = vmatpush1.bf16.msra.mxu0 %v870
        %954 = vmatprep.subr.bf16.mxu0 0
        %955 = vmatpush1.bf16.msra.mxu0 0
        %956 = vmatprep.subr.bf16.mxu0 0
        %957 = vmatpush1.bf16.msra.mxu0 0
        %958 = vmatprep.subr.bf16.mxu0 0
        %959 = vmatpush1.bf16.msra.mxu0 0
        %960 = vmatprep.subr.bf16.mxu0 0
        %961 = vmatpush1.bf16.msra.mxu0 0
        %962 = vmatprep.subr.bf16.mxu0 0
        %963 = vmatpush1.bf16.msra.mxu0 0
        %964 = vmatprep.subr.bf16.mxu0 0
        %965 = vmatpush1.bf16.msra.mxu0 0
        %966 = vmatprep.subr.bf16.mxu0 0
        %967 = vmatpush1.bf16.msra.mxu0 0
        %968 = vmatprep.subr.bf16.mxu0 0
        %969 = vmatpush1.bf16.msra.mxu0 0
        %970 = vmatprep.mubr.bf16.mxu0 0
        %971 = vmatmul.mubr.bf16.gmra.mrb[0].mxu0 %v718
        %v972 = vpop.f32.mrb[0].mxu0
        %v973 = vadd.f32 %v763, %v972
        %v974 = vpop.f32.mrb[0].mxu0
        %v975 = vpop.f32.mrb[0].mxu0
        %v976 = vadd.f32 %v763, %v975
        %v977 = vpop.f32.mrb[0].mxu0
        %978 = vdwg.mxu0
        %v979 = vpack.c.bf16 %v930, %v930
        %v980 = vpack.c.bf16 %v934, %v934
        %v981 = vpack.c.bf16 %v932, %v932
        %v982 = vpack.c.bf16 %v936, %v936
        %v983 = vpack.c.bf16 %v973, %v973
        %v984 = vpack.c.bf16 %v976, %v976
        %v987 = vlaneseq
        %v988 = vshrl.u32 %v987, 7
        %v989 = vsub.s32 0, %v988
        %v990 = vrot.slane %v709, %v989
        %v991 = vlaneseq
        %v992 = vshrl.u32 %v991, 7
        %v993 = vsub.s32 0, %v992
        %v994 = vrot.slane %v710, %v993
        %vm997 = vcmask 261120
        %v999 = vsel %vm997, %v979, 0
        %v1002 = vsel %vm997, %v981, 0
        %1004 = vmatprep.subr.bf16.mxu0 0
        %1005 = vmatpush1.bf16.xpose.msra.mxu0 %v1002
        %1006 = vmatprep.subr.bf16.mxu0 0
        %1007 = vmatpush1.bf16.xpose.msra.mxu0 0
        %1008 = vmatprep.subr.bf16.mxu0 0
        %1009 = vmatpush1.bf16.xpose.msra.mxu0 0
        %1010 = vmatprep.subr.bf16.mxu0 0
        %1011 = vmatpush1.bf16.xpose.msra.mxu0 0
        %1012 = vmatprep.subr.bf16.mxu0 0
        %1013 = vmatpush1.bf16.xpose.msra.mxu0 0
        %1014 = vmatprep.subr.bf16.mxu0 0
        %1015 = vmatpush1.bf16.xpose.msra.mxu0 0
        %1016 = vmatprep.subr.bf16.mxu0 0
        %1017 = vmatpush1.bf16.xpose.msra.mxu0 0
        %1018 = vmatprep.subr.bf16.mxu0 0
        %1019 = vmatpush1.bf16.xpose.msra.mxu0 0
        %1020 = vmatprep.subr.bf16.mxu0 0
        %1021 = vmatpush1.bf16.xpose.msra.mxu0 0
        %1022 = vmatprep.subr.bf16.mxu0 0
        %1023 = vmatpush1.bf16.xpose.msra.mxu0 0
        %1024 = vmatprep.subr.bf16.mxu0 0
        %1025 = vmatpush1.bf16.xpose.msra.mxu0 0
        %1026 = vmatprep.subr.bf16.mxu0 0
        %1027 = vmatpush1.bf16.xpose.msra.mxu0 0
        %1028 = vmatprep.subr.bf16.mxu0 0
        %1029 = vmatpush1.bf16.xpose.msra.mxu0 0
        %1030 = vmatprep.subr.bf16.mxu0 0
        %1031 = vmatpush1.bf16.xpose.msra.mxu0 0
        %1032 = vmatprep.subr.bf16.mxu0 0
        %1033 = vmatpush1.bf16.xpose.msra.mxu0 0
        %1034 = vmatprep.subr.bf16.mxu0 0
        %1035 = vmatpush1.bf16.xpose.msra.mxu0 0
        %1036 = vmatprep.mubr.bf16.mxu0 0
        %1037 = vmatmul.mubr.bf16.gmra.mrb[0].mxu0 %v999
        %v1038 = vpop.f32.mrb[0].mxu0
        %v1039 = vadd.f32 %v990, %v1038
        %v1040 = vpop.f32.mrb[0].mxu0
        %v1041 = vpop.f32.mrb[0].mxu0
        %v1042 = vpop.f32.mrb[0].mxu0
        %1043 = vdwg.mxu0
        %v1045 = vsel %vm997, %v980, 0
        %v1048 = vsel %vm997, %v982, 0
        %1050 = vmatprep.subr.bf16.mxu0 0
        %1051 = vmatpush1.bf16.xpose.msra.mxu0 %v1048
        %1052 = vmatprep.subr.bf16.mxu0 0
        %1053 = vmatpush1.bf16.xpose.msra.mxu0 0
        %1054 = vmatprep.subr.bf16.mxu0 0
        %1055 = vmatpush1.bf16.xpose.msra.mxu0 0
        %1056 = vmatprep.subr.bf16.mxu0 0
        %1057 = vmatpush1.bf16.xpose.msra.mxu0 0
        %1058 = vmatprep.subr.bf16.mxu0 0
        %1059 = vmatpush1.bf16.xpose.msra.mxu0 0
        %1060 = vmatprep.subr.bf16.mxu0 0
        %1061 = vmatpush1.bf16.xpose.msra.mxu0 0
        %1062 = vmatprep.subr.bf16.mxu0 0
        %1063 = vmatpush1.bf16.xpose.msra.mxu0 0
        %1064 = vmatprep.subr.bf16.mxu0 0
        %1065 = vmatpush1.bf16.xpose.msra.mxu0 0
        %1066 = vmatprep.subr.bf16.mxu0 0
        %1067 = vmatpush1.bf16.xpose.msra.mxu0 0
        %1068 = vmatprep.subr.bf16.mxu0 0
        %1069 = vmatpush1.bf16.xpose.msra.mxu0 0
        %1070 = vmatprep.subr.bf16.mxu0 0
        %1071 = vmatpush1.bf16.xpose.msra.mxu0 0
        %1072 = vmatprep.subr.bf16.mxu0 0
        %1073 = vmatpush1.bf16.xpose.msra.mxu0 0
        %1074 = vmatprep.subr.bf16.mxu0 0
        %1075 = vmatpush1.bf16.xpose.msra.mxu0 0
        %1076 = vmatprep.subr.bf16.mxu0 0
        %1077 = vmatpush1.bf16.xpose.msra.mxu0 0
        %1078 = vmatprep.subr.bf16.mxu0 0
        %1079 = vmatpush1.bf16.xpose.msra.mxu0 0
        %1080 = vmatprep.subr.bf16.mxu0 0
        %1081 = vmatpush1.bf16.xpose.msra.mxu0 0
        %1082 = vmatprep.mubr.bf16.mxu0 0
        %1083 = vmatmul.mubr.bf16.gmra.mrb[0].mxu0 %v1045
        %v1084 = vpop.f32.mrb[0].mxu0
        %v1085 = vadd.f32 %v994, %v1084
        %v1086 = vpop.f32.mrb[0].mxu0
        %v1087 = vpop.f32.mrb[0].mxu0
        %v1088 = vpop.f32.mrb[0].mxu0
        %1089 = vdwg.mxu0
        %vm1090 = vcmask 64512
        %v1091 = vsel %vm1090, %v1039, -inf
        %1092 = vmax.xlane.f32.xlu0 %v1091
        %v1093 = vpop.xlane.xlu0 %1092
        %v1094 = vsel %vm1090, %v1085, -inf
        %1095 = vmax.xlane.f32.xlu0 %v1094
        %v1096 = vpop.xlane.xlu0 %1095
        %v1097 = vsub.f32 %v1039, %v1093
        %v1098 = vsub.f32 %v1085, %v1096
        %v1099 = vmul.f32 %v1097, 1.442695
        %v1100 = vpow.pop %v1099
        %v1101 = vmul.f32 %v1098, 1.442695
        %v1102 = vpow.pop %v1101
        %v1103 = vsel %vm1090, %v1100, 0.0
        %1104 = vadd.xlane.f32.xlu0 %v1103
        %v1105 = vpop.xlane.xlu0 %1104
        %v1106 = vsel %vm1090, %v1102, 0.0
        %1107 = vadd.xlane.f32.xlu0 %v1106
        %v1108 = vpop.xlane.xlu0 %1107
        %v1109 = vrcp.pop %v1105
        %v1110 = vrcp.pop %v1108
        %v1111 = vmul.f32 %v1100, %v1109
        %v1112 = vmul.f32 %v1102, %v1110
        %v1113 = vpack.c.bf16 %v1111, %v1111
        %v1114 = vpack.c.bf16 %v1112, %v1112
        %v1116 = vsel %vm1090, %v1113, 0
        %vm1118 = vcmask 1043456
        %v1120 = vsel %vm1118, %v983, 0
        %1122 = vmatprep.subr.bf16.mxu0 0
        %1123 = vmatpush1.bf16.msra.mxu0 %v1120
        %1124 = vmatprep.subr.bf16.mxu0 0
        %1125 = vmatpush1.bf16.msra.mxu0 0
        %1126 = vmatprep.subr.bf16.mxu0 0
        %1127 = vmatpush1.bf16.msra.mxu0 0
        %1128 = vmatprep.subr.bf16.mxu0 0
        %1129 = vmatpush1.bf16.msra.mxu0 0
        %1130 = vmatprep.subr.bf16.mxu0 0
        %1131 = vmatpush1.bf16.msra.mxu0 0
        %1132 = vmatprep.subr.bf16.mxu0 0
        %1133 = vmatpush1.bf16.msra.mxu0 0
        %1134 = vmatprep.subr.bf16.mxu0 0
        %1135 = vmatpush1.bf16.msra.mxu0 0
        %1136 = vmatprep.subr.bf16.mxu0 0
        %1137 = vmatpush1.bf16.msra.mxu0 0
        %1138 = vmatprep.subr.bf16.mxu0 0
        %1139 = vmatpush1.bf16.msra.mxu0 0
        %1140 = vmatprep.subr.bf16.mxu0 0
        %1141 = vmatpush1.bf16.msra.mxu0 0
        %1142 = vmatprep.subr.bf16.mxu0 0
        %1143 = vmatpush1.bf16.msra.mxu0 0
        %1144 = vmatprep.subr.bf16.mxu0 0
        %1145 = vmatpush1.bf16.msra.mxu0 0
        %1146 = vmatprep.subr.bf16.mxu0 0
        %1147 = vmatpush1.bf16.msra.mxu0 0
        %1148 = vmatprep.subr.bf16.mxu0 0
        %1149 = vmatpush1.bf16.msra.mxu0 0
        %1150 = vmatprep.subr.bf16.mxu0 0
        %1151 = vmatpush1.bf16.msra.mxu0 0
        %1152 = vmatprep.subr.bf16.mxu0 0
        %1153 = vmatpush1.bf16.msra.mxu0 0
        %1154 = vmatprep.mubr.bf16.mxu0 0
        %1155 = vmatmul.mubr.bf16.gmra.mrb[0].mxu0 %v1116
        %v1156 = vpop.f32.mrb[0].mxu0
        %v1157 = vadd.f32 0.0, %v1156
        %v1158 = vpop.f32.mrb[0].mxu0
        %v1159 = vpop.f32.mrb[0].mxu0
        %v1160 = vpop.f32.mrb[0].mxu0
        %1161 = vdwg.mxu0
        %v1163 = vsel %vm1090, %v1114, 0
        %v1166 = vsel %vm1118, %v984, 0
        %1168 = vmatprep.subr.bf16.mxu0 0
        %1169 = vmatpush1.bf16.msra.mxu0 %v1166
        %1170 = vmatprep.subr.bf16.mxu0 0
        %1171 = vmatpush1.bf16.msra.mxu0 0
        %1172 = vmatprep.subr.bf16.mxu0 0
        %1173 = vmatpush1.bf16.msra.mxu0 0
        %1174 = vmatprep.subr.bf16.mxu0 0
        %1175 = vmatpush1.bf16.msra.mxu0 0
        %1176 = vmatprep.subr.bf16.mxu0 0
        %1177 = vmatpush1.bf16.msra.mxu0 0
        %1178 = vmatprep.subr.bf16.mxu0 0
        %1179 = vmatpush1.bf16.msra.mxu0 0
        %1180 = vmatprep.subr.bf16.mxu0 0
        %1181 = vmatpush1.bf16.msra.mxu0 0
        %1182 = vmatprep.subr.bf16.mxu0 0
        %1183 = vmatpush1.bf16.msra.mxu0 0
        %1184 = vmatprep.subr.bf16.mxu0 0
        %1185 = vmatpush1.bf16.msra.mxu0 0
        %1186 = vmatprep.subr.bf16.mxu0 0
        %1187 = vmatpush1.bf16.msra.mxu0 0
        %1188 = vmatprep.subr.bf16.mxu0 0
        %1189 = vmatpush1.bf16.msra.mxu0 0
        %1190 = vmatprep.subr.bf16.mxu0 0
        %1191 = vmatpush1.bf16.msra.mxu0 0
        %1192 = vmatprep.subr.bf16.mxu0 0
        %1193 = vmatpush1.bf16.msra.mxu0 0
        %1194 = vmatprep.subr.bf16.mxu0 0
        %1195 = vmatpush1.bf16.msra.mxu0 0
        %1196 = vmatprep.subr.bf16.mxu0 0
        %1197 = vmatpush1.bf16.msra.mxu0 0
        %1198 = vmatprep.subr.bf16.mxu0 0
        %1199 = vmatpush1.bf16.msra.mxu0 0
        %1200 = vmatprep.mubr.bf16.mxu0 0
        %1201 = vmatmul.mubr.bf16.gmra.mrb[0].mxu0 %v1163
        %v1202 = vpop.f32.mrb[0].mxu0
        %v1203 = vadd.f32 0.0, %v1202
        %v1204 = vpop.f32.mrb[0].mxu0
        %v1205 = vpop.f32.mrb[0].mxu0
        %v1206 = vpop.f32.mrb[0].mxu0
        %1207 = vdwg.mxu0
        %v1208 = vpack.c.bf16 %v1203, %v1157
        %1209 = vst.msk [vmem:[#allocation2] sm:$0xff] %vm997, %v1208
        %1211 = vrot.lane.b32.xlu0 %v979, 96
        %v1212 = vpop.permute.xlu0 %1211
        %1214 = vrot.lane.b32.xlu0 %v981, 96
        %v1215 = vpop.permute.xlu0 %1214
        %v1217 = vsel %vm997, %v1212, 0
        %v1220 = vsel %vm997, %v1215, 0
        %1222 = vmatprep.subr.bf16.mxu0 0
        %1223 = vmatpush1.bf16.xpose.msra.mxu0 %v1220
        %1224 = vmatprep.subr.bf16.mxu0 0
        %1225 = vmatpush1.bf16.xpose.msra.mxu0 0
        %1226 = vmatprep.subr.bf16.mxu0 0
        %1227 = vmatpush1.bf16.xpose.msra.mxu0 0
        %1228 = vmatprep.subr.bf16.mxu0 0
        %1229 = vmatpush1.bf16.xpose.msra.mxu0 0
        %1230 = vmatprep.subr.bf16.mxu0 0
        %1231 = vmatpush1.bf16.xpose.msra.mxu0 0
        %1232 = vmatprep.subr.bf16.mxu0 0
        %1233 = vmatpush1.bf16.xpose.msra.mxu0 0
        %1234 = vmatprep.subr.bf16.mxu0 0
        %1235 = vmatpush1.bf16.xpose.msra.mxu0 0
        %1236 = vmatprep.subr.bf16.mxu0 0
        %1237 = vmatpush1.bf16.xpose.msra.mxu0 0
        %1238 = vmatprep.subr.bf16.mxu0 0
        %1239 = vmatpush1.bf16.xpose.msra.mxu0 0
        %1240 = vmatprep.subr.bf16.mxu0 0
        %1241 = vmatpush1.bf16.xpose.msra.mxu0 0
        %1242 = vmatprep.subr.bf16.mxu0 0
        %1243 = vmatpush1.bf16.xpose.msra.mxu0 0
        %1244 = vmatprep.subr.bf16.mxu0 0
        %1245 = vmatpush1.bf16.xpose.msra.mxu0 0
        %1246 = vmatprep.subr.bf16.mxu0 0
        %1247 = vmatpush1.bf16.xpose.msra.mxu0 0
        %1248 = vmatprep.subr.bf16.mxu0 0
        %1249 = vmatpush1.bf16.xpose.msra.mxu0 0
        %1250 = vmatprep.subr.bf16.mxu0 0
        %1251 = vmatpush1.bf16.xpose.msra.mxu0 0
        %1252 = vmatprep.subr.bf16.mxu0 0
        %1253 = vmatpush1.bf16.xpose.msra.mxu0 0
        %1254 = vmatprep.mubr.bf16.mxu0 0
        %1255 = vmatmul.mubr.bf16.gmra.mrb[0].mxu0 %v1217
        %v1256 = vpop.f32.mrb[0].mxu0
        %v1257 = vadd.f32 %v990, %v1256
        %v1258 = vpop.f32.mrb[0].mxu0
        %v1259 = vpop.f32.mrb[0].mxu0
        %v1260 = vpop.f32.mrb[0].mxu0
        %1261 = vdwg.mxu0
        %1263 = vrot.lane.b32.xlu0 %v980, 96
        %v1264 = vpop.permute.xlu0 %1263
        %1266 = vrot.lane.b32.xlu0 %v982, 96
        %v1267 = vpop.permute.xlu0 %1266
        %v1269 = vsel %vm997, %v1264, 0
        %v1272 = vsel %vm997, %v1267, 0
        %1274 = vmatprep.subr.bf16.mxu0 0
        %1275 = vmatpush1.bf16.xpose.msra.mxu0 %v1272
        %1276 = vmatprep.subr.bf16.mxu0 0
        %1277 = vmatpush1.bf16.xpose.msra.mxu0 0
        %1278 = vmatprep.subr.bf16.mxu0 0
        %1279 = vmatpush1.bf16.xpose.msra.mxu0 0
        %1280 = vmatprep.subr.bf16.mxu0 0
        %1281 = vmatpush1.bf16.xpose.msra.mxu0 0
        %1282 = vmatprep.subr.bf16.mxu0 0
        %1283 = vmatpush1.bf16.xpose.msra.mxu0 0
        %1284 = vmatprep.subr.bf16.mxu0 0
        %1285 = vmatpush1.bf16.xpose.msra.mxu0 0
        %1286 = vmatprep.subr.bf16.mxu0 0
        %1287 = vmatpush1.bf16.xpose.msra.mxu0 0
        %1288 = vmatprep.subr.bf16.mxu0 0
        %1289 = vmatpush1.bf16.xpose.msra.mxu0 0
        %1290 = vmatprep.subr.bf16.mxu0 0
        %1291 = vmatpush1.bf16.xpose.msra.mxu0 0
        %1292 = vmatprep.subr.bf16.mxu0 0
        %1293 = vmatpush1.bf16.xpose.msra.mxu0 0
        %1294 = vmatprep.subr.bf16.mxu0 0
        %1295 = vmatpush1.bf16.xpose.msra.mxu0 0
        %1296 = vmatprep.subr.bf16.mxu0 0
        %1297 = vmatpush1.bf16.xpose.msra.mxu0 0
        %1298 = vmatprep.subr.bf16.mxu0 0
        %1299 = vmatpush1.bf16.xpose.msra.mxu0 0
        %1300 = vmatprep.subr.bf16.mxu0 0
        %1301 = vmatpush1.bf16.xpose.msra.mxu0 0
        %1302 = vmatprep.subr.bf16.mxu0 0
        %1303 = vmatpush1.bf16.xpose.msra.mxu0 0
        %1304 = vmatprep.subr.bf16.mxu0 0
        %1305 = vmatpush1.bf16.xpose.msra.mxu0 0
        %1306 = vmatprep.mubr.bf16.mxu0 0
        %1307 = vmatmul.mubr.bf16.gmra.mrb[0].mxu0 %v1269
        %v1308 = vpop.f32.mrb[0].mxu0
        %v1309 = vadd.f32 %v994, %v1308
        %v1310 = vpop.f32.mrb[0].mxu0
        %v1311 = vpop.f32.mrb[0].mxu0
        %v1312 = vpop.f32.mrb[0].mxu0
        %1313 = vdwg.mxu0
        %v1314 = vsel %vm1090, %v1257, -inf
        %1315 = vmax.xlane.f32.xlu0 %v1314
        %v1316 = vpop.xlane.xlu0 %1315
        %v1317 = vsel %vm1090, %v1309, -inf
        %1318 = vmax.xlane.f32.xlu0 %v1317
        %v1319 = vpop.xlane.xlu0 %1318
        %v1320 = vsub.f32 %v1257, %v1316
        %v1321 = vsub.f32 %v1309, %v1319
        %v1322 = vmul.f32 %v1320, 1.442695
        %v1323 = vpow.pop %v1322
        %v1324 = vmul.f32 %v1321, 1.442695
        %v1325 = vpow.pop %v1324
        %v1326 = vsel %vm1090, %v1323, 0.0
        %1327 = vadd.xlane.f32.xlu0 %v1326
        %v1328 = vpop.xlane.xlu0 %1327
        %v1329 = vsel %vm1090, %v1325, 0.0
        %1330 = vadd.xlane.f32.xlu0 %v1329
        %v1331 = vpop.xlane.xlu0 %1330
        %v1332 = vrcp.pop %v1328
        %v1333 = vrcp.pop %v1331
        %v1334 = vmul.f32 %v1323, %v1332
        %v1335 = vmul.f32 %v1325, %v1333
        %v1336 = vpack.c.bf16 %v1334, %v1334
        %v1337 = vpack.c.bf16 %v1335, %v1335
        %1339 = vrot.lane.b32.xlu0 %v983, 96
        %v1340 = vpop.permute.xlu0 %1339
        %v1342 = vsel %vm1090, %v1336, 0
        %v1345 = vsel %vm1118, %v1340, 0
        %1347 = vmatprep.subr.bf16.mxu0 0
        %1348 = vmatpush1.bf16.msra.mxu0 %v1345
        %1349 = vmatprep.subr.bf16.mxu0 0
        %1350 = vmatpush1.bf16.msra.mxu0 0
        %1351 = vmatprep.subr.bf16.mxu0 0
        %1352 = vmatpush1.bf16.msra.mxu0 0
        %1353 = vmatprep.subr.bf16.mxu0 0
        %1354 = vmatpush1.bf16.msra.mxu0 0
        %1355 = vmatprep.subr.bf16.mxu0 0
        %1356 = vmatpush1.bf16.msra.mxu0 0
        %1357 = vmatprep.subr.bf16.mxu0 0
        %1358 = vmatpush1.bf16.msra.mxu0 0
        %1359 = vmatprep.subr.bf16.mxu0 0
        %1360 = vmatpush1.bf16.msra.mxu0 0
        %1361 = vmatprep.subr.bf16.mxu0 0
        %1362 = vmatpush1.bf16.msra.mxu0 0
        %1363 = vmatprep.subr.bf16.mxu0 0
        %1364 = vmatpush1.bf16.msra.mxu0 0
        %1365 = vmatprep.subr.bf16.mxu0 0
        %1366 = vmatpush1.bf16.msra.mxu0 0
        %1367 = vmatprep.subr.bf16.mxu0 0
        %1368 = vmatpush1.bf16.msra.mxu0 0
        %1369 = vmatprep.subr.bf16.mxu0 0
        %1370 = vmatpush1.bf16.msra.mxu0 0
        %1371 = vmatprep.subr.bf16.mxu0 0
        %1372 = vmatpush1.bf16.msra.mxu0 0
        %1373 = vmatprep.subr.bf16.mxu0 0
        %1374 = vmatpush1.bf16.msra.mxu0 0
        %1375 = vmatprep.subr.bf16.mxu0 0
        %1376 = vmatpush1.bf16.msra.mxu0 0
        %1377 = vmatprep.subr.bf16.mxu0 0
        %1378 = vmatpush1.bf16.msra.mxu0 0
        %1379 = vmatprep.mubr.bf16.mxu0 0
        %1380 = vmatmul.mubr.bf16.gmra.mrb[0].mxu0 %v1342
        %v1381 = vpop.f32.mrb[0].mxu0
        %v1382 = vadd.f32 0.0, %v1381
        %v1383 = vpop.f32.mrb[0].mxu0
        %v1384 = vpop.f32.mrb[0].mxu0
        %v1385 = vpop.f32.mrb[0].mxu0
        %1386 = vdwg.mxu0
        %1388 = vrot.lane.b32.xlu0 %v984, 96
        %v1389 = vpop.permute.xlu0 %1388
        %v1391 = vsel %vm1090, %v1337, 0
        %v1394 = vsel %vm1118, %v1389, 0
        %1396 = vmatprep.subr.bf16.mxu0 0
        %1397 = vmatpush1.bf16.msra.mxu0 %v1394
        %1398 = vmatprep.subr.bf16.mxu0 0
        %1399 = vmatpush1.bf16.msra.mxu0 0
        %1400 = vmatprep.subr.bf16.mxu0 0
        %1401 = vmatpush1.bf16.msra.mxu0 0
        %1402 = vmatprep.subr.bf16.mxu0 0
        %1403 = vmatpush1.bf16.msra.mxu0 0
        %1404 = vmatprep.subr.bf16.mxu0 0
        %1405 = vmatpush1.bf16.msra.mxu0 0
        %1406 = vmatprep.subr.bf16.mxu0 0
        %1407 = vmatpush1.bf16.msra.mxu0 0
        %1408 = vmatprep.subr.bf16.mxu0 0
        %1409 = vmatpush1.bf16.msra.mxu0 0
        %1410 = vmatprep.subr.bf16.mxu0 0
        %1411 = vmatpush1.bf16.msra.mxu0 0
        %1412 = vmatprep.subr.bf16.mxu0 0
        %1413 = vmatpush1.bf16.msra.mxu0 0
        %1414 = vmatprep.subr.bf16.mxu0 0
        %1415 = vmatpush1.bf16.msra.mxu0 0
        %1416 = vmatprep.subr.bf16.mxu0 0
        %1417 = vmatpush1.bf16.msra.mxu0 0
        %1418 = vmatprep.subr.bf16.mxu0 0
        %1419 = vmatpush1.bf16.msra.mxu0 0
        %1420 = vmatprep.subr.bf16.mxu0 0
        %1421 = vmatpush1.bf16.msra.mxu0 0
        %1422 = vmatprep.subr.bf16.mxu0 0
        %1423 = vmatpush1.bf16.msra.mxu0 0
        %1424 = vmatprep.subr.bf16.mxu0 0
        %1425 = vmatpush1.bf16.msra.mxu0 0
        %1426 = vmatprep.subr.bf16.mxu0 0
        %1427 = vmatpush1.bf16.msra.mxu0 0
        %1428 = vmatprep.mubr.bf16.mxu0 0
        %1429 = vmatmul.mubr.bf16.gmra.mrb[0].mxu0 %v1391
        %v1430 = vpop.f32.mrb[0].mxu0
        %v1431 = vadd.f32 0.0, %v1430
        %v1432 = vpop.f32.mrb[0].mxu0
        %v1433 = vpop.f32.mrb[0].mxu0
        %v1434 = vpop.f32.mrb[0].mxu0
        %1435 = vdwg.mxu0
        %v1436 = vpack.c.bf16 %v1431, %v1382
        %1438 = vrot.lane.b32.xlu0 %v1436, 32
        %v1439 = vpop.permute.xlu0 %1438
        %vm1441 = vcmask 523520
        %1442 = vst.msk [vmem:[#allocation2] sm:$0xff] %vm1441, %v1439
        %1443 = vrot.lane.b32.xlu0 %v979, 64
        %v1444 = vpop.permute.xlu0 %1443
        %1445 = vrot.lane.b32.xlu0 %v981, 64
        %v1446 = vpop.permute.xlu0 %1445
        %v1448 = vsel %vm997, %v1444, 0
        %v1451 = vsel %vm997, %v1446, 0
        %1453 = vmatprep.subr.bf16.mxu0 0
        %1454 = vmatpush1.bf16.xpose.msra.mxu0 %v1451
        %1455 = vmatprep.subr.bf16.mxu0 0
        %1456 = vmatpush1.bf16.xpose.msra.mxu0 0
        %1457 = vmatprep.subr.bf16.mxu0 0
        %1458 = vmatpush1.bf16.xpose.msra.mxu0 0
        %1459 = vmatprep.subr.bf16.mxu0 0
        %1460 = vmatpush1.bf16.xpose.msra.mxu0 0
        %1461 = vmatprep.subr.bf16.mxu0 0
        %1462 = vmatpush1.bf16.xpose.msra.mxu0 0
        %1463 = vmatprep.subr.bf16.mxu0 0
        %1464 = vmatpush1.bf16.xpose.msra.mxu0 0
        %1465 = vmatprep.subr.bf16.mxu0 0
        %1466 = vmatpush1.bf16.xpose.msra.mxu0 0
        %1467 = vmatprep.subr.bf16.mxu0 0
        %1468 = vmatpush1.bf16.xpose.msra.mxu0 0
        %1469 = vmatprep.subr.bf16.mxu0 0
        %1470 = vmatpush1.bf16.xpose.msra.mxu0 0
        %1471 = vmatprep.subr.bf16.mxu0 0
        %1472 = vmatpush1.bf16.xpose.msra.mxu0 0
        %1473 = vmatprep.subr.bf16.mxu0 0
        %1474 = vmatpush1.bf16.xpose.msra.mxu0 0
        %1475 = vmatprep.subr.bf16.mxu0 0
        %1476 = vmatpush1.bf16.xpose.msra.mxu0 0
        %1477 = vmatprep.subr.bf16.mxu0 0
        %1478 = vmatpush1.bf16.xpose.msra.mxu0 0
        %1479 = vmatprep.subr.bf16.mxu0 0
        %1480 = vmatpush1.bf16.xpose.msra.mxu0 0
        %1481 = vmatprep.subr.bf16.mxu0 0
        %1482 = vmatpush1.bf16.xpose.msra.mxu0 0
        %1483 = vmatprep.subr.bf16.mxu0 0
        %1484 = vmatpush1.bf16.xpose.msra.mxu0 0
        %1485 = vmatprep.mubr.bf16.mxu0 0
        %1486 = vmatmul.mubr.bf16.gmra.mrb[0].mxu0 %v1448
        %v1487 = vpop.f32.mrb[0].mxu0
        %v1488 = vadd.f32 %v990, %v1487
        %v1489 = vpop.f32.mrb[0].mxu0
        %v1490 = vpop.f32.mrb[0].mxu0
        %v1491 = vpop.f32.mrb[0].mxu0
        %1492 = vdwg.mxu0
        %1493 = vrot.lane.b32.xlu0 %v980, 64
        %v1494 = vpop.permute.xlu0 %1493
        %1495 = vrot.lane.b32.xlu0 %v982, 64
        %v1496 = vpop.permute.xlu0 %1495
        %v1498 = vsel %vm997, %v1494, 0
        %v1501 = vsel %vm997, %v1496, 0
        %1503 = vmatprep.subr.bf16.mxu0 0
        %1504 = vmatpush1.bf16.xpose.msra.mxu0 %v1501
        %1505 = vmatprep.subr.bf16.mxu0 0
        %1506 = vmatpush1.bf16.xpose.msra.mxu0 0
        %1507 = vmatprep.subr.bf16.mxu0 0
        %1508 = vmatpush1.bf16.xpose.msra.mxu0 0
        %1509 = vmatprep.subr.bf16.mxu0 0
        %1510 = vmatpush1.bf16.xpose.msra.mxu0 0
        %1511 = vmatprep.subr.bf16.mxu0 0
        %1512 = vmatpush1.bf16.xpose.msra.mxu0 0
        %1513 = vmatprep.subr.bf16.mxu0 0
        %1514 = vmatpush1.bf16.xpose.msra.mxu0 0
        %1515 = vmatprep.subr.bf16.mxu0 0
        %1516 = vmatpush1.bf16.xpose.msra.mxu0 0
        %1517 = vmatprep.subr.bf16.mxu0 0
        %1518 = vmatpush1.bf16.xpose.msra.mxu0 0
        %1519 = vmatprep.subr.bf16.mxu0 0
        %1520 = vmatpush1.bf16.xpose.msra.mxu0 0
        %1521 = vmatprep.subr.bf16.mxu0 0
        %1522 = vmatpush1.bf16.xpose.msra.mxu0 0
        %1523 = vmatprep.subr.bf16.mxu0 0
        %1524 = vmatpush1.bf16.xpose.msra.mxu0 0
        %1525 = vmatprep.subr.bf16.mxu0 0
        %1526 = vmatpush1.bf16.xpose.msra.mxu0 0
        %1527 = vmatprep.subr.bf16.mxu0 0
        %1528 = vmatpush1.bf16.xpose.msra.mxu0 0
        %1529 = vmatprep.subr.bf16.mxu0 0
        %1530 = vmatpush1.bf16.xpose.msra.mxu0 0
        %1531 = vmatprep.subr.bf16.mxu0 0
        %1532 = vmatpush1.bf16.xpose.msra.mxu0 0
        %1533 = vmatprep.subr.bf16.mxu0 0
        %1534 = vmatpush1.bf16.xpose.msra.mxu0 0
        %1535 = vmatprep.mubr.bf16.mxu0 0
        %1536 = vmatmul.mubr.bf16.gmra.mrb[0].mxu0 %v1498
        %v1537 = vpop.f32.mrb[0].mxu0
        %v1538 = vadd.f32 %v994, %v1537
        %v1539 = vpop.f32.mrb[0].mxu0
        %v1540 = vpop.f32.mrb[0].mxu0
        %v1541 = vpop.f32.mrb[0].mxu0
        %1542 = vdwg.mxu0
        %v1543 = vsel %vm1090, %v1488, -inf
        %1544 = vmax.xlane.f32.xlu0 %v1543
        %v1545 = vpop.xlane.xlu0 %1544
        %v1546 = vsel %vm1090, %v1538, -inf
        %1547 = vmax.xlane.f32.xlu0 %v1546
        %v1548 = vpop.xlane.xlu0 %1547
        %v1549 = vsub.f32 %v1488, %v1545
        %v1550 = vsub.f32 %v1538, %v1548
        %v1551 = vmul.f32 %v1549, 1.442695
        %v1552 = vpow.pop %v1551
        %v1553 = vmul.f32 %v1550, 1.442695
        %v1554 = vpow.pop %v1553
        %v1555 = vsel %vm1090, %v1552, 0.0
        %1556 = vadd.xlane.f32.xlu0 %v1555
        %v1557 = vpop.xlane.xlu0 %1556
        %v1558 = vsel %vm1090, %v1554, 0.0
        %1559 = vadd.xlane.f32.xlu0 %v1558
        %v1560 = vpop.xlane.xlu0 %1559
        %v1561 = vrcp.pop %v1557
        %v1562 = vrcp.pop %v1560
        %v1563 = vmul.f32 %v1552, %v1561
        %v1564 = vmul.f32 %v1554, %v1562
        %v1565 = vpack.c.bf16 %v1563, %v1563
        %v1566 = vpack.c.bf16 %v1564, %v1564
        %1567 = vrot.lane.b32.xlu0 %v983, 64
        %v1568 = vpop.permute.xlu0 %1567
        %v1570 = vsel %vm1090, %v1565, 0
        %v1573 = vsel %vm1118, %v1568, 0
        %1575 = vmatprep.subr.bf16.mxu0 0
        %1576 = vmatpush1.bf16.msra.mxu0 %v1573
        %1577 = vmatprep.subr.bf16.mxu0 0
        %1578 = vmatpush1.bf16.msra.mxu0 0
        %1579 = vmatprep.subr.bf16.mxu0 0
        %1580 = vmatpush1.bf16.msra.mxu0 0
        %1581 = vmatprep.subr.bf16.mxu0 0
        %1582 = vmatpush1.bf16.msra.mxu0 0
        %1583 = vmatprep.subr.bf16.mxu0 0
        %1584 = vmatpush1.bf16.msra.mxu0 0
        %1585 = vmatprep.subr.bf16.mxu0 0
        %1586 = vmatpush1.bf16.msra.mxu0 0
        %1587 = vmatprep.subr.bf16.mxu0 0
        %1588 = vmatpush1.bf16.msra.mxu0 0
        %1589 = vmatprep.subr.bf16.mxu0 0
        %1590 = vmatpush1.bf16.msra.mxu0 0
        %1591 = vmatprep.subr.bf16.mxu0 0
        %1592 = vmatpush1.bf16.msra.mxu0 0
        %1593 = vmatprep.subr.bf16.mxu0 0
        %1594 = vmatpush1.bf16.msra.mxu0 0
        %1595 = vmatprep.subr.bf16.mxu0 0
        %1596 = vmatpush1.bf16.msra.mxu0 0
        %1597 = vmatprep.subr.bf16.mxu0 0
        %1598 = vmatpush1.bf16.msra.mxu0 0
        %1599 = vmatprep.subr.bf16.mxu0 0
        %1600 = vmatpush1.bf16.msra.mxu0 0
        %1601 = vmatprep.subr.bf16.mxu0 0
        %1602 = vmatpush1.bf16.msra.mxu0 0
        %1603 = vmatprep.subr.bf16.mxu0 0
        %1604 = vmatpush1.bf16.msra.mxu0 0
        %1605 = vmatprep.subr.bf16.mxu0 0
        %1606 = vmatpush1.bf16.msra.mxu0 0
        %1607 = vmatprep.mubr.bf16.mxu0 0
        %1608 = vmatmul.mubr.bf16.gmra.mrb[0].mxu0 %v1570
        %v1609 = vpop.f32.mrb[0].mxu0
        %v1610 = vadd.f32 0.0, %v1609
        %v1611 = vpop.f32.mrb[0].mxu0
        %v1612 = vpop.f32.mrb[0].mxu0
        %v1613 = vpop.f32.mrb[0].mxu0
        %1614 = vdwg.mxu0
        %1615 = vrot.lane.b32.xlu0 %v984, 64
        %v1616 = vpop.permute.xlu0 %1615
        %v1618 = vsel %vm1090, %v1566, 0
        %v1621 = vsel %vm1118, %v1616, 0
        %1623 = vmatprep.subr.bf16.mxu0 0
        %1624 = vmatpush1.bf16.msra.mxu0 %v1621
        %1625 = vmatprep.subr.bf16.mxu0 0
        %1626 = vmatpush1.bf16.msra.mxu0 0
        %1627 = vmatprep.subr.bf16.mxu0 0
        %1628 = vmatpush1.bf16.msra.mxu0 0
        %1629 = vmatprep.subr.bf16.mxu0 0
        %1630 = vmatpush1.bf16.msra.mxu0 0
        %1631 = vmatprep.subr.bf16.mxu0 0
        %1632 = vmatpush1.bf16.msra.mxu0 0
        %1633 = vmatprep.subr.bf16.mxu0 0
        %1634 = vmatpush1.bf16.msra.mxu0 0
        %1635 = vmatprep.subr.bf16.mxu0 0
        %1636 = vmatpush1.bf16.msra.mxu0 0
        %1637 = vmatprep.subr.bf16.mxu0 0
        %1638 = vmatpush1.bf16.msra.mxu0 0
        %1639 = vmatprep.subr.bf16.mxu0 0
        %1640 = vmatpush1.bf16.msra.mxu0 0
        %1641 = vmatprep.subr.bf16.mxu0 0
        %1642 = vmatpush1.bf16.msra.mxu0 0
        %1643 = vmatprep.subr.bf16.mxu0 0
        %1644 = vmatpush1.bf16.msra.mxu0 0
        %1645 = vmatprep.subr.bf16.mxu0 0
        %1646 = vmatpush1.bf16.msra.mxu0 0
        %1647 = vmatprep.subr.bf16.mxu0 0
        %1648 = vmatpush1.bf16.msra.mxu0 0
        %1649 = vmatprep.subr.bf16.mxu0 0
        %1650 = vmatpush1.bf16.msra.mxu0 0
        %1651 = vmatprep.subr.bf16.mxu0 0
        %1652 = vmatpush1.bf16.msra.mxu0 0
        %1653 = vmatprep.subr.bf16.mxu0 0
        %1654 = vmatpush1.bf16.msra.mxu0 0
        %1655 = vmatprep.mubr.bf16.mxu0 0
        %1656 = vmatmul.mubr.bf16.gmra.mrb[0].mxu0 %v1618
        %v1657 = vpop.f32.mrb[0].mxu0
        %v1658 = vadd.f32 0.0, %v1657
        %v1659 = vpop.f32.mrb[0].mxu0
        %v1660 = vpop.f32.mrb[0].mxu0
        %v1661 = vpop.f32.mrb[0].mxu0
        %1662 = vdwg.mxu0
        %v1663 = vpack.c.bf16 %v1658, %v1610
        %1665 = vrot.lane.b32.xlu0 %v1663, 64
        %v1666 = vpop.permute.xlu0 %1665
        %vm1668 = vcmask 785920
        %1669 = vst.msk [vmem:[#allocation2] sm:$0xff] %vm1668, %v1666
        %1670 = vrot.lane.b32.xlu0 %v979, 32
        %v1671 = vpop.permute.xlu0 %1670
        %1672 = vrot.lane.b32.xlu0 %v981, 32
        %v1673 = vpop.permute.xlu0 %1672
        %v1675 = vsel %vm997, %v1671, 0
        %v1678 = vsel %vm997, %v1673, 0
        %1680 = vmatprep.subr.bf16.mxu0 0
        %1681 = vmatpush1.bf16.xpose.msra.mxu0 %v1678
        %1682 = vmatprep.subr.bf16.mxu0 0
        %1683 = vmatpush1.bf16.xpose.msra.mxu0 0
        %1684 = vmatprep.subr.bf16.mxu0 0
        %1685 = vmatpush1.bf16.xpose.msra.mxu0 0
        %1686 = vmatprep.subr.bf16.mxu0 0
        %1687 = vmatpush1.bf16.xpose.msra.mxu0 0
        %1688 = vmatprep.subr.bf16.mxu0 0
        %1689 = vmatpush1.bf16.xpose.msra.mxu0 0
        %1690 = vmatprep.subr.bf16.mxu0 0
        %1691 = vmatpush1.bf16.xpose.msra.mxu0 0
        %1692 = vmatprep.subr.bf16.mxu0 0
        %1693 = vmatpush1.bf16.xpose.msra.mxu0 0
        %1694 = vmatprep.subr.bf16.mxu0 0
        %1695 = vmatpush1.bf16.xpose.msra.mxu0 0
        %1696 = vmatprep.subr.bf16.mxu0 0
        %1697 = vmatpush1.bf16.xpose.msra.mxu0 0
        %1698 = vmatprep.subr.bf16.mxu0 0
        %1699 = vmatpush1.bf16.xpose.msra.mxu0 0
        %1700 = vmatprep.subr.bf16.mxu0 0
        %1701 = vmatpush1.bf16.xpose.msra.mxu0 0
        %1702 = vmatprep.subr.bf16.mxu0 0
        %1703 = vmatpush1.bf16.xpose.msra.mxu0 0
        %1704 = vmatprep.subr.bf16.mxu0 0
        %1705 = vmatpush1.bf16.xpose.msra.mxu0 0
        %1706 = vmatprep.subr.bf16.mxu0 0
        %1707 = vmatpush1.bf16.xpose.msra.mxu0 0
        %1708 = vmatprep.subr.bf16.mxu0 0
        %1709 = vmatpush1.bf16.xpose.msra.mxu0 0
        %1710 = vmatprep.subr.bf16.mxu0 0
        %1711 = vmatpush1.bf16.xpose.msra.mxu0 0
        %1712 = vmatprep.mubr.bf16.mxu0 0
        %1713 = vmatmul.mubr.bf16.gmra.mrb[0].mxu0 %v1675
        %v1714 = vpop.f32.mrb[0].mxu0
        %v1715 = vadd.f32 %v990, %v1714
        %v1716 = vpop.f32.mrb[0].mxu0
        %v1717 = vpop.f32.mrb[0].mxu0
        %v1718 = vpop.f32.mrb[0].mxu0
        %1719 = vdwg.mxu0
        %1720 = vrot.lane.b32.xlu0 %v980, 32
        %v1721 = vpop.permute.xlu0 %1720
        %1722 = vrot.lane.b32.xlu0 %v982, 32
        %v1723 = vpop.permute.xlu0 %1722
        %v1725 = vsel %vm997, %v1721, 0
        %v1728 = vsel %vm997, %v1723, 0
        %1730 = vmatprep.subr.bf16.mxu0 0
        %1731 = vmatpush1.bf16.xpose.msra.mxu0 %v1728
        %1732 = vmatprep.subr.bf16.mxu0 0
        %1733 = vmatpush1.bf16.xpose.msra.mxu0 0
        %1734 = vmatprep.subr.bf16.mxu0 0
        %1735 = vmatpush1.bf16.xpose.msra.mxu0 0
        %1736 = vmatprep.subr.bf16.mxu0 0
        %1737 = vmatpush1.bf16.xpose.msra.mxu0 0
        %1738 = vmatprep.subr.bf16.mxu0 0
        %1739 = vmatpush1.bf16.xpose.msra.mxu0 0
        %1740 = vmatprep.subr.bf16.mxu0 0
        %1741 = vmatpush1.bf16.xpose.msra.mxu0 0
        %1742 = vmatprep.subr.bf16.mxu0 0
        %1743 = vmatpush1.bf16.xpose.msra.mxu0 0
        %1744 = vmatprep.subr.bf16.mxu0 0
        %1745 = vmatpush1.bf16.xpose.msra.mxu0 0
        %1746 = vmatprep.subr.bf16.mxu0 0
        %1747 = vmatpush1.bf16.xpose.msra.mxu0 0
        %1748 = vmatprep.subr.bf16.mxu0 0
        %1749 = vmatpush1.bf16.xpose.msra.mxu0 0
        %1750 = vmatprep.subr.bf16.mxu0 0
        %1751 = vmatpush1.bf16.xpose.msra.mxu0 0
        %1752 = vmatprep.subr.bf16.mxu0 0
        %1753 = vmatpush1.bf16.xpose.msra.mxu0 0
        %1754 = vmatprep.subr.bf16.mxu0 0
        %1755 = vmatpush1.bf16.xpose.msra.mxu0 0
        %1756 = vmatprep.subr.bf16.mxu0 0
        %1757 = vmatpush1.bf16.xpose.msra.mxu0 0
        %1758 = vmatprep.subr.bf16.mxu0 0
        %1759 = vmatpush1.bf16.xpose.msra.mxu0 0
        %1760 = vmatprep.subr.bf16.mxu0 0
        %1761 = vmatpush1.bf16.xpose.msra.mxu0 0
        %1762 = vmatprep.mubr.bf16.mxu0 0
        %1763 = vmatmul.mubr.bf16.gmra.mrb[0].mxu0 %v1725
        %v1764 = vpop.f32.mrb[0].mxu0
        %v1765 = vadd.f32 %v994, %v1764
        %v1766 = vpop.f32.mrb[0].mxu0
        %v1767 = vpop.f32.mrb[0].mxu0
        %v1768 = vpop.f32.mrb[0].mxu0
        %1769 = vdwg.mxu0
        %v1770 = vsel %vm1090, %v1715, -inf
        %1771 = vmax.xlane.f32.xlu0 %v1770
        %v1772 = vpop.xlane.xlu0 %1771
        %v1773 = vsel %vm1090, %v1765, -inf
        %1774 = vmax.xlane.f32.xlu0 %v1773
        %v1775 = vpop.xlane.xlu0 %1774
        %v1776 = vsub.f32 %v1715, %v1772
        %v1777 = vsub.f32 %v1765, %v1775
        %v1778 = vmul.f32 %v1776, 1.442695
        %v1779 = vpow.pop %v1778
        %v1780 = vmul.f32 %v1777, 1.442695
        %v1781 = vpow.pop %v1780
        %v1782 = vsel %vm1090, %v1779, 0.0
        %1783 = vadd.xlane.f32.xlu0 %v1782
        %v1784 = vpop.xlane.xlu0 %1783
        %v1785 = vsel %vm1090, %v1781, 0.0
        %1786 = vadd.xlane.f32.xlu0 %v1785
        %v1787 = vpop.xlane.xlu0 %1786
        %v1788 = vrcp.pop %v1784
        %v1789 = vrcp.pop %v1787
        %v1790 = vmul.f32 %v1779, %v1788
        %v1791 = vmul.f32 %v1781, %v1789
        %v1792 = vpack.c.bf16 %v1790, %v1790
        %v1793 = vpack.c.bf16 %v1791, %v1791
        %1794 = vrot.lane.b32.xlu0 %v983, 32
        %v1795 = vpop.permute.xlu0 %1794
        %v1797 = vsel %vm1090, %v1792, 0
        %v1800 = vsel %vm1118, %v1795, 0
        %1802 = vmatprep.subr.bf16.mxu0 0
        %1803 = vmatpush1.bf16.msra.mxu0 %v1800
        %1804 = vmatprep.subr.bf16.mxu0 0
        %1805 = vmatpush1.bf16.msra.mxu0 0
        %1806 = vmatprep.subr.bf16.mxu0 0
        %1807 = vmatpush1.bf16.msra.mxu0 0
        %1808 = vmatprep.subr.bf16.mxu0 0
        %1809 = vmatpush1.bf16.msra.mxu0 0
        %1810 = vmatprep.subr.bf16.mxu0 0
        %1811 = vmatpush1.bf16.msra.mxu0 0
        %1812 = vmatprep.subr.bf16.mxu0 0
        %1813 = vmatpush1.bf16.msra.mxu0 0
        %1814 = vmatprep.subr.bf16.mxu0 0
        %1815 = vmatpush1.bf16.msra.mxu0 0
        %1816 = vmatprep.subr.bf16.mxu0 0
        %1817 = vmatpush1.bf16.msra.mxu0 0
        %1818 = vmatprep.subr.bf16.mxu0 0
        %1819 = vmatpush1.bf16.msra.mxu0 0
        %1820 = vmatprep.subr.bf16.mxu0 0
        %1821 = vmatpush1.bf16.msra.mxu0 0
        %1822 = vmatprep.subr.bf16.mxu0 0
        %1823 = vmatpush1.bf16.msra.mxu0 0
        %1824 = vmatprep.subr.bf16.mxu0 0
        %1825 = vmatpush1.bf16.msra.mxu0 0
        %1826 = vmatprep.subr.bf16.mxu0 0
        %1827 = vmatpush1.bf16.msra.mxu0 0
        %1828 = vmatprep.subr.bf16.mxu0 0
        %1829 = vmatpush1.bf16.msra.mxu0 0
        %1830 = vmatprep.subr.bf16.mxu0 0
        %1831 = vmatpush1.bf16.msra.mxu0 0
        %1832 = vmatprep.subr.bf16.mxu0 0
        %1833 = vmatpush1.bf16.msra.mxu0 0
        %1834 = vmatprep.mubr.bf16.mxu0 0
        %1835 = vmatmul.mubr.bf16.gmra.mrb[0].mxu0 %v1797
        %v1836 = vpop.f32.mrb[0].mxu0
        %v1837 = vadd.f32 0.0, %v1836
        %v1838 = vpop.f32.mrb[0].mxu0
        %v1839 = vpop.f32.mrb[0].mxu0
        %v1840 = vpop.f32.mrb[0].mxu0
        %1841 = vdwg.mxu0
        %1842 = vrot.lane.b32.xlu0 %v984, 32
        %v1843 = vpop.permute.xlu0 %1842
        %v1845 = vsel %vm1090, %v1793, 0
        %v1848 = vsel %vm1118, %v1843, 0
        %1850 = vmatprep.subr.bf16.mxu0 0
        %1851 = vmatpush1.bf16.msra.mxu0 %v1848
        %1852 = vmatprep.subr.bf16.mxu0 0
        %1853 = vmatpush1.bf16.msra.mxu0 0
        %1854 = vmatprep.subr.bf16.mxu0 0
        %1855 = vmatpush1.bf16.msra.mxu0 0
        %1856 = vmatprep.subr.bf16.mxu0 0
        %1857 = vmatpush1.bf16.msra.mxu0 0
        %1858 = vmatprep.subr.bf16.mxu0 0
        %1859 = vmatpush1.bf16.msra.mxu0 0
        %1860 = vmatprep.subr.bf16.mxu0 0
        %1861 = vmatpush1.bf16.msra.mxu0 0
        %1862 = vmatprep.subr.bf16.mxu0 0
        %1863 = vmatpush1.bf16.msra.mxu0 0
        %1864 = vmatprep.subr.bf16.mxu0 0
        %1865 = vmatpush1.bf16.msra.mxu0 0
        %1866 = vmatprep.subr.bf16.mxu0 0
        %1867 = vmatpush1.bf16.msra.mxu0 0
        %1868 = vmatprep.subr.bf16.mxu0 0
        %1869 = vmatpush1.bf16.msra.mxu0 0
        %1870 = vmatprep.subr.bf16.mxu0 0
        %1871 = vmatpush1.bf16.msra.mxu0 0
        %1872 = vmatprep.subr.bf16.mxu0 0
        %1873 = vmatpush1.bf16.msra.mxu0 0
        %1874 = vmatprep.subr.bf16.mxu0 0
        %1875 = vmatpush1.bf16.msra.mxu0 0
        %1876 = vmatprep.subr.bf16.mxu0 0
        %1877 = vmatpush1.bf16.msra.mxu0 0
        %1878 = vmatprep.subr.bf16.mxu0 0
        %1879 = vmatpush1.bf16.msra.mxu0 0
        %1880 = vmatprep.subr.bf16.mxu0 0
        %1881 = vmatpush1.bf16.msra.mxu0 0
        %1882 = vmatprep.mubr.bf16.mxu0 0
        %1883 = vmatmul.mubr.bf16.gmra.mrb[0].mxu0 %v1845
        %v1884 = vpop.f32.mrb[0].mxu0
        %v1885 = vadd.f32 0.0, %v1884
        %v1886 = vpop.f32.mrb[0].mxu0
        %v1887 = vpop.f32.mrb[0].mxu0
        %v1888 = vpop.f32.mrb[0].mxu0
        %1889 = vdwg.mxu0
        %v1890 = vpack.c.bf16 %v1885, %v1837
        %1892 = vrot.lane.b32.xlu0 %v1890, 96
        %v1893 = vpop.permute.xlu0 %1892
        %vm1895 = vcmask 1048320
        %1896 = vst.msk [vmem:[#allocation2] sm:$0xff] %vm1895, %v1893
        %v1897 = vld [vmem:[#allocation2] sm:$0xff]
        %v1898 = vld [vmem:[#allocation9] sm:$0xf]
        %v1899 = vld [vmem:[#allocation9 + $0x4] sm:$0xf]
        %v1900 = vld [vmem:[#allocation9 + $0x8] sm:$0xf]
        %v1901 = vld [vmem:[#allocation9 + $0xc] sm:$0xf]
        %v1902 = vld [vmem:[#allocation9 + $0x10] sm:$0xf]
        %v1903 = vld [vmem:[#allocation9 + $0x14] sm:$0xf]
        %v1904 = vld [vmem:[#allocation9 + $0x18] sm:$0xf]
        %v1905 = vld [vmem:[#allocation9 + $0x1c] sm:$0xf]
        %v1906 = vld [vmem:[#allocation9 + $0x20] sm:$0xf]
        %v1907 = vld [vmem:[#allocation9 + $0x24] sm:$0xf]
        %v1908 = vld [vmem:[#allocation9 + $0x28] sm:$0xf]
        %v1909 = vld [vmem:[#allocation9 + $0x2c] sm:$0xf]
        %v1910 = vld [vmem:[#allocation9 + $0x30] sm:$0xf]
        %v1911 = vld [vmem:[#allocation9 + $0x34] sm:$0xf]
        %v1912 = vld [vmem:[#allocation9 + $0x38] sm:$0xf]
        %v1913 = vld [vmem:[#allocation9 + $0x3c] sm:$0xf]
        %v1914 = vlaneseq
        %v1915 = vshrl.u32 %v1914, 7
        %v1916 = vsub.s32 0, %v1915
        %v1917 = vrot.slane %v697, %v1916
        %v1934 = vunpack.c.l.b16 %v1898
        %v1935 = vunpack.c.l.b16 %v1899
        %v1936 = vunpack.c.l.b16 %v1900
        %v1937 = vunpack.c.l.b16 %v1901
        %v1938 = vunpack.c.l.b16 %v1902
        %v1939 = vunpack.c.l.b16 %v1903
        %v1940 = vunpack.c.l.b16 %v1904
        %v1941 = vunpack.c.l.b16 %v1905
        %v1942 = vunpack.c.l.b16 %v1906
        %v1943 = vunpack.c.l.b16 %v1907
        %v1944 = vunpack.c.l.b16 %v1908
        %v1945 = vunpack.c.l.b16 %v1909
        %v1946 = vunpack.c.l.b16 %v1910
        %v1947 = vunpack.c.l.b16 %v1911
        %v1948 = vunpack.c.l.b16 %v1912
        %v1949 = vunpack.c.l.b16 %v1913
        %v1950 = vpack.c.b16 %v1935, %v1934
        %v1951 = vpack.c.b16 %v1937, %v1936
        %v1952 = vpack.c.b16 %v1939, %v1938
        %v1953 = vpack.c.b16 %v1941, %v1940
        %v1954 = vpack.c.b16 %v1943, %v1942
        %v1955 = vpack.c.b16 %v1945, %v1944
        %v1956 = vpack.c.b16 %v1947, %v1946
        %v1957 = vpack.c.b16 %v1949, %v1948
        %1966 = vmatprep.subr.bf16.mxu0 0
        %1967 = vmatpush1.bf16.msra.mxu0 %v1950
        %1968 = vmatprep.subr.bf16.mxu0 0
        %1969 = vmatpush1.bf16.msra.mxu0 %v1951
        %1970 = vmatprep.subr.bf16.mxu0 0
        %1971 = vmatpush1.bf16.msra.mxu0 %v1952
        %1972 = vmatprep.subr.bf16.mxu0 0
        %1973 = vmatpush1.bf16.msra.mxu0 %v1953
        %1974 = vmatprep.subr.bf16.mxu0 0
        %1975 = vmatpush1.bf16.msra.mxu0 %v1954
        %1976 = vmatprep.subr.bf16.mxu0 0
        %1977 = vmatpush1.bf16.msra.mxu0 %v1955
        %1978 = vmatprep.subr.bf16.mxu0 0
        %1979 = vmatpush1.bf16.msra.mxu0 %v1956
        %1980 = vmatprep.subr.bf16.mxu0 0
        %1981 = vmatpush1.bf16.msra.mxu0 %v1957
        %1982 = vmatprep.subr.bf16.mxu0 0
        %1983 = vmatpush1.bf16.msra.mxu0 0
        %1984 = vmatprep.subr.bf16.mxu0 0
        %1985 = vmatpush1.bf16.msra.mxu0 0
        %1986 = vmatprep.subr.bf16.mxu0 0
        %1987 = vmatpush1.bf16.msra.mxu0 0
        %1988 = vmatprep.subr.bf16.mxu0 0
        %1989 = vmatpush1.bf16.msra.mxu0 0
        %1990 = vmatprep.subr.bf16.mxu0 0
        %1991 = vmatpush1.bf16.msra.mxu0 0
        %1992 = vmatprep.subr.bf16.mxu0 0
        %1993 = vmatpush1.bf16.msra.mxu0 0
        %1994 = vmatprep.subr.bf16.mxu0 0
        %1995 = vmatpush1.bf16.msra.mxu0 0
        %1996 = vmatprep.subr.bf16.mxu0 0
        %1997 = vmatpush1.bf16.msra.mxu0 0
        %1998 = vmatprep.mubr.bf16.mxu0 0
        %1999 = vmatmul.mubr.bf16.gmra.mrb[0].mxu0 %v1897
        %v2000 = vpop.f32.mrb[0].mxu0
        %v2001 = vadd.f32 %v1917, %v2000
        %v2002 = vpop.f32.mrb[0].mxu0
        %v2003 = vpop.f32.mrb[0].mxu0
        %v2004 = vadd.f32 %v1917, %v2003
        %v2005 = vpop.f32.mrb[0].mxu0
        %2006 = vdwg.mxu0
        %v2007 = vadd.f32 %v699, %v2001
        %v2008 = vadd.f32 %v700, %v2004
        %2009 = vadd.xlane.f32.xlu0 %v2007
        %v2010 = vpop.xlane.xlu0 %2009
        %2011 = vadd.xlane.f32.xlu0 %v2008
        %v2012 = vpop.xlane.xlu0 %2011
        %v2013 = vrcp.pop 128.0
        %v2014 = vmul.f32 %v2010, %v2013
        %v2015 = vmul.f32 %v2012, %v2013
        %v2016 = vsub.f32 %v2007, %v2014
        %v2017 = vsub.f32 %v2008, %v2015
        %v2018 = vmul.f32 %v2016, %v2016
        %v2019 = vmul.f32 %v2017, %v2017
        %2020 = vadd.xlane.f32.xlu0 %v2018
        %v2021 = vpop.xlane.xlu0 %2020
        %2022 = vadd.xlane.f32.xlu0 %v2019
        %v2023 = vpop.xlane.xlu0 %2022
        %v2024 = vmul.f32 %v2021, 0.007874016
        %v2025 = vmul.f32 %v2023, 0.007874016
        %v2026 = vrsqrt.pop %v2024
        %v2027 = vmul.f32 %v2024, %v2026
        %vm2028 = vcmp.eq.f32.partialorder %v2024, inf
        %v2029 = vsel %vm2028, %v2024, %v2027
        %vm2030 = vcmp.eq.f32.partialorder %v2024, 0.0
        %v2031 = vand.u32 %v2024, 2147483648
        %v2032 = vsel %vm2030, %v2031, %v2029
        %v2033 = vrsqrt.pop %v2025
        %v2034 = vmul.f32 %v2025, %v2033
        %vm2035 = vcmp.eq.f32.partialorder %v2025, inf
        %v2036 = vsel %vm2035, %v2025, %v2034
        %vm2037 = vcmp.eq.f32.partialorder %v2025, 0.0
        %v2038 = vand.u32 %v2025, 2147483648
        %v2039 = vsel %vm2037, %v2038, %v2036
        %v2040 = vadd.f32 %v2032, 1e-06
        %v2041 = vadd.f32 %v2039, 1e-06
        %v2042 = vrcp.pop %v2040
        %v2043 = vmul.f32 1.0, %v2042
        %v2044 = vrcp.pop %v2041
        %v2045 = vmul.f32 1.0, %v2044
        %v2046 = vmul.f32 %v2016, %v2043
        %v2047 = vmul.f32 %v2017, %v2045
        %v2048 = vlaneseq
        %v2049 = vshrl.u32 %v2048, 7
        %v2050 = vsub.s32 4, %v2049
        %v2051 = vrot.slane %v697, %v2050
        %v2052 = vmul.f32 %v2051, %v2046
        %v2053 = vmul.f32 %v2051, %v2047
        %v2054 = vlaneseq
        %v2055 = vshrl.u32 %v2054, 7
        %v2056 = vsub.s32 5, %v2055
        %v2057 = vrot.slane %v697, %v2056
        %v2058 = vadd.f32 %v2052, %v2057
        %v2059 = vadd.f32 %v2053, %v2057
        %v2060 = vpack.c.bf16 %v2059, %v2058
        %v2061 = vld [vmem:[#allocation11] sm:$0xf]
        %v2062 = vld [vmem:[#allocation11 + $0x4] sm:$0xf]
        %v2063 = vld [vmem:[#allocation11 + $0x8] sm:$0xf]
        %v2064 = vld [vmem:[#allocation11 + $0xc] sm:$0xf]
        %v2065 = vld [vmem:[#allocation11 + $0x10] sm:$0xf]
        %v2066 = vld [vmem:[#allocation11 + $0x14] sm:$0xf]
        %v2067 = vld [vmem:[#allocation11 + $0x18] sm:$0xf]
        %v2068 = vld [vmem:[#allocation11 + $0x1c] sm:$0xf]
        %v2069 = vld [vmem:[#allocation11 + $0x20] sm:$0xf]
        %v2070 = vld [vmem:[#allocation11 + $0x24] sm:$0xf]
        %v2071 = vld [vmem:[#allocation11 + $0x28] sm:$0xf]
        %v2072 = vld [vmem:[#allocation11 + $0x2c] sm:$0xf]
        %v2073 = vld [vmem:[#allocation11 + $0x30] sm:$0xf]
        %v2074 = vld [vmem:[#allocation11 + $0x34] sm:$0xf]
        %v2075 = vld [vmem:[#allocation11 + $0x38] sm:$0xf]
        %v2076 = vld [vmem:[#allocation11 + $0x3c] sm:$0xf]
        %v2077 = vlaneseq
        %v2078 = vshrl.u32 %v2077, 7
        %v2079 = vsub.s32 1, %v2078
        %v2080 = vrot.slane %v697, %v2079
        %v2097 = vunpack.c.l.b16 %v2061
        %v2098 = vunpack.c.l.b16 %v2062
        %v2099 = vunpack.c.l.b16 %v2063
        %v2100 = vunpack.c.l.b16 %v2064
        %v2101 = vunpack.c.l.b16 %v2065
        %v2102 = vunpack.c.l.b16 %v2066
        %v2103 = vunpack.c.l.b16 %v2067
        %v2104 = vunpack.c.l.b16 %v2068
        %v2105 = vunpack.c.l.b16 %v2069
        %v2106 = vunpack.c.l.b16 %v2070
        %v2107 = vunpack.c.l.b16 %v2071
        %v2108 = vunpack.c.l.b16 %v2072
        %v2109 = vunpack.c.l.b16 %v2073
        %v2110 = vunpack.c.l.b16 %v2074
        %v2111 = vunpack.c.l.b16 %v2075
        %v2112 = vunpack.c.l.b16 %v2076
        %v2113 = vpack.c.b16 %v2098, %v2097
        %v2114 = vpack.c.b16 %v2100, %v2099
        %v2115 = vpack.c.b16 %v2102, %v2101
        %v2116 = vpack.c.b16 %v2104, %v2103
        %v2117 = vpack.c.b16 %v2106, %v2105
        %v2118 = vpack.c.b16 %v2108, %v2107
        %v2119 = vpack.c.b16 %v2110, %v2109
        %v2120 = vpack.c.b16 %v2112, %v2111
        %2129 = vmatprep.subr.bf16.mxu0 0
        %2130 = vmatpush1.bf16.msra.mxu0 %v2113
        %2131 = vmatprep.subr.bf16.mxu0 0
        %2132 = vmatpush1.bf16.msra.mxu0 %v2114
        %2133 = vmatprep.subr.bf16.mxu0 0
        %2134 = vmatpush1.bf16.msra.mxu0 %v2115
        %2135 = vmatprep.subr.bf16.mxu0 0
        %2136 = vmatpush1.bf16.msra.mxu0 %v2116
        %2137 = vmatprep.subr.bf16.mxu0 0
        %2138 = vmatpush1.bf16.msra.mxu0 %v2117
        %2139 = vmatprep.subr.bf16.mxu0 0
        %2140 = vmatpush1.bf16.msra.mxu0 %v2118
        %2141 = vmatprep.subr.bf16.mxu0 0
        %2142 = vmatpush1.bf16.msra.mxu0 %v2119
        %2143 = vmatprep.subr.bf16.mxu0 0
        %2144 = vmatpush1.bf16.msra.mxu0 %v2120
        %2145 = vmatprep.subr.bf16.mxu0 0
        %2146 = vmatpush1.bf16.msra.mxu0 0
        %2147 = vmatprep.subr.bf16.mxu0 0
        %2148 = vmatpush1.bf16.msra.mxu0 0
        %2149 = vmatprep.subr.bf16.mxu0 0
        %2150 = vmatpush1.bf16.msra.mxu0 0
        %2151 = vmatprep.subr.bf16.mxu0 0
        %2152 = vmatpush1.bf16.msra.mxu0 0
        %2153 = vmatprep.subr.bf16.mxu0 0
        %2154 = vmatpush1.bf16.msra.mxu0 0
        %2155 = vmatprep.subr.bf16.mxu0 0
        %2156 = vmatpush1.bf16.msra.mxu0 0
        %2157 = vmatprep.subr.bf16.mxu0 0
        %2158 = vmatpush1.bf16.msra.mxu0 0
        %2159 = vmatprep.subr.bf16.mxu0 0
        %2160 = vmatpush1.bf16.msra.mxu0 0
        %2161 = vmatprep.mubr.bf16.mxu0 0
        %2162 = vmatmul.mubr.bf16.gmra.mrb[0].mxu0 %v2060
        %v2163 = vpop.f32.mrb[0].mxu0
        %v2164 = vadd.f32 %v2080, %v2163
        %v2165 = vpop.f32.mrb[0].mxu0
        %v2166 = vpop.f32.mrb[0].mxu0
        %v2167 = vadd.f32 %v2080, %v2166
        %v2168 = vpop.f32.mrb[0].mxu0
        %2169 = vdwg.mxu0
        %v2170 = vld [vmem:[%s9] sm:$0x3]
        %v2171 = vpack.c.bf16 %v702, %v701
        %v2172 = vpack.c.bf16 %v704, %v703
        %v2173 = vld [vmem:[#allocation12] sm:$0xff]
        %v2174 = vld [vmem:[#allocation12 + $0x8] sm:$0xff]
        %v2175 = vld [vmem:[#allocation12 + $0x10] sm:$0xff]
        %v2176 = vld [vmem:[#allocation12 + $0x18] sm:$0xff]
        %v2177 = vld [vmem:[#allocation12 + $0x20] sm:$0xff]
        %v2178 = vld [vmem:[#allocation12 + $0x28] sm:$0xff]
        %v2179 = vld [vmem:[#allocation12 + $0x30] sm:$0xff]
        %v2180 = vld [vmem:[#allocation12 + $0x38] sm:$0xff]
        %v2181 = vld [vmem:[#allocation12 + $0x40] sm:$0xff]
        %v2182 = vld [vmem:[#allocation12 + $0x48] sm:$0xff]
        %v2183 = vld [vmem:[#allocation12 + $0x50] sm:$0xff]
        %v2184 = vld [vmem:[#allocation12 + $0x58] sm:$0xff]
        %v2185 = vld [vmem:[#allocation12 + $0x60] sm:$0xff]
        %v2186 = vld [vmem:[#allocation12 + $0x68] sm:$0xff]
        %v2187 = vld [vmem:[#allocation12 + $0x70] sm:$0xff]
        %v2188 = vld [vmem:[#allocation12 + $0x78] sm:$0xff]
        %v2190 = vlaneseq
        %v2191 = vshrl.u32 %v2190, 7
        %v2192 = vsub.s32 0, %v2191
        %v2193 = vrot.slane %v2170, %v2192
        %v2194 = vlaneseq
        %v2195 = vshrl.u32 %v2194, 7
        %v2196 = vsub.s32 1, %v2195
        %v2197 = vrot.slane %v2170, %v2196
        %v2216 = vunpack.c.l.b16 %v2173
        %v2217 = vunpack.c.h.b16 %v2173
        %v2218 = vunpack.c.l.b16 %v2174
        %v2219 = vunpack.c.h.b16 %v2174
        %v2220 = vunpack.c.l.b16 %v2175
        %v2221 = vunpack.c.h.b16 %v2175
        %v2222 = vunpack.c.l.b16 %v2176
        %v2223 = vunpack.c.h.b16 %v2176
        %v2224 = vunpack.c.l.b16 %v2177
        %v2225 = vunpack.c.h.b16 %v2177
        %v2226 = vunpack.c.l.b16 %v2178
        %v2227 = vunpack.c.h.b16 %v2178
        %v2228 = vunpack.c.l.b16 %v2179
        %v2229 = vunpack.c.h.b16 %v2179
        %v2230 = vunpack.c.l.b16 %v2180
        %v2231 = vunpack.c.h.b16 %v2180
        %v2232 = vunpack.c.l.b16 %v2181
        %v2233 = vunpack.c.h.b16 %v2181
        %v2234 = vunpack.c.l.b16 %v2182
        %v2235 = vunpack.c.h.b16 %v2182
        %v2236 = vunpack.c.l.b16 %v2183
        %v2237 = vunpack.c.h.b16 %v2183
        %v2238 = vunpack.c.l.b16 %v2184
        %v2239 = vunpack.c.h.b16 %v2184
        %v2240 = vunpack.c.l.b16 %v2185
        %v2241 = vunpack.c.h.b16 %v2185
        %v2242 = vunpack.c.l.b16 %v2186
        %v2243 = vunpack.c.h.b16 %v2186
        %v2244 = vunpack.c.l.b16 %v2187
        %v2245 = vunpack.c.h.b16 %v2187
        %v2246 = vunpack.c.l.b16 %v2188
        %v2247 = vunpack.c.h.b16 %v2188
        %v2248 = vpack.c.b16 %v2218, %v2216
        %v2249 = vpack.c.b16 %v2219, %v2217
        %v2250 = vpack.c.b16 %v2222, %v2220
        %v2251 = vpack.c.b16 %v2223, %v2221
        %v2252 = vpack.c.b16 %v2226, %v2224
        %v2253 = vpack.c.b16 %v2227, %v2225
        %v2254 = vpack.c.b16 %v2230, %v2228
        %v2255 = vpack.c.b16 %v2231, %v2229
        %v2256 = vpack.c.b16 %v2234, %v2232
        %v2257 = vpack.c.b16 %v2235, %v2233
        %v2258 = vpack.c.b16 %v2238, %v2236
        %v2259 = vpack.c.b16 %v2239, %v2237
        %v2260 = vpack.c.b16 %v2242, %v2240
        %v2261 = vpack.c.b16 %v2243, %v2241
        %v2262 = vpack.c.b16 %v2246, %v2244
        %v2263 = vpack.c.b16 %v2247, %v2245
        %2280 = vmatprep.subr.bf16.mxu0 %v2249
        %2281 = vmatpush1.bf16.msra.mxu0 %v2248
        %2282 = vmatprep.subr.bf16.mxu0 %v2251
        %2283 = vmatpush1.bf16.msra.mxu0 %v2250
        %2284 = vmatprep.subr.bf16.mxu0 %v2253
        %2285 = vmatpush1.bf16.msra.mxu0 %v2252
        %2286 = vmatprep.subr.bf16.mxu0 %v2255
        %2287 = vmatpush1.bf16.msra.mxu0 %v2254
        %2288 = vmatprep.subr.bf16.mxu0 %v2257
        %2289 = vmatpush1.bf16.msra.mxu0 %v2256
        %2290 = vmatprep.subr.bf16.mxu0 %v2259
        %2291 = vmatpush1.bf16.msra.mxu0 %v2258
        %2292 = vmatprep.subr.bf16.mxu0 %v2261
        %2293 = vmatpush1.bf16.msra.mxu0 %v2260
        %2294 = vmatprep.subr.bf16.mxu0 %v2263
        %2295 = vmatpush1.bf16.msra.mxu0 %v2262
        %2296 = vmatprep.subr.bf16.mxu0 0
        %2297 = vmatpush1.bf16.msra.mxu0 0
        %2298 = vmatprep.subr.bf16.mxu0 0
        %2299 = vmatpush1.bf16.msra.mxu0 0
        %2300 = vmatprep.subr.bf16.mxu0 0
        %2301 = vmatpush1.bf16.msra.mxu0 0
        %2302 = vmatprep.subr.bf16.mxu0 0
        %2303 = vmatpush1.bf16.msra.mxu0 0
        %2304 = vmatprep.subr.bf16.mxu0 0
        %2305 = vmatpush1.bf16.msra.mxu0 0
        %2306 = vmatprep.subr.bf16.mxu0 0
        %2307 = vmatpush1.bf16.msra.mxu0 0
        %2308 = vmatprep.subr.bf16.mxu0 0
        %2309 = vmatpush1.bf16.msra.mxu0 0
        %2310 = vmatprep.subr.bf16.mxu0 0
        %2311 = vmatpush1.bf16.msra.mxu0 0
        %2312 = vmatprep.mubr.bf16.mxu0 0
        %2313 = vmatmul.mubr.bf16.gmra.mrb[0].mxu0 %v2171
        %v2314 = vpop.f32.mrb[0].mxu0
        %v2315 = vadd.f32 %v2193, %v2314
        %v2316 = vpop.f32.mrb[0].mxu0
        %v2317 = vadd.f32 %v2197, %v2316
        %v2318 = vpop.f32.mrb[0].mxu0
        %v2319 = vadd.f32 %v2193, %v2318
        %v2320 = vpop.f32.mrb[0].mxu0
        %v2321 = vadd.f32 %v2197, %v2320
        %2322 = vmatprep.mubr.bf16.mxu0 0
        %2323 = vmatmul.mubr.bf16.gmra.mrb[0].mxu0 %v2172
        %v2324 = vpop.f32.mrb[0].mxu0
        %v2325 = vadd.f32 %v2193, %v2324
        %v2326 = vpop.f32.mrb[0].mxu0
        %v2327 = vadd.f32 %v2197, %v2326
        %v2328 = vpop.f32.mrb[0].mxu0
        %v2329 = vadd.f32 %v2193, %v2328
        %v2330 = vpop.f32.mrb[0].mxu0
        %v2331 = vadd.f32 %v2197, %v2330
        %2332 = vdwg.mxu0
        %v2333 = vpack.c.bf16 %v2164, %v2164
        %v2334 = vpack.c.bf16 %v2167, %v2167
        %v2335 = vpack.c.bf16 %v2319, %v2315
        %v2336 = vpack.c.bf16 %v2329, %v2325
        %v2337 = vpack.c.bf16 %v2321, %v2317
        %v2338 = vpack.c.bf16 %v2331, %v2327
        %v2341 = vlaneseq
        %v2342 = vshrl.u32 %v2341, 7
        %v2343 = vsub.s32 0, %v2342
        %v2344 = vrot.slane %v715, %v2343
        %v2345 = vlaneseq
        %v2346 = vshrl.u32 %v2345, 7
        %v2347 = vsub.s32 0, %v2346
        %v2348 = vrot.slane %v716, %v2347
        %v2352 = vsel %vm997, %v2333, 0
        %v2355 = vsel %vm997, %v2335, 0
        %2357 = vmatprep.subr.bf16.mxu0 0
        %2358 = vmatpush1.bf16.xpose.msra.mxu0 %v2355
        %2359 = vmatprep.subr.bf16.mxu0 0
        %2360 = vmatpush1.bf16.xpose.msra.mxu0 0
        %2361 = vmatprep.subr.bf16.mxu0 0
        %2362 = vmatpush1.bf16.xpose.msra.mxu0 0
        %2363 = vmatprep.subr.bf16.mxu0 0
        %2364 = vmatpush1.bf16.xpose.msra.mxu0 0
        %2365 = vmatprep.subr.bf16.mxu0 0
        %2366 = vmatpush1.bf16.xpose.msra.mxu0 0
        %2367 = vmatprep.subr.bf16.mxu0 0
        %2368 = vmatpush1.bf16.xpose.msra.mxu0 0
        %2369 = vmatprep.subr.bf16.mxu0 0
        %2370 = vmatpush1.bf16.xpose.msra.mxu0 0
        %2371 = vmatprep.subr.bf16.mxu0 0
        %2372 = vmatpush1.bf16.xpose.msra.mxu0 0
        %2373 = vmatprep.subr.bf16.mxu0 0
        %2374 = vmatpush1.bf16.xpose.msra.mxu0 0
        %2375 = vmatprep.subr.bf16.mxu0 0
        %2376 = vmatpush1.bf16.xpose.msra.mxu0 0
        %2377 = vmatprep.subr.bf16.mxu0 0
        %2378 = vmatpush1.bf16.xpose.msra.mxu0 0
        %2379 = vmatprep.subr.bf16.mxu0 0
        %2380 = vmatpush1.bf16.xpose.msra.mxu0 0
        %2381 = vmatprep.subr.bf16.mxu0 0
        %2382 = vmatpush1.bf16.xpose.msra.mxu0 0
        %2383 = vmatprep.subr.bf16.mxu0 0
        %2384 = vmatpush1.bf16.xpose.msra.mxu0 0
        %2385 = vmatprep.subr.bf16.mxu0 0
        %2386 = vmatpush1.bf16.xpose.msra.mxu0 0
        %2387 = vmatprep.subr.bf16.mxu0 0
        %2388 = vmatpush1.bf16.xpose.msra.mxu0 0
        %2389 = vmatprep.mubr.bf16.mxu0 0
        %2390 = vmatmul.mubr.bf16.gmra.mrb[0].mxu0 %v2352
        %v2391 = vpop.f32.mrb[0].mxu0
        %v2392 = vadd.f32 %v2344, %v2391
        %v2393 = vpop.f32.mrb[0].mxu0
        %v2394 = vpop.f32.mrb[0].mxu0
        %v2395 = vpop.f32.mrb[0].mxu0
        %2396 = vdwg.mxu0
        %v2398 = vsel %vm997, %v2334, 0
        %v2401 = vsel %vm997, %v2336, 0
        %2403 = vmatprep.subr.bf16.mxu0 0
        %2404 = vmatpush1.bf16.xpose.msra.mxu0 %v2401
        %2405 = vmatprep.subr.bf16.mxu0 0
        %2406 = vmatpush1.bf16.xpose.msra.mxu0 0
        %2407 = vmatprep.subr.bf16.mxu0 0
        %2408 = vmatpush1.bf16.xpose.msra.mxu0 0
        %2409 = vmatprep.subr.bf16.mxu0 0
        %2410 = vmatpush1.bf16.xpose.msra.mxu0 0
        %2411 = vmatprep.subr.bf16.mxu0 0
        %2412 = vmatpush1.bf16.xpose.msra.mxu0 0
        %2413 = vmatprep.subr.bf16.mxu0 0
        %2414 = vmatpush1.bf16.xpose.msra.mxu0 0
        %2415 = vmatprep.subr.bf16.mxu0 0
        %2416 = vmatpush1.bf16.xpose.msra.mxu0 0
        %2417 = vmatprep.subr.bf16.mxu0 0
        %2418 = vmatpush1.bf16.xpose.msra.mxu0 0
        %2419 = vmatprep.subr.bf16.mxu0 0
        %2420 = vmatpush1.bf16.xpose.msra.mxu0 0
        %2421 = vmatprep.subr.bf16.mxu0 0
        %2422 = vmatpush1.bf16.xpose.msra.mxu0 0
        %2423 = vmatprep.subr.bf16.mxu0 0
        %2424 = vmatpush1.bf16.xpose.msra.mxu0 0
        %2425 = vmatprep.subr.bf16.mxu0 0
        %2426 = vmatpush1.bf16.xpose.msra.mxu0 0
        %2427 = vmatprep.subr.bf16.mxu0 0
        %2428 = vmatpush1.bf16.xpose.msra.mxu0 0
        %2429 = vmatprep.subr.bf16.mxu0 0
        %2430 = vmatpush1.bf16.xpose.msra.mxu0 0
        %2431 = vmatprep.subr.bf16.mxu0 0
        %2432 = vmatpush1.bf16.xpose.msra.mxu0 0
        %2433 = vmatprep.subr.bf16.mxu0 0
        %2434 = vmatpush1.bf16.xpose.msra.mxu0 0
        %2435 = vmatprep.mubr.bf16.mxu0 0
        %2436 = vmatmul.mubr.bf16.gmra.mrb[0].mxu0 %v2398
        %v2437 = vpop.f32.mrb[0].mxu0
        %v2438 = vadd.f32 %v2348, %v2437
        %v2439 = vpop.f32.mrb[0].mxu0
        %v2440 = vpop.f32.mrb[0].mxu0
        %v2441 = vpop.f32.mrb[0].mxu0
        %2442 = vdwg.mxu0
        %vm2443 = vcmask 130048
        %v2444 = vsel %vm2443, %v2392, -inf
        %2445 = vmax.xlane.f32.xlu0 %v2444
        %v2446 = vpop.xlane.xlu0 %2445
        %v2447 = vsel %vm2443, %v2438, -inf
        %2448 = vmax.xlane.f32.xlu0 %v2447
        %v2449 = vpop.xlane.xlu0 %2448
        %v2450 = vsub.f32 %v2392, %v2446
        %v2451 = vsub.f32 %v2438, %v2449
        %v2452 = vmul.f32 %v2450, 1.442695
        %v2453 = vpow.pop %v2452
        %v2454 = vmul.f32 %v2451, 1.442695
        %v2455 = vpow.pop %v2454
        %v2456 = vsel %vm2443, %v2453, 0.0
        %2457 = vadd.xlane.f32.xlu0 %v2456
        %v2458 = vpop.xlane.xlu0 %2457
        %v2459 = vsel %vm2443, %v2455, 0.0
        %2460 = vadd.xlane.f32.xlu0 %v2459
        %v2461 = vpop.xlane.xlu0 %2460
        %v2462 = vrcp.pop %v2458
        %v2463 = vrcp.pop %v2461
        %v2464 = vmul.f32 %v2453, %v2462
        %v2465 = vmul.f32 %v2455, %v2463
        %v2466 = vpack.c.bf16 %v2464, %v2464
        %v2467 = vpack.c.bf16 %v2465, %v2465
        %v2469 = vsel %vm2443, %v2466, 0
        %2471 = vmatprep.subr.bf16.mxu0 0
        %2472 = vmatpush1.bf16.msra.mxu0 %v2337
        %2473 = vmatprep.subr.bf16.mxu0 0
        %2474 = vmatpush1.bf16.msra.mxu0 0
        %2475 = vmatprep.subr.bf16.mxu0 0
        %2476 = vmatpush1.bf16.msra.mxu0 0
        %2477 = vmatprep.subr.bf16.mxu0 0
        %2478 = vmatpush1.bf16.msra.mxu0 0
        %2479 = vmatprep.subr.bf16.mxu0 0
        %2480 = vmatpush1.bf16.msra.mxu0 0
        %2481 = vmatprep.subr.bf16.mxu0 0
        %2482 = vmatpush1.bf16.msra.mxu0 0
        %2483 = vmatprep.subr.bf16.mxu0 0
        %2484 = vmatpush1.bf16.msra.mxu0 0
        %2485 = vmatprep.subr.bf16.mxu0 0
        %2486 = vmatpush1.bf16.msra.mxu0 0
        %2487 = vmatprep.subr.bf16.mxu0 0
        %2488 = vmatpush1.bf16.msra.mxu0 0
        %2489 = vmatprep.subr.bf16.mxu0 0
        %2490 = vmatpush1.bf16.msra.mxu0 0
        %2491 = vmatprep.subr.bf16.mxu0 0
        %2492 = vmatpush1.bf16.msra.mxu0 0
        %2493 = vmatprep.subr.bf16.mxu0 0
        %2494 = vmatpush1.bf16.msra.mxu0 0
        %2495 = vmatprep.subr.bf16.mxu0 0
        %2496 = vmatpush1.bf16.msra.mxu0 0
        %2497 = vmatprep.subr.bf16.mxu0 0
        %2498 = vmatpush1.bf16.msra.mxu0 0
        %2499 = vmatprep.subr.bf16.mxu0 0
        %2500 = vmatpush1.bf16.msra.mxu0 0
        %2501 = vmatprep.subr.bf16.mxu0 0
        %2502 = vmatpush1.bf16.msra.mxu0 0
        %2503 = vmatprep.mubr.bf16.mxu0 0
        %2504 = vmatmul.mubr.bf16.gmra.mrb[0].mxu0 %v2469
        %v2505 = vpop.f32.mrb[0].mxu0
        %v2506 = vadd.f32 0.0, %v2505
        %v2507 = vpop.f32.mrb[0].mxu0
        %v2508 = vpop.f32.mrb[0].mxu0
        %v2509 = vpop.f32.mrb[0].mxu0
        %2510 = vdwg.mxu0
        %v2512 = vsel %vm2443, %v2467, 0
        %2514 = vmatprep.subr.bf16.mxu0 0
        %2515 = vmatpush1.bf16.msra.mxu0 %v2338
        %2516 = vmatprep.subr.bf16.mxu0 0
        %2517 = vmatpush1.bf16.msra.mxu0 0
        %2518 = vmatprep.subr.bf16.mxu0 0
        %2519 = vmatpush1.bf16.msra.mxu0 0
        %2520 = vmatprep.subr.bf16.mxu0 0
        %2521 = vmatpush1.bf16.msra.mxu0 0
        %2522 = vmatprep.subr.bf16.mxu0 0
        %2523 = vmatpush1.bf16.msra.mxu0 0
        %2524 = vmatprep.subr.bf16.mxu0 0
        %2525 = vmatpush1.bf16.msra.mxu0 0
        %2526 = vmatprep.subr.bf16.mxu0 0
        %2527 = vmatpush1.bf16.msra.mxu0 0
        %2528 = vmatprep.subr.bf16.mxu0 0
        %2529 = vmatpush1.bf16.msra.mxu0 0
        %2530 = vmatprep.subr.bf16.mxu0 0
        %2531 = vmatpush1.bf16.msra.mxu0 0
        %2532 = vmatprep.subr.bf16.mxu0 0
        %2533 = vmatpush1.bf16.msra.mxu0 0
        %2534 = vmatprep.subr.bf16.mxu0 0
        %2535 = vmatpush1.bf16.msra.mxu0 0
        %2536 = vmatprep.subr.bf16.mxu0 0
        %2537 = vmatpush1.bf16.msra.mxu0 0
        %2538 = vmatprep.subr.bf16.mxu0 0
        %2539 = vmatpush1.bf16.msra.mxu0 0
        %2540 = vmatprep.subr.bf16.mxu0 0
        %2541 = vmatpush1.bf16.msra.mxu0 0
        %2542 = vmatprep.subr.bf16.mxu0 0
        %2543 = vmatpush1.bf16.msra.mxu0 0
        %2544 = vmatprep.subr.bf16.mxu0 0
        %2545 = vmatpush1.bf16.msra.mxu0 0
        %2546 = vmatprep.mubr.bf16.mxu0 0
        %2547 = vmatmul.mubr.bf16.gmra.mrb[0].mxu0 %v2512
        %v2548 = vpop.f32.mrb[0].mxu0
        %v2549 = vadd.f32 0.0, %v2548
        %v2550 = vpop.f32.mrb[0].mxu0
        %v2551 = vpop.f32.mrb[0].mxu0
        %v2552 = vpop.f32.mrb[0].mxu0
        %2553 = vdwg.mxu0
        %v2554 = vpack.c.bf16 %v2549, %v2506
        %2555 = vst.msk [vmem:[#allocation2] sm:$0xff] %vm997, %v2554
        %2557 = vrot.lane.b32.xlu0 %v2333, 96
        %v2558 = vpop.permute.xlu0 %2557
        %2560 = vrot.lane.b32.xlu0 %v2335, 96
        %v2561 = vpop.permute.xlu0 %2560
        %v2563 = vsel %vm997, %v2558, 0
        %v2566 = vsel %vm997, %v2561, 0
        %2568 = vmatprep.subr.bf16.mxu0 0
        %2569 = vmatpush1.bf16.xpose.msra.mxu0 %v2566
        %2570 = vmatprep.subr.bf16.mxu0 0
        %2571 = vmatpush1.bf16.xpose.msra.mxu0 0
        %2572 = vmatprep.subr.bf16.mxu0 0
        %2573 = vmatpush1.bf16.xpose.msra.mxu0 0
        %2574 = vmatprep.subr.bf16.mxu0 0
        %2575 = vmatpush1.bf16.xpose.msra.mxu0 0
        %2576 = vmatprep.subr.bf16.mxu0 0
        %2577 = vmatpush1.bf16.xpose.msra.mxu0 0
        %2578 = vmatprep.subr.bf16.mxu0 0
        %2579 = vmatpush1.bf16.xpose.msra.mxu0 0
        %2580 = vmatprep.subr.bf16.mxu0 0
        %2581 = vmatpush1.bf16.xpose.msra.mxu0 0
        %2582 = vmatprep.subr.bf16.mxu0 0
        %2583 = vmatpush1.bf16.xpose.msra.mxu0 0
        %2584 = vmatprep.subr.bf16.mxu0 0
        %2585 = vmatpush1.bf16.xpose.msra.mxu0 0
        %2586 = vmatprep.subr.bf16.mxu0 0
        %2587 = vmatpush1.bf16.xpose.msra.mxu0 0
        %2588 = vmatprep.subr.bf16.mxu0 0
        %2589 = vmatpush1.bf16.xpose.msra.mxu0 0
        %2590 = vmatprep.subr.bf16.mxu0 0
        %2591 = vmatpush1.bf16.xpose.msra.mxu0 0
        %2592 = vmatprep.subr.bf16.mxu0 0
        %2593 = vmatpush1.bf16.xpose.msra.mxu0 0
        %2594 = vmatprep.subr.bf16.mxu0 0
        %2595 = vmatpush1.bf16.xpose.msra.mxu0 0
        %2596 = vmatprep.subr.bf16.mxu0 0
        %2597 = vmatpush1.bf16.xpose.msra.mxu0 0
        %2598 = vmatprep.subr.bf16.mxu0 0
        %2599 = vmatpush1.bf16.xpose.msra.mxu0 0
        %2600 = vmatprep.mubr.bf16.mxu0 0
        %2601 = vmatmul.mubr.bf16.gmra.mrb[0].mxu0 %v2563
        %v2602 = vpop.f32.mrb[0].mxu0
        %v2603 = vadd.f32 %v2344, %v2602
        %v2604 = vpop.f32.mrb[0].mxu0
        %v2605 = vpop.f32.mrb[0].mxu0
        %v2606 = vpop.f32.mrb[0].mxu0
        %2607 = vdwg.mxu0
        %2609 = vrot.lane.b32.xlu0 %v2334, 96
        %v2610 = vpop.permute.xlu0 %2609
        %2612 = vrot.lane.b32.xlu0 %v2336, 96
        %v2613 = vpop.permute.xlu0 %2612
        %v2615 = vsel %vm997, %v2610, 0
        %v2618 = vsel %vm997, %v2613, 0
        %2620 = vmatprep.subr.bf16.mxu0 0
        %2621 = vmatpush1.bf16.xpose.msra.mxu0 %v2618
        %2622 = vmatprep.subr.bf16.mxu0 0
        %2623 = vmatpush1.bf16.xpose.msra.mxu0 0
        %2624 = vmatprep.subr.bf16.mxu0 0
        %2625 = vmatpush1.bf16.xpose.msra.mxu0 0
        %2626 = vmatprep.subr.bf16.mxu0 0
        %2627 = vmatpush1.bf16.xpose.msra.mxu0 0
        %2628 = vmatprep.subr.bf16.mxu0 0
        %2629 = vmatpush1.bf16.xpose.msra.mxu0 0
        %2630 = vmatprep.subr.bf16.mxu0 0
        %2631 = vmatpush1.bf16.xpose.msra.mxu0 0
        %2632 = vmatprep.subr.bf16.mxu0 0
        %2633 = vmatpush1.bf16.xpose.msra.mxu0 0
        %2634 = vmatprep.subr.bf16.mxu0 0
        %2635 = vmatpush1.bf16.xpose.msra.mxu0 0
        %2636 = vmatprep.subr.bf16.mxu0 0
        %2637 = vmatpush1.bf16.xpose.msra.mxu0 0
        %2638 = vmatprep.subr.bf16.mxu0 0
        %2639 = vmatpush1.bf16.xpose.msra.mxu0 0
        %2640 = vmatprep.subr.bf16.mxu0 0
        %2641 = vmatpush1.bf16.xpose.msra.mxu0 0
        %2642 = vmatprep.subr.bf16.mxu0 0
        %2643 = vmatpush1.bf16.xpose.msra.mxu0 0
        %2644 = vmatprep.subr.bf16.mxu0 0
        %2645 = vmatpush1.bf16.xpose.msra.mxu0 0
        %2646 = vmatprep.subr.bf16.mxu0 0
        %2647 = vmatpush1.bf16.xpose.msra.mxu0 0
        %2648 = vmatprep.subr.bf16.mxu0 0
        %2649 = vmatpush1.bf16.xpose.msra.mxu0 0
        %2650 = vmatprep.subr.bf16.mxu0 0
        %2651 = vmatpush1.bf16.xpose.msra.mxu0 0
        %2652 = vmatprep.mubr.bf16.mxu0 0
        %2653 = vmatmul.mubr.bf16.gmra.mrb[0].mxu0 %v2615
        %v2654 = vpop.f32.mrb[0].mxu0
        %v2655 = vadd.f32 %v2348, %v2654
        %v2656 = vpop.f32.mrb[0].mxu0
        %v2657 = vpop.f32.mrb[0].mxu0
        %v2658 = vpop.f32.mrb[0].mxu0
        %2659 = vdwg.mxu0
        %v2660 = vsel %vm2443, %v2603, -inf
        %2661 = vmax.xlane.f32.xlu0 %v2660
        %v2662 = vpop.xlane.xlu0 %2661
        %v2663 = vsel %vm2443, %v2655, -inf
        %2664 = vmax.xlane.f32.xlu0 %v2663
        %v2665 = vpop.xlane.xlu0 %2664
        %v2666 = vsub.f32 %v2603, %v2662
        %v2667 = vsub.f32 %v2655, %v2665
        %v2668 = vmul.f32 %v2666, 1.442695
        %v2669 = vpow.pop %v2668
        %v2670 = vmul.f32 %v2667, 1.442695
        %v2671 = vpow.pop %v2670
        %v2672 = vsel %vm2443, %v2669, 0.0
        %2673 = vadd.xlane.f32.xlu0 %v2672
        %v2674 = vpop.xlane.xlu0 %2673
        %v2675 = vsel %vm2443, %v2671, 0.0
        %2676 = vadd.xlane.f32.xlu0 %v2675
        %v2677 = vpop.xlane.xlu0 %2676
        %v2678 = vrcp.pop %v2674
        %v2679 = vrcp.pop %v2677
        %v2680 = vmul.f32 %v2669, %v2678
        %v2681 = vmul.f32 %v2671, %v2679
        %v2682 = vpack.c.bf16 %v2680, %v2680
        %v2683 = vpack.c.bf16 %v2681, %v2681
        %2685 = vrot.lane.b32.xlu0 %v2337, 96
        %v2686 = vpop.permute.xlu0 %2685
        %v2689 = vsel %vm2443, %v2682, 0
        %2691 = vmatprep.subr.bf16.mxu0 0
        %2692 = vmatpush1.bf16.msra.mxu0 %v2686
        %2693 = vmatprep.subr.bf16.mxu0 0
        %2694 = vmatpush1.bf16.msra.mxu0 0
        %2695 = vmatprep.subr.bf16.mxu0 0
        %2696 = vmatpush1.bf16.msra.mxu0 0
        %2697 = vmatprep.subr.bf16.mxu0 0
        %2698 = vmatpush1.bf16.msra.mxu0 0
        %2699 = vmatprep.subr.bf16.mxu0 0
        %2700 = vmatpush1.bf16.msra.mxu0 0
        %2701 = vmatprep.subr.bf16.mxu0 0
        %2702 = vmatpush1.bf16.msra.mxu0 0
        %2703 = vmatprep.subr.bf16.mxu0 0
        %2704 = vmatpush1.bf16.msra.mxu0 0
        %2705 = vmatprep.subr.bf16.mxu0 0
        %2706 = vmatpush1.bf16.msra.mxu0 0
        %2707 = vmatprep.subr.bf16.mxu0 0
        %2708 = vmatpush1.bf16.msra.mxu0 0
        %2709 = vmatprep.subr.bf16.mxu0 0
        %2710 = vmatpush1.bf16.msra.mxu0 0
        %2711 = vmatprep.subr.bf16.mxu0 0
        %2712 = vmatpush1.bf16.msra.mxu0 0
        %2713 = vmatprep.subr.bf16.mxu0 0
        %2714 = vmatpush1.bf16.msra.mxu0 0
        %2715 = vmatprep.subr.bf16.mxu0 0
        %2716 = vmatpush1.bf16.msra.mxu0 0
        %2717 = vmatprep.subr.bf16.mxu0 0
        %2718 = vmatpush1.bf16.msra.mxu0 0
        %2719 = vmatprep.subr.bf16.mxu0 0
        %2720 = vmatpush1.bf16.msra.mxu0 0
        %2721 = vmatprep.subr.bf16.mxu0 0
        %2722 = vmatpush1.bf16.msra.mxu0 0
        %2723 = vmatprep.mubr.bf16.mxu0 0
        %2724 = vmatmul.mubr.bf16.gmra.mrb[0].mxu0 %v2689
        %v2725 = vpop.f32.mrb[0].mxu0
        %v2726 = vadd.f32 0.0, %v2725
        %v2727 = vpop.f32.mrb[0].mxu0
        %v2728 = vpop.f32.mrb[0].mxu0
        %v2729 = vpop.f32.mrb[0].mxu0
        %2730 = vdwg.mxu0
        %2732 = vrot.lane.b32.xlu0 %v2338, 96
        %v2733 = vpop.permute.xlu0 %2732
        %v2736 = vsel %vm2443, %v2683, 0
        %2738 = vmatprep.subr.bf16.mxu0 0
        %2739 = vmatpush1.bf16.msra.mxu0 %v2733
        %2740 = vmatprep.subr.bf16.mxu0 0
        %2741 = vmatpush1.bf16.msra.mxu0 0
        %2742 = vmatprep.subr.bf16.mxu0 0
        %2743 = vmatpush1.bf16.msra.mxu0 0
        %2744 = vmatprep.subr.bf16.mxu0 0
        %2745 = vmatpush1.bf16.msra.mxu0 0
        %2746 = vmatprep.subr.bf16.mxu0 0
        %2747 = vmatpush1.bf16.msra.mxu0 0
        %2748 = vmatprep.subr.bf16.mxu0 0
        %2749 = vmatpush1.bf16.msra.mxu0 0
        %2750 = vmatprep.subr.bf16.mxu0 0
        %2751 = vmatpush1.bf16.msra.mxu0 0
        %2752 = vmatprep.subr.bf16.mxu0 0
        %2753 = vmatpush1.bf16.msra.mxu0 0
        %2754 = vmatprep.subr.bf16.mxu0 0
        %2755 = vmatpush1.bf16.msra.mxu0 0
        %2756 = vmatprep.subr.bf16.mxu0 0
        %2757 = vmatpush1.bf16.msra.mxu0 0
        %2758 = vmatprep.subr.bf16.mxu0 0
        %2759 = vmatpush1.bf16.msra.mxu0 0
        %2760 = vmatprep.subr.bf16.mxu0 0
        %2761 = vmatpush1.bf16.msra.mxu0 0
        %2762 = vmatprep.subr.bf16.mxu0 0
        %2763 = vmatpush1.bf16.msra.mxu0 0
        %2764 = vmatprep.subr.bf16.mxu0 0
        %2765 = vmatpush1.bf16.msra.mxu0 0
        %2766 = vmatprep.subr.bf16.mxu0 0
        %2767 = vmatpush1.bf16.msra.mxu0 0
        %2768 = vmatprep.subr.bf16.mxu0 0
        %2769 = vmatpush1.bf16.msra.mxu0 0
        %2770 = vmatprep.mubr.bf16.mxu0 0
        %2771 = vmatmul.mubr.bf16.gmra.mrb[0].mxu0 %v2736
        %v2772 = vpop.f32.mrb[0].mxu0
        %v2773 = vadd.f32 0.0, %v2772
        %v2774 = vpop.f32.mrb[0].mxu0
        %v2775 = vpop.f32.mrb[0].mxu0
        %v2776 = vpop.f32.mrb[0].mxu0
        %2777 = vdwg.mxu0
        %v2778 = vpack.c.bf16 %v2773, %v2726
        %2780 = vrot.lane.b32.xlu0 %v2778, 32
        %v2781 = vpop.permute.xlu0 %2780
        %2783 = vst.msk [vmem:[#allocation2] sm:$0xff] %vm1441, %v2781
        %2784 = vrot.lane.b32.xlu0 %v2333, 64
        %v2785 = vpop.permute.xlu0 %2784
        %2786 = vrot.lane.b32.xlu0 %v2335, 64
        %v2787 = vpop.permute.xlu0 %2786
        %v2789 = vsel %vm997, %v2785, 0
        %v2792 = vsel %vm997, %v2787, 0
        %2794 = vmatprep.subr.bf16.mxu0 0
        %2795 = vmatpush1.bf16.xpose.msra.mxu0 %v2792
        %2796 = vmatprep.subr.bf16.mxu0 0
        %2797 = vmatpush1.bf16.xpose.msra.mxu0 0
        %2798 = vmatprep.subr.bf16.mxu0 0
        %2799 = vmatpush1.bf16.xpose.msra.mxu0 0
        %2800 = vmatprep.subr.bf16.mxu0 0
        %2801 = vmatpush1.bf16.xpose.msra.mxu0 0
        %2802 = vmatprep.subr.bf16.mxu0 0
        %2803 = vmatpush1.bf16.xpose.msra.mxu0 0
        %2804 = vmatprep.subr.bf16.mxu0 0
        %2805 = vmatpush1.bf16.xpose.msra.mxu0 0
        %2806 = vmatprep.subr.bf16.mxu0 0
        %2807 = vmatpush1.bf16.xpose.msra.mxu0 0
        %2808 = vmatprep.subr.bf16.mxu0 0
        %2809 = vmatpush1.bf16.xpose.msra.mxu0 0
        %2810 = vmatprep.subr.bf16.mxu0 0
        %2811 = vmatpush1.bf16.xpose.msra.mxu0 0
        %2812 = vmatprep.subr.bf16.mxu0 0
        %2813 = vmatpush1.bf16.xpose.msra.mxu0 0
        %2814 = vmatprep.subr.bf16.mxu0 0
        %2815 = vmatpush1.bf16.xpose.msra.mxu0 0
        %2816 = vmatprep.subr.bf16.mxu0 0
        %2817 = vmatpush1.bf16.xpose.msra.mxu0 0
        %2818 = vmatprep.subr.bf16.mxu0 0
        %2819 = vmatpush1.bf16.xpose.msra.mxu0 0
        %2820 = vmatprep.subr.bf16.mxu0 0
        %2821 = vmatpush1.bf16.xpose.msra.mxu0 0
        %2822 = vmatprep.subr.bf16.mxu0 0
        %2823 = vmatpush1.bf16.xpose.msra.mxu0 0
        %2824 = vmatprep.subr.bf16.mxu0 0
        %2825 = vmatpush1.bf16.xpose.msra.mxu0 0
        %2826 = vmatprep.mubr.bf16.mxu0 0
        %2827 = vmatmul.mubr.bf16.gmra.mrb[0].mxu0 %v2789
        %v2828 = vpop.f32.mrb[0].mxu0
        %v2829 = vadd.f32 %v2344, %v2828
        %v2830 = vpop.f32.mrb[0].mxu0
        %v2831 = vpop.f32.mrb[0].mxu0
        %v2832 = vpop.f32.mrb[0].mxu0
        %2833 = vdwg.mxu0
        %2834 = vrot.lane.b32.xlu0 %v2334, 64
        %v2835 = vpop.permute.xlu0 %2834
        %2836 = vrot.lane.b32.xlu0 %v2336, 64
        %v2837 = vpop.permute.xlu0 %2836
        %v2839 = vsel %vm997, %v2835, 0
        %v2842 = vsel %vm997, %v2837, 0
        %2844 = vmatprep.subr.bf16.mxu0 0
        %2845 = vmatpush1.bf16.xpose.msra.mxu0 %v2842
        %2846 = vmatprep.subr.bf16.mxu0 0
        %2847 = vmatpush1.bf16.xpose.msra.mxu0 0
        %2848 = vmatprep.subr.bf16.mxu0 0
        %2849 = vmatpush1.bf16.xpose.msra.mxu0 0
        %2850 = vmatprep.subr.bf16.mxu0 0
        %2851 = vmatpush1.bf16.xpose.msra.mxu0 0
        %2852 = vmatprep.subr.bf16.mxu0 0
        %2853 = vmatpush1.bf16.xpose.msra.mxu0 0
        %2854 = vmatprep.subr.bf16.mxu0 0
        %2855 = vmatpush1.bf16.xpose.msra.mxu0 0
        %2856 = vmatprep.subr.bf16.mxu0 0
        %2857 = vmatpush1.bf16.xpose.msra.mxu0 0
        %2858 = vmatprep.subr.bf16.mxu0 0
        %2859 = vmatpush1.bf16.xpose.msra.mxu0 0
        %2860 = vmatprep.subr.bf16.mxu0 0
        %2861 = vmatpush1.bf16.xpose.msra.mxu0 0
        %2862 = vmatprep.subr.bf16.mxu0 0
        %2863 = vmatpush1.bf16.xpose.msra.mxu0 0
        %2864 = vmatprep.subr.bf16.mxu0 0
        %2865 = vmatpush1.bf16.xpose.msra.mxu0 0
        %2866 = vmatprep.subr.bf16.mxu0 0
        %2867 = vmatpush1.bf16.xpose.msra.mxu0 0
        %2868 = vmatprep.subr.bf16.mxu0 0
        %2869 = vmatpush1.bf16.xpose.msra.mxu0 0
        %2870 = vmatprep.subr.bf16.mxu0 0
        %2871 = vmatpush1.bf16.xpose.msra.mxu0 0
        %2872 = vmatprep.subr.bf16.mxu0 0
        %2873 = vmatpush1.bf16.xpose.msra.mxu0 0
        %2874 = vmatprep.subr.bf16.mxu0 0
        %2875 = vmatpush1.bf16.xpose.msra.mxu0 0
        %2876 = vmatprep.mubr.bf16.mxu0 0
        %2877 = vmatmul.mubr.bf16.gmra.mrb[0].mxu0 %v2839
        %v2878 = vpop.f32.mrb[0].mxu0
        %v2879 = vadd.f32 %v2348, %v2878
        %v2880 = vpop.f32.mrb[0].mxu0
        %v2881 = vpop.f32.mrb[0].mxu0
        %v2882 = vpop.f32.mrb[0].mxu0
        %2883 = vdwg.mxu0
        %v2884 = vsel %vm2443, %v2829, -inf
        %2885 = vmax.xlane.f32.xlu0 %v2884
        %v2886 = vpop.xlane.xlu0 %2885
        %v2887 = vsel %vm2443, %v2879, -inf
        %2888 = vmax.xlane.f32.xlu0 %v2887
        %v2889 = vpop.xlane.xlu0 %2888
        %v2890 = vsub.f32 %v2829, %v2886
        %v2891 = vsub.f32 %v2879, %v2889
        %v2892 = vmul.f32 %v2890, 1.442695
        %v2893 = vpow.pop %v2892
        %v2894 = vmul.f32 %v2891, 1.442695
        %v2895 = vpow.pop %v2894
        %v2896 = vsel %vm2443, %v2893, 0.0
        %2897 = vadd.xlane.f32.xlu0 %v2896
        %v2898 = vpop.xlane.xlu0 %2897
        %v2899 = vsel %vm2443, %v2895, 0.0
        %2900 = vadd.xlane.f32.xlu0 %v2899
        %v2901 = vpop.xlane.xlu0 %2900
        %v2902 = vrcp.pop %v2898
        %v2903 = vrcp.pop %v2901
        %v2904 = vmul.f32 %v2893, %v2902
        %v2905 = vmul.f32 %v2895, %v2903
        %v2906 = vpack.c.bf16 %v2904, %v2904
        %v2907 = vpack.c.bf16 %v2905, %v2905
        %2908 = vrot.lane.b32.xlu0 %v2337, 64
        %v2909 = vpop.permute.xlu0 %2908
        %v2912 = vsel %vm2443, %v2906, 0
        %2914 = vmatprep.subr.bf16.mxu0 0
        %2915 = vmatpush1.bf16.msra.mxu0 %v2909
        %2916 = vmatprep.subr.bf16.mxu0 0
        %2917 = vmatpush1.bf16.msra.mxu0 0
        %2918 = vmatprep.subr.bf16.mxu0 0
        %2919 = vmatpush1.bf16.msra.mxu0 0
        %2920 = vmatprep.subr.bf16.mxu0 0
        %2921 = vmatpush1.bf16.msra.mxu0 0
        %2922 = vmatprep.subr.bf16.mxu0 0
        %2923 = vmatpush1.bf16.msra.mxu0 0
        %2924 = vmatprep.subr.bf16.mxu0 0
        %2925 = vmatpush1.bf16.msra.mxu0 0
        %2926 = vmatprep.subr.bf16.mxu0 0
        %2927 = vmatpush1.bf16.msra.mxu0 0
        %2928 = vmatprep.subr.bf16.mxu0 0
        %2929 = vmatpush1.bf16.msra.mxu0 0
        %2930 = vmatprep.subr.bf16.mxu0 0
        %2931 = vmatpush1.bf16.msra.mxu0 0
        %2932 = vmatprep.subr.bf16.mxu0 0
        %2933 = vmatpush1.bf16.msra.mxu0 0
        %2934 = vmatprep.subr.bf16.mxu0 0
        %2935 = vmatpush1.bf16.msra.mxu0 0
        %2936 = vmatprep.subr.bf16.mxu0 0
        %2937 = vmatpush1.bf16.msra.mxu0 0
        %2938 = vmatprep.subr.bf16.mxu0 0
        %2939 = vmatpush1.bf16.msra.mxu0 0
        %2940 = vmatprep.subr.bf16.mxu0 0
        %2941 = vmatpush1.bf16.msra.mxu0 0
        %2942 = vmatprep.subr.bf16.mxu0 0
        %2943 = vmatpush1.bf16.msra.mxu0 0
        %2944 = vmatprep.subr.bf16.mxu0 0
        %2945 = vmatpush1.bf16.msra.mxu0 0
        %2946 = vmatprep.mubr.bf16.mxu0 0
        %2947 = vmatmul.mubr.bf16.gmra.mrb[0].mxu0 %v2912
        %v2948 = vpop.f32.mrb[0].mxu0
        %v2949 = vadd.f32 0.0, %v2948
        %v2950 = vpop.f32.mrb[0].mxu0
        %v2951 = vpop.f32.mrb[0].mxu0
        %v2952 = vpop.f32.mrb[0].mxu0
        %2953 = vdwg.mxu0
        %2954 = vrot.lane.b32.xlu0 %v2338, 64
        %v2955 = vpop.permute.xlu0 %2954
        %v2958 = vsel %vm2443, %v2907, 0
        %2960 = vmatprep.subr.bf16.mxu0 0
        %2961 = vmatpush1.bf16.msra.mxu0 %v2955
        %2962 = vmatprep.subr.bf16.mxu0 0
        %2963 = vmatpush1.bf16.msra.mxu0 0
        %2964 = vmatprep.subr.bf16.mxu0 0
        %2965 = vmatpush1.bf16.msra.mxu0 0
        %2966 = vmatprep.subr.bf16.mxu0 0
        %2967 = vmatpush1.bf16.msra.mxu0 0
        %2968 = vmatprep.subr.bf16.mxu0 0
        %2969 = vmatpush1.bf16.msra.mxu0 0
        %2970 = vmatprep.subr.bf16.mxu0 0
        %2971 = vmatpush1.bf16.msra.mxu0 0
        %2972 = vmatprep.subr.bf16.mxu0 0
        %2973 = vmatpush1.bf16.msra.mxu0 0
        %2974 = vmatprep.subr.bf16.mxu0 0
        %2975 = vmatpush1.bf16.msra.mxu0 0
        %2976 = vmatprep.subr.bf16.mxu0 0
        %2977 = vmatpush1.bf16.msra.mxu0 0
        %2978 = vmatprep.subr.bf16.mxu0 0
        %2979 = vmatpush1.bf16.msra.mxu0 0
        %2980 = vmatprep.subr.bf16.mxu0 0
        %2981 = vmatpush1.bf16.msra.mxu0 0
        %2982 = vmatprep.subr.bf16.mxu0 0
        %2983 = vmatpush1.bf16.msra.mxu0 0
        %2984 = vmatprep.subr.bf16.mxu0 0
        %2985 = vmatpush1.bf16.msra.mxu0 0
        %2986 = vmatprep.subr.bf16.mxu0 0
        %2987 = vmatpush1.bf16.msra.mxu0 0
        %2988 = vmatprep.subr.bf16.mxu0 0
        %2989 = vmatpush1.bf16.msra.mxu0 0
        %2990 = vmatprep.subr.bf16.mxu0 0
        %2991 = vmatpush1.bf16.msra.mxu0 0
        %2992 = vmatprep.mubr.bf16.mxu0 0
        %2993 = vmatmul.mubr.bf16.gmra.mrb[0].mxu0 %v2958
        %v2994 = vpop.f32.mrb[0].mxu0
        %v2995 = vadd.f32 0.0, %v2994
        %v2996 = vpop.f32.mrb[0].mxu0
        %v2997 = vpop.f32.mrb[0].mxu0
        %v2998 = vpop.f32.mrb[0].mxu0
        %2999 = vdwg.mxu0
        %v3000 = vpack.c.bf16 %v2995, %v2949
        %3002 = vrot.lane.b32.xlu0 %v3000, 64
        %v3003 = vpop.permute.xlu0 %3002
        %3005 = vst.msk [vmem:[#allocation2] sm:$0xff] %vm1668, %v3003
        %3006 = vrot.lane.b32.xlu0 %v2333, 32
        %v3007 = vpop.permute.xlu0 %3006
        %3008 = vrot.lane.b32.xlu0 %v2335, 32
        %v3009 = vpop.permute.xlu0 %3008
        %v3011 = vsel %vm997, %v3007, 0
        %v3014 = vsel %vm997, %v3009, 0
        %3016 = vmatprep.subr.bf16.mxu0 0
        %3017 = vmatpush1.bf16.xpose.msra.mxu0 %v3014
        %3018 = vmatprep.subr.bf16.mxu0 0
        %3019 = vmatpush1.bf16.xpose.msra.mxu0 0
        %3020 = vmatprep.subr.bf16.mxu0 0
        %3021 = vmatpush1.bf16.xpose.msra.mxu0 0
        %3022 = vmatprep.subr.bf16.mxu0 0
        %3023 = vmatpush1.bf16.xpose.msra.mxu0 0
        %3024 = vmatprep.subr.bf16.mxu0 0
        %3025 = vmatpush1.bf16.xpose.msra.mxu0 0
        %3026 = vmatprep.subr.bf16.mxu0 0
        %3027 = vmatpush1.bf16.xpose.msra.mxu0 0
        %3028 = vmatprep.subr.bf16.mxu0 0
        %3029 = vmatpush1.bf16.xpose.msra.mxu0 0
        %3030 = vmatprep.subr.bf16.mxu0 0
        %3031 = vmatpush1.bf16.xpose.msra.mxu0 0
        %3032 = vmatprep.subr.bf16.mxu0 0
        %3033 = vmatpush1.bf16.xpose.msra.mxu0 0
        %3034 = vmatprep.subr.bf16.mxu0 0
        %3035 = vmatpush1.bf16.xpose.msra.mxu0 0
        %3036 = vmatprep.subr.bf16.mxu0 0
        %3037 = vmatpush1.bf16.xpose.msra.mxu0 0
        %3038 = vmatprep.subr.bf16.mxu0 0
        %3039 = vmatpush1.bf16.xpose.msra.mxu0 0
        %3040 = vmatprep.subr.bf16.mxu0 0
        %3041 = vmatpush1.bf16.xpose.msra.mxu0 0
        %3042 = vmatprep.subr.bf16.mxu0 0
        %3043 = vmatpush1.bf16.xpose.msra.mxu0 0
        %3044 = vmatprep.subr.bf16.mxu0 0
        %3045 = vmatpush1.bf16.xpose.msra.mxu0 0
        %3046 = vmatprep.subr.bf16.mxu0 0
        %3047 = vmatpush1.bf16.xpose.msra.mxu0 0
        %3048 = vmatprep.mubr.bf16.mxu0 0
        %3049 = vmatmul.mubr.bf16.gmra.mrb[0].mxu0 %v3011
        %v3050 = vpop.f32.mrb[0].mxu0
        %v3051 = vadd.f32 %v2344, %v3050
        %v3052 = vpop.f32.mrb[0].mxu0
        %v3053 = vpop.f32.mrb[0].mxu0
        %v3054 = vpop.f32.mrb[0].mxu0
        %3055 = vdwg.mxu0
        %3056 = vrot.lane.b32.xlu0 %v2334, 32
        %v3057 = vpop.permute.xlu0 %3056
        %3058 = vrot.lane.b32.xlu0 %v2336, 32
        %v3059 = vpop.permute.xlu0 %3058
        %v3061 = vsel %vm997, %v3057, 0
        %v3064 = vsel %vm997, %v3059, 0
        %3066 = vmatprep.subr.bf16.mxu0 0
        %3067 = vmatpush1.bf16.xpose.msra.mxu0 %v3064
        %3068 = vmatprep.subr.bf16.mxu0 0
        %3069 = vmatpush1.bf16.xpose.msra.mxu0 0
        %3070 = vmatprep.subr.bf16.mxu0 0
        %3071 = vmatpush1.bf16.xpose.msra.mxu0 0
        %3072 = vmatprep.subr.bf16.mxu0 0
        %3073 = vmatpush1.bf16.xpose.msra.mxu0 0
        %3074 = vmatprep.subr.bf16.mxu0 0
        %3075 = vmatpush1.bf16.xpose.msra.mxu0 0
        %3076 = vmatprep.subr.bf16.mxu0 0
        %3077 = vmatpush1.bf16.xpose.msra.mxu0 0
        %3078 = vmatprep.subr.bf16.mxu0 0
        %3079 = vmatpush1.bf16.xpose.msra.mxu0 0
        %3080 = vmatprep.subr.bf16.mxu0 0
        %3081 = vmatpush1.bf16.xpose.msra.mxu0 0
        %3082 = vmatprep.subr.bf16.mxu0 0
        %3083 = vmatpush1.bf16.xpose.msra.mxu0 0
        %3084 = vmatprep.subr.bf16.mxu0 0
        %3085 = vmatpush1.bf16.xpose.msra.mxu0 0
        %3086 = vmatprep.subr.bf16.mxu0 0
        %3087 = vmatpush1.bf16.xpose.msra.mxu0 0
        %3088 = vmatprep.subr.bf16.mxu0 0
        %3089 = vmatpush1.bf16.xpose.msra.mxu0 0
        %3090 = vmatprep.subr.bf16.mxu0 0
        %3091 = vmatpush1.bf16.xpose.msra.mxu0 0
        %3092 = vmatprep.subr.bf16.mxu0 0
        %3093 = vmatpush1.bf16.xpose.msra.mxu0 0
        %3094 = vmatprep.subr.bf16.mxu0 0
        %3095 = vmatpush1.bf16.xpose.msra.mxu0 0
        %3096 = vmatprep.subr.bf16.mxu0 0
        %3097 = vmatpush1.bf16.xpose.msra.mxu0 0
        %3098 = vmatprep.mubr.bf16.mxu0 0
        %3099 = vmatmul.mubr.bf16.gmra.mrb[0].mxu0 %v3061
        %v3100 = vpop.f32.mrb[0].mxu0
        %v3101 = vadd.f32 %v2348, %v3100
        %v3102 = vpop.f32.mrb[0].mxu0
        %v3103 = vpop.f32.mrb[0].mxu0
        %v3104 = vpop.f32.mrb[0].mxu0
        %3105 = vdwg.mxu0
        %v3106 = vsel %vm2443, %v3051, -inf
        %3107 = vmax.xlane.f32.xlu0 %v3106
        %v3108 = vpop.xlane.xlu0 %3107
        %v3109 = vsel %vm2443, %v3101, -inf
        %3110 = vmax.xlane.f32.xlu0 %v3109
        %v3111 = vpop.xlane.xlu0 %3110
        %v3112 = vsub.f32 %v3051, %v3108
        %v3113 = vsub.f32 %v3101, %v3111
        %v3114 = vmul.f32 %v3112, 1.442695
        %v3115 = vpow.pop %v3114
        %v3116 = vmul.f32 %v3113, 1.442695
        %v3117 = vpow.pop %v3116
        %v3118 = vsel %vm2443, %v3115, 0.0
        %3119 = vadd.xlane.f32.xlu0 %v3118
        %v3120 = vpop.xlane.xlu0 %3119
        %v3121 = vsel %vm2443, %v3117, 0.0
        %3122 = vadd.xlane.f32.xlu0 %v3121
        %v3123 = vpop.xlane.xlu0 %3122
        %v3124 = vrcp.pop %v3120
        %v3125 = vrcp.pop %v3123
        %v3126 = vmul.f32 %v3115, %v3124
        %v3127 = vmul.f32 %v3117, %v3125
        %v3128 = vpack.c.bf16 %v3126, %v3126
        %v3129 = vpack.c.bf16 %v3127, %v3127
        %3130 = vrot.lane.b32.xlu0 %v2337, 32
        %v3131 = vpop.permute.xlu0 %3130
        %v3134 = vsel %vm2443, %v3128, 0
        %3136 = vmatprep.subr.bf16.mxu0 0
        %3137 = vmatpush1.bf16.msra.mxu0 %v3131
        %3138 = vmatprep.subr.bf16.mxu0 0
        %3139 = vmatpush1.bf16.msra.mxu0 0
        %3140 = vmatprep.subr.bf16.mxu0 0
        %3141 = vmatpush1.bf16.msra.mxu0 0
        %3142 = vmatprep.subr.bf16.mxu0 0
        %3143 = vmatpush1.bf16.msra.mxu0 0
        %3144 = vmatprep.subr.bf16.mxu0 0
        %3145 = vmatpush1.bf16.msra.mxu0 0
        %3146 = vmatprep.subr.bf16.mxu0 0
        %3147 = vmatpush1.bf16.msra.mxu0 0
        %3148 = vmatprep.subr.bf16.mxu0 0
        %3149 = vmatpush1.bf16.msra.mxu0 0
        %3150 = vmatprep.subr.bf16.mxu0 0
        %3151 = vmatpush1.bf16.msra.mxu0 0
        %3152 = vmatprep.subr.bf16.mxu0 0
        %3153 = vmatpush1.bf16.msra.mxu0 0
        %3154 = vmatprep.subr.bf16.mxu0 0
        %3155 = vmatpush1.bf16.msra.mxu0 0
        %3156 = vmatprep.subr.bf16.mxu0 0
        %3157 = vmatpush1.bf16.msra.mxu0 0
        %3158 = vmatprep.subr.bf16.mxu0 0
        %3159 = vmatpush1.bf16.msra.mxu0 0
        %3160 = vmatprep.subr.bf16.mxu0 0
        %3161 = vmatpush1.bf16.msra.mxu0 0
        %3162 = vmatprep.subr.bf16.mxu0 0
        %3163 = vmatpush1.bf16.msra.mxu0 0
        %3164 = vmatprep.subr.bf16.mxu0 0
        %3165 = vmatpush1.bf16.msra.mxu0 0
        %3166 = vmatprep.subr.bf16.mxu0 0
        %3167 = vmatpush1.bf16.msra.mxu0 0
        %3168 = vmatprep.mubr.bf16.mxu0 0
        %3169 = vmatmul.mubr.bf16.gmra.mrb[0].mxu0 %v3134
        %v3170 = vpop.f32.mrb[0].mxu0
        %v3171 = vadd.f32 0.0, %v3170
        %v3172 = vpop.f32.mrb[0].mxu0
        %v3173 = vpop.f32.mrb[0].mxu0
        %v3174 = vpop.f32.mrb[0].mxu0
        %3175 = vdwg.mxu0
        %3176 = vrot.lane.b32.xlu0 %v2338, 32
        %v3177 = vpop.permute.xlu0 %3176
        %v3180 = vsel %vm2443, %v3129, 0
        %3182 = vmatprep.subr.bf16.mxu0 0
        %3183 = vmatpush1.bf16.msra.mxu0 %v3177
        %3184 = vmatprep.subr.bf16.mxu0 0
        %3185 = vmatpush1.bf16.msra.mxu0 0
        %3186 = vmatprep.subr.bf16.mxu0 0
        %3187 = vmatpush1.bf16.msra.mxu0 0
        %3188 = vmatprep.subr.bf16.mxu0 0
        %3189 = vmatpush1.bf16.msra.mxu0 0
        %3190 = vmatprep.subr.bf16.mxu0 0
        %3191 = vmatpush1.bf16.msra.mxu0 0
        %3192 = vmatprep.subr.bf16.mxu0 0
        %3193 = vmatpush1.bf16.msra.mxu0 0
        %3194 = vmatprep.subr.bf16.mxu0 0
        %3195 = vmatpush1.bf16.msra.mxu0 0
        %3196 = vmatprep.subr.bf16.mxu0 0
        %3197 = vmatpush1.bf16.msra.mxu0 0
        %3198 = vmatprep.subr.bf16.mxu0 0
        %3199 = vmatpush1.bf16.msra.mxu0 0
        %3200 = vmatprep.subr.bf16.mxu0 0
        %3201 = vmatpush1.bf16.msra.mxu0 0
        %3202 = vmatprep.subr.bf16.mxu0 0
        %3203 = vmatpush1.bf16.msra.mxu0 0
        %3204 = vmatprep.subr.bf16.mxu0 0
        %3205 = vmatpush1.bf16.msra.mxu0 0
        %3206 = vmatprep.subr.bf16.mxu0 0
        %3207 = vmatpush1.bf16.msra.mxu0 0
        %3208 = vmatprep.subr.bf16.mxu0 0
        %3209 = vmatpush1.bf16.msra.mxu0 0
        %3210 = vmatprep.subr.bf16.mxu0 0
        %3211 = vmatpush1.bf16.msra.mxu0 0
        %3212 = vmatprep.subr.bf16.mxu0 0
        %3213 = vmatpush1.bf16.msra.mxu0 0
        %3214 = vmatprep.mubr.bf16.mxu0 0
        %3215 = vmatmul.mubr.bf16.gmra.mrb[0].mxu0 %v3180
        %v3216 = vpop.f32.mrb[0].mxu0
        %v3217 = vadd.f32 0.0, %v3216
        %v3218 = vpop.f32.mrb[0].mxu0
        %v3219 = vpop.f32.mrb[0].mxu0
        %v3220 = vpop.f32.mrb[0].mxu0
        %3221 = vdwg.mxu0
        %v3222 = vpack.c.bf16 %v3217, %v3171
        %3224 = vrot.lane.b32.xlu0 %v3222, 96
        %v3225 = vpop.permute.xlu0 %3224
        %3227 = vst.msk [vmem:[#allocation2] sm:$0xff] %vm1895, %v3225
        %v3228 = vld [vmem:[#allocation2] sm:$0xff]
        %v3229 = vld [vmem:[#allocation14] sm:$0xf]
        %v3230 = vld [vmem:[#allocation14 + $0x4] sm:$0xf]
        %v3231 = vld [vmem:[#allocation14 + $0x8] sm:$0xf]
        %v3232 = vld [vmem:[#allocation14 + $0xc] sm:$0xf]
        %v3233 = vld [vmem:[#allocation14 + $0x10] sm:$0xf]
        %v3234 = vld [vmem:[#allocation14 + $0x14] sm:$0xf]
        %v3235 = vld [vmem:[#allocation14 + $0x18] sm:$0xf]
        %v3236 = vld [vmem:[#allocation14 + $0x1c] sm:$0xf]
        %v3237 = vld [vmem:[#allocation14 + $0x20] sm:$0xf]
        %v3238 = vld [vmem:[#allocation14 + $0x24] sm:$0xf]
        %v3239 = vld [vmem:[#allocation14 + $0x28] sm:$0xf]
        %v3240 = vld [vmem:[#allocation14 + $0x2c] sm:$0xf]
        %v3241 = vld [vmem:[#allocation14 + $0x30] sm:$0xf]
        %v3242 = vld [vmem:[#allocation14 + $0x34] sm:$0xf]
        %v3243 = vld [vmem:[#allocation14 + $0x38] sm:$0xf]
        %v3244 = vld [vmem:[#allocation14 + $0x3c] sm:$0xf]
        %v3245 = vlaneseq
        %v3246 = vshrl.u32 %v3245, 7
        %v3247 = vsub.s32 2, %v3246
        %v3248 = vrot.slane %v697, %v3247
        %v3265 = vunpack.c.l.b16 %v3229
        %v3266 = vunpack.c.l.b16 %v3230
        %v3267 = vunpack.c.l.b16 %v3231
        %v3268 = vunpack.c.l.b16 %v3232
        %v3269 = vunpack.c.l.b16 %v3233
        %v3270 = vunpack.c.l.b16 %v3234
        %v3271 = vunpack.c.l.b16 %v3235
        %v3272 = vunpack.c.l.b16 %v3236
        %v3273 = vunpack.c.l.b16 %v3237
        %v3274 = vunpack.c.l.b16 %v3238
        %v3275 = vunpack.c.l.b16 %v3239
        %v3276 = vunpack.c.l.b16 %v3240
        %v3277 = vunpack.c.l.b16 %v3241
        %v3278 = vunpack.c.l.b16 %v3242
        %v3279 = vunpack.c.l.b16 %v3243
        %v3280 = vunpack.c.l.b16 %v3244
        %v3281 = vpack.c.b16 %v3266, %v3265
        %v3282 = vpack.c.b16 %v3268, %v3267
        %v3283 = vpack.c.b16 %v3270, %v3269
        %v3284 = vpack.c.b16 %v3272, %v3271
        %v3285 = vpack.c.b16 %v3274, %v3273
        %v3286 = vpack.c.b16 %v3276, %v3275
        %v3287 = vpack.c.b16 %v3278, %v3277
        %v3288 = vpack.c.b16 %v3280, %v3279
        %3297 = vmatprep.subr.bf16.mxu0 0
        %3298 = vmatpush1.bf16.msra.mxu0 %v3281
        %3299 = vmatprep.subr.bf16.mxu0 0
        %3300 = vmatpush1.bf16.msra.mxu0 %v3282
        %3301 = vmatprep.subr.bf16.mxu0 0
        %3302 = vmatpush1.bf16.msra.mxu0 %v3283
        %3303 = vmatprep.subr.bf16.mxu0 0
        %3304 = vmatpush1.bf16.msra.mxu0 %v3284
        %3305 = vmatprep.subr.bf16.mxu0 0
        %3306 = vmatpush1.bf16.msra.mxu0 %v3285
        %3307 = vmatprep.subr.bf16.mxu0 0
        %3308 = vmatpush1.bf16.msra.mxu0 %v3286
        %3309 = vmatprep.subr.bf16.mxu0 0
        %3310 = vmatpush1.bf16.msra.mxu0 %v3287
        %3311 = vmatprep.subr.bf16.mxu0 0
        %3312 = vmatpush1.bf16.msra.mxu0 %v3288
        %3313 = vmatprep.subr.bf16.mxu0 0
        %3314 = vmatpush1.bf16.msra.mxu0 0
        %3315 = vmatprep.subr.bf16.mxu0 0
        %3316 = vmatpush1.bf16.msra.mxu0 0
        %3317 = vmatprep.subr.bf16.mxu0 0
        %3318 = vmatpush1.bf16.msra.mxu0 0
        %3319 = vmatprep.subr.bf16.mxu0 0
        %3320 = vmatpush1.bf16.msra.mxu0 0
        %3321 = vmatprep.subr.bf16.mxu0 0
        %3322 = vmatpush1.bf16.msra.mxu0 0
        %3323 = vmatprep.subr.bf16.mxu0 0
        %3324 = vmatpush1.bf16.msra.mxu0 0
        %3325 = vmatprep.subr.bf16.mxu0 0
        %3326 = vmatpush1.bf16.msra.mxu0 0
        %3327 = vmatprep.subr.bf16.mxu0 0
        %3328 = vmatpush1.bf16.msra.mxu0 0
        %3329 = vmatprep.mubr.bf16.mxu0 0
        %3330 = vmatmul.mubr.bf16.gmra.mrb[0].mxu0 %v3228
        %v3331 = vpop.f32.mrb[0].mxu0
        %v3332 = vadd.f32 %v3248, %v3331
        %v3333 = vpop.f32.mrb[0].mxu0
        %v3334 = vpop.f32.mrb[0].mxu0
        %v3335 = vadd.f32 %v3248, %v3334
        %v3336 = vpop.f32.mrb[0].mxu0
        %3337 = vdwg.mxu0
        %v3338 = vadd.f32 %v2058, %v3332
        %v3339 = vadd.f32 %v2059, %v3335
        %3340 = vadd.xlane.f32.xlu0 %v3338
        %v3341 = vpop.xlane.xlu0 %3340
        %3342 = vadd.xlane.f32.xlu0 %v3339
        %v3343 = vpop.xlane.xlu0 %3342
        %v3344 = vmul.f32 %v3341, %v2013
        %v3345 = vmul.f32 %v3343, %v2013
        %v3346 = vsub.f32 %v3338, %v3344
        %v3347 = vsub.f32 %v3339, %v3345
        %v3348 = vmul.f32 %v3346, %v3346
        %v3349 = vmul.f32 %v3347, %v3347
        %3350 = vadd.xlane.f32.xlu0 %v3348
        %v3351 = vpop.xlane.xlu0 %3350
        %3352 = vadd.xlane.f32.xlu0 %v3349
        %v3353 = vpop.xlane.xlu0 %3352
        %v3354 = vmul.f32 %v3351, 0.007874016
        %v3355 = vmul.f32 %v3353, 0.007874016
        %v3356 = vrsqrt.pop %v3354
        %v3357 = vmul.f32 %v3354, %v3356
        %vm3358 = vcmp.eq.f32.partialorder %v3354, inf
        %v3359 = vsel %vm3358, %v3354, %v3357
        %vm3360 = vcmp.eq.f32.partialorder %v3354, 0.0
        %v3361 = vand.u32 %v3354, 2147483648
        %v3362 = vsel %vm3360, %v3361, %v3359
        %v3363 = vrsqrt.pop %v3355
        %v3364 = vmul.f32 %v3355, %v3363
        %vm3365 = vcmp.eq.f32.partialorder %v3355, inf
        %v3366 = vsel %vm3365, %v3355, %v3364
        %vm3367 = vcmp.eq.f32.partialorder %v3355, 0.0
        %v3368 = vand.u32 %v3355, 2147483648
        %v3369 = vsel %vm3367, %v3368, %v3366
        %v3370 = vadd.f32 %v3362, 1e-06
        %v3371 = vadd.f32 %v3369, 1e-06
        %v3372 = vrcp.pop %v3370
        %v3373 = vmul.f32 1.0, %v3372
        %v3374 = vrcp.pop %v3371
        %v3375 = vmul.f32 1.0, %v3374
        %v3376 = vmul.f32 %v3346, %v3373
        %v3377 = vmul.f32 %v3347, %v3375
        %v3378 = vlaneseq
        %v3379 = vshrl.u32 %v3378, 7
        %v3380 = vsub.s32 6, %v3379
        %v3381 = vrot.slane %v697, %v3380
        %v3382 = vmul.f32 %v3381, %v3376
        %v3383 = vmul.f32 %v3381, %v3377
        %v3384 = vlaneseq
        %v3385 = vshrl.u32 %v3384, 7
        %v3386 = vsub.s32 7, %v3385
        %v3387 = vrot.slane %v697, %v3386
        %v3388 = vadd.f32 %v3382, %v3387
        %v3389 = vadd.f32 %v3383, %v3387
        %v3390 = vld [vmem:[%s12] sm:$0x3]
        %v3391 = vpack.c.bf16 %v3389, %v3388
        %v3392 = vld [vmem:[#allocation15] sm:$0xff]
        %v3393 = vld [vmem:[#allocation15 + $0x8] sm:$0xff]
        %v3394 = vld [vmem:[#allocation15 + $0x10] sm:$0xff]
        %v3395 = vld [vmem:[#allocation15 + $0x18] sm:$0xff]
        %v3396 = vld [vmem:[#allocation15 + $0x20] sm:$0xff]
        %v3397 = vld [vmem:[#allocation15 + $0x28] sm:$0xff]
        %v3398 = vld [vmem:[#allocation15 + $0x30] sm:$0xff]
        %v3399 = vld [vmem:[#allocation15 + $0x38] sm:$0xff]
        %v3400 = vld [vmem:[#allocation15 + $0x40] sm:$0xff]
        %v3401 = vld [vmem:[#allocation15 + $0x48] sm:$0xff]
        %v3402 = vld [vmem:[#allocation15 + $0x50] sm:$0xff]
        %v3403 = vld [vmem:[#allocation15 + $0x58] sm:$0xff]
        %v3404 = vld [vmem:[#allocation15 + $0x60] sm:$0xff]
        %v3405 = vld [vmem:[#allocation15 + $0x68] sm:$0xff]
        %v3406 = vld [vmem:[#allocation15 + $0x70] sm:$0xff]
        %v3407 = vld [vmem:[#allocation15 + $0x78] sm:$0xff]
        %v3409 = vlaneseq
        %v3410 = vshrl.u32 %v3409, 7
        %v3411 = vsub.s32 0, %v3410
        %v3412 = vrot.slane %v3390, %v3411
        %v3413 = vlaneseq
        %v3414 = vshrl.u32 %v3413, 7
        %v3415 = vsub.s32 1, %v3414
        %v3416 = vrot.slane %v3390, %v3415
        %v3435 = vunpack.c.l.b16 %v3392
        %v3436 = vunpack.c.h.b16 %v3392
        %v3437 = vunpack.c.l.b16 %v3393
        %v3438 = vunpack.c.h.b16 %v3393
        %v3439 = vunpack.c.l.b16 %v3394
        %v3440 = vunpack.c.h.b16 %v3394
        %v3441 = vunpack.c.l.b16 %v3395
        %v3442 = vunpack.c.h.b16 %v3395
        %v3443 = vunpack.c.l.b16 %v3396
        %v3444 = vunpack.c.h.b16 %v3396
        %v3445 = vunpack.c.l.b16 %v3397
        %v3446 = vunpack.c.h.b16 %v3397
        %v3447 = vunpack.c.l.b16 %v3398
        %v3448 = vunpack.c.h.b16 %v3398
        %v3449 = vunpack.c.l.b16 %v3399
        %v3450 = vunpack.c.h.b16 %v3399
        %v3451 = vunpack.c.l.b16 %v3400
        %v3452 = vunpack.c.h.b16 %v3400
        %v3453 = vunpack.c.l.b16 %v3401
        %v3454 = vunpack.c.h.b16 %v3401
        %v3455 = vunpack.c.l.b16 %v3402
        %v3456 = vunpack.c.h.b16 %v3402
        %v3457 = vunpack.c.l.b16 %v3403
        %v3458 = vunpack.c.h.b16 %v3403
        %v3459 = vunpack.c.l.b16 %v3404
        %v3460 = vunpack.c.h.b16 %v3404
        %v3461 = vunpack.c.l.b16 %v3405
        %v3462 = vunpack.c.h.b16 %v3405
        %v3463 = vunpack.c.l.b16 %v3406
        %v3464 = vunpack.c.h.b16 %v3406
        %v3465 = vunpack.c.l.b16 %v3407
        %v3466 = vunpack.c.h.b16 %v3407
        %v3467 = vpack.c.b16 %v3437, %v3435
        %v3468 = vpack.c.b16 %v3438, %v3436
        %v3469 = vpack.c.b16 %v3441, %v3439
        %v3470 = vpack.c.b16 %v3442, %v3440
        %v3471 = vpack.c.b16 %v3445, %v3443
        %v3472 = vpack.c.b16 %v3446, %v3444
        %v3473 = vpack.c.b16 %v3449, %v3447
        %v3474 = vpack.c.b16 %v3450, %v3448
        %v3475 = vpack.c.b16 %v3453, %v3451
        %v3476 = vpack.c.b16 %v3454, %v3452
        %v3477 = vpack.c.b16 %v3457, %v3455
        %v3478 = vpack.c.b16 %v3458, %v3456
        %v3479 = vpack.c.b16 %v3461, %v3459
        %v3480 = vpack.c.b16 %v3462, %v3460
        %v3481 = vpack.c.b16 %v3465, %v3463
        %v3482 = vpack.c.b16 %v3466, %v3464
        %3499 = vmatprep.subr.bf16.mxu0 %v3468
        %3500 = vmatpush1.bf16.msra.mxu0 %v3467
        %3501 = vmatprep.subr.bf16.mxu0 %v3470
        %3502 = vmatpush1.bf16.msra.mxu0 %v3469
        %3503 = vmatprep.subr.bf16.mxu0 %v3472
        %3504 = vmatpush1.bf16.msra.mxu0 %v3471
        %3505 = vmatprep.subr.bf16.mxu0 %v3474
        %3506 = vmatpush1.bf16.msra.mxu0 %v3473
        %3507 = vmatprep.subr.bf16.mxu0 %v3476
        %3508 = vmatpush1.bf16.msra.mxu0 %v3475
        %3509 = vmatprep.subr.bf16.mxu0 %v3478
        %3510 = vmatpush1.bf16.msra.mxu0 %v3477
        %3511 = vmatprep.subr.bf16.mxu0 %v3480
        %3512 = vmatpush1.bf16.msra.mxu0 %v3479
        %3513 = vmatprep.subr.bf16.mxu0 %v3482
        %3514 = vmatpush1.bf16.msra.mxu0 %v3481
        %3515 = vmatprep.subr.bf16.mxu0 0
        %3516 = vmatpush1.bf16.msra.mxu0 0
        %3517 = vmatprep.subr.bf16.mxu0 0
        %3518 = vmatpush1.bf16.msra.mxu0 0
        %3519 = vmatprep.subr.bf16.mxu0 0
        %3520 = vmatpush1.bf16.msra.mxu0 0
        %3521 = vmatprep.subr.bf16.mxu0 0
        %3522 = vmatpush1.bf16.msra.mxu0 0
        %3523 = vmatprep.subr.bf16.mxu0 0
        %3524 = vmatpush1.bf16.msra.mxu0 0
        %3525 = vmatprep.subr.bf16.mxu0 0
        %3526 = vmatpush1.bf16.msra.mxu0 0
        %3527 = vmatprep.subr.bf16.mxu0 0
        %3528 = vmatpush1.bf16.msra.mxu0 0
        %3529 = vmatprep.subr.bf16.mxu0 0
        %3530 = vmatpush1.bf16.msra.mxu0 0
        %3531 = vmatprep.mubr.bf16.mxu0 0
        %3532 = vmatmul.mubr.bf16.gmra.mrb[0].mxu0 %v3391
        %v3533 = vpop.f32.mrb[0].mxu0
        %v3534 = vadd.f32 %v3412, %v3533
        %v3535 = vpop.f32.mrb[0].mxu0
        %v3536 = vadd.f32 %v3416, %v3535
        %v3537 = vpop.f32.mrb[0].mxu0
        %v3538 = vadd.f32 %v3412, %v3537
        %v3539 = vpop.f32.mrb[0].mxu0
        %v3540 = vadd.f32 %v3416, %v3539
        %3541 = vdwg.mxu0
        %v3542 = vmax.f32 %v3534, 0.0
        %v3543 = vmax.f32 %v3536, 0.0
        %v3544 = vmax.f32 %v3538, 0.0
        %v3545 = vmax.f32 %v3540, 0.0
        %v3546 = vpack.c.bf16 %v3544, %v3542
        %v3547 = vpack.c.bf16 %v3545, %v3543
        %v3548 = vld [vmem:[#allocation17] sm:$0xf]
        %v3549 = vld [vmem:[#allocation17 + $0x4] sm:$0xf]
        %v3550 = vld [vmem:[#allocation17 + $0x8] sm:$0xf]
        %v3551 = vld [vmem:[#allocation17 + $0xc] sm:$0xf]
        %v3552 = vld [vmem:[#allocation17 + $0x10] sm:$0xf]
        %v3553 = vld [vmem:[#allocation17 + $0x14] sm:$0xf]
        %v3554 = vld [vmem:[#allocation17 + $0x18] sm:$0xf]
        %v3555 = vld [vmem:[#allocation17 + $0x1c] sm:$0xf]
        %v3556 = vld [vmem:[#allocation17 + $0x20] sm:$0xf]
        %v3557 = vld [vmem:[#allocation17 + $0x24] sm:$0xf]
        %v3558 = vld [vmem:[#allocation17 + $0x28] sm:$0xf]
        %v3559 = vld [vmem:[#allocation17 + $0x2c] sm:$0xf]
        %v3560 = vld [vmem:[#allocation17 + $0x30] sm:$0xf]
        %v3561 = vld [vmem:[#allocation17 + $0x34] sm:$0xf]
        %v3562 = vld [vmem:[#allocation17 + $0x38] sm:$0xf]
        %v3563 = vld [vmem:[#allocation17 + $0x3c] sm:$0xf]
        %v3564 = vld [vmem:[#allocation17 + $0x40] sm:$0xf]
        %v3565 = vld [vmem:[#allocation17 + $0x44] sm:$0xf]
        %v3566 = vld [vmem:[#allocation17 + $0x48] sm:$0xf]
        %v3567 = vld [vmem:[#allocation17 + $0x4c] sm:$0xf]
        %v3568 = vld [vmem:[#allocation17 + $0x50] sm:$0xf]
        %v3569 = vld [vmem:[#allocation17 + $0x54] sm:$0xf]
        %v3570 = vld [vmem:[#allocation17 + $0x58] sm:$0xf]
        %v3571 = vld [vmem:[#allocation17 + $0x5c] sm:$0xf]
        %v3572 = vld [vmem:[#allocation17 + $0x60] sm:$0xf]
        %v3573 = vld [vmem:[#allocation17 + $0x64] sm:$0xf]
        %v3574 = vld [vmem:[#allocation17 + $0x68] sm:$0xf]
        %v3575 = vld [vmem:[#allocation17 + $0x6c] sm:$0xf]
        %v3576 = vld [vmem:[#allocation17 + $0x70] sm:$0xf]
        %v3577 = vld [vmem:[#allocation17 + $0x74] sm:$0xf]
        %v3578 = vld [vmem:[#allocation17 + $0x78] sm:$0xf]
        %v3579 = vld [vmem:[#allocation17 + $0x7c] sm:$0xf]
        %v3580 = vlaneseq
        %v3581 = vshrl.u32 %v3580, 7
        %v3582 = vsub.s32 3, %v3581
        %v3583 = vrot.slane %v697, %v3582
        %v3616 = vunpack.c.l.b16 %v3548
        %v3617 = vunpack.c.l.b16 %v3549
        %v3618 = vunpack.c.l.b16 %v3550
        %v3619 = vunpack.c.l.b16 %v3551
        %v3620 = vunpack.c.l.b16 %v3552
        %v3621 = vunpack.c.l.b16 %v3553
        %v3622 = vunpack.c.l.b16 %v3554
        %v3623 = vunpack.c.l.b16 %v3555
        %v3624 = vunpack.c.l.b16 %v3556
        %v3625 = vunpack.c.l.b16 %v3557
        %v3626 = vunpack.c.l.b16 %v3558
        %v3627 = vunpack.c.l.b16 %v3559
        %v3628 = vunpack.c.l.b16 %v3560
        %v3629 = vunpack.c.l.b16 %v3561
        %v3630 = vunpack.c.l.b16 %v3562
        %v3631 = vunpack.c.l.b16 %v3563
        %v3632 = vunpack.c.l.b16 %v3564
        %v3633 = vunpack.c.l.b16 %v3565
        %v3634 = vunpack.c.l.b16 %v3566
        %v3635 = vunpack.c.l.b16 %v3567
        %v3636 = vunpack.c.l.b16 %v3568
        %v3637 = vunpack.c.l.b16 %v3569
        %v3638 = vunpack.c.l.b16 %v3570
        %v3639 = vunpack.c.l.b16 %v3571
        %v3640 = vunpack.c.l.b16 %v3572
        %v3641 = vunpack.c.l.b16 %v3573
        %v3642 = vunpack.c.l.b16 %v3574
        %v3643 = vunpack.c.l.b16 %v3575
        %v3644 = vunpack.c.l.b16 %v3576
        %v3645 = vunpack.c.l.b16 %v3577
        %v3646 = vunpack.c.l.b16 %v3578
        %v3647 = vunpack.c.l.b16 %v3579
        %v3648 = vpack.c.b16 %v3617, %v3616
        %v3649 = vpack.c.b16 %v3619, %v3618
        %v3650 = vpack.c.b16 %v3621, %v3620
        %v3651 = vpack.c.b16 %v3623, %v3622
        %v3652 = vpack.c.b16 %v3625, %v3624
        %v3653 = vpack.c.b16 %v3627, %v3626
        %v3654 = vpack.c.b16 %v3629, %v3628
        %v3655 = vpack.c.b16 %v3631, %v3630
        %v3656 = vpack.c.b16 %v3633, %v3632
        %v3657 = vpack.c.b16 %v3635, %v3634
        %v3658 = vpack.c.b16 %v3637, %v3636
        %v3659 = vpack.c.b16 %v3639, %v3638
        %v3660 = vpack.c.b16 %v3641, %v3640
        %v3661 = vpack.c.b16 %v3643, %v3642
        %v3662 = vpack.c.b16 %v3645, %v3644
        %v3663 = vpack.c.b16 %v3647, %v3646
        %3680 = vmatprep.subr.bf16.mxu0 0
        %3681 = vmatpush1.bf16.msra.mxu0 %v3648
        %3682 = vmatprep.subr.bf16.mxu0 0
        %3683 = vmatpush1.bf16.msra.mxu0 %v3649
        %3684 = vmatprep.subr.bf16.mxu0 0
        %3685 = vmatpush1.bf16.msra.mxu0 %v3650
        %3686 = vmatprep.subr.bf16.mxu0 0
        %3687 = vmatpush1.bf16.msra.mxu0 %v3651
        %3688 = vmatprep.subr.bf16.mxu0 0
        %3689 = vmatpush1.bf16.msra.mxu0 %v3652
        %3690 = vmatprep.subr.bf16.mxu0 0
        %3691 = vmatpush1.bf16.msra.mxu0 %v3653
        %3692 = vmatprep.subr.bf16.mxu0 0
        %3693 = vmatpush1.bf16.msra.mxu0 %v3654
        %3694 = vmatprep.subr.bf16.mxu0 0
        %3695 = vmatpush1.bf16.msra.mxu0 %v3655
        %3696 = vmatprep.subr.bf16.mxu0 0
        %3697 = vmatpush1.bf16.msra.mxu0 %v3656
        %3698 = vmatprep.subr.bf16.mxu0 0
        %3699 = vmatpush1.bf16.msra.mxu0 %v3657
        %3700 = vmatprep.subr.bf16.mxu0 0
        %3701 = vmatpush1.bf16.msra.mxu0 %v3658
        %3702 = vmatprep.subr.bf16.mxu0 0
        %3703 = vmatpush1.bf16.msra.mxu0 %v3659
        %3704 = vmatprep.subr.bf16.mxu0 0
        %3705 = vmatpush1.bf16.msra.mxu0 %v3660
        %3706 = vmatprep.subr.bf16.mxu0 0
        %3707 = vmatpush1.bf16.msra.mxu0 %v3661
        %3708 = vmatprep.subr.bf16.mxu0 0
        %3709 = vmatpush1.bf16.msra.mxu0 %v3662
        %3710 = vmatprep.subr.bf16.mxu0 0
        %3711 = vmatpush1.bf16.msra.mxu0 %v3663
        %3712 = vmatprep.mubr.bf16.mxu0 %v3547
        %3713 = vmatmul.mubr.bf16.gmra.mrb[0].mxu0 %v3546
        %v3714 = vpop.f32.mrb[0].mxu0
        %v3715 = vadd.f32 %v3583, %v3714
        %v3716 = vpop.f32.mrb[0].mxu0
        %v3717 = vpop.f32.mrb[0].mxu0
        %v3718 = vadd.f32 %v3583, %v3717
        %v3719 = vpop.f32.mrb[0].mxu0
        %3720 = vdwg.mxu0
        %v3721 = vadd.f32 %v3388, %v3715
        %v3722 = vadd.f32 %v3389, %v3718
        %3723 = vadd.xlane.f32.xlu0 %v3721
        %v3724 = vpop.xlane.xlu0 %3723
        %3725 = vadd.xlane.f32.xlu0 %v3722
        %v3726 = vpop.xlane.xlu0 %3725
        %v3727 = vmul.f32 %v3724, %v2013
        %v3728 = vmul.f32 %v3726, %v2013
        %v3729 = vsub.f32 %v3721, %v3727
        %v3730 = vsub.f32 %v3722, %v3728
        %v3731 = vmul.f32 %v3729, %v3729
        %v3732 = vmul.f32 %v3730, %v3730
        %3733 = vadd.xlane.f32.xlu0 %v3731
        %v3734 = vpop.xlane.xlu0 %3733
        %3735 = vadd.xlane.f32.xlu0 %v3732
        %v3736 = vpop.xlane.xlu0 %3735
        %v3737 = vmul.f32 %v3734, 0.007874016
        %v3738 = vmul.f32 %v3736, 0.007874016
        %v3739 = vrsqrt.pop %v3737
        %v3740 = vmul.f32 %v3737, %v3739
        %vm3741 = vcmp.eq.f32.partialorder %v3737, inf
        %v3742 = vsel %vm3741, %v3737, %v3740
        %vm3743 = vcmp.eq.f32.partialorder %v3737, 0.0
        %v3744 = vand.u32 %v3737, 2147483648
        %v3745 = vsel %vm3743, %v3744, %v3742
        %v3746 = vrsqrt.pop %v3738
        %v3747 = vmul.f32 %v3738, %v3746
        %vm3748 = vcmp.eq.f32.partialorder %v3738, inf
        %v3749 = vsel %vm3748, %v3738, %v3747
        %vm3750 = vcmp.eq.f32.partialorder %v3738, 0.0
        %v3751 = vand.u32 %v3738, 2147483648
        %v3752 = vsel %vm3750, %v3751, %v3749
        %v3753 = vadd.f32 %v3745, 1e-06
        %v3754 = vadd.f32 %v3752, 1e-06
        %v3755 = vrcp.pop %v3753
        %v3756 = vmul.f32 1.0, %v3755
        %v3757 = vrcp.pop %v3754
        %v3758 = vmul.f32 1.0, %v3757
        %v3759 = vmul.f32 %v3729, %v3756
        %v3760 = vmul.f32 %v3730, %v3758
        %v3761 = vlaneseq
        %v3762 = vshrl.u32 %v3761, 7
        %v3763 = vsub.s32 0, %v3762
        %v3764 = vrot.slane %v698, %v3763
        %v3765 = vmul.f32 %v3764, %v3759
        %v3766 = vmul.f32 %v3764, %v3760
        %v3767 = vlaneseq
        %v3768 = vshrl.u32 %v3767, 7
        %v3769 = vsub.s32 1, %v3768
        %v3770 = vrot.slane %v698, %v3769
        %v3771 = vadd.f32 %v3765, %v3770
        %v3772 = vadd.f32 %v3766, %v3770
        %3773 = vst [vmem:[%s682] sm:$0xff] %v3771
        %3774 = vst [vmem:[%s682 + $0x8] sm:$0xff] %v3772
        %s3775 = sand.u32 %s381, 1
        %s3776 = scalar_lea.sflag [#allocation5], %s3775
        %s3777 = sand.u32 %s381, 1
        %s3778 = smul.addr %s3777, 16
        %s3779 = scalar_lea.vmem [#allocation18], %s3778
        // Predicated region
        $region117: #{tpu_custom_call.1} parent=79 // pred_check
          %p3780 = pneg %p391
        $region118: #{tpu_custom_call.1} parent=79 // pred_check_branch
          %3782 = sbr.rel (%p3780) target = $region120
        $region119: #{tpu_custom_call.1} parent=79 // pred_region
          %s3783 = smul.u32 2, %s38
          %s3785 = ssub.s32 256, 256
          %3786 = vsyncadd %s3776, %s3785
          %s3787 = smul.addr %s3783, 128
          %s3788 = scalar_lea.hbm %s15, %s3787
          %s3789 = sshll.u32 %s3779, 4
          %s3790 = int_to_ptr.vmem [resolvable:$true] %s3789
          %3795 = dma.vmem_to_hbm [thread:$0]  %s3790, 256, %s3788, %s3776, 128, 128, 8
        $region120: #{tpu_custom_call.1} parent=79 // pred_fallthru
          _
      $region80: #{tpu_custom_call.1} parent=5 // pred_fallthru
        _
      %p3796 = scmp.le.s32.totalorder 2, %s33
      // Predicated region
      $region121: #{tpu_custom_call.1} parent=5 // pred_check
        %p3797 = pneg %p3796
      $region122: #{tpu_custom_call.1} parent=5 // pred_check_branch
        %3799 = sbr.rel (%p3797) target = $region124
      $region123: #{tpu_custom_call.1} parent=5 // pred_region
        %s3800 = ssub.s32 %s33, 2
        // Predicated region
        $region125: #{tpu_custom_call.1} parent=123 // pred_check
          %p3801 = pneg %p397
        $region126: #{tpu_custom_call.1} parent=123 // pred_check_branch
          %3803 = sbr.rel (%p3801) target = $region128
        $region127: #{tpu_custom_call.1} parent=123 // pred_region
          %s3804 = sand.u32 %s382, 1
          %s3805 = scalar_lea.sflag [#allocation5], %s3804
          %s3806 = sand.u32 %s382, 1
          %s3807 = smul.addr %s3806, 16
          %s3808 = scalar_lea.vmem [#allocation18], %s3807
          %3809 = dma.done %s3805, 256
        $region128: #{tpu_custom_call.1} parent=123 // pred_fallthru
          _
      $region124: #{tpu_custom_call.1} parent=5 // pred_fallthru
        _
    $region6: #{tpu_custom_call.1} parent=1 // loop_footer
      %s37 = sadd.s32 1, %s33
    $region7: #{tpu_custom_call.1} parent=1 // loop_footer_branch
      %32 = sbr.rel target = $region3
    $region8: #{tpu_custom_call.1} parent=1 // loop_exit
      _
    %3810 = vsyncpa [#allocation4], 1
    %s3811 = scalar_lea.sflag [#allocation4], 1
    %3812 = vsyncpa %s3811, 1
    %3813 = vsyncpa [#allocation7], 1
    %s3814 = scalar_lea.sflag [#allocation7], 1
    %3815 = vsyncpa %s3814, 1
    %3816 = vsyncpa [#allocation10], 1
    %3817 = vsyncpa [#allocation13], 1
    %3818 = vsyncpa [#allocation16], 1
    %3819 = vsyncpa [#allocation5], 1
    %s3820 = scalar_lea.sflag [#allocation5], 1
    %3821 = vsyncpa %s3820, 1

</llo_original>
